<compile_context>
chip_gen: v7x
topology: tpu7x:2x2x1
jax: 0.10.0
libtpu: 0.0.40
codegen_flags: <defaults>
</compile_context>

<pallas_src>
import jax
import jax.numpy as jnp
from jax import lax
from jax.experimental import pallas as pl
from jax.experimental.pallas import tpu as pltpu
import numpy as np

HALO = 4          # zero halo rows at top/bottom of every time-major VMEM scratch (conv padding)
K = 7             # conv kernel size
S = 4             # conv stride / upsampling factor
EPS = 1e-5        # nn.BatchNorm1d default eps

# true channel plan of _PhaseNet
C_IN = 3
C_STEM = 8
C_D = (11, 16, 22, 32)      # conv1..conv4 output channels
C_U = (22, 16, 11, 8)       # up1..up4 output channels
UP_PAD = (2, 2, 2, 3)       # up1..up4 "padding" arguments
N_CLS = 3

# 8-aligned padded channel plan (zero-padded -> padded channels stay exactly zero)
C_DP = (16, 16, 24, 32)
C_UP = (24, 16, 16, 8)
DOWN_CIN = (C_STEM, C_D[0], C_D[1], C_D[2])        # (8, 11, 16, 22)
DOWN_CIN_P = (C_STEM, C_DP[0], C_DP[1], C_DP[2])   # (8, 16, 16, 24)
UP_SRC = ((C_D[3],), (C_U[0], C_D[2]), (C_U[1], C_D[1]), (C_U[2], C_D[0]))
UP_SRC_P = ((C_DP[3],), (C_UP[0], C_DP[2]), (C_UP[1], C_DP[1]), (C_UP[2], C_DP[0]))


# ----------------------------------------------------------------------------
# Fused whole-network kernel (one grid step == one batch element)
# ----------------------------------------------------------------------------
def _make_kernel(lengths):
    L0, L1, L2, L3, L4 = lengths
    H = HALO

    def zero_halos(ref):
        rows, width = ref.shape
        z = jnp.zeros((H, width), jnp.float32)
        ref[0:H, :] = z
        ref[rows - H:rows, :] = z

    def down_conv(src, lout, cin, w_ref, s_ref, dst):
        # stride-4 / k=7 / pad=3 conv: 7 per-tap matmuls accumulated in f32 (no lane concat).
        shift = s_ref[...]
        acc = None
        for k in range(K):
            x_k = src[pl.ds(H - 3 + k, lout, S), :]          # (lout, cin) strided tap gather
            w_k = w_ref[k * cin:(k + 1) * cin, :]            # 8-aligned sublane slice
            d = jnp.dot(x_k, w_k, preferred_element_type=jnp.float32)
            acc = d if acc is None else acc + d
        dst[H:H + lout, :] = jnp.maximum(acc + shift, 0.0)

    def up_conv(sources, w_ref, s_ref, pad, lout, dst):
        # stride-4 / k=7 transpose conv, phase-decomposed; the channel-concat of `sources`
        # is folded into split-weight matmuls (no concatenate of activations).
        c_total = sum(c for _, c in sources)
        shift = s_ref[...]                                    # read folded BN/bias once per layer
        for r in range(S):
            m_r = (lout - r + S - 1) // S                     # output positions in phase r
            if m_r <= 0:
                continue
            acc = None
            for k in range((r + pad) % S, K, S):              # taps contributing to this phase
                delta = (r + pad - k) // S                    # input time offset (-1, 0 or +1)
                col = 0
                for src, c in sources:
                    w_k = w_ref[k * c_total + col:k * c_total + col + c, :]
                    x_k = src[H + delta:H + delta + m_r, :]
                    d = jnp.dot(x_k, w_k, preferred_element_type=jnp.float32)
                    acc = d if acc is None else acc + d
                    col += c
            y_r = jnp.maximum(acc + shift, 0.0)
            dst[pl.ds(H + r, m_r, S), :] = y_r                # interleave phase r (stride-4 store)

    def kernel(x_ref,
               w_inc, s_inc,
               wd1, sd1, wd2, sd2, wd3, sd3, wd4, sd4,
               wu1, su1, wu2, su2, wu3, su3, wu4, su4,
               w_out, b_out,
               out_ref,
               s_xin, s_x1, s_x2, s_x3, s_x4,
               s_u1, s_u2, s_u3, s_u4):
        # zero only the halo rows (interiors are fully rewritten each step; padded channel
        # columns are rewritten to exact zeros by the zero-padded weights/shifts)
        for s in (s_xin, s_x1, s_x2, s_x3, s_x4, s_u1, s_u2, s_u3, s_u4):
            zero_halos(s)

        # ---- stem: lane-dense (C_IN, L0) input, 1x1 conv (+ folded BN) + ReLU ----------------
        x_tm = jnp.transpose(x_ref[0])                                     # (L0, 3)
        s_xin[H:H + L0, :] = jnp.maximum(
            jnp.dot(x_tm, w_inc[...], preferred_element_type=jnp.float32) + s_inc[...], 0.0)

        # ---- encoder --------------------------------------------------------------------------
        down_conv(s_xin, L1, DOWN_CIN_P[0], wd1, sd1, s_x1)
        down_conv(s_x1, L2, DOWN_CIN_P[1], wd2, sd2, s_x2)
        down_conv(s_x2, L3, DOWN_CIN_P[2], wd3, sd3, s_x3)
        down_conv(s_x3, L4, DOWN_CIN_P[3], wd4, sd4, s_x4)

        # ---- decoder (skip concats folded into split weights; padded channel offsets) ---------
        up_conv([(s_x4, C_DP[3])],                 wu1, su1, UP_PAD[0], L3, s_u1)
        up_conv([(s_u1, C_UP[0]), (s_x3, C_DP[2])], wu2, su2, UP_PAD[1], L2, s_u2)
        up_conv([(s_u2, C_UP[1]), (s_x2, C_DP[1])], wu3, su3, UP_PAD[2], L1, s_u3)
        up_conv([(s_u3, C_UP[2]), (s_x1, C_DP[0])], wu4, su4, UP_PAD[3], L0, s_u4)

        # ---- head: 1x1 ConvTranspose on concat([u4, x_in]) == split matmul, softmax,
        #      transposed so the output store is lane-dense (3, L0) ------------------------------
        u4 = s_u4[H:H + L0, :]                                             # (L0, 8)
        xin_sig = s_xin[H:H + L0, :]                                       # (L0, 8)
        logits = (jnp.dot(u4, w_out[0:C_UP[3], :], preferred_element_type=jnp.float32)
                  + jnp.dot(xin_sig, w_out[C_UP[3]:2 * C_STEM, :],
                            preferred_element_type=jnp.float32)
                  + b_out[...])                                            # (L0, 3)
        z = logits - jnp.max(logits, axis=-1, keepdims=True)
        e = jnp.exp(z)
        probs = e * pl.reciprocal(jnp.sum(e, axis=-1, keepdims=True), approx=True)
        out_ref[0] = jnp.transpose(probs)                                  # (3, L0) lane-dense

    return kernel


# ----------------------------------------------------------------------------
# Wrapper: layout plumbing, BlockSpecs, scratch, single pallas_call
# ----------------------------------------------------------------------------
def phasenet_forward(x_nct, prep):
    n, c_in, l0 = x_nct.shape
    assert c_in == C_IN
    l1 = (l0 - 1) // S + 1
    l2 = (l1 - 1) // S + 1
    l3 = (l2 - 1) // S + 1
    l4 = (l3 - 1) // S + 1
    # same length-compatibility constraint the PyTorch module needs for its skip concats
    assert (4 * l4 - 1 == l3 and 4 * l3 == l2 and 4 * l2 - 1 == l1 and 4 * l1 - 3 == l0), \
        "input length incompatible with _PhaseNet's stride-4 U-Net"
    lengths = (l0, l1, l2, l3, l4)

    x = x_nct.astype(jnp.float32)                       # stays (N, C, T): lane-dense, no transpose

    weight_order = ["w_inc", "s_inc",
                    "wd1", "sd1", "wd2", "sd2", "wd3", "sd3", "wd4", "sd4",
                    "wu1", "su1", "wu2", "su2", "wu3", "su3", "wu4", "su4",
                    "w_out", "b_out"]
    weights = [prep[name] for name in weight_order]

    in_specs = [pl.BlockSpec((1, C_IN, l0), lambda i: (i, 0, 0))]
    for w in weights:
        in_specs.append(pl.BlockSpec(w.shape, lambda i: (0, 0)))

    h2 = 2 * HALO
    scratch = [
        pltpu.VMEM((l0 + h2, C_STEM), jnp.float32),   # x_in
        pltpu.VMEM((l1 + h2, C_DP[0]), jnp.float32),  # x1  (padded 16)
        pltpu.VMEM((l2 + h2, C_DP[1]), jnp.float32),  # x2
        pltpu.VMEM((l3 + h2, C_DP[2]), jnp.float32),  # x3  (padded 24)
        pltpu.VMEM((l4 + h2, C_DP[3]), jnp.float32),  # x4
        pltpu.VMEM((l3 + h2, C_UP[0]), jnp.float32),  # u1  (padded 24)
        pltpu.VMEM((l2 + h2, C_UP[1]), jnp.float32),  # u2
        pltpu.VMEM((l1 + h2, C_UP[2]), jnp.float32),  # u3  (padded 16)
        pltpu.VMEM((l0 + h2, C_UP[3]), jnp.float32),  # u4
    ]

    out = pl.pallas_call(
        _make_kernel(lengths),
        out_shape=jax.ShapeDtypeStruct((n, N_CLS, l0), jnp.float32),
        grid=(n,),
        in_specs=in_specs,
        out_specs=pl.BlockSpec((1, N_CLS, l0), lambda i: (i, 0, 0)),
        scratch_shapes=scratch,
        compiler_params=pltpu.CompilerParams(
            dimension_semantics=("parallel",),
            vmem_limit_bytes=32 * 1024 * 1024),
    )(x, *weights)
    return out                                          # (N, 3, T) like PyTorch


# ----------------------------------------------------------------------------
# Deterministic raw (PyTorch-layout) parameters + kernel-layout preparation
# ----------------------------------------------------------------------------
def init_raw_params(key):
    def conv_init(k, c_out, c_in, ksize):
        lim = 1.0 / np.sqrt(c_in * ksize)
        k1, k2 = jax.random.split(k)
        return (jax.random.uniform(k1, (c_out, c_in, ksize), jnp.float32, -lim, lim),
                jax.random.uniform(k2, (c_out,), jnp.float32, -lim, lim))

    def convt_init(k, c_in, c_out, ksize):
        lim = 1.0 / np.sqrt(c_in * ksize)
        k1, k2 = jax.random.split(k)
        return (jax.random.uniform(k1, (c_in, c_out, ksize), jnp.float32, -lim, lim),
                jax.random.uniform(k2, (c_out,), jnp.float32, -lim, lim))

    def bn_init(k, c):
        k1, k2, k3, k4 = jax.random.split(k, 4)
        gamma = 1.0 + 0.1 * jax.random.normal(k1, (c,), jnp.float32)
        beta = 0.1 * jax.random.normal(k2, (c,), jnp.float32)
        mean = 0.1 * jax.random.normal(k3, (c,), jnp.float32)
        var = jax.random.uniform(k4, (c,), jnp.float32, 0.5, 1.5)
        return (gamma, beta, mean, var)

    keys = jax.random.split(key, 32)
    rp = {}
    rp["inc_w"], rp["inc_b"] = conv_init(keys[0], C_STEM, C_IN, 1)
    rp["in_bn"] = bn_init(keys[1], C_STEM)
    c_prev = C_STEM
    for i, c in enumerate(C_D):
        rp[f"conv{i+1}_w"], rp[f"conv{i+1}_b"] = conv_init(keys[2 + 2 * i], c, c_prev, K)
        rp[f"bnd{i+1}"] = bn_init(keys[3 + 2 * i], c)
        c_prev = c
    up_in = (32, 44, 32, 22)
    for i, (ci, co) in enumerate(zip(up_in, C_U)):
        rp[f"up{i+1}_w"], rp[f"up{i+1}_b"] = convt_init(keys[10 + 2 * i], ci, co, K)
        rp[f"bnu{i+1}"] = bn_init(keys[11 + 2 * i], co)
    rp["out_w"], rp["out_b"] = convt_init(keys[20], 2 * C_STEM, N_CLS, 1)
    return rp


def prepare_params(rp):
    # Fold eval-mode BatchNorm + conv bias into matmul-ready weights/shift rows, zero-padded to
    # 8-aligned channel counts (padded activations stay exactly zero through the whole network).
    def fold(bn):
        g, b, m, v = (np.asarray(a) for a in bn)
        scale = g / np.sqrt(v + EPS)
        return scale, b - m * scale

    prep = {}
    sc, sh = fold(rp["in_bn"])
    prep["w_inc"] = jnp.asarray((np.asarray(rp["inc_w"])[:, :, 0] * sc[:, None]).T)   # (3, 8)
    prep["s_inc"] = jnp.asarray((np.asarray(rp["inc_b"]) * sc + sh)[None, :])

    for i in range(4):
        sc, sh = fold(rp[f"bnd{i+1}"])
        w = np.asarray(rp[f"conv{i+1}_w"]) * sc[:, None, None]            # (Cout, Cin, K)
        wk = np.transpose(w, (2, 1, 0))                                   # (K, Cin, Cout)
        wp = np.zeros((K, DOWN_CIN_P[i], C_DP[i]), np.float32)
        wp[:, :DOWN_CIN[i], :C_D[i]] = wk
        prep[f"wd{i+1}"] = jnp.asarray(wp.reshape(K * DOWN_CIN_P[i], C_DP[i]))
        sp = np.zeros((1, C_DP[i]), np.float32)
        sp[0, :C_D[i]] = np.asarray(rp[f"conv{i+1}_b"]) * sc + sh
        prep[f"sd{i+1}"] = jnp.asarray(sp)

    for i in range(4):
        sc, sh = fold(rp[f"bnu{i+1}"])
        w = np.asarray(rp[f"up{i+1}_w"]) * sc[None, :, None]              # (Cin, Cout, K)
        wk = np.transpose(w, (2, 0, 1))                                   # (K, Cin, Cout)
        c_total_pad = sum(UP_SRC_P[i])
        wp = np.zeros((K, c_total_pad, C_UP[i]), np.float32)
        oo, op = 0, 0
        for co, cp in zip(UP_SRC[i], UP_SRC_P[i]):
            wp[:, op:op + co, :C_U[i]] = wk[:, oo:oo + co, :]
            oo += co
            op += cp
        prep[f"wu{i+1}"] = jnp.asarray(wp.reshape(K * c_total_pad, C_UP[i]))
        sp = np.zeros((1, C_UP[i]), np.float32)
        sp[0, :C_U[i]] = np.asarray(rp[f"up{i+1}_b"]) * sc + sh
        prep[f"su{i+1}"] = jnp.asarray(sp)

    prep["w_out"] = jnp.asarray(np.asarray(rp["out_w"])[:, :, 0])         # (16, 3)
    prep["b_out"] = jnp.asarray(np.asarray(rp["out_b"])[None, :])         # (1, 3)
    return prep


# ----------------------------------------------------------------------------
# Pure-JAX reference (eval-mode semantics) for validation
# ----------------------------------------------------------------------------
def _conv(y, w, b, stride, pad):
    rhs = jnp.transpose(w, (2, 1, 0))
    out = lax.conv_general_dilated(y, rhs, (stride,), [(pad, pad)],
                                   dimension_numbers=("NWC", "WIO", "NWC"),
                                   precision=lax.Precision.HIGHEST)
    return out + b


def _convt(y, w, b, stride, pad, out_pad):
    ksize = w.shape[-1]
    rhs = jnp.transpose(w[:, :, ::-1], (2, 0, 1))
    out = lax.conv_general_dilated(y, rhs, (1,),
                                   [(ksize - 1 - pad, ksize - 1 - pad + out_pad)],
                                   lhs_dilation=(stride,),
                                   dimension_numbers=("NWC", "WIO", "NWC"),
                                   precision=lax.Precision.HIGHEST)
    return out + b


def _bn_relu(y, bn):
    g, b, m, v = bn
    return jnp.maximum((y - m) * (g / jnp.sqrt(v + EPS)) + b, 0.0)


def phasenet_reference(x_nct, rp):
    x = jnp.transpose(x_nct, (0, 2, 1))
    x_in = _bn_relu(_conv(x, rp["inc_w"], rp["inc_b"], 1, 0), rp["in_bn"])
    x1 = _bn_relu(_conv(x_in, rp["conv1_w"], rp["conv1_b"], S, 3), rp["bnd1"])
    x2 = _bn_relu(_conv(x1, rp["conv2_w"], rp["conv2_b"], S, 3), rp["bnd2"])
    x3 = _bn_relu(_conv(x2, rp["conv3_w"], rp["conv3_b"], S, 3), rp["bnd3"])
    x4 = _bn_relu(_conv(x3, rp["conv4_w"], rp["conv4_b"], S, 3), rp["bnd4"])
    u1 = _bn_relu(_convt(x4, rp["up1_w"], rp["up1_b"], S, 2, 0), rp["bnu1"])
    c = jnp.concatenate([u1, x3], axis=-1)
    u2 = _bn_relu(_convt(c, rp["up2_w"], rp["up2_b"], S, 2, 1), rp["bnu2"])
    c = jnp.concatenate([u2, x2], axis=-1)
    u3 = _bn_relu(_convt(c, rp["up3_w"], rp["up3_b"], S, 2, 0), rp["bnu3"])
    c = jnp.concatenate([u3, x1], axis=-1)
    u4 = _bn_relu(_convt(c, rp["up4_w"], rp["up4_b"], S, 3, 0), rp["bnu4"])
    c = jnp.concatenate([u4, x_in], axis=-1)
    logits = _convt(c, rp["out_w"], rp["out_b"], 1, 0, 0)
    pred = jax.nn.softmax(logits, axis=-1)
    return jnp.transpose(pred, (0, 2, 1))


# ----------------------------------------------------------------------------
if __name__ == "__main__":
    key = jax.random.PRNGKey(0)
    key, kx, kp = jax.random.split(key, 3)

    batch, length = 2, 185            # 185 is the smallest length compatible with the U-Net
    x = jax.random.normal(kx, (batch, C_IN, length), jnp.float32)     # (N, C, T) like PyTorch

    raw = init_raw_params(kp)
    prep = prepare_params(raw)

    out = jax.block_until_ready(phasenet_forward(x, prep))
    ref = jax.block_until_ready(phasenet_reference(x, raw))

    assert out.shape == (batch, N_CLS, length), out.shape
    if not np.isfinite(np.asarray(out)).all():
        raise SystemExit("non-finite values in kernel output")
    err = float(jnp.max(jnp.abs(out - ref)))
    if err > 1e-2:
        raise SystemExit(f"mismatch vs reference: max_abs_err={err}")
    print("KERNEL_OK")
</pallas_src>

<mosaic_0001>
module attributes {stable_mosaic.version = 11 : i64} {
  func.func @kernel(%arg0: i32, %arg1: memref<1x3x185xf32, #tpu.memory_space<vmem>>, %arg2: memref<3x8xf32, #tpu.memory_space<vmem>>, %arg3: memref<1x8xf32, #tpu.memory_space<vmem>>, %arg4: memref<56x16xf32, #tpu.memory_space<vmem>>, %arg5: memref<1x16xf32, #tpu.memory_space<vmem>>, %arg6: memref<112x16xf32, #tpu.memory_space<vmem>>, %arg7: memref<1x16xf32, #tpu.memory_space<vmem>>, %arg8: memref<112x24xf32, #tpu.memory_space<vmem>>, %arg9: memref<1x24xf32, #tpu.memory_space<vmem>>, %arg10: memref<168x32xf32, #tpu.memory_space<vmem>>, %arg11: memref<1x32xf32, #tpu.memory_space<vmem>>, %arg12: memref<224x24xf32, #tpu.memory_space<vmem>>, %arg13: memref<1x24xf32, #tpu.memory_space<vmem>>, %arg14: memref<336x16xf32, #tpu.memory_space<vmem>>, %arg15: memref<1x16xf32, #tpu.memory_space<vmem>>, %arg16: memref<224x16xf32, #tpu.memory_space<vmem>>, %arg17: memref<1x16xf32, #tpu.memory_space<vmem>>, %arg18: memref<224x8xf32, #tpu.memory_space<vmem>>, %arg19: memref<1x8xf32, #tpu.memory_space<vmem>>, %arg20: memref<16x3xf32, #tpu.memory_space<vmem>>, %arg21: memref<1x3xf32, #tpu.memory_space<vmem>>, %arg22: memref<1x3x185xf32, #tpu.memory_space<vmem>>, %arg23: memref<193x8xf32, #tpu.memory_space<vmem>>, %arg24: memref<55x16xf32, #tpu.memory_space<vmem>>, %arg25: memref<20x16xf32, #tpu.memory_space<vmem>>, %arg26: memref<11x24xf32, #tpu.memory_space<vmem>>, %arg27: memref<9x32xf32, #tpu.memory_space<vmem>>, %arg28: memref<11x24xf32, #tpu.memory_space<vmem>>, %arg29: memref<20x16xf32, #tpu.memory_space<vmem>>, %arg30: memref<55x16xf32, #tpu.memory_space<vmem>>, %arg31: memref<193x8xf32, #tpu.memory_space<vmem>>) attributes {dimension_semantics = [#tpu.dimension_semantics<parallel>], iteration_bounds = array<i64: 2>, scalar_prefetch = 0 : i64, scratch_operands = 9 : i64, tpu.core_type = #tpu.core_type<tc>, window_params = [{transform_indices = @transform_0, window_bounds = array<i64: 1, 3, 185>}, {pipeline_mode = #tpu.pipeline_mode<synchronous>, transform_indices = @transform_1, window_bounds = array<i64: 3, 8>}, {pipeline_mode = #tpu.pipeline_mode<synchronous>, transform_indices = @transform_2, window_bounds = array<i64: 1, 8>}, {pipeline_mode = #tpu.pipeline_mode<synchronous>, transform_indices = @transform_3, window_bounds = array<i64: 56, 16>}, {pipeline_mode = #tpu.pipeline_mode<synchronous>, transform_indices = @transform_4, window_bounds = array<i64: 1, 16>}, {pipeline_mode = #tpu.pipeline_mode<synchronous>, transform_indices = @transform_5, window_bounds = array<i64: 112, 16>}, {pipeline_mode = #tpu.pipeline_mode<synchronous>, transform_indices = @transform_6, window_bounds = array<i64: 1, 16>}, {pipeline_mode = #tpu.pipeline_mode<synchronous>, transform_indices = @transform_7, window_bounds = array<i64: 112, 24>}, {pipeline_mode = #tpu.pipeline_mode<synchronous>, transform_indices = @transform_8, window_bounds = array<i64: 1, 24>}, {pipeline_mode = #tpu.pipeline_mode<synchronous>, transform_indices = @transform_9, window_bounds = array<i64: 168, 32>}, {pipeline_mode = #tpu.pipeline_mode<synchronous>, transform_indices = @transform_10, window_bounds = array<i64: 1, 32>}, {pipeline_mode = #tpu.pipeline_mode<synchronous>, transform_indices = @transform_11, window_bounds = array<i64: 224, 24>}, {pipeline_mode = #tpu.pipeline_mode<synchronous>, transform_indices = @transform_12, window_bounds = array<i64: 1, 24>}, {pipeline_mode = #tpu.pipeline_mode<synchronous>, transform_indices = @transform_13, window_bounds = array<i64: 336, 16>}, {pipeline_mode = #tpu.pipeline_mode<synchronous>, transform_indices = @transform_14, window_bounds = array<i64: 1, 16>}, {pipeline_mode = #tpu.pipeline_mode<synchronous>, transform_indices = @transform_15, window_bounds = array<i64: 224, 16>}, {pipeline_mode = #tpu.pipeline_mode<synchronous>, transform_indices = @transform_16, window_bounds = array<i64: 1, 16>}, {pipeline_mode = #tpu.pipeline_mode<synchronous>, transform_indices = @transform_17, window_bounds = array<i64: 224, 8>}, {pipeline_mode = #tpu.pipeline_mode<synchronous>, transform_indices = @transform_18, window_bounds = array<i64: 1, 8>}, {pipeline_mode = #tpu.pipeline_mode<synchronous>, transform_indices = @transform_19, window_bounds = array<i64: 16, 3>}, {pipeline_mode = #tpu.pipeline_mode<synchronous>, transform_indices = @transform_20, window_bounds = array<i64: 1, 3>}, {transform_indices = @transform_21, window_bounds = array<i64: 1, 3, 185>}]} {
    %cst = arith.constant 0.000000e+00 : f32
    %0 = vector.broadcast %cst : f32 to vector<4x8xf32>
    %c0 = arith.constant 0 : index
    %c0_0 = arith.constant 0 : index
    %1 = vector.load %arg23[%c0, %c0_0] : memref<193x8xf32, #tpu.memory_space<vmem>>, vector<4x8xf32>
    tpu.vector_store %arg23[%c0, %c0_0], %0 {strides = array<i32>} : memref<193x8xf32, #tpu.memory_space<vmem>>, vector<4x8xf32>,
    %c189 = arith.constant 189 : index
    %c0_1 = arith.constant 0 : index
    %2 = vector.load %arg23[%c189, %c0_1] : memref<193x8xf32, #tpu.memory_space<vmem>>, vector<4x8xf32>
    tpu.vector_store %arg23[%c189, %c0_1], %0 {strides = array<i32>} : memref<193x8xf32, #tpu.memory_space<vmem>>, vector<4x8xf32>,
    %cst_2 = arith.constant 0.000000e+00 : f32
    %3 = vector.broadcast %cst_2 : f32 to vector<4x16xf32>
    %c0_3 = arith.constant 0 : index
    %c0_4 = arith.constant 0 : index
    %4 = vector.load %arg24[%c0_3, %c0_4] : memref<55x16xf32, #tpu.memory_space<vmem>>, vector<4x16xf32>
    tpu.vector_store %arg24[%c0_3, %c0_4], %3 {strides = array<i32>} : memref<55x16xf32, #tpu.memory_space<vmem>>, vector<4x16xf32>,
    %c51 = arith.constant 51 : index
    %c0_5 = arith.constant 0 : index
    %5 = vector.load %arg24[%c51, %c0_5] : memref<55x16xf32, #tpu.memory_space<vmem>>, vector<4x16xf32>
    tpu.vector_store %arg24[%c51, %c0_5], %3 {strides = array<i32>} : memref<55x16xf32, #tpu.memory_space<vmem>>, vector<4x16xf32>,
    %cst_6 = arith.constant 0.000000e+00 : f32
    %6 = vector.broadcast %cst_6 : f32 to vector<4x16xf32>
    %c0_7 = arith.constant 0 : index
    %c0_8 = arith.constant 0 : index
    %7 = vector.load %arg25[%c0_7, %c0_8] : memref<20x16xf32, #tpu.memory_space<vmem>>, vector<4x16xf32>
    tpu.vector_store %arg25[%c0_7, %c0_8], %6 {strides = array<i32>} : memref<20x16xf32, #tpu.memory_space<vmem>>, vector<4x16xf32>,
    %c16 = arith.constant 16 : index
    %c0_9 = arith.constant 0 : index
    %8 = vector.load %arg25[%c16, %c0_9] : memref<20x16xf32, #tpu.memory_space<vmem>>, vector<4x16xf32>
    tpu.vector_store %arg25[%c16, %c0_9], %6 {strides = array<i32>} : memref<20x16xf32, #tpu.memory_space<vmem>>, vector<4x16xf32>,
    %cst_10 = arith.constant 0.000000e+00 : f32
    %9 = vector.broadcast %cst_10 : f32 to vector<4x24xf32>
    %c0_11 = arith.constant 0 : index
    %c0_12 = arith.constant 0 : index
    %10 = vector.load %arg26[%c0_11, %c0_12] : memref<11x24xf32, #tpu.memory_space<vmem>>, vector<4x24xf32>
    tpu.vector_store %arg26[%c0_11, %c0_12], %9 {strides = array<i32>} : memref<11x24xf32, #tpu.memory_space<vmem>>, vector<4x24xf32>,
    %c7 = arith.constant 7 : index
    %c0_13 = arith.constant 0 : index
    %11 = vector.load %arg26[%c7, %c0_13] : memref<11x24xf32, #tpu.memory_space<vmem>>, vector<4x24xf32>
    tpu.vector_store %arg26[%c7, %c0_13], %9 {strides = array<i32>} : memref<11x24xf32, #tpu.memory_space<vmem>>, vector<4x24xf32>,
    %cst_14 = arith.constant 0.000000e+00 : f32
    %12 = vector.broadcast %cst_14 : f32 to vector<4x32xf32>
    %c0_15 = arith.constant 0 : index
    %c0_16 = arith.constant 0 : index
    %13 = vector.load %arg27[%c0_15, %c0_16] : memref<9x32xf32, #tpu.memory_space<vmem>>, vector<4x32xf32>
    tpu.vector_store %arg27[%c0_15, %c0_16], %12 {strides = array<i32>} : memref<9x32xf32, #tpu.memory_space<vmem>>, vector<4x32xf32>,
    %c5 = arith.constant 5 : index
    %c0_17 = arith.constant 0 : index
    %14 = vector.load %arg27[%c5, %c0_17] : memref<9x32xf32, #tpu.memory_space<vmem>>, vector<4x32xf32>
    tpu.vector_store %arg27[%c5, %c0_17], %12 {strides = array<i32>} : memref<9x32xf32, #tpu.memory_space<vmem>>, vector<4x32xf32>,
    %cst_18 = arith.constant 0.000000e+00 : f32
    %15 = vector.broadcast %cst_18 : f32 to vector<4x24xf32>
    %c0_19 = arith.constant 0 : index
    %c0_20 = arith.constant 0 : index
    %16 = vector.load %arg28[%c0_19, %c0_20] : memref<11x24xf32, #tpu.memory_space<vmem>>, vector<4x24xf32>
    tpu.vector_store %arg28[%c0_19, %c0_20], %15 {strides = array<i32>} : memref<11x24xf32, #tpu.memory_space<vmem>>, vector<4x24xf32>,
    %c7_21 = arith.constant 7 : index
    %c0_22 = arith.constant 0 : index
    %17 = vector.load %arg28[%c7_21, %c0_22] : memref<11x24xf32, #tpu.memory_space<vmem>>, vector<4x24xf32>
    tpu.vector_store %arg28[%c7_21, %c0_22], %15 {strides = array<i32>} : memref<11x24xf32, #tpu.memory_space<vmem>>, vector<4x24xf32>,
    %cst_23 = arith.constant 0.000000e+00 : f32
    %18 = vector.broadcast %cst_23 : f32 to vector<4x16xf32>
    %c0_24 = arith.constant 0 : index
    %c0_25 = arith.constant 0 : index
    %19 = vector.load %arg29[%c0_24, %c0_25] : memref<20x16xf32, #tpu.memory_space<vmem>>, vector<4x16xf32>
    tpu.vector_store %arg29[%c0_24, %c0_25], %18 {strides = array<i32>} : memref<20x16xf32, #tpu.memory_space<vmem>>, vector<4x16xf32>,
    %c16_26 = arith.constant 16 : index
    %c0_27 = arith.constant 0 : index
    %20 = vector.load %arg29[%c16_26, %c0_27] : memref<20x16xf32, #tpu.memory_space<vmem>>, vector<4x16xf32>
    tpu.vector_store %arg29[%c16_26, %c0_27], %18 {strides = array<i32>} : memref<20x16xf32, #tpu.memory_space<vmem>>, vector<4x16xf32>,
    %cst_28 = arith.constant 0.000000e+00 : f32
    %21 = vector.broadcast %cst_28 : f32 to vector<4x16xf32>
    %c0_29 = arith.constant 0 : index
    %c0_30 = arith.constant 0 : index
    %22 = vector.load %arg30[%c0_29, %c0_30] : memref<55x16xf32, #tpu.memory_space<vmem>>, vector<4x16xf32>
    tpu.vector_store %arg30[%c0_29, %c0_30], %21 {strides = array<i32>} : memref<55x16xf32, #tpu.memory_space<vmem>>, vector<4x16xf32>,
    %c51_31 = arith.constant 51 : index
    %c0_32 = arith.constant 0 : index
    %23 = vector.load %arg30[%c51_31, %c0_32] : memref<55x16xf32, #tpu.memory_space<vmem>>, vector<4x16xf32>
    tpu.vector_store %arg30[%c51_31, %c0_32], %21 {strides = array<i32>} : memref<55x16xf32, #tpu.memory_space<vmem>>, vector<4x16xf32>,
    %cst_33 = arith.constant 0.000000e+00 : f32
    %24 = vector.broadcast %cst_33 : f32 to vector<4x8xf32>
    %c0_34 = arith.constant 0 : index
    %c0_35 = arith.constant 0 : index
    %25 = vector.load %arg31[%c0_34, %c0_35] : memref<193x8xf32, #tpu.memory_space<vmem>>, vector<4x8xf32>
    tpu.vector_store %arg31[%c0_34, %c0_35], %24 {strides = array<i32>} : memref<193x8xf32, #tpu.memory_space<vmem>>, vector<4x8xf32>,
    %c189_36 = arith.constant 189 : index
    %c0_37 = arith.constant 0 : index
    %26 = vector.load %arg31[%c189_36, %c0_37] : memref<193x8xf32, #tpu.memory_space<vmem>>, vector<4x8xf32>
    tpu.vector_store %arg31[%c189_36, %c0_37], %24 {strides = array<i32>} : memref<193x8xf32, #tpu.memory_space<vmem>>, vector<4x8xf32>,
    %c0_38 = arith.constant 0 : index
    %c0_39 = arith.constant 0 : index
    %c0_40 = arith.constant 0 : index
    %27 = vector.load %arg1[%c0_38, %c0_39, %c0_40] : memref<1x3x185xf32, #tpu.memory_space<vmem>>, vector<1x3x185xf32>
    %28 = vector.shape_cast %27 : vector<1x3x185xf32> to vector<3x185xf32>
    %29 = tpu.transpose %28, [1, 0] : vector<3x185xf32> -> vector<185x3xf32>
    %c0_41 = arith.constant 0 : index
    %c0_42 = arith.constant 0 : index
    %30 = vector.load %arg2[%c0_41, %c0_42] : memref<3x8xf32, #tpu.memory_space<vmem>>, vector<3x8xf32>
    %cst_43 = arith.constant dense<0.000000e+00> : vector<185x8xf32>
    %31 = tpu.matmul %29, %30, %cst_43 {dimension_numbers = #tpu.dot_dimension_numbers<[1], [0], [0], [1], [0, 0, 1, 1], [], []>} : vector<185x3xf32>, vector<3x8xf32>, vector<185x8xf32> -> vector<185x8xf32>
    %c0_44 = arith.constant 0 : index
    %c0_45 = arith.constant 0 : index
    %32 = vector.load %arg3[%c0_44, %c0_45] : memref<1x8xf32, #tpu.memory_space<vmem>>, vector<1x8xf32>
    %33 = vector.broadcast %32 : vector<1x8xf32> to vector<185x8xf32>
    %34 = arith.addf %31, %33 : vector<185x8xf32>
    %cst_46 = arith.constant 0.000000e+00 : f32
    %35 = vector.broadcast %cst_46 : f32 to vector<185x8xf32>
    %36 = arith.maximumf %34, %35 : vector<185x8xf32>
    %c4 = arith.constant 4 : index
    %c0_47 = arith.constant 0 : index
    %37 = vector.load %arg23[%c4, %c0_47] : memref<193x8xf32, #tpu.memory_space<vmem>>, vector<185x8xf32>
    tpu.vector_store %arg23[%c4, %c0_47], %36 {strides = array<i32>} : memref<193x8xf32, #tpu.memory_space<vmem>>, vector<185x8xf32>,
    %c0_48 = arith.constant 0 : index
    %c0_49 = arith.constant 0 : index
    %38 = vector.load %arg5[%c0_48, %c0_49] : memref<1x16xf32, #tpu.memory_space<vmem>>, vector<1x16xf32>
    %c1 = arith.constant 1 : index
    %c0_50 = arith.constant 0 : index
    %39 = tpu.strided_load %arg23[%c1, %c0_50] {strides = array<i32: 4, 1>} : memref<193x8xf32, #tpu.memory_space<vmem>>, vector<47x8xf32>
    %c0_51 = arith.constant 0 : index
    %c0_52 = arith.constant 0 : index
    %40 = vector.load %arg4[%c0_51, %c0_52] : memref<56x16xf32, #tpu.memory_space<vmem>>, vector<8x16xf32>
    %cst_53 = arith.constant dense<0.000000e+00> : vector<47x16xf32>
    %41 = tpu.matmul %39, %40, %cst_53 {dimension_numbers = #tpu.dot_dimension_numbers<[1], [0], [0], [1], [0, 0, 1, 1], [], []>} : vector<47x8xf32>, vector<8x16xf32>, vector<47x16xf32> -> vector<47x16xf32>
    %c2 = arith.constant 2 : index
    %c0_54 = arith.constant 0 : index
    %42 = tpu.strided_load %arg23[%c2, %c0_54] {strides = array<i32: 4, 1>} : memref<193x8xf32, #tpu.memory_space<vmem>>, vector<47x8xf32>
    %c8 = arith.constant 8 : index
    %c0_55 = arith.constant 0 : index
    %43 = vector.load %arg4[%c8, %c0_55] : memref<56x16xf32, #tpu.memory_space<vmem>>, vector<8x16xf32>
    %cst_56 = arith.constant dense<0.000000e+00> : vector<47x16xf32>
    %44 = tpu.matmul %42, %43, %cst_56 {dimension_numbers = #tpu.dot_dimension_numbers<[1], [0], [0], [1], [0, 0, 1, 1], [], []>} : vector<47x8xf32>, vector<8x16xf32>, vector<47x16xf32> -> vector<47x16xf32>
    %45 = arith.addf %41, %44 : vector<47x16xf32>
    %c3 = arith.constant 3 : index
    %c0_57 = arith.constant 0 : index
    %46 = tpu.strided_load %arg23[%c3, %c0_57] {strides = array<i32: 4, 1>} : memref<193x8xf32, #tpu.memory_space<vmem>>, vector<47x8xf32>
    %c16_58 = arith.constant 16 : index
    %c0_59 = arith.constant 0 : index
    %47 = vector.load %arg4[%c16_58, %c0_59] : memref<56x16xf32, #tpu.memory_space<vmem>>, vector<8x16xf32>
    %cst_60 = arith.constant dense<0.000000e+00> : vector<47x16xf32>
    %48 = tpu.matmul %46, %47, %cst_60 {dimension_numbers = #tpu.dot_dimension_numbers<[1], [0], [0], [1], [0, 0, 1, 1], [], []>} : vector<47x8xf32>, vector<8x16xf32>, vector<47x16xf32> -> vector<47x16xf32>
    %49 = arith.addf %45, %48 : vector<47x16xf32>
    %c4_61 = arith.constant 4 : index
    %c0_62 = arith.constant 0 : index
    %50 = tpu.strided_load %arg23[%c4_61, %c0_62] {strides = array<i32: 4, 1>} : memref<193x8xf32, #tpu.memory_space<vmem>>, vector<47x8xf32>
    %c24 = arith.constant 24 : index
    %c0_63 = arith.constant 0 : index
    %51 = vector.load %arg4[%c24, %c0_63] : memref<56x16xf32, #tpu.memory_space<vmem>>, vector<8x16xf32>
    %cst_64 = arith.constant dense<0.000000e+00> : vector<47x16xf32>
    %52 = tpu.matmul %50, %51, %cst_64 {dimension_numbers = #tpu.dot_dimension_numbers<[1], [0], [0], [1], [0, 0, 1, 1], [], []>} : vector<47x8xf32>, vector<8x16xf32>, vector<47x16xf32> -> vector<47x16xf32>
    %53 = arith.addf %49, %52 : vector<47x16xf32>
    %c5_65 = arith.constant 5 : index
    %c0_66 = arith.constant 0 : index
    %54 = tpu.strided_load %arg23[%c5_65, %c0_66] {strides = array<i32: 4, 1>} : memref<193x8xf32, #tpu.memory_space<vmem>>, vector<47x8xf32>
    %c32 = arith.constant 32 : index
    %c0_67 = arith.constant 0 : index
    %55 = vector.load %arg4[%c32, %c0_67] : memref<56x16xf32, #tpu.memory_space<vmem>>, vector<8x16xf32>
    %cst_68 = arith.constant dense<0.000000e+00> : vector<47x16xf32>
    %56 = tpu.matmul %54, %55, %cst_68 {dimension_numbers = #tpu.dot_dimension_numbers<[1], [0], [0], [1], [0, 0, 1, 1], [], []>} : vector<47x8xf32>, vector<8x16xf32>, vector<47x16xf32> -> vector<47x16xf32>
    %57 = arith.addf %53, %56 : vector<47x16xf32>
    %c6 = arith.constant 6 : index
    %c0_69 = arith.constant 0 : index
    %58 = tpu.strided_load %arg23[%c6, %c0_69] {strides = array<i32: 4, 1>} : memref<193x8xf32, #tpu.memory_space<vmem>>, vector<47x8xf32>
    %c40 = arith.constant 40 : index
    %c0_70 = arith.constant 0 : index
    %59 = vector.load %arg4[%c40, %c0_70] : memref<56x16xf32, #tpu.memory_space<vmem>>, vector<8x16xf32>
    %cst_71 = arith.constant dense<0.000000e+00> : vector<47x16xf32>
    %60 = tpu.matmul %58, %59, %cst_71 {dimension_numbers = #tpu.dot_dimension_numbers<[1], [0], [0], [1], [0, 0, 1, 1], [], []>} : vector<47x8xf32>, vector<8x16xf32>, vector<47x16xf32> -> vector<47x16xf32>
    %61 = arith.addf %57, %60 : vector<47x16xf32>
    %c7_72 = arith.constant 7 : index
    %c0_73 = arith.constant 0 : index
    %62 = tpu.strided_load %arg23[%c7_72, %c0_73] {strides = array<i32: 4, 1>} : memref<193x8xf32, #tpu.memory_space<vmem>>, vector<47x8xf32>
    %c48 = arith.constant 48 : index
    %c0_74 = arith.constant 0 : index
    %63 = vector.load %arg4[%c48, %c0_74] : memref<56x16xf32, #tpu.memory_space<vmem>>, vector<8x16xf32>
    %cst_75 = arith.constant dense<0.000000e+00> : vector<47x16xf32>
    %64 = tpu.matmul %62, %63, %cst_75 {dimension_numbers = #tpu.dot_dimension_numbers<[1], [0], [0], [1], [0, 0, 1, 1], [], []>} : vector<47x8xf32>, vector<8x16xf32>, vector<47x16xf32> -> vector<47x16xf32>
    %65 = arith.addf %61, %64 : vector<47x16xf32>
    %66 = vector.broadcast %38 : vector<1x16xf32> to vector<47x16xf32>
    %67 = arith.addf %65, %66 : vector<47x16xf32>
    %cst_76 = arith.constant 0.000000e+00 : f32
    %68 = vector.broadcast %cst_76 : f32 to vector<47x16xf32>
    %69 = arith.maximumf %67, %68 : vector<47x16xf32>
    %c4_77 = arith.constant 4 : index
    %c0_78 = arith.constant 0 : index
    %70 = vector.load %arg24[%c4_77, %c0_78] : memref<55x16xf32, #tpu.memory_space<vmem>>, vector<47x16xf32>
    tpu.vector_store %arg24[%c4_77, %c0_78], %69 {strides = array<i32>} : memref<55x16xf32, #tpu.memory_space<vmem>>, vector<47x16xf32>,
    %c0_79 = arith.constant 0 : index
    %c0_80 = arith.constant 0 : index
    %71 = vector.load %arg7[%c0_79, %c0_80] : memref<1x16xf32, #tpu.memory_space<vmem>>, vector<1x16xf32>
    %c1_81 = arith.constant 1 : index
    %c0_82 = arith.constant 0 : index
    %72 = tpu.strided_load %arg24[%c1_81, %c0_82] {strides = array<i32: 4, 1>} : memref<55x16xf32, #tpu.memory_space<vmem>>, vector<12x16xf32>
    %c0_83 = arith.constant 0 : index
    %c0_84 = arith.constant 0 : index
    %73 = vector.load %arg6[%c0_83, %c0_84] : memref<112x16xf32, #tpu.memory_space<vmem>>, vector<16x16xf32>
    %cst_85 = arith.constant dense<0.000000e+00> : vector<12x16xf32>
    %74 = tpu.matmul %72, %73, %cst_85 {dimension_numbers = #tpu.dot_dimension_numbers<[1], [0], [0], [1], [0, 0, 1, 1], [], []>} : vector<12x16xf32>, vector<16x16xf32>, vector<12x16xf32> -> vector<12x16xf32>
    %c2_86 = arith.constant 2 : index
    %c0_87 = arith.constant 0 : index
    %75 = tpu.strided_load %arg24[%c2_86, %c0_87] {strides = array<i32: 4, 1>} : memref<55x16xf32, #tpu.memory_space<vmem>>, vector<12x16xf32>
    %c16_88 = arith.constant 16 : index
    %c0_89 = arith.constant 0 : index
    %76 = vector.load %arg6[%c16_88, %c0_89] : memref<112x16xf32, #tpu.memory_space<vmem>>, vector<16x16xf32>
    %cst_90 = arith.constant dense<0.000000e+00> : vector<12x16xf32>
    %77 = tpu.matmul %75, %76, %cst_90 {dimension_numbers = #tpu.dot_dimension_numbers<[1], [0], [0], [1], [0, 0, 1, 1], [], []>} : vector<12x16xf32>, vector<16x16xf32>, vector<12x16xf32> -> vector<12x16xf32>
    %78 = arith.addf %74, %77 : vector<12x16xf32>
    %c3_91 = arith.constant 3 : index
    %c0_92 = arith.constant 0 : index
    %79 = tpu.strided_load %arg24[%c3_91, %c0_92] {strides = array<i32: 4, 1>} : memref<55x16xf32, #tpu.memory_space<vmem>>, vector<12x16xf32>
    %c32_93 = arith.constant 32 : index
    %c0_94 = arith.constant 0 : index
    %80 = vector.load %arg6[%c32_93, %c0_94] : memref<112x16xf32, #tpu.memory_space<vmem>>, vector<16x16xf32>
    %cst_95 = arith.constant dense<0.000000e+00> : vector<12x16xf32>
    %81 = tpu.matmul %79, %80, %cst_95 {dimension_numbers = #tpu.dot_dimension_numbers<[1], [0], [0], [1], [0, 0, 1, 1], [], []>} : vector<12x16xf32>, vector<16x16xf32>, vector<12x16xf32> -> vector<12x16xf32>
    %82 = arith.addf %78, %81 : vector<12x16xf32>
    %c4_96 = arith.constant 4 : index
    %c0_97 = arith.constant 0 : index
    %83 = tpu.strided_load %arg24[%c4_96, %c0_97] {strides = array<i32: 4, 1>} : memref<55x16xf32, #tpu.memory_space<vmem>>, vector<12x16xf32>
    %c48_98 = arith.constant 48 : index
    %c0_99 = arith.constant 0 : index
    %84 = vector.load %arg6[%c48_98, %c0_99] : memref<112x16xf32, #tpu.memory_space<vmem>>, vector<16x16xf32>
    %cst_100 = arith.constant dense<0.000000e+00> : vector<12x16xf32>
    %85 = tpu.matmul %83, %84, %cst_100 {dimension_numbers = #tpu.dot_dimension_numbers<[1], [0], [0], [1], [0, 0, 1, 1], [], []>} : vector<12x16xf32>, vector<16x16xf32>, vector<12x16xf32> -> vector<12x16xf32>
    %86 = arith.addf %82, %85 : vector<12x16xf32>
    %c5_101 = arith.constant 5 : index
    %c0_102 = arith.constant 0 : index
    %87 = tpu.strided_load %arg24[%c5_101, %c0_102] {strides = array<i32: 4, 1>} : memref<55x16xf32, #tpu.memory_space<vmem>>, vector<12x16xf32>
    %c64 = arith.constant 64 : index
    %c0_103 = arith.constant 0 : index
    %88 = vector.load %arg6[%c64, %c0_103] : memref<112x16xf32, #tpu.memory_space<vmem>>, vector<16x16xf32>
    %cst_104 = arith.constant dense<0.000000e+00> : vector<12x16xf32>
    %89 = tpu.matmul %87, %88, %cst_104 {dimension_numbers = #tpu.dot_dimension_numbers<[1], [0], [0], [1], [0, 0, 1, 1], [], []>} : vector<12x16xf32>, vector<16x16xf32>, vector<12x16xf32> -> vector<12x16xf32>
    %90 = arith.addf %86, %89 : vector<12x16xf32>
    %c6_105 = arith.constant 6 : index
    %c0_106 = arith.constant 0 : index
    %91 = tpu.strided_load %arg24[%c6_105, %c0_106] {strides = array<i32: 4, 1>} : memref<55x16xf32, #tpu.memory_space<vmem>>, vector<12x16xf32>
    %c80 = arith.constant 80 : index
    %c0_107 = arith.constant 0 : index
    %92 = vector.load %arg6[%c80, %c0_107] : memref<112x16xf32, #tpu.memory_space<vmem>>, vector<16x16xf32>
    %cst_108 = arith.constant dense<0.000000e+00> : vector<12x16xf32>
    %93 = tpu.matmul %91, %92, %cst_108 {dimension_numbers = #tpu.dot_dimension_numbers<[1], [0], [0], [1], [0, 0, 1, 1], [], []>} : vector<12x16xf32>, vector<16x16xf32>, vector<12x16xf32> -> vector<12x16xf32>
    %94 = arith.addf %90, %93 : vector<12x16xf32>
    %c7_109 = arith.constant 7 : index
    %c0_110 = arith.constant 0 : index
    %95 = tpu.strided_load %arg24[%c7_109, %c0_110] {strides = array<i32: 4, 1>} : memref<55x16xf32, #tpu.memory_space<vmem>>, vector<12x16xf32>
    %c96 = arith.constant 96 : index
    %c0_111 = arith.constant 0 : index
    %96 = vector.load %arg6[%c96, %c0_111] : memref<112x16xf32, #tpu.memory_space<vmem>>, vector<16x16xf32>
    %cst_112 = arith.constant dense<0.000000e+00> : vector<12x16xf32>
    %97 = tpu.matmul %95, %96, %cst_112 {dimension_numbers = #tpu.dot_dimension_numbers<[1], [0], [0], [1], [0, 0, 1, 1], [], []>} : vector<12x16xf32>, vector<16x16xf32>, vector<12x16xf32> -> vector<12x16xf32>
    %98 = arith.addf %94, %97 : vector<12x16xf32>
    %99 = vector.broadcast %71 : vector<1x16xf32> to vector<12x16xf32>
    %100 = arith.addf %98, %99 : vector<12x16xf32>
    %cst_113 = arith.constant 0.000000e+00 : f32
    %101 = vector.broadcast %cst_113 : f32 to vector<12x16xf32>
    %102 = arith.maximumf %100, %101 : vector<12x16xf32>
    %c4_114 = arith.constant 4 : index
    %c0_115 = arith.constant 0 : index
    %103 = vector.load %arg25[%c4_114, %c0_115] : memref<20x16xf32, #tpu.memory_space<vmem>>, vector<12x16xf32>
    tpu.vector_store %arg25[%c4_114, %c0_115], %102 {strides = array<i32>} : memref<20x16xf32, #tpu.memory_space<vmem>>, vector<12x16xf32>,
    %c0_116 = arith.constant 0 : index
    %c0_117 = arith.constant 0 : index
    %104 = vector.load %arg9[%c0_116, %c0_117] : memref<1x24xf32, #tpu.memory_space<vmem>>, vector<1x24xf32>
    %c1_118 = arith.constant 1 : index
    %c0_119 = arith.constant 0 : index
    %105 = tpu.strided_load %arg25[%c1_118, %c0_119] {strides = array<i32: 4, 1>} : memref<20x16xf32, #tpu.memory_space<vmem>>, vector<3x16xf32>
    %c0_120 = arith.constant 0 : index
    %c0_121 = arith.constant 0 : index
    %106 = vector.load %arg8[%c0_120, %c0_121] : memref<112x24xf32, #tpu.memory_space<vmem>>, vector<16x24xf32>
    %cst_122 = arith.constant dense<0.000000e+00> : vector<3x24xf32>
    %107 = tpu.matmul %105, %106, %cst_122 {dimension_numbers = #tpu.dot_dimension_numbers<[1], [0], [0], [1], [0, 0, 1, 1], [], []>} : vector<3x16xf32>, vector<16x24xf32>, vector<3x24xf32> -> vector<3x24xf32>
    %c2_123 = arith.constant 2 : index
    %c0_124 = arith.constant 0 : index
    %108 = tpu.strided_load %arg25[%c2_123, %c0_124] {strides = array<i32: 4, 1>} : memref<20x16xf32, #tpu.memory_space<vmem>>, vector<3x16xf32>
    %c16_125 = arith.constant 16 : index
    %c0_126 = arith.constant 0 : index
    %109 = vector.load %arg8[%c16_125, %c0_126] : memref<112x24xf32, #tpu.memory_space<vmem>>, vector<16x24xf32>
    %cst_127 = arith.constant dense<0.000000e+00> : vector<3x24xf32>
    %110 = tpu.matmul %108, %109, %cst_127 {dimension_numbers = #tpu.dot_dimension_numbers<[1], [0], [0], [1], [0, 0, 1, 1], [], []>} : vector<3x16xf32>, vector<16x24xf32>, vector<3x24xf32> -> vector<3x24xf32>
    %111 = arith.addf %107, %110 : vector<3x24xf32>
    %c3_128 = arith.constant 3 : index
    %c0_129 = arith.constant 0 : index
    %112 = tpu.strided_load %arg25[%c3_128, %c0_129] {strides = array<i32: 4, 1>} : memref<20x16xf32, #tpu.memory_space<vmem>>, vector<3x16xf32>
    %c32_130 = arith.constant 32 : index
    %c0_131 = arith.constant 0 : index
    %113 = vector.load %arg8[%c32_130, %c0_131] : memref<112x24xf32, #tpu.memory_space<vmem>>, vector<16x24xf32>
    %cst_132 = arith.constant dense<0.000000e+00> : vector<3x24xf32>
    %114 = tpu.matmul %112, %113, %cst_132 {dimension_numbers = #tpu.dot_dimension_numbers<[1], [0], [0], [1], [0, 0, 1, 1], [], []>} : vector<3x16xf32>, vector<16x24xf32>, vector<3x24xf32> -> vector<3x24xf32>
    %115 = arith.addf %111, %114 : vector<3x24xf32>
    %c4_133 = arith.constant 4 : index
    %c0_134 = arith.constant 0 : index
    %116 = tpu.strided_load %arg25[%c4_133, %c0_134] {strides = array<i32: 4, 1>} : memref<20x16xf32, #tpu.memory_space<vmem>>, vector<3x16xf32>
    %c48_135 = arith.constant 48 : index
    %c0_136 = arith.constant 0 : index
    %117 = vector.load %arg8[%c48_135, %c0_136] : memref<112x24xf32, #tpu.memory_space<vmem>>, vector<16x24xf32>
    %cst_137 = arith.constant dense<0.000000e+00> : vector<3x24xf32>
    %118 = tpu.matmul %116, %117, %cst_137 {dimension_numbers = #tpu.dot_dimension_numbers<[1], [0], [0], [1], [0, 0, 1, 1], [], []>} : vector<3x16xf32>, vector<16x24xf32>, vector<3x24xf32> -> vector<3x24xf32>
    %119 = arith.addf %115, %118 : vector<3x24xf32>
    %c5_138 = arith.constant 5 : index
    %c0_139 = arith.constant 0 : index
    %120 = tpu.strided_load %arg25[%c5_138, %c0_139] {strides = array<i32: 4, 1>} : memref<20x16xf32, #tpu.memory_space<vmem>>, vector<3x16xf32>
    %c64_140 = arith.constant 64 : index
    %c0_141 = arith.constant 0 : index
    %121 = vector.load %arg8[%c64_140, %c0_141] : memref<112x24xf32, #tpu.memory_space<vmem>>, vector<16x24xf32>
    %cst_142 = arith.constant dense<0.000000e+00> : vector<3x24xf32>
    %122 = tpu.matmul %120, %121, %cst_142 {dimension_numbers = #tpu.dot_dimension_numbers<[1], [0], [0], [1], [0, 0, 1, 1], [], []>} : vector<3x16xf32>, vector<16x24xf32>, vector<3x24xf32> -> vector<3x24xf32>
    %123 = arith.addf %119, %122 : vector<3x24xf32>
    %c6_143 = arith.constant 6 : index
    %c0_144 = arith.constant 0 : index
    %124 = tpu.strided_load %arg25[%c6_143, %c0_144] {strides = array<i32: 4, 1>} : memref<20x16xf32, #tpu.memory_space<vmem>>, vector<3x16xf32>
    %c80_145 = arith.constant 80 : index
    %c0_146 = arith.constant 0 : index
    %125 = vector.load %arg8[%c80_145, %c0_146] : memref<112x24xf32, #tpu.memory_space<vmem>>, vector<16x24xf32>
    %cst_147 = arith.constant dense<0.000000e+00> : vector<3x24xf32>
    %126 = tpu.matmul %124, %125, %cst_147 {dimension_numbers = #tpu.dot_dimension_numbers<[1], [0], [0], [1], [0, 0, 1, 1], [], []>} : vector<3x16xf32>, vector<16x24xf32>, vector<3x24xf32> -> vector<3x24xf32>
    %127 = arith.addf %123, %126 : vector<3x24xf32>
    %c7_148 = arith.constant 7 : index
    %c0_149 = arith.constant 0 : index
    %128 = tpu.strided_load %arg25[%c7_148, %c0_149] {strides = array<i32: 4, 1>} : memref<20x16xf32, #tpu.memory_space<vmem>>, vector<3x16xf32>
    %c96_150 = arith.constant 96 : index
    %c0_151 = arith.constant 0 : index
    %129 = vector.load %arg8[%c96_150, %c0_151] : memref<112x24xf32, #tpu.memory_space<vmem>>, vector<16x24xf32>
    %cst_152 = arith.constant dense<0.000000e+00> : vector<3x24xf32>
    %130 = tpu.matmul %128, %129, %cst_152 {dimension_numbers = #tpu.dot_dimension_numbers<[1], [0], [0], [1], [0, 0, 1, 1], [], []>} : vector<3x16xf32>, vector<16x24xf32>, vector<3x24xf32> -> vector<3x24xf32>
    %131 = arith.addf %127, %130 : vector<3x24xf32>
    %132 = vector.broadcast %104 : vector<1x24xf32> to vector<3x24xf32>
    %133 = arith.addf %131, %132 : vector<3x24xf32>
    %cst_153 = arith.constant 0.000000e+00 : f32
    %134 = vector.broadcast %cst_153 : f32 to vector<3x24xf32>
    %135 = arith.maximumf %133, %134 : vector<3x24xf32>
    %c4_154 = arith.constant 4 : index
    %c0_155 = arith.constant 0 : index
    %136 = vector.load %arg26[%c4_154, %c0_155] : memref<11x24xf32, #tpu.memory_space<vmem>>, vector<3x24xf32>
    tpu.vector_store %arg26[%c4_154, %c0_155], %135 {strides = array<i32>} : memref<11x24xf32, #tpu.memory_space<vmem>>, vector<3x24xf32>,
    %c0_156 = arith.constant 0 : index
    %c0_157 = arith.constant 0 : index
    %137 = vector.load %arg11[%c0_156, %c0_157] : memref<1x32xf32, #tpu.memory_space<vmem>>, vector<1x32xf32>
    %c1_158 = arith.constant 1 : index
    %c0_159 = arith.constant 0 : index
    %138 = tpu.strided_load %arg26[%c1_158, %c0_159] {strides = array<i32: 4, 1>} : memref<11x24xf32, #tpu.memory_space<vmem>>, vector<1x24xf32>
    %c0_160 = arith.constant 0 : index
    %c0_161 = arith.constant 0 : index
    %139 = vector.load %arg10[%c0_160, %c0_161] : memref<168x32xf32, #tpu.memory_space<vmem>>, vector<24x32xf32>
    %cst_162 = arith.constant dense<0.000000e+00> : vector<1x32xf32>
    %140 = tpu.matmul %138, %139, %cst_162 {dimension_numbers = #tpu.dot_dimension_numbers<[1], [0], [0], [1], [0, 0, 1, 1], [], []>} : vector<1x24xf32>, vector<24x32xf32>, vector<1x32xf32> -> vector<1x32xf32>
    %c2_163 = arith.constant 2 : index
    %c0_164 = arith.constant 0 : index
    %141 = tpu.strided_load %arg26[%c2_163, %c0_164] {strides = array<i32: 4, 1>} : memref<11x24xf32, #tpu.memory_space<vmem>>, vector<1x24xf32>
    %c24_165 = arith.constant 24 : index
    %c0_166 = arith.constant 0 : index
    %142 = vector.load %arg10[%c24_165, %c0_166] : memref<168x32xf32, #tpu.memory_space<vmem>>, vector<24x32xf32>
    %cst_167 = arith.constant dense<0.000000e+00> : vector<1x32xf32>
    %143 = tpu.matmul %141, %142, %cst_167 {dimension_numbers = #tpu.dot_dimension_numbers<[1], [0], [0], [1], [0, 0, 1, 1], [], []>} : vector<1x24xf32>, vector<24x32xf32>, vector<1x32xf32> -> vector<1x32xf32>
    %144 = arith.addf %140, %143 : vector<1x32xf32>
    %c3_168 = arith.constant 3 : index
    %c0_169 = arith.constant 0 : index
    %145 = tpu.strided_load %arg26[%c3_168, %c0_169] {strides = array<i32: 4, 1>} : memref<11x24xf32, #tpu.memory_space<vmem>>, vector<1x24xf32>
    %c48_170 = arith.constant 48 : index
    %c0_171 = arith.constant 0 : index
    %146 = vector.load %arg10[%c48_170, %c0_171] : memref<168x32xf32, #tpu.memory_space<vmem>>, vector<24x32xf32>
    %cst_172 = arith.constant dense<0.000000e+00> : vector<1x32xf32>
    %147 = tpu.matmul %145, %146, %cst_172 {dimension_numbers = #tpu.dot_dimension_numbers<[1], [0], [0], [1], [0, 0, 1, 1], [], []>} : vector<1x24xf32>, vector<24x32xf32>, vector<1x32xf32> -> vector<1x32xf32>
    %148 = arith.addf %144, %147 : vector<1x32xf32>
    %c4_173 = arith.constant 4 : index
    %c0_174 = arith.constant 0 : index
    %149 = tpu.strided_load %arg26[%c4_173, %c0_174] {strides = array<i32: 4, 1>} : memref<11x24xf32, #tpu.memory_space<vmem>>, vector<1x24xf32>
    %c72 = arith.constant 72 : index
    %c0_175 = arith.constant 0 : index
    %150 = vector.load %arg10[%c72, %c0_175] : memref<168x32xf32, #tpu.memory_space<vmem>>, vector<24x32xf32>
    %cst_176 = arith.constant dense<0.000000e+00> : vector<1x32xf32>
    %151 = tpu.matmul %149, %150, %cst_176 {dimension_numbers = #tpu.dot_dimension_numbers<[1], [0], [0], [1], [0, 0, 1, 1], [], []>} : vector<1x24xf32>, vector<24x32xf32>, vector<1x32xf32> -> vector<1x32xf32>
    %152 = arith.addf %148, %151 : vector<1x32xf32>
    %c5_177 = arith.constant 5 : index
    %c0_178 = arith.constant 0 : index
    %153 = tpu.strided_load %arg26[%c5_177, %c0_178] {strides = array<i32: 4, 1>} : memref<11x24xf32, #tpu.memory_space<vmem>>, vector<1x24xf32>
    %c96_179 = arith.constant 96 : index
    %c0_180 = arith.constant 0 : index
    %154 = vector.load %arg10[%c96_179, %c0_180] : memref<168x32xf32, #tpu.memory_space<vmem>>, vector<24x32xf32>
    %cst_181 = arith.constant dense<0.000000e+00> : vector<1x32xf32>
    %155 = tpu.matmul %153, %154, %cst_181 {dimension_numbers = #tpu.dot_dimension_numbers<[1], [0], [0], [1], [0, 0, 1, 1], [], []>} : vector<1x24xf32>, vector<24x32xf32>, vector<1x32xf32> -> vector<1x32xf32>
    %156 = arith.addf %152, %155 : vector<1x32xf32>
    %c6_182 = arith.constant 6 : index
    %c0_183 = arith.constant 0 : index
    %157 = tpu.strided_load %arg26[%c6_182, %c0_183] {strides = array<i32: 4, 1>} : memref<11x24xf32, #tpu.memory_space<vmem>>, vector<1x24xf32>
    %c120 = arith.constant 120 : index
    %c0_184 = arith.constant 0 : index
    %158 = vector.load %arg10[%c120, %c0_184] : memref<168x32xf32, #tpu.memory_space<vmem>>, vector<24x32xf32>
    %cst_185 = arith.constant dense<0.000000e+00> : vector<1x32xf32>
    %159 = tpu.matmul %157, %158, %cst_185 {dimension_numbers = #tpu.dot_dimension_numbers<[1], [0], [0], [1], [0, 0, 1, 1], [], []>} : vector<1x24xf32>, vector<24x32xf32>, vector<1x32xf32> -> vector<1x32xf32>
    %160 = arith.addf %156, %159 : vector<1x32xf32>
    %c7_186 = arith.constant 7 : index
    %c0_187 = arith.constant 0 : index
    %161 = tpu.strided_load %arg26[%c7_186, %c0_187] {strides = array<i32: 4, 1>} : memref<11x24xf32, #tpu.memory_space<vmem>>, vector<1x24xf32>
    %c144 = arith.constant 144 : index
    %c0_188 = arith.constant 0 : index
    %162 = vector.load %arg10[%c144, %c0_188] : memref<168x32xf32, #tpu.memory_space<vmem>>, vector<24x32xf32>
    %cst_189 = arith.constant dense<0.000000e+00> : vector<1x32xf32>
    %163 = tpu.matmul %161, %162, %cst_189 {dimension_numbers = #tpu.dot_dimension_numbers<[1], [0], [0], [1], [0, 0, 1, 1], [], []>} : vector<1x24xf32>, vector<24x32xf32>, vector<1x32xf32> -> vector<1x32xf32>
    %164 = arith.addf %160, %163 : vector<1x32xf32>
    %165 = arith.addf %164, %137 : vector<1x32xf32>
    %cst_190 = arith.constant 0.000000e+00 : f32
    %166 = vector.broadcast %cst_190 : f32 to vector<1x32xf32>
    %167 = arith.maximumf %165, %166 : vector<1x32xf32>
    %c4_191 = arith.constant 4 : index
    %c0_192 = arith.constant 0 : index
    %168 = vector.load %arg27[%c4_191, %c0_192] : memref<9x32xf32, #tpu.memory_space<vmem>>, vector<1x32xf32>
    tpu.vector_store %arg27[%c4_191, %c0_192], %167 {strides = array<i32>} : memref<9x32xf32, #tpu.memory_space<vmem>>, vector<1x32xf32>,
    %c0_193 = arith.constant 0 : index
    %c0_194 = arith.constant 0 : index
    %169 = vector.load %arg13[%c0_193, %c0_194] : memref<1x24xf32, #tpu.memory_space<vmem>>, vector<1x24xf32>
    %c64_195 = arith.constant 64 : index
    %c0_196 = arith.constant 0 : index
    %170 = vector.load %arg12[%c64_195, %c0_196] : memref<224x24xf32, #tpu.memory_space<vmem>>, vector<32x24xf32>
    %c4_197 = arith.constant 4 : index
    %c0_198 = arith.constant 0 : index
    %171 = vector.load %arg27[%c4_197, %c0_198] : memref<9x32xf32, #tpu.memory_space<vmem>>, vector<1x32xf32>
    %cst_199 = arith.constant dense<0.000000e+00> : vector<1x24xf32>
    %172 = tpu.matmul %171, %170, %cst_199 {dimension_numbers = #tpu.dot_dimension_numbers<[1], [0], [0], [1], [0, 0, 1, 1], [], []>} : vector<1x32xf32>, vector<32x24xf32>, vector<1x24xf32> -> vector<1x24xf32>
    %c192 = arith.constant 192 : index
    %c0_200 = arith.constant 0 : index
    %173 = vector.load %arg12[%c192, %c0_200] : memref<224x24xf32, #tpu.memory_space<vmem>>, vector<32x24xf32>
    %c3_201 = arith.constant 3 : index
    %c0_202 = arith.constant 0 : index
    %174 = vector.load %arg27[%c3_201, %c0_202] : memref<9x32xf32, #tpu.memory_space<vmem>>, vector<1x32xf32>
    %cst_203 = arith.constant dense<0.000000e+00> : vector<1x24xf32>
    %175 = tpu.matmul %174, %173, %cst_203 {dimension_numbers = #tpu.dot_dimension_numbers<[1], [0], [0], [1], [0, 0, 1, 1], [], []>} : vector<1x32xf32>, vector<32x24xf32>, vector<1x24xf32> -> vector<1x24xf32>
    %176 = arith.addf %172, %175 : vector<1x24xf32>
    %177 = arith.addf %176, %169 : vector<1x24xf32>
    %cst_204 = arith.constant 0.000000e+00 : f32
    %178 = vector.broadcast %cst_204 : f32 to vector<1x24xf32>
    %179 = arith.maximumf %177, %178 : vector<1x24xf32>
    %c4_205 = arith.constant 4 : index
    %c0_206 = arith.constant 0 : index
    %180 = tpu.strided_load %arg28[%c4_205, %c0_206] {strides = array<i32: 4, 1>} : memref<11x24xf32, #tpu.memory_space<vmem>>, vector<1x24xf32>
    tpu.strided_store %arg28[%c4_205, %c0_206], %179 {strides = array<i32: 4, 1>} : memref<11x24xf32, #tpu.memory_space<vmem>>, vector<1x24xf32>
    %c96_207 = arith.constant 96 : index
    %c0_208 = arith.constant 0 : index
    %181 = vector.load %arg12[%c96_207, %c0_208] : memref<224x24xf32, #tpu.memory_space<vmem>>, vector<32x24xf32>
    %c4_209 = arith.constant 4 : index
    %c0_210 = arith.constant 0 : index
    %182 = vector.load %arg27[%c4_209, %c0_210] : memref<9x32xf32, #tpu.memory_space<vmem>>, vector<1x32xf32>
    %cst_211 = arith.constant dense<0.000000e+00> : vector<1x24xf32>
    %183 = tpu.matmul %182, %181, %cst_211 {dimension_numbers = #tpu.dot_dimension_numbers<[1], [0], [0], [1], [0, 0, 1, 1], [], []>} : vector<1x32xf32>, vector<32x24xf32>, vector<1x24xf32> -> vector<1x24xf32>
    %184 = arith.addf %183, %169 : vector<1x24xf32>
    %cst_212 = arith.constant 0.000000e+00 : f32
    %185 = vector.broadcast %cst_212 : f32 to vector<1x24xf32>
    %186 = arith.maximumf %184, %185 : vector<1x24xf32>
    %c5_213 = arith.constant 5 : index
    %c0_214 = arith.constant 0 : index
    %187 = tpu.strided_load %arg28[%c5_213, %c0_214] {strides = array<i32: 4, 1>} : memref<11x24xf32, #tpu.memory_space<vmem>>, vector<1x24xf32>
    tpu.strided_store %arg28[%c5_213, %c0_214], %186 {strides = array<i32: 4, 1>} : memref<11x24xf32, #tpu.memory_space<vmem>>, vector<1x24xf32>
    %c0_215 = arith.constant 0 : index
    %c0_216 = arith.constant 0 : index
    %188 = vector.load %arg12[%c0_215, %c0_216] : memref<224x24xf32, #tpu.memory_space<vmem>>, vector<32x24xf32>
    %c5_217 = arith.constant 5 : index
    %c0_218 = arith.constant 0 : index
    %189 = vector.load %arg27[%c5_217, %c0_218] : memref<9x32xf32, #tpu.memory_space<vmem>>, vector<1x32xf32>
    %cst_219 = arith.constant dense<0.000000e+00> : vector<1x24xf32>
    %190 = tpu.matmul %189, %188, %cst_219 {dimension_numbers = #tpu.dot_dimension_numbers<[1], [0], [0], [1], [0, 0, 1, 1], [], []>} : vector<1x32xf32>, vector<32x24xf32>, vector<1x24xf32> -> vector<1x24xf32>
    %c128 = arith.constant 128 : index
    %c0_220 = arith.constant 0 : index
    %191 = vector.load %arg12[%c128, %c0_220] : memref<224x24xf32, #tpu.memory_space<vmem>>, vector<32x24xf32>
    %c4_221 = arith.constant 4 : index
    %c0_222 = arith.constant 0 : index
    %192 = vector.load %arg27[%c4_221, %c0_222] : memref<9x32xf32, #tpu.memory_space<vmem>>, vector<1x32xf32>
    %cst_223 = arith.constant dense<0.000000e+00> : vector<1x24xf32>
    %193 = tpu.matmul %192, %191, %cst_223 {dimension_numbers = #tpu.dot_dimension_numbers<[1], [0], [0], [1], [0, 0, 1, 1], [], []>} : vector<1x32xf32>, vector<32x24xf32>, vector<1x24xf32> -> vector<1x24xf32>
    %194 = arith.addf %190, %193 : vector<1x24xf32>
    %195 = arith.addf %194, %169 : vector<1x24xf32>
    %cst_224 = arith.constant 0.000000e+00 : f32
    %196 = vector.broadcast %cst_224 : f32 to vector<1x24xf32>
    %197 = arith.maximumf %195, %196 : vector<1x24xf32>
    %c6_225 = arith.constant 6 : index
    %c0_226 = arith.constant 0 : index
    %198 = tpu.strided_load %arg28[%c6_225, %c0_226] {strides = array<i32: 4, 1>} : memref<11x24xf32, #tpu.memory_space<vmem>>, vector<1x24xf32>
    tpu.strided_store %arg28[%c6_225, %c0_226], %197 {strides = array<i32: 4, 1>} : memref<11x24xf32, #tpu.memory_space<vmem>>, vector<1x24xf32>
    %c0_227 = arith.constant 0 : index
    %c0_228 = arith.constant 0 : index
    %199 = vector.load %arg15[%c0_227, %c0_228] : memref<1x16xf32, #tpu.memory_space<vmem>>, vector<1x16xf32>
    %c96_229 = arith.constant 96 : index
    %c0_230 = arith.constant 0 : index
    %200 = vector.load %arg14[%c96_229, %c0_230] : memref<336x16xf32, #tpu.memory_space<vmem>>, vector<24x16xf32>
    %c4_231 = arith.constant 4 : index
    %c0_232 = arith.constant 0 : index
    %201 = vector.load %arg28[%c4_231, %c0_232] : memref<11x24xf32, #tpu.memory_space<vmem>>, vector<3x24xf32>
    %cst_233 = arith.constant dense<0.000000e+00> : vector<3x16xf32>
    %202 = tpu.matmul %201, %200, %cst_233 {dimension_numbers = #tpu.dot_dimension_numbers<[1], [0], [0], [1], [0, 0, 1, 1], [], []>} : vector<3x24xf32>, vector<24x16xf32>, vector<3x16xf32> -> vector<3x16xf32>
    %c120_234 = arith.constant 120 : index
    %c0_235 = arith.constant 0 : index
    %203 = vector.load %arg14[%c120_234, %c0_235] : memref<336x16xf32, #tpu.memory_space<vmem>>, vector<24x16xf32>
    %c4_236 = arith.constant 4 : index
    %c0_237 = arith.constant 0 : index
    %204 = vector.load %arg26[%c4_236, %c0_237] : memref<11x24xf32, #tpu.memory_space<vmem>>, vector<3x24xf32>
    %cst_238 = arith.constant dense<0.000000e+00> : vector<3x16xf32>
    %205 = tpu.matmul %204, %203, %cst_238 {dimension_numbers = #tpu.dot_dimension_numbers<[1], [0], [0], [1], [0, 0, 1, 1], [], []>} : vector<3x24xf32>, vector<24x16xf32>, vector<3x16xf32> -> vector<3x16xf32>
    %206 = arith.addf %202, %205 : vector<3x16xf32>
    %c288 = arith.constant 288 : index
    %c0_239 = arith.constant 0 : index
    %207 = vector.load %arg14[%c288, %c0_239] : memref<336x16xf32, #tpu.memory_space<vmem>>, vector<24x16xf32>
    %c3_240 = arith.constant 3 : index
    %c0_241 = arith.constant 0 : index
    %208 = vector.load %arg28[%c3_240, %c0_241] : memref<11x24xf32, #tpu.memory_space<vmem>>, vector<3x24xf32>
    %cst_242 = arith.constant dense<0.000000e+00> : vector<3x16xf32>
    %209 = tpu.matmul %208, %207, %cst_242 {dimension_numbers = #tpu.dot_dimension_numbers<[1], [0], [0], [1], [0, 0, 1, 1], [], []>} : vector<3x24xf32>, vector<24x16xf32>, vector<3x16xf32> -> vector<3x16xf32>
    %210 = arith.addf %206, %209 : vector<3x16xf32>
    %c312 = arith.constant 312 : index
    %c0_243 = arith.constant 0 : index
    %211 = vector.load %arg14[%c312, %c0_243] : memref<336x16xf32, #tpu.memory_space<vmem>>, vector<24x16xf32>
    %c3_244 = arith.constant 3 : index
    %c0_245 = arith.constant 0 : index
    %212 = vector.load %arg26[%c3_244, %c0_245] : memref<11x24xf32, #tpu.memory_space<vmem>>, vector<3x24xf32>
    %cst_246 = arith.constant dense<0.000000e+00> : vector<3x16xf32>
    %213 = tpu.matmul %212, %211, %cst_246 {dimension_numbers = #tpu.dot_dimension_numbers<[1], [0], [0], [1], [0, 0, 1, 1], [], []>} : vector<3x24xf32>, vector<24x16xf32>, vector<3x16xf32> -> vector<3x16xf32>
    %214 = arith.addf %210, %213 : vector<3x16xf32>
    %215 = vector.broadcast %199 : vector<1x16xf32> to vector<3x16xf32>
    %216 = arith.addf %214, %215 : vector<3x16xf32>
    %cst_247 = arith.constant 0.000000e+00 : f32
    %217 = vector.broadcast %cst_247 : f32 to vector<3x16xf32>
    %218 = arith.maximumf %216, %217 : vector<3x16xf32>
    %c4_248 = arith.constant 4 : index
    %c0_249 = arith.constant 0 : index
    %219 = tpu.strided_load %arg29[%c4_248, %c0_249] {strides = array<i32: 4, 1>} : memref<20x16xf32, #tpu.memory_space<vmem>>, vector<3x16xf32>
    tpu.strided_store %arg29[%c4_248, %c0_249], %218 {strides = array<i32: 4, 1>} : memref<20x16xf32, #tpu.memory_space<vmem>>, vector<3x16xf32>
    %c144_250 = arith.constant 144 : index
    %c0_251 = arith.constant 0 : index
    %220 = vector.load %arg14[%c144_250, %c0_251] : memref<336x16xf32, #tpu.memory_space<vmem>>, vector<24x16xf32>
    %c4_252 = arith.constant 4 : index
    %c0_253 = arith.constant 0 : index
    %221 = vector.load %arg28[%c4_252, %c0_253] : memref<11x24xf32, #tpu.memory_space<vmem>>, vector<3x24xf32>
    %cst_254 = arith.constant dense<0.000000e+00> : vector<3x16xf32>
    %222 = tpu.matmul %221, %220, %cst_254 {dimension_numbers = #tpu.dot_dimension_numbers<[1], [0], [0], [1], [0, 0, 1, 1], [], []>} : vector<3x24xf32>, vector<24x16xf32>, vector<3x16xf32> -> vector<3x16xf32>
    %c168 = arith.constant 168 : index
    %c0_255 = arith.constant 0 : index
    %223 = vector.load %arg14[%c168, %c0_255] : memref<336x16xf32, #tpu.memory_space<vmem>>, vector<24x16xf32>
    %c4_256 = arith.constant 4 : index
    %c0_257 = arith.constant 0 : index
    %224 = vector.load %arg26[%c4_256, %c0_257] : memref<11x24xf32, #tpu.memory_space<vmem>>, vector<3x24xf32>
    %cst_258 = arith.constant dense<0.000000e+00> : vector<3x16xf32>
    %225 = tpu.matmul %224, %223, %cst_258 {dimension_numbers = #tpu.dot_dimension_numbers<[1], [0], [0], [1], [0, 0, 1, 1], [], []>} : vector<3x24xf32>, vector<24x16xf32>, vector<3x16xf32> -> vector<3x16xf32>
    %226 = arith.addf %222, %225 : vector<3x16xf32>
    %227 = vector.broadcast %199 : vector<1x16xf32> to vector<3x16xf32>
    %228 = arith.addf %226, %227 : vector<3x16xf32>
    %cst_259 = arith.constant 0.000000e+00 : f32
    %229 = vector.broadcast %cst_259 : f32 to vector<3x16xf32>
    %230 = arith.maximumf %228, %229 : vector<3x16xf32>
    %c5_260 = arith.constant 5 : index
    %c0_261 = arith.constant 0 : index
    %231 = tpu.strided_load %arg29[%c5_260, %c0_261] {strides = array<i32: 4, 1>} : memref<20x16xf32, #tpu.memory_space<vmem>>, vector<3x16xf32>
    tpu.strided_store %arg29[%c5_260, %c0_261], %230 {strides = array<i32: 4, 1>} : memref<20x16xf32, #tpu.memory_space<vmem>>, vector<3x16xf32>
    %c0_262 = arith.constant 0 : index
    %c0_263 = arith.constant 0 : index
    %232 = vector.load %arg14[%c0_262, %c0_263] : memref<336x16xf32, #tpu.memory_space<vmem>>, vector<24x16xf32>
    %c5_264 = arith.constant 5 : index
    %c0_265 = arith.constant 0 : index
    %233 = vector.load %arg28[%c5_264, %c0_265] : memref<11x24xf32, #tpu.memory_space<vmem>>, vector<3x24xf32>
    %cst_266 = arith.constant dense<0.000000e+00> : vector<3x16xf32>
    %234 = tpu.matmul %233, %232, %cst_266 {dimension_numbers = #tpu.dot_dimension_numbers<[1], [0], [0], [1], [0, 0, 1, 1], [], []>} : vector<3x24xf32>, vector<24x16xf32>, vector<3x16xf32> -> vector<3x16xf32>
    %c24_267 = arith.constant 24 : index
    %c0_268 = arith.constant 0 : index
    %235 = vector.load %arg14[%c24_267, %c0_268] : memref<336x16xf32, #tpu.memory_space<vmem>>, vector<24x16xf32>
    %c5_269 = arith.constant 5 : index
    %c0_270 = arith.constant 0 : index
    %236 = vector.load %arg26[%c5_269, %c0_270] : memref<11x24xf32, #tpu.memory_space<vmem>>, vector<3x24xf32>
    %cst_271 = arith.constant dense<0.000000e+00> : vector<3x16xf32>
    %237 = tpu.matmul %236, %235, %cst_271 {dimension_numbers = #tpu.dot_dimension_numbers<[1], [0], [0], [1], [0, 0, 1, 1], [], []>} : vector<3x24xf32>, vector<24x16xf32>, vector<3x16xf32> -> vector<3x16xf32>
    %238 = arith.addf %234, %237 : vector<3x16xf32>
    %c192_272 = arith.constant 192 : index
    %c0_273 = arith.constant 0 : index
    %239 = vector.load %arg14[%c192_272, %c0_273] : memref<336x16xf32, #tpu.memory_space<vmem>>, vector<24x16xf32>
    %c4_274 = arith.constant 4 : index
    %c0_275 = arith.constant 0 : index
    %240 = vector.load %arg28[%c4_274, %c0_275] : memref<11x24xf32, #tpu.memory_space<vmem>>, vector<3x24xf32>
    %cst_276 = arith.constant dense<0.000000e+00> : vector<3x16xf32>
    %241 = tpu.matmul %240, %239, %cst_276 {dimension_numbers = #tpu.dot_dimension_numbers<[1], [0], [0], [1], [0, 0, 1, 1], [], []>} : vector<3x24xf32>, vector<24x16xf32>, vector<3x16xf32> -> vector<3x16xf32>
    %242 = arith.addf %238, %241 : vector<3x16xf32>
    %c216 = arith.constant 216 : index
    %c0_277 = arith.constant 0 : index
    %243 = vector.load %arg14[%c216, %c0_277] : memref<336x16xf32, #tpu.memory_space<vmem>>, vector<24x16xf32>
    %c4_278 = arith.constant 4 : index
    %c0_279 = arith.constant 0 : index
    %244 = vector.load %arg26[%c4_278, %c0_279] : memref<11x24xf32, #tpu.memory_space<vmem>>, vector<3x24xf32>
    %cst_280 = arith.constant dense<0.000000e+00> : vector<3x16xf32>
    %245 = tpu.matmul %244, %243, %cst_280 {dimension_numbers = #tpu.dot_dimension_numbers<[1], [0], [0], [1], [0, 0, 1, 1], [], []>} : vector<3x24xf32>, vector<24x16xf32>, vector<3x16xf32> -> vector<3x16xf32>
    %246 = arith.addf %242, %245 : vector<3x16xf32>
    %247 = vector.broadcast %199 : vector<1x16xf32> to vector<3x16xf32>
    %248 = arith.addf %246, %247 : vector<3x16xf32>
    %cst_281 = arith.constant 0.000000e+00 : f32
    %249 = vector.broadcast %cst_281 : f32 to vector<3x16xf32>
    %250 = arith.maximumf %248, %249 : vector<3x16xf32>
    %c6_282 = arith.constant 6 : index
    %c0_283 = arith.constant 0 : index
    %251 = tpu.strided_load %arg29[%c6_282, %c0_283] {strides = array<i32: 4, 1>} : memref<20x16xf32, #tpu.memory_space<vmem>>, vector<3x16xf32>
    tpu.strided_store %arg29[%c6_282, %c0_283], %250 {strides = array<i32: 4, 1>} : memref<20x16xf32, #tpu.memory_space<vmem>>, vector<3x16xf32>
    %c48_284 = arith.constant 48 : index
    %c0_285 = arith.constant 0 : index
    %252 = vector.load %arg14[%c48_284, %c0_285] : memref<336x16xf32, #tpu.memory_space<vmem>>, vector<24x16xf32>
    %c5_286 = arith.constant 5 : index
    %c0_287 = arith.constant 0 : index
    %253 = vector.load %arg28[%c5_286, %c0_287] : memref<11x24xf32, #tpu.memory_space<vmem>>, vector<3x24xf32>
    %cst_288 = arith.constant dense<0.000000e+00> : vector<3x16xf32>
    %254 = tpu.matmul %253, %252, %cst_288 {dimension_numbers = #tpu.dot_dimension_numbers<[1], [0], [0], [1], [0, 0, 1, 1], [], []>} : vector<3x24xf32>, vector<24x16xf32>, vector<3x16xf32> -> vector<3x16xf32>
    %c72_289 = arith.constant 72 : index
    %c0_290 = arith.constant 0 : index
    %255 = vector.load %arg14[%c72_289, %c0_290] : memref<336x16xf32, #tpu.memory_space<vmem>>, vector<24x16xf32>
    %c5_291 = arith.constant 5 : index
    %c0_292 = arith.constant 0 : index
    %256 = vector.load %arg26[%c5_291, %c0_292] : memref<11x24xf32, #tpu.memory_space<vmem>>, vector<3x24xf32>
    %cst_293 = arith.constant dense<0.000000e+00> : vector<3x16xf32>
    %257 = tpu.matmul %256, %255, %cst_293 {dimension_numbers = #tpu.dot_dimension_numbers<[1], [0], [0], [1], [0, 0, 1, 1], [], []>} : vector<3x24xf32>, vector<24x16xf32>, vector<3x16xf32> -> vector<3x16xf32>
    %258 = arith.addf %254, %257 : vector<3x16xf32>
    %c240 = arith.constant 240 : index
    %c0_294 = arith.constant 0 : index
    %259 = vector.load %arg14[%c240, %c0_294] : memref<336x16xf32, #tpu.memory_space<vmem>>, vector<24x16xf32>
    %c4_295 = arith.constant 4 : index
    %c0_296 = arith.constant 0 : index
    %260 = vector.load %arg28[%c4_295, %c0_296] : memref<11x24xf32, #tpu.memory_space<vmem>>, vector<3x24xf32>
    %cst_297 = arith.constant dense<0.000000e+00> : vector<3x16xf32>
    %261 = tpu.matmul %260, %259, %cst_297 {dimension_numbers = #tpu.dot_dimension_numbers<[1], [0], [0], [1], [0, 0, 1, 1], [], []>} : vector<3x24xf32>, vector<24x16xf32>, vector<3x16xf32> -> vector<3x16xf32>
    %262 = arith.addf %258, %261 : vector<3x16xf32>
    %c264 = arith.constant 264 : index
    %c0_298 = arith.constant 0 : index
    %263 = vector.load %arg14[%c264, %c0_298] : memref<336x16xf32, #tpu.memory_space<vmem>>, vector<24x16xf32>
    %c4_299 = arith.constant 4 : index
    %c0_300 = arith.constant 0 : index
    %264 = vector.load %arg26[%c4_299, %c0_300] : memref<11x24xf32, #tpu.memory_space<vmem>>, vector<3x24xf32>
    %cst_301 = arith.constant dense<0.000000e+00> : vector<3x16xf32>
    %265 = tpu.matmul %264, %263, %cst_301 {dimension_numbers = #tpu.dot_dimension_numbers<[1], [0], [0], [1], [0, 0, 1, 1], [], []>} : vector<3x24xf32>, vector<24x16xf32>, vector<3x16xf32> -> vector<3x16xf32>
    %266 = arith.addf %262, %265 : vector<3x16xf32>
    %267 = vector.broadcast %199 : vector<1x16xf32> to vector<3x16xf32>
    %268 = arith.addf %266, %267 : vector<3x16xf32>
    %cst_302 = arith.constant 0.000000e+00 : f32
    %269 = vector.broadcast %cst_302 : f32 to vector<3x16xf32>
    %270 = arith.maximumf %268, %269 : vector<3x16xf32>
    %c7_303 = arith.constant 7 : index
    %c0_304 = arith.constant 0 : index
    %271 = tpu.strided_load %arg29[%c7_303, %c0_304] {strides = array<i32: 4, 1>} : memref<20x16xf32, #tpu.memory_space<vmem>>, vector<3x16xf32>
    tpu.strided_store %arg29[%c7_303, %c0_304], %270 {strides = array<i32: 4, 1>} : memref<20x16xf32, #tpu.memory_space<vmem>>, vector<3x16xf32>
    %c0_305 = arith.constant 0 : index
    %c0_306 = arith.constant 0 : index
    %272 = vector.load %arg17[%c0_305, %c0_306] : memref<1x16xf32, #tpu.memory_space<vmem>>, vector<1x16xf32>
    %c64_307 = arith.constant 64 : index
    %c0_308 = arith.constant 0 : index
    %273 = vector.load %arg16[%c64_307, %c0_308] : memref<224x16xf32, #tpu.memory_space<vmem>>, vector<16x16xf32>
    %c4_309 = arith.constant 4 : index
    %c0_310 = arith.constant 0 : index
    %274 = vector.load %arg29[%c4_309, %c0_310] : memref<20x16xf32, #tpu.memory_space<vmem>>, vector<12x16xf32>
    %cst_311 = arith.constant dense<0.000000e+00> : vector<12x16xf32>
    %275 = tpu.matmul %274, %273, %cst_311 {dimension_numbers = #tpu.dot_dimension_numbers<[1], [0], [0], [1], [0, 0, 1, 1], [], []>} : vector<12x16xf32>, vector<16x16xf32>, vector<12x16xf32> -> vector<12x16xf32>
    %c80_312 = arith.constant 80 : index
    %c0_313 = arith.constant 0 : index
    %276 = vector.load %arg16[%c80_312, %c0_313] : memref<224x16xf32, #tpu.memory_space<vmem>>, vector<16x16xf32>
    %c4_314 = arith.constant 4 : index
    %c0_315 = arith.constant 0 : index
    %277 = vector.load %arg25[%c4_314, %c0_315] : memref<20x16xf32, #tpu.memory_space<vmem>>, vector<12x16xf32>
    %cst_316 = arith.constant dense<0.000000e+00> : vector<12x16xf32>
    %278 = tpu.matmul %277, %276, %cst_316 {dimension_numbers = #tpu.dot_dimension_numbers<[1], [0], [0], [1], [0, 0, 1, 1], [], []>} : vector<12x16xf32>, vector<16x16xf32>, vector<12x16xf32> -> vector<12x16xf32>
    %279 = arith.addf %275, %278 : vector<12x16xf32>
    %c192_317 = arith.constant 192 : index
    %c0_318 = arith.constant 0 : index
    %280 = vector.load %arg16[%c192_317, %c0_318] : memref<224x16xf32, #tpu.memory_space<vmem>>, vector<16x16xf32>
    %c3_319 = arith.constant 3 : index
    %c0_320 = arith.constant 0 : index
    %281 = vector.load %arg29[%c3_319, %c0_320] : memref<20x16xf32, #tpu.memory_space<vmem>>, vector<12x16xf32>
    %cst_321 = arith.constant dense<0.000000e+00> : vector<12x16xf32>
    %282 = tpu.matmul %281, %280, %cst_321 {dimension_numbers = #tpu.dot_dimension_numbers<[1], [0], [0], [1], [0, 0, 1, 1], [], []>} : vector<12x16xf32>, vector<16x16xf32>, vector<12x16xf32> -> vector<12x16xf32>
    %283 = arith.addf %279, %282 : vector<12x16xf32>
    %c208 = arith.constant 208 : index
    %c0_322 = arith.constant 0 : index
    %284 = vector.load %arg16[%c208, %c0_322] : memref<224x16xf32, #tpu.memory_space<vmem>>, vector<16x16xf32>
    %c3_323 = arith.constant 3 : index
    %c0_324 = arith.constant 0 : index
    %285 = vector.load %arg25[%c3_323, %c0_324] : memref<20x16xf32, #tpu.memory_space<vmem>>, vector<12x16xf32>
    %cst_325 = arith.constant dense<0.000000e+00> : vector<12x16xf32>
    %286 = tpu.matmul %285, %284, %cst_325 {dimension_numbers = #tpu.dot_dimension_numbers<[1], [0], [0], [1], [0, 0, 1, 1], [], []>} : vector<12x16xf32>, vector<16x16xf32>, vector<12x16xf32> -> vector<12x16xf32>
    %287 = arith.addf %283, %286 : vector<12x16xf32>
    %288 = vector.broadcast %272 : vector<1x16xf32> to vector<12x16xf32>
    %289 = arith.addf %287, %288 : vector<12x16xf32>
    %cst_326 = arith.constant 0.000000e+00 : f32
    %290 = vector.broadcast %cst_326 : f32 to vector<12x16xf32>
    %291 = arith.maximumf %289, %290 : vector<12x16xf32>
    %c4_327 = arith.constant 4 : index
    %c0_328 = arith.constant 0 : index
    %292 = tpu.strided_load %arg30[%c4_327, %c0_328] {strides = array<i32: 4, 1>} : memref<55x16xf32, #tpu.memory_space<vmem>>, vector<12x16xf32>
    tpu.strided_store %arg30[%c4_327, %c0_328], %291 {strides = array<i32: 4, 1>} : memref<55x16xf32, #tpu.memory_space<vmem>>, vector<12x16xf32>
    %c96_329 = arith.constant 96 : index
    %c0_330 = arith.constant 0 : index
    %293 = vector.load %arg16[%c96_329, %c0_330] : memref<224x16xf32, #tpu.memory_space<vmem>>, vector<16x16xf32>
    %c4_331 = arith.constant 4 : index
    %c0_332 = arith.constant 0 : index
    %294 = vector.load %arg29[%c4_331, %c0_332] : memref<20x16xf32, #tpu.memory_space<vmem>>, vector<12x16xf32>
    %cst_333 = arith.constant dense<0.000000e+00> : vector<12x16xf32>
    %295 = tpu.matmul %294, %293, %cst_333 {dimension_numbers = #tpu.dot_dimension_numbers<[1], [0], [0], [1], [0, 0, 1, 1], [], []>} : vector<12x16xf32>, vector<16x16xf32>, vector<12x16xf32> -> vector<12x16xf32>
    %c112 = arith.constant 112 : index
    %c0_334 = arith.constant 0 : index
    %296 = vector.load %arg16[%c112, %c0_334] : memref<224x16xf32, #tpu.memory_space<vmem>>, vector<16x16xf32>
    %c4_335 = arith.constant 4 : index
    %c0_336 = arith.constant 0 : index
    %297 = vector.load %arg25[%c4_335, %c0_336] : memref<20x16xf32, #tpu.memory_space<vmem>>, vector<12x16xf32>
    %cst_337 = arith.constant dense<0.000000e+00> : vector<12x16xf32>
    %298 = tpu.matmul %297, %296, %cst_337 {dimension_numbers = #tpu.dot_dimension_numbers<[1], [0], [0], [1], [0, 0, 1, 1], [], []>} : vector<12x16xf32>, vector<16x16xf32>, vector<12x16xf32> -> vector<12x16xf32>
    %299 = arith.addf %295, %298 : vector<12x16xf32>
    %300 = vector.broadcast %272 : vector<1x16xf32> to vector<12x16xf32>
    %301 = arith.addf %299, %300 : vector<12x16xf32>
    %cst_338 = arith.constant 0.000000e+00 : f32
    %302 = vector.broadcast %cst_338 : f32 to vector<12x16xf32>
    %303 = arith.maximumf %301, %302 : vector<12x16xf32>
    %c5_339 = arith.constant 5 : index
    %c0_340 = arith.constant 0 : index
    %304 = tpu.strided_load %arg30[%c5_339, %c0_340] {strides = array<i32: 4, 1>} : memref<55x16xf32, #tpu.memory_space<vmem>>, vector<12x16xf32>
    tpu.strided_store %arg30[%c5_339, %c0_340], %303 {strides = array<i32: 4, 1>} : memref<55x16xf32, #tpu.memory_space<vmem>>, vector<12x16xf32>
    %c0_341 = arith.constant 0 : index
    %c0_342 = arith.constant 0 : index
    %305 = vector.load %arg16[%c0_341, %c0_342] : memref<224x16xf32, #tpu.memory_space<vmem>>, vector<16x16xf32>
    %c5_343 = arith.constant 5 : index
    %c0_344 = arith.constant 0 : index
    %306 = vector.load %arg29[%c5_343, %c0_344] : memref<20x16xf32, #tpu.memory_space<vmem>>, vector<12x16xf32>
    %cst_345 = arith.constant dense<0.000000e+00> : vector<12x16xf32>
    %307 = tpu.matmul %306, %305, %cst_345 {dimension_numbers = #tpu.dot_dimension_numbers<[1], [0], [0], [1], [0, 0, 1, 1], [], []>} : vector<12x16xf32>, vector<16x16xf32>, vector<12x16xf32> -> vector<12x16xf32>
    %c16_346 = arith.constant 16 : index
    %c0_347 = arith.constant 0 : index
    %308 = vector.load %arg16[%c16_346, %c0_347] : memref<224x16xf32, #tpu.memory_space<vmem>>, vector<16x16xf32>
    %c5_348 = arith.constant 5 : index
    %c0_349 = arith.constant 0 : index
    %309 = vector.load %arg25[%c5_348, %c0_349] : memref<20x16xf32, #tpu.memory_space<vmem>>, vector<12x16xf32>
    %cst_350 = arith.constant dense<0.000000e+00> : vector<12x16xf32>
    %310 = tpu.matmul %309, %308, %cst_350 {dimension_numbers = #tpu.dot_dimension_numbers<[1], [0], [0], [1], [0, 0, 1, 1], [], []>} : vector<12x16xf32>, vector<16x16xf32>, vector<12x16xf32> -> vector<12x16xf32>
    %311 = arith.addf %307, %310 : vector<12x16xf32>
    %c128_351 = arith.constant 128 : index
    %c0_352 = arith.constant 0 : index
    %312 = vector.load %arg16[%c128_351, %c0_352] : memref<224x16xf32, #tpu.memory_space<vmem>>, vector<16x16xf32>
    %c4_353 = arith.constant 4 : index
    %c0_354 = arith.constant 0 : index
    %313 = vector.load %arg29[%c4_353, %c0_354] : memref<20x16xf32, #tpu.memory_space<vmem>>, vector<12x16xf32>
    %cst_355 = arith.constant dense<0.000000e+00> : vector<12x16xf32>
    %314 = tpu.matmul %313, %312, %cst_355 {dimension_numbers = #tpu.dot_dimension_numbers<[1], [0], [0], [1], [0, 0, 1, 1], [], []>} : vector<12x16xf32>, vector<16x16xf32>, vector<12x16xf32> -> vector<12x16xf32>
    %315 = arith.addf %311, %314 : vector<12x16xf32>
    %c144_356 = arith.constant 144 : index
    %c0_357 = arith.constant 0 : index
    %316 = vector.load %arg16[%c144_356, %c0_357] : memref<224x16xf32, #tpu.memory_space<vmem>>, vector<16x16xf32>
    %c4_358 = arith.constant 4 : index
    %c0_359 = arith.constant 0 : index
    %317 = vector.load %arg25[%c4_358, %c0_359] : memref<20x16xf32, #tpu.memory_space<vmem>>, vector<12x16xf32>
    %cst_360 = arith.constant dense<0.000000e+00> : vector<12x16xf32>
    %318 = tpu.matmul %317, %316, %cst_360 {dimension_numbers = #tpu.dot_dimension_numbers<[1], [0], [0], [1], [0, 0, 1, 1], [], []>} : vector<12x16xf32>, vector<16x16xf32>, vector<12x16xf32> -> vector<12x16xf32>
    %319 = arith.addf %315, %318 : vector<12x16xf32>
    %320 = vector.broadcast %272 : vector<1x16xf32> to vector<12x16xf32>
    %321 = arith.addf %319, %320 : vector<12x16xf32>
    %cst_361 = arith.constant 0.000000e+00 : f32
    %322 = vector.broadcast %cst_361 : f32 to vector<12x16xf32>
    %323 = arith.maximumf %321, %322 : vector<12x16xf32>
    %c6_362 = arith.constant 6 : index
    %c0_363 = arith.constant 0 : index
    %324 = tpu.strided_load %arg30[%c6_362, %c0_363] {strides = array<i32: 4, 1>} : memref<55x16xf32, #tpu.memory_space<vmem>>, vector<12x16xf32>
    tpu.strided_store %arg30[%c6_362, %c0_363], %323 {strides = array<i32: 4, 1>} : memref<55x16xf32, #tpu.memory_space<vmem>>, vector<12x16xf32>
    %c32_364 = arith.constant 32 : index
    %c0_365 = arith.constant 0 : index
    %325 = vector.load %arg16[%c32_364, %c0_365] : memref<224x16xf32, #tpu.memory_space<vmem>>, vector<16x16xf32>
    %c5_366 = arith.constant 5 : index
    %c0_367 = arith.constant 0 : index
    %326 = vector.load %arg29[%c5_366, %c0_367] : memref<20x16xf32, #tpu.memory_space<vmem>>, vector<11x16xf32>
    %cst_368 = arith.constant dense<0.000000e+00> : vector<11x16xf32>
    %327 = tpu.matmul %326, %325, %cst_368 {dimension_numbers = #tpu.dot_dimension_numbers<[1], [0], [0], [1], [0, 0, 1, 1], [], []>} : vector<11x16xf32>, vector<16x16xf32>, vector<11x16xf32> -> vector<11x16xf32>
    %c48_369 = arith.constant 48 : index
    %c0_370 = arith.constant 0 : index
    %328 = vector.load %arg16[%c48_369, %c0_370] : memref<224x16xf32, #tpu.memory_space<vmem>>, vector<16x16xf32>
    %c5_371 = arith.constant 5 : index
    %c0_372 = arith.constant 0 : index
    %329 = vector.load %arg25[%c5_371, %c0_372] : memref<20x16xf32, #tpu.memory_space<vmem>>, vector<11x16xf32>
    %cst_373 = arith.constant dense<0.000000e+00> : vector<11x16xf32>
    %330 = tpu.matmul %329, %328, %cst_373 {dimension_numbers = #tpu.dot_dimension_numbers<[1], [0], [0], [1], [0, 0, 1, 1], [], []>} : vector<11x16xf32>, vector<16x16xf32>, vector<11x16xf32> -> vector<11x16xf32>
    %331 = arith.addf %327, %330 : vector<11x16xf32>
    %c160 = arith.constant 160 : index
    %c0_374 = arith.constant 0 : index
    %332 = vector.load %arg16[%c160, %c0_374] : memref<224x16xf32, #tpu.memory_space<vmem>>, vector<16x16xf32>
    %c4_375 = arith.constant 4 : index
    %c0_376 = arith.constant 0 : index
    %333 = vector.load %arg29[%c4_375, %c0_376] : memref<20x16xf32, #tpu.memory_space<vmem>>, vector<11x16xf32>
    %cst_377 = arith.constant dense<0.000000e+00> : vector<11x16xf32>
    %334 = tpu.matmul %333, %332, %cst_377 {dimension_numbers = #tpu.dot_dimension_numbers<[1], [0], [0], [1], [0, 0, 1, 1], [], []>} : vector<11x16xf32>, vector<16x16xf32>, vector<11x16xf32> -> vector<11x16xf32>
    %335 = arith.addf %331, %334 : vector<11x16xf32>
    %c176 = arith.constant 176 : index
    %c0_378 = arith.constant 0 : index
    %336 = vector.load %arg16[%c176, %c0_378] : memref<224x16xf32, #tpu.memory_space<vmem>>, vector<16x16xf32>
    %c4_379 = arith.constant 4 : index
    %c0_380 = arith.constant 0 : index
    %337 = vector.load %arg25[%c4_379, %c0_380] : memref<20x16xf32, #tpu.memory_space<vmem>>, vector<11x16xf32>
    %cst_381 = arith.constant dense<0.000000e+00> : vector<11x16xf32>
    %338 = tpu.matmul %337, %336, %cst_381 {dimension_numbers = #tpu.dot_dimension_numbers<[1], [0], [0], [1], [0, 0, 1, 1], [], []>} : vector<11x16xf32>, vector<16x16xf32>, vector<11x16xf32> -> vector<11x16xf32>
    %339 = arith.addf %335, %338 : vector<11x16xf32>
    %340 = vector.broadcast %272 : vector<1x16xf32> to vector<11x16xf32>
    %341 = arith.addf %339, %340 : vector<11x16xf32>
    %cst_382 = arith.constant 0.000000e+00 : f32
    %342 = vector.broadcast %cst_382 : f32 to vector<11x16xf32>
    %343 = arith.maximumf %341, %342 : vector<11x16xf32>
    %c7_383 = arith.constant 7 : index
    %c0_384 = arith.constant 0 : index
    %344 = tpu.strided_load %arg30[%c7_383, %c0_384] {strides = array<i32: 4, 1>} : memref<55x16xf32, #tpu.memory_space<vmem>>, vector<11x16xf32>
    tpu.strided_store %arg30[%c7_383, %c0_384], %343 {strides = array<i32: 4, 1>} : memref<55x16xf32, #tpu.memory_space<vmem>>, vector<11x16xf32>
    %c0_385 = arith.constant 0 : index
    %c0_386 = arith.constant 0 : index
    %345 = vector.load %arg19[%c0_385, %c0_386] : memref<1x8xf32, #tpu.memory_space<vmem>>, vector<1x8xf32>
    %c96_387 = arith.constant 96 : index
    %c0_388 = arith.constant 0 : index
    %346 = vector.load %arg18[%c96_387, %c0_388] : memref<224x8xf32, #tpu.memory_space<vmem>>, vector<16x8xf32>
    %c4_389 = arith.constant 4 : index
    %c0_390 = arith.constant 0 : index
    %347 = vector.load %arg30[%c4_389, %c0_390] : memref<55x16xf32, #tpu.memory_space<vmem>>, vector<47x16xf32>
    %cst_391 = arith.constant dense<0.000000e+00> : vector<47x8xf32>
    %348 = tpu.matmul %347, %346, %cst_391 {dimension_numbers = #tpu.dot_dimension_numbers<[1], [0], [0], [1], [0, 0, 1, 1], [], []>} : vector<47x16xf32>, vector<16x8xf32>, vector<47x8xf32> -> vector<47x8xf32>
    %c112_392 = arith.constant 112 : index
    %c0_393 = arith.constant 0 : index
    %349 = vector.load %arg18[%c112_392, %c0_393] : memref<224x8xf32, #tpu.memory_space<vmem>>, vector<16x8xf32>
    %c4_394 = arith.constant 4 : index
    %c0_395 = arith.constant 0 : index
    %350 = vector.load %arg24[%c4_394, %c0_395] : memref<55x16xf32, #tpu.memory_space<vmem>>, vector<47x16xf32>
    %cst_396 = arith.constant dense<0.000000e+00> : vector<47x8xf32>
    %351 = tpu.matmul %350, %349, %cst_396 {dimension_numbers = #tpu.dot_dimension_numbers<[1], [0], [0], [1], [0, 0, 1, 1], [], []>} : vector<47x16xf32>, vector<16x8xf32>, vector<47x8xf32> -> vector<47x8xf32>
    %352 = arith.addf %348, %351 : vector<47x8xf32>
    %353 = vector.broadcast %345 : vector<1x8xf32> to vector<47x8xf32>
    %354 = arith.addf %352, %353 : vector<47x8xf32>
    %cst_397 = arith.constant 0.000000e+00 : f32
    %355 = vector.broadcast %cst_397 : f32 to vector<47x8xf32>
    %356 = arith.maximumf %354, %355 : vector<47x8xf32>
    %c4_398 = arith.constant 4 : index
    %c0_399 = arith.constant 0 : index
    %357 = tpu.strided_load %arg31[%c4_398, %c0_399] {strides = array<i32: 4, 1>} : memref<193x8xf32, #tpu.memory_space<vmem>>, vector<47x8xf32>
    tpu.strided_store %arg31[%c4_398, %c0_399], %356 {strides = array<i32: 4, 1>} : memref<193x8xf32, #tpu.memory_space<vmem>>, vector<47x8xf32>
    %c0_400 = arith.constant 0 : index
    %c0_401 = arith.constant 0 : index
    %358 = vector.load %arg18[%c0_400, %c0_401] : memref<224x8xf32, #tpu.memory_space<vmem>>, vector<16x8xf32>
    %c5_402 = arith.constant 5 : index
    %c0_403 = arith.constant 0 : index
    %359 = vector.load %arg30[%c5_402, %c0_403] : memref<55x16xf32, #tpu.memory_space<vmem>>, vector<46x16xf32>
    %cst_404 = arith.constant dense<0.000000e+00> : vector<46x8xf32>
    %360 = tpu.matmul %359, %358, %cst_404 {dimension_numbers = #tpu.dot_dimension_numbers<[1], [0], [0], [1], [0, 0, 1, 1], [], []>} : vector<46x16xf32>, vector<16x8xf32>, vector<46x8xf32> -> vector<46x8xf32>
    %c16_405 = arith.constant 16 : index
    %c0_406 = arith.constant 0 : index
    %361 = vector.load %arg18[%c16_405, %c0_406] : memref<224x8xf32, #tpu.memory_space<vmem>>, vector<16x8xf32>
    %c5_407 = arith.constant 5 : index
    %c0_408 = arith.constant 0 : index
    %362 = vector.load %arg24[%c5_407, %c0_408] : memref<55x16xf32, #tpu.memory_space<vmem>>, vector<46x16xf32>
    %cst_409 = arith.constant dense<0.000000e+00> : vector<46x8xf32>
    %363 = tpu.matmul %362, %361, %cst_409 {dimension_numbers = #tpu.dot_dimension_numbers<[1], [0], [0], [1], [0, 0, 1, 1], [], []>} : vector<46x16xf32>, vector<16x8xf32>, vector<46x8xf32> -> vector<46x8xf32>
    %364 = arith.addf %360, %363 : vector<46x8xf32>
    %c128_410 = arith.constant 128 : index
    %c0_411 = arith.constant 0 : index
    %365 = vector.load %arg18[%c128_410, %c0_411] : memref<224x8xf32, #tpu.memory_space<vmem>>, vector<16x8xf32>
    %c4_412 = arith.constant 4 : index
    %c0_413 = arith.constant 0 : index
    %366 = vector.load %arg30[%c4_412, %c0_413] : memref<55x16xf32, #tpu.memory_space<vmem>>, vector<46x16xf32>
    %cst_414 = arith.constant dense<0.000000e+00> : vector<46x8xf32>
    %367 = tpu.matmul %366, %365, %cst_414 {dimension_numbers = #tpu.dot_dimension_numbers<[1], [0], [0], [1], [0, 0, 1, 1], [], []>} : vector<46x16xf32>, vector<16x8xf32>, vector<46x8xf32> -> vector<46x8xf32>
    %368 = arith.addf %364, %367 : vector<46x8xf32>
    %c144_415 = arith.constant 144 : index
    %c0_416 = arith.constant 0 : index
    %369 = vector.load %arg18[%c144_415, %c0_416] : memref<224x8xf32, #tpu.memory_space<vmem>>, vector<16x8xf32>
    %c4_417 = arith.constant 4 : index
    %c0_418 = arith.constant 0 : index
    %370 = vector.load %arg24[%c4_417, %c0_418] : memref<55x16xf32, #tpu.memory_space<vmem>>, vector<46x16xf32>
    %cst_419 = arith.constant dense<0.000000e+00> : vector<46x8xf32>
    %371 = tpu.matmul %370, %369, %cst_419 {dimension_numbers = #tpu.dot_dimension_numbers<[1], [0], [0], [1], [0, 0, 1, 1], [], []>} : vector<46x16xf32>, vector<16x8xf32>, vector<46x8xf32> -> vector<46x8xf32>
    %372 = arith.addf %368, %371 : vector<46x8xf32>
    %373 = vector.broadcast %345 : vector<1x8xf32> to vector<46x8xf32>
    %374 = arith.addf %372, %373 : vector<46x8xf32>
    %cst_420 = arith.constant 0.000000e+00 : f32
    %375 = vector.broadcast %cst_420 : f32 to vector<46x8xf32>
    %376 = arith.maximumf %374, %375 : vector<46x8xf32>
    %c5_421 = arith.constant 5 : index
    %c0_422 = arith.constant 0 : index
    %377 = tpu.strided_load %arg31[%c5_421, %c0_422] {strides = array<i32: 4, 1>} : memref<193x8xf32, #tpu.memory_space<vmem>>, vector<46x8xf32>
    tpu.strided_store %arg31[%c5_421, %c0_422], %376 {strides = array<i32: 4, 1>} : memref<193x8xf32, #tpu.memory_space<vmem>>, vector<46x8xf32>
    %c32_423 = arith.constant 32 : index
    %c0_424 = arith.constant 0 : index
    %378 = vector.load %arg18[%c32_423, %c0_424] : memref<224x8xf32, #tpu.memory_space<vmem>>, vector<16x8xf32>
    %c5_425 = arith.constant 5 : index
    %c0_426 = arith.constant 0 : index
    %379 = vector.load %arg30[%c5_425, %c0_426] : memref<55x16xf32, #tpu.memory_space<vmem>>, vector<46x16xf32>
    %cst_427 = arith.constant dense<0.000000e+00> : vector<46x8xf32>
    %380 = tpu.matmul %379, %378, %cst_427 {dimension_numbers = #tpu.dot_dimension_numbers<[1], [0], [0], [1], [0, 0, 1, 1], [], []>} : vector<46x16xf32>, vector<16x8xf32>, vector<46x8xf32> -> vector<46x8xf32>
    %c48_428 = arith.constant 48 : index
    %c0_429 = arith.constant 0 : index
    %381 = vector.load %arg18[%c48_428, %c0_429] : memref<224x8xf32, #tpu.memory_space<vmem>>, vector<16x8xf32>
    %c5_430 = arith.constant 5 : index
    %c0_431 = arith.constant 0 : index
    %382 = vector.load %arg24[%c5_430, %c0_431] : memref<55x16xf32, #tpu.memory_space<vmem>>, vector<46x16xf32>
    %cst_432 = arith.constant dense<0.000000e+00> : vector<46x8xf32>
    %383 = tpu.matmul %382, %381, %cst_432 {dimension_numbers = #tpu.dot_dimension_numbers<[1], [0], [0], [1], [0, 0, 1, 1], [], []>} : vector<46x16xf32>, vector<16x8xf32>, vector<46x8xf32> -> vector<46x8xf32>
    %384 = arith.addf %380, %383 : vector<46x8xf32>
    %c160_433 = arith.constant 160 : index
    %c0_434 = arith.constant 0 : index
    %385 = vector.load %arg18[%c160_433, %c0_434] : memref<224x8xf32, #tpu.memory_space<vmem>>, vector<16x8xf32>
    %c4_435 = arith.constant 4 : index
    %c0_436 = arith.constant 0 : index
    %386 = vector.load %arg30[%c4_435, %c0_436] : memref<55x16xf32, #tpu.memory_space<vmem>>, vector<46x16xf32>
    %cst_437 = arith.constant dense<0.000000e+00> : vector<46x8xf32>
    %387 = tpu.matmul %386, %385, %cst_437 {dimension_numbers = #tpu.dot_dimension_numbers<[1], [0], [0], [1], [0, 0, 1, 1], [], []>} : vector<46x16xf32>, vector<16x8xf32>, vector<46x8xf32> -> vector<46x8xf32>
    %388 = arith.addf %384, %387 : vector<46x8xf32>
    %c176_438 = arith.constant 176 : index
    %c0_439 = arith.constant 0 : index
    %389 = vector.load %arg18[%c176_438, %c0_439] : memref<224x8xf32, #tpu.memory_space<vmem>>, vector<16x8xf32>
    %c4_440 = arith.constant 4 : index
    %c0_441 = arith.constant 0 : index
    %390 = vector.load %arg24[%c4_440, %c0_441] : memref<55x16xf32, #tpu.memory_space<vmem>>, vector<46x16xf32>
    %cst_442 = arith.constant dense<0.000000e+00> : vector<46x8xf32>
    %391 = tpu.matmul %390, %389, %cst_442 {dimension_numbers = #tpu.dot_dimension_numbers<[1], [0], [0], [1], [0, 0, 1, 1], [], []>} : vector<46x16xf32>, vector<16x8xf32>, vector<46x8xf32> -> vector<46x8xf32>
    %392 = arith.addf %388, %391 : vector<46x8xf32>
    %393 = vector.broadcast %345 : vector<1x8xf32> to vector<46x8xf32>
    %394 = arith.addf %392, %393 : vector<46x8xf32>
    %cst_443 = arith.constant 0.000000e+00 : f32
    %395 = vector.broadcast %cst_443 : f32 to vector<46x8xf32>
    %396 = arith.maximumf %394, %395 : vector<46x8xf32>
    %c6_444 = arith.constant 6 : index
    %c0_445 = arith.constant 0 : index
    %397 = tpu.strided_load %arg31[%c6_444, %c0_445] {strides = array<i32: 4, 1>} : memref<193x8xf32, #tpu.memory_space<vmem>>, vector<46x8xf32>
    tpu.strided_store %arg31[%c6_444, %c0_445], %396 {strides = array<i32: 4, 1>} : memref<193x8xf32, #tpu.memory_space<vmem>>, vector<46x8xf32>
    %c64_446 = arith.constant 64 : index
    %c0_447 = arith.constant 0 : index
    %398 = vector.load %arg18[%c64_446, %c0_447] : memref<224x8xf32, #tpu.memory_space<vmem>>, vector<16x8xf32>
    %c5_448 = arith.constant 5 : index
    %c0_449 = arith.constant 0 : index
    %399 = vector.load %arg30[%c5_448, %c0_449] : memref<55x16xf32, #tpu.memory_space<vmem>>, vector<46x16xf32>
    %cst_450 = arith.constant dense<0.000000e+00> : vector<46x8xf32>
    %400 = tpu.matmul %399, %398, %cst_450 {dimension_numbers = #tpu.dot_dimension_numbers<[1], [0], [0], [1], [0, 0, 1, 1], [], []>} : vector<46x16xf32>, vector<16x8xf32>, vector<46x8xf32> -> vector<46x8xf32>
    %c80_451 = arith.constant 80 : index
    %c0_452 = arith.constant 0 : index
    %401 = vector.load %arg18[%c80_451, %c0_452] : memref<224x8xf32, #tpu.memory_space<vmem>>, vector<16x8xf32>
    %c5_453 = arith.constant 5 : index
    %c0_454 = arith.constant 0 : index
    %402 = vector.load %arg24[%c5_453, %c0_454] : memref<55x16xf32, #tpu.memory_space<vmem>>, vector<46x16xf32>
    %cst_455 = arith.constant dense<0.000000e+00> : vector<46x8xf32>
    %403 = tpu.matmul %402, %401, %cst_455 {dimension_numbers = #tpu.dot_dimension_numbers<[1], [0], [0], [1], [0, 0, 1, 1], [], []>} : vector<46x16xf32>, vector<16x8xf32>, vector<46x8xf32> -> vector<46x8xf32>
    %404 = arith.addf %400, %403 : vector<46x8xf32>
    %c192_456 = arith.constant 192 : index
    %c0_457 = arith.constant 0 : index
    %405 = vector.load %arg18[%c192_456, %c0_457] : memref<224x8xf32, #tpu.memory_space<vmem>>, vector<16x8xf32>
    %c4_458 = arith.constant 4 : index
    %c0_459 = arith.constant 0 : index
    %406 = vector.load %arg30[%c4_458, %c0_459] : memref<55x16xf32, #tpu.memory_space<vmem>>, vector<46x16xf32>
    %cst_460 = arith.constant dense<0.000000e+00> : vector<46x8xf32>
    %407 = tpu.matmul %406, %405, %cst_460 {dimension_numbers = #tpu.dot_dimension_numbers<[1], [0], [0], [1], [0, 0, 1, 1], [], []>} : vector<46x16xf32>, vector<16x8xf32>, vector<46x8xf32> -> vector<46x8xf32>
    %408 = arith.addf %404, %407 : vector<46x8xf32>
    %c208_461 = arith.constant 208 : index
    %c0_462 = arith.constant 0 : index
    %409 = vector.load %arg18[%c208_461, %c0_462] : memref<224x8xf32, #tpu.memory_space<vmem>>, vector<16x8xf32>
    %c4_463 = arith.constant 4 : index
    %c0_464 = arith.constant 0 : index
    %410 = vector.load %arg24[%c4_463, %c0_464] : memref<55x16xf32, #tpu.memory_space<vmem>>, vector<46x16xf32>
    %cst_465 = arith.constant dense<0.000000e+00> : vector<46x8xf32>
    %411 = tpu.matmul %410, %409, %cst_465 {dimension_numbers = #tpu.dot_dimension_numbers<[1], [0], [0], [1], [0, 0, 1, 1], [], []>} : vector<46x16xf32>, vector<16x8xf32>, vector<46x8xf32> -> vector<46x8xf32>
    %412 = arith.addf %408, %411 : vector<46x8xf32>
    %413 = vector.broadcast %345 : vector<1x8xf32> to vector<46x8xf32>
    %414 = arith.addf %412, %413 : vector<46x8xf32>
    %cst_466 = arith.constant 0.000000e+00 : f32
    %415 = vector.broadcast %cst_466 : f32 to vector<46x8xf32>
    %416 = arith.maximumf %414, %415 : vector<46x8xf32>
    %c7_467 = arith.constant 7 : index
    %c0_468 = arith.constant 0 : index
    %417 = tpu.strided_load %arg31[%c7_467, %c0_468] {strides = array<i32: 4, 1>} : memref<193x8xf32, #tpu.memory_space<vmem>>, vector<46x8xf32>
    tpu.strided_store %arg31[%c7_467, %c0_468], %416 {strides = array<i32: 4, 1>} : memref<193x8xf32, #tpu.memory_space<vmem>>, vector<46x8xf32>
    %c4_469 = arith.constant 4 : index
    %c0_470 = arith.constant 0 : index
    %418 = vector.load %arg31[%c4_469, %c0_470] : memref<193x8xf32, #tpu.memory_space<vmem>>, vector<185x8xf32>
    %c4_471 = arith.constant 4 : index
    %c0_472 = arith.constant 0 : index
    %419 = vector.load %arg23[%c4_471, %c0_472] : memref<193x8xf32, #tpu.memory_space<vmem>>, vector<185x8xf32>
    %c0_473 = arith.constant 0 : index
    %c0_474 = arith.constant 0 : index
    %420 = vector.load %arg20[%c0_473, %c0_474] : memref<16x3xf32, #tpu.memory_space<vmem>>, vector<8x3xf32>
    %cst_475 = arith.constant dense<0.000000e+00> : vector<185x3xf32>
    %421 = tpu.matmul %418, %420, %cst_475 {dimension_numbers = #tpu.dot_dimension_numbers<[1], [0], [0], [1], [0, 0, 1, 1], [], []>} : vector<185x8xf32>, vector<8x3xf32>, vector<185x3xf32> -> vector<185x3xf32>
    %c8_476 = arith.constant 8 : index
    %c0_477 = arith.constant 0 : index
    %422 = vector.load %arg20[%c8_476, %c0_477] : memref<16x3xf32, #tpu.memory_space<vmem>>, vector<8x3xf32>
    %cst_478 = arith.constant dense<0.000000e+00> : vector<185x3xf32>
    %423 = tpu.matmul %419, %422, %cst_478 {dimension_numbers = #tpu.dot_dimension_numbers<[1], [0], [0], [1], [0, 0, 1, 1], [], []>} : vector<185x8xf32>, vector<8x3xf32>, vector<185x3xf32> -> vector<185x3xf32>
    %424 = arith.addf %421, %423 : vector<185x3xf32>
    %c0_479 = arith.constant 0 : index
    %c0_480 = arith.constant 0 : index
    %425 = vector.load %arg21[%c0_479, %c0_480] : memref<1x3xf32, #tpu.memory_space<vmem>>, vector<1x3xf32>
    %426 = vector.broadcast %425 : vector<1x3xf32> to vector<185x3xf32>
    %427 = arith.addf %424, %426 : vector<185x3xf32>
    %cst_481 = arith.constant dense<0xFF800000> : vector<185xf32>
    %428 = vector.multi_reduction <maximumf>, %427, %cst_481 [1] : vector<185x3xf32> to vector<185xf32>
    %429 = vector.shape_cast %428 : vector<185xf32> to vector<185x1xf32>
    %430 = vector.broadcast %429 : vector<185x1xf32> to vector<185x3xf32>
    %431 = arith.subf %427, %430 : vector<185x3xf32>
    %432 = math.exp %431 : vector<185x3xf32>
    %cst_482 = arith.constant dense<0.000000e+00> : vector<185xf32>
    %433 = vector.multi_reduction <add>, %432, %cst_482 [1] : vector<185x3xf32> to vector<185xf32>
    %434 = vector.shape_cast %433 : vector<185xf32> to vector<185x1xf32>
    %435 = tpu.reciprocal %434 {approx = true} : vector<185x1xf32> -> vector<185x1xf32>
    %436 = vector.broadcast %435 : vector<185x1xf32> to vector<185x3xf32>
    %437 = arith.mulf %432, %436 : vector<185x3xf32>
    %438 = tpu.transpose %437, [1, 0] : vector<185x3xf32> -> vector<3x185xf32>
    %c0_483 = arith.constant 0 : index
    %c0_484 = arith.constant 0 : index
    %c0_485 = arith.constant 0 : index
    %439 = vector.load %arg22[%c0_483, %c0_484, %c0_485] : memref<1x3x185xf32, #tpu.memory_space<vmem>>, vector<1x3x185xf32>
    %440 = vector.shape_cast %439 : vector<1x3x185xf32> to vector<3x185xf32>
    %441 = vector.shape_cast %438 : vector<3x185xf32> to vector<1x3x185xf32>
    tpu.vector_store %arg22[%c0_483, %c0_484, %c0_485], %441 {strides = array<i32>} : memref<1x3x185xf32, #tpu.memory_space<vmem>>, vector<1x3x185xf32>,
    return
  }
  func.func @transform_0(%arg0: i32) -> (i32, i32, i32) {
    %c0_i32 = arith.constant 0 : i32
    %c0_i32_0 = arith.constant 0 : i32
    %c0_i32_1 = arith.constant 0 : i32
    return %arg0, %c0_i32, %c0_i32_0 : i32, i32, i32
  }
  func.func @transform_1(%arg0: i32) -> (i32, i32) {
    %c0_i32 = arith.constant 0 : i32
    %c0_i32_0 = arith.constant 0 : i32
    %c0_i32_1 = arith.constant 0 : i32
    return %c0_i32, %c0_i32_0 : i32, i32
  }
  func.func @transform_2(%arg0: i32) -> (i32, i32) {
    %c0_i32 = arith.constant 0 : i32
    %c0_i32_0 = arith.constant 0 : i32
    %c0_i32_1 = arith.constant 0 : i32
    return %c0_i32, %c0_i32_0 : i32, i32
  }
  func.func @transform_3(%arg0: i32) -> (i32, i32) {
    %c0_i32 = arith.constant 0 : i32
    %c0_i32_0 = arith.constant 0 : i32
    %c0_i32_1 = arith.constant 0 : i32
    return %c0_i32, %c0_i32_0 : i32, i32
  }
  func.func @transform_4(%arg0: i32) -> (i32, i32) {
    %c0_i32 = arith.constant 0 : i32
    %c0_i32_0 = arith.constant 0 : i32
    %c0_i32_1 = arith.constant 0 : i32
    return %c0_i32, %c0_i32_0 : i32, i32
  }
  func.func @transform_5(%arg0: i32) -> (i32, i32) {
    %c0_i32 = arith.constant 0 : i32
    %c0_i32_0 = arith.constant 0 : i32
    %c0_i32_1 = arith.constant 0 : i32
    return %c0_i32, %c0_i32_0 : i32, i32
  }
  func.func @transform_6(%arg0: i32) -> (i32, i32) {
    %c0_i32 = arith.constant 0 : i32
    %c0_i32_0 = arith.constant 0 : i32
    %c0_i32_1 = arith.constant 0 : i32
    return %c0_i32, %c0_i32_0 : i32, i32
  }
  func.func @transform_7(%arg0: i32) -> (i32, i32) {
    %c0_i32 = arith.constant 0 : i32
    %c0_i32_0 = arith.constant 0 : i32
    %c0_i32_1 = arith.constant 0 : i32
    return %c0_i32, %c0_i32_0 : i32, i32
  }
  func.func @transform_8(%arg0: i32) -> (i32, i32) {
    %c0_i32 = arith.constant 0 : i32
    %c0_i32_0 = arith.constant 0 : i32
    %c0_i32_1 = arith.constant 0 : i32
    return %c0_i32, %c0_i32_0 : i32, i32
  }
  func.func @transform_9(%arg0: i32) -> (i32, i32) {
    %c0_i32 = arith.constant 0 : i32
    %c0_i32_0 = arith.constant 0 : i32
    %c0_i32_1 = arith.constant 0 : i32
    return %c0_i32, %c0_i32_0 : i32, i32
  }
  func.func @transform_10(%arg0: i32) -> (i32, i32) {
    %c0_i32 = arith.constant 0 : i32
    %c0_i32_0 = arith.constant 0 : i32
    %c0_i32_1 = arith.constant 0 : i32
    return %c0_i32, %c0_i32_0 : i32, i32
  }
  func.func @transform_11(%arg0: i32) -> (i32, i32) {
    %c0_i32 = arith.constant 0 : i32
    %c0_i32_0 = arith.constant 0 : i32
    %c0_i32_1 = arith.constant 0 : i32
    return %c0_i32, %c0_i32_0 : i32, i32
  }
  func.func @transform_12(%arg0: i32) -> (i32, i32) {
    %c0_i32 = arith.constant 0 : i32
    %c0_i32_0 = arith.constant 0 : i32
    %c0_i32_1 = arith.constant 0 : i32
    return %c0_i32, %c0_i32_0 : i32, i32
  }
  func.func @transform_13(%arg0: i32) -> (i32, i32) {
    %c0_i32 = arith.constant 0 : i32
    %c0_i32_0 = arith.constant 0 : i32
    %c0_i32_1 = arith.constant 0 : i32
    return %c0_i32, %c0_i32_0 : i32, i32
  }
  func.func @transform_14(%arg0: i32) -> (i32, i32) {
    %c0_i32 = arith.constant 0 : i32
    %c0_i32_0 = arith.constant 0 : i32
    %c0_i32_1 = arith.constant 0 : i32
    return %c0_i32, %c0_i32_0 : i32, i32
  }
  func.func @transform_15(%arg0: i32) -> (i32, i32) {
    %c0_i32 = arith.constant 0 : i32
    %c0_i32_0 = arith.constant 0 : i32
    %c0_i32_1 = arith.constant 0 : i32
    return %c0_i32, %c0_i32_0 : i32, i32
  }
  func.func @transform_16(%arg0: i32) -> (i32, i32) {
    %c0_i32 = arith.constant 0 : i32
    %c0_i32_0 = arith.constant 0 : i32
    %c0_i32_1 = arith.constant 0 : i32
    return %c0_i32, %c0_i32_0 : i32, i32
  }
  func.func @transform_17(%arg0: i32) -> (i32, i32) {
    %c0_i32 = arith.constant 0 : i32
    %c0_i32_0 = arith.constant 0 : i32
    %c0_i32_1 = arith.constant 0 : i32
    return %c0_i32, %c0_i32_0 : i32, i32
  }
  func.func @transform_18(%arg0: i32) -> (i32, i32) {
    %c0_i32 = arith.constant 0 : i32
    %c0_i32_0 = arith.constant 0 : i32
    %c0_i32_1 = arith.constant 0 : i32
    return %c0_i32, %c0_i32_0 : i32, i32
  }
  func.func @transform_19(%arg0: i32) -> (i32, i32) {
    %c0_i32 = arith.constant 0 : i32
    %c0_i32_0 = arith.constant 0 : i32
    %c0_i32_1 = arith.constant 0 : i32
    return %c0_i32, %c0_i32_0 : i32, i32
  }
  func.func @transform_20(%arg0: i32) -> (i32, i32) {
    %c0_i32 = arith.constant 0 : i32
    %c0_i32_0 = arith.constant 0 : i32
    %c0_i32_1 = arith.constant 0 : i32
    return %c0_i32, %c0_i32_0 : i32, i32
  }
  func.func @transform_21(%arg0: i32) -> (i32, i32, i32) {
    %c0_i32 = arith.constant 0 : i32
    %c0_i32_0 = arith.constant 0 : i32
    %c0_i32_1 = arith.constant 0 : i32
    return %arg0, %c0_i32, %c0_i32_0 : i32, i32, i32
  }
}

</mosaic_0001>

<llo_original>
// kernel: tpu_custom_call.1
$region0: #{tpu_custom_call.1}
  #allocation0 [shape = 'u32[]', space=smem, size = 0x4, offset = 0x4, fixed_abs, tag = 'smem constant byte address 0x4 - core index']
  #allocation1 [shape = 'u32[144,128]{1,0:T(1,128)}', space=vmem, size = 0x12000, scoped, tag = 'internal scratch']
  #allocation2 [shape = 'f32[193,8]{1,0:T(8,128)}', space=vmem, size = 0x19000, scoped, tag = 'scratch operand']
  #allocation3 [shape = 'f32[55,16]{1,0:T(8,128)}', space=vmem, size = 0x7000, scoped, tag = 'scratch operand']
  #allocation4 [shape = 'f32[20,16]{1,0:T(8,128)}', space=vmem, size = 0x3000, scoped, tag = 'scratch operand']
  #allocation5 [shape = 'f32[11,24]{1,0:T(8,128)}', space=vmem, size = 0x2000, scoped, tag = 'scratch operand']
  #allocation6 [shape = 'f32[9,32]{1,0:T(8,128)}', space=vmem, size = 0x2000, scoped, tag = 'scratch operand']
  #allocation7 [shape = 'f32[11,24]{1,0:T(8,128)}', space=vmem, size = 0x2000, scoped, tag = 'scratch operand']
  #allocation8 [shape = 'f32[20,16]{1,0:T(8,128)}', space=vmem, size = 0x3000, scoped, tag = 'scratch operand']
  #allocation9 [shape = 'f32[55,16]{1,0:T(8,128)}', space=vmem, size = 0x7000, scoped, tag = 'scratch operand']
  #allocation10 [shape = 'f32[193,8]{1,0:T(8,128)}', space=vmem, size = 0x19000, scoped, tag = 'scratch operand']
  %s0 = inlined_call_operand.vmem [shape: f32[2,3,185], index: 0, kind: input, shape index: {}]
  %s1 = inlined_call_operand.vmem [shape: f32[3,8], index: 1, kind: input, shape index: {}]
  %s2 = inlined_call_operand.vmem [shape: f32[1,8], index: 2, kind: input, shape index: {}]
  %s3 = inlined_call_operand.vmem [shape: f32[56,16], index: 3, kind: input, shape index: {}]
  %s4 = inlined_call_operand.vmem [shape: f32[1,16], index: 4, kind: input, shape index: {}]
  %s5 = inlined_call_operand.vmem [shape: f32[112,16], index: 5, kind: input, shape index: {}]
  %s6 = inlined_call_operand.vmem [shape: f32[1,16], index: 6, kind: input, shape index: {}]
  %s7 = inlined_call_operand.vmem [shape: f32[112,24], index: 7, kind: input, shape index: {}]
  %s8 = inlined_call_operand.vmem [shape: f32[1,24], index: 8, kind: input, shape index: {}]
  %s9 = inlined_call_operand.vmem [shape: f32[168,32], index: 9, kind: input, shape index: {}]
  %s10 = inlined_call_operand.vmem [shape: f32[1,32], index: 10, kind: input, shape index: {}]
  %s11 = inlined_call_operand.vmem [shape: f32[224,24], index: 11, kind: input, shape index: {}]
  %s12 = inlined_call_operand.vmem [shape: f32[1,24], index: 12, kind: input, shape index: {}]
  %s13 = inlined_call_operand.vmem [shape: f32[336,16], index: 13, kind: input, shape index: {}]
  %s14 = inlined_call_operand.vmem [shape: f32[1,16], index: 14, kind: input, shape index: {}]
  %s15 = inlined_call_operand.vmem [shape: f32[224,16], index: 15, kind: input, shape index: {}]
  %s16 = inlined_call_operand.vmem [shape: f32[1,16], index: 16, kind: input, shape index: {}]
  %s17 = inlined_call_operand.vmem [shape: f32[224,8], index: 17, kind: input, shape index: {}]
  %s18 = inlined_call_operand.vmem [shape: f32[1,8], index: 18, kind: input, shape index: {}]
  %s19 = inlined_call_operand.vmem [shape: f32[16,3], index: 19, kind: input, shape index: {}]
  %s20 = inlined_call_operand.vmem [shape: f32[1,3], index: 20, kind: input, shape index: {}]
  %s21 = inlined_call_operand.vmem [shape: f32[2,3,185], index: 21, kind: output, shape index: {}]
  %s22 = sld [smem:[#allocation0]]
  $region117: #{tpu_custom_call.1} parent=0
    _
  %s24 = ssub.s32 1, %s22
  %s25 = scalar_select 0, %s24, %s22
  loop: start=0, step=1, limit=4
  $region2: #{tpu_custom_call.1} parent=0 // loop_pre_header
    _
  $region3: #{tpu_custom_call.1} parent=0 // loop_header
    %s27 = sphi 0, %s31
    %p28 = scmp.ge.s32.totalorder %s27, 4
    %s37 = sphi 0, %s39
    %s40 = sphi 0, %s37
    %s41 = sphi 0, %s40
    %s57 = sphi 0, %s41
    %s61 = sphi 0, %s61
    %s63 = sphi 0, %s61
    %s64 = sphi 0, %s63
    %s78 = sphi 0, %s64
    %s82 = sphi 0, %s82
    %s84 = sphi 0, %s82
    %s85 = sphi 0, %s84
    %s99 = sphi 0, %s85
    %s103 = sphi 0, %s103
    %s105 = sphi 0, %s103
    %s106 = sphi 0, %s105
    %s120 = sphi 0, %s106
    %s124 = sphi 0, %s124
    %s126 = sphi 0, %s124
    %s127 = sphi 0, %s126
    %s141 = sphi 0, %s127
    %s145 = sphi 0, %s145
    %s147 = sphi 0, %s145
    %s148 = sphi 0, %s147
    %s162 = sphi 0, %s148
    %s166 = sphi 0, %s166
    %s168 = sphi 0, %s166
    %s169 = sphi 0, %s168
    %s183 = sphi 0, %s169
    %s187 = sphi 0, %s187
    %s189 = sphi 0, %s187
    %s190 = sphi 0, %s189
    %s204 = sphi 0, %s190
    %s208 = sphi 0, %s208
    %s210 = sphi 0, %s208
    %s211 = sphi 0, %s210
    %s225 = sphi 0, %s211
    %s229 = sphi 0, %s229
    %s231 = sphi 0, %s229
    %s232 = sphi 0, %s231
    %s246 = sphi 0, %s232
    %s250 = sphi 0, %s250
    %s252 = sphi 0, %s250
    %s253 = sphi 0, %s252
    %s267 = sphi 0, %s253
    %s271 = sphi 0, %s271
    %s273 = sphi 0, %s271
    %s274 = sphi 0, %s273
    %s288 = sphi 0, %s274
    %s292 = sphi 0, %s292
    %s294 = sphi 0, %s292
    %s295 = sphi 0, %s294
    %s309 = sphi 0, %s295
    %s313 = sphi 0, %s313
    %s315 = sphi 0, %s313
    %s316 = sphi 0, %s315
    %s330 = sphi 0, %s316
    %s334 = sphi 0, %s334
    %s336 = sphi 0, %s334
    %s337 = sphi 0, %s336
    %s351 = sphi 0, %s337
    %s355 = sphi 0, %s355
    %s357 = sphi 0, %s355
    %s358 = sphi 0, %s357
    %s372 = sphi 0, %s358
    %s376 = sphi 0, %s376
    %s378 = sphi 0, %s376
    %s379 = sphi 0, %s378
    %s393 = sphi 0, %s379
    %s397 = sphi 0, %s397
    %s399 = sphi 0, %s397
    %s400 = sphi 0, %s399
    %s414 = sphi 0, %s400
    %s418 = sphi 0, %s418
    %s420 = sphi 0, %s418
    %s421 = sphi 0, %s420
    %s435 = sphi 0, %s421
    %s439 = sphi 0, %s439
    %s441 = sphi 0, %s439
    %s442 = sphi 0, %s441
    %s456 = sphi 0, %s442
    %s460 = sphi 0, %s460
    %s462 = sphi 0, %s460
    %s463 = sphi 0, %s462
    %s477 = sphi 0, %s463
    %s483 = sphi 0, %s485
    %s486 = sphi 0, %s483
    %s487 = sphi 0, %s486
    %s503 = sphi 0, %s487
  $region4: #{tpu_custom_call.1} parent=0 // loop_header_branch
    %30 = sbr.rel (%p28) target = $region8
  $region5: #{tpu_custom_call.1} parent=0 // loop_body
    %s32 = ssub.s32 %s27, 1
    %s33 = ssub.s32 %s27, 2
    %s34 = sadd.s32 %s27, 1
    %s35 = ssub.s32 %s27, %s34
    %p36 = scmp.eq.s32.totalorder %s35, 0
    %s38 = sadd.s32 %s37, 1
    %s39 = scalar_select %p36, %s37, %s38
    %p42 = pneg %p36
    %p43 = scmp.eq.s32.totalorder %s27, 1
    %p44 = por %p42, %p43
    %p45 = scmp.ne.s32.totalorder %s37, %s40
    %p46 = scmp.eq.s32.totalorder %s27, 0
    %p47 = por %p45, %p46
    %p48 = scmp.ne.s32.totalorder %s37, %s40
    %p49 = scmp.eq.s32.totalorder %s32, 1
    %p50 = por %p48, %p49
    %p51 = scmp.ne.s32.totalorder %s40, %s41
    %p52 = scmp.eq.s32.totalorder %s32, 0
    %p53 = por %p51, %p52
    %p54 = scmp.ne.s32.totalorder %s40, %s41
    %p55 = scmp.eq.s32.totalorder %s33, 1
    %p56 = por %p54, %p55
    %p58 = scmp.ne.s32.totalorder %s41, %s57
    %p59 = scmp.eq.s32.totalorder %s33, 0
    %p60 = por %p58, %p59
    %s62 = sadd.s32 %s61, 1
    %p65 = scmp.eq.s32.totalorder %s27, 1
    %p66 = scmp.ne.s32.totalorder %s61, %s63
    %p67 = scmp.eq.s32.totalorder %s27, 0
    %p68 = por %p66, %p67
    %p69 = scmp.ne.s32.totalorder %s61, %s63
    %p70 = scmp.eq.s32.totalorder %s32, 1
    %p71 = por %p69, %p70
    %p72 = scmp.ne.s32.totalorder %s63, %s64
    %p73 = scmp.eq.s32.totalorder %s32, 0
    %p74 = por %p72, %p73
    %p75 = scmp.ne.s32.totalorder %s63, %s64
    %p76 = scmp.eq.s32.totalorder %s33, 1
    %p77 = por %p75, %p76
    %p79 = scmp.ne.s32.totalorder %s64, %s78
    %p80 = scmp.eq.s32.totalorder %s33, 0
    %p81 = por %p79, %p80
    %s83 = sadd.s32 %s82, 1
    %p86 = scmp.eq.s32.totalorder %s27, 1
    %p87 = scmp.ne.s32.totalorder %s82, %s84
    %p88 = scmp.eq.s32.totalorder %s27, 0
    %p89 = por %p87, %p88
    %p90 = scmp.ne.s32.totalorder %s82, %s84
    %p91 = scmp.eq.s32.totalorder %s32, 1
    %p92 = por %p90, %p91
    %p93 = scmp.ne.s32.totalorder %s84, %s85
    %p94 = scmp.eq.s32.totalorder %s32, 0
    %p95 = por %p93, %p94
    %p96 = scmp.ne.s32.totalorder %s84, %s85
    %p97 = scmp.eq.s32.totalorder %s33, 1
    %p98 = por %p96, %p97
    %p100 = scmp.ne.s32.totalorder %s85, %s99
    %p101 = scmp.eq.s32.totalorder %s33, 0
    %p102 = por %p100, %p101
    %s104 = sadd.s32 %s103, 1
    %p107 = scmp.eq.s32.totalorder %s27, 1
    %p108 = scmp.ne.s32.totalorder %s103, %s105
    %p109 = scmp.eq.s32.totalorder %s27, 0
    %p110 = por %p108, %p109
    %p111 = scmp.ne.s32.totalorder %s103, %s105
    %p112 = scmp.eq.s32.totalorder %s32, 1
    %p113 = por %p111, %p112
    %p114 = scmp.ne.s32.totalorder %s105, %s106
    %p115 = scmp.eq.s32.totalorder %s32, 0
    %p116 = por %p114, %p115
    %p117 = scmp.ne.s32.totalorder %s105, %s106
    %p118 = scmp.eq.s32.totalorder %s33, 1
    %p119 = por %p117, %p118
    %p121 = scmp.ne.s32.totalorder %s106, %s120
    %p122 = scmp.eq.s32.totalorder %s33, 0
    %p123 = por %p121, %p122
    %s125 = sadd.s32 %s124, 1
    %p128 = scmp.eq.s32.totalorder %s27, 1
    %p129 = scmp.ne.s32.totalorder %s124, %s126
    %p130 = scmp.eq.s32.totalorder %s27, 0
    %p131 = por %p129, %p130
    %p132 = scmp.ne.s32.totalorder %s124, %s126
    %p133 = scmp.eq.s32.totalorder %s32, 1
    %p134 = por %p132, %p133
    %p135 = scmp.ne.s32.totalorder %s126, %s127
    %p136 = scmp.eq.s32.totalorder %s32, 0
    %p137 = por %p135, %p136
    %p138 = scmp.ne.s32.totalorder %s126, %s127
    %p139 = scmp.eq.s32.totalorder %s33, 1
    %p140 = por %p138, %p139
    %p142 = scmp.ne.s32.totalorder %s127, %s141
    %p143 = scmp.eq.s32.totalorder %s33, 0
    %p144 = por %p142, %p143
    %s146 = sadd.s32 %s145, 1
    %p149 = scmp.eq.s32.totalorder %s27, 1
    %p150 = scmp.ne.s32.totalorder %s145, %s147
    %p151 = scmp.eq.s32.totalorder %s27, 0
    %p152 = por %p150, %p151
    %p153 = scmp.ne.s32.totalorder %s145, %s147
    %p154 = scmp.eq.s32.totalorder %s32, 1
    %p155 = por %p153, %p154
    %p156 = scmp.ne.s32.totalorder %s147, %s148
    %p157 = scmp.eq.s32.totalorder %s32, 0
    %p158 = por %p156, %p157
    %p159 = scmp.ne.s32.totalorder %s147, %s148
    %p160 = scmp.eq.s32.totalorder %s33, 1
    %p161 = por %p159, %p160
    %p163 = scmp.ne.s32.totalorder %s148, %s162
    %p164 = scmp.eq.s32.totalorder %s33, 0
    %p165 = por %p163, %p164
    %s167 = sadd.s32 %s166, 1
    %p170 = scmp.eq.s32.totalorder %s27, 1
    %p171 = scmp.ne.s32.totalorder %s166, %s168
    %p172 = scmp.eq.s32.totalorder %s27, 0
    %p173 = por %p171, %p172
    %p174 = scmp.ne.s32.totalorder %s166, %s168
    %p175 = scmp.eq.s32.totalorder %s32, 1
    %p176 = por %p174, %p175
    %p177 = scmp.ne.s32.totalorder %s168, %s169
    %p178 = scmp.eq.s32.totalorder %s32, 0
    %p179 = por %p177, %p178
    %p180 = scmp.ne.s32.totalorder %s168, %s169
    %p181 = scmp.eq.s32.totalorder %s33, 1
    %p182 = por %p180, %p181
    %p184 = scmp.ne.s32.totalorder %s169, %s183
    %p185 = scmp.eq.s32.totalorder %s33, 0
    %p186 = por %p184, %p185
    %s188 = sadd.s32 %s187, 1
    %p191 = scmp.eq.s32.totalorder %s27, 1
    %p192 = scmp.ne.s32.totalorder %s187, %s189
    %p193 = scmp.eq.s32.totalorder %s27, 0
    %p194 = por %p192, %p193
    %p195 = scmp.ne.s32.totalorder %s187, %s189
    %p196 = scmp.eq.s32.totalorder %s32, 1
    %p197 = por %p195, %p196
    %p198 = scmp.ne.s32.totalorder %s189, %s190
    %p199 = scmp.eq.s32.totalorder %s32, 0
    %p200 = por %p198, %p199
    %p201 = scmp.ne.s32.totalorder %s189, %s190
    %p202 = scmp.eq.s32.totalorder %s33, 1
    %p203 = por %p201, %p202
    %p205 = scmp.ne.s32.totalorder %s190, %s204
    %p206 = scmp.eq.s32.totalorder %s33, 0
    %p207 = por %p205, %p206
    %s209 = sadd.s32 %s208, 1
    %p212 = scmp.eq.s32.totalorder %s27, 1
    %p213 = scmp.ne.s32.totalorder %s208, %s210
    %p214 = scmp.eq.s32.totalorder %s27, 0
    %p215 = por %p213, %p214
    %p216 = scmp.ne.s32.totalorder %s208, %s210
    %p217 = scmp.eq.s32.totalorder %s32, 1
    %p218 = por %p216, %p217
    %p219 = scmp.ne.s32.totalorder %s210, %s211
    %p220 = scmp.eq.s32.totalorder %s32, 0
    %p221 = por %p219, %p220
    %p222 = scmp.ne.s32.totalorder %s210, %s211
    %p223 = scmp.eq.s32.totalorder %s33, 1
    %p224 = por %p222, %p223
    %p226 = scmp.ne.s32.totalorder %s211, %s225
    %p227 = scmp.eq.s32.totalorder %s33, 0
    %p228 = por %p226, %p227
    %s230 = sadd.s32 %s229, 1
    %p233 = scmp.eq.s32.totalorder %s27, 1
    %p234 = scmp.ne.s32.totalorder %s229, %s231
    %p235 = scmp.eq.s32.totalorder %s27, 0
    %p236 = por %p234, %p235
    %p237 = scmp.ne.s32.totalorder %s229, %s231
    %p238 = scmp.eq.s32.totalorder %s32, 1
    %p239 = por %p237, %p238
    %p240 = scmp.ne.s32.totalorder %s231, %s232
    %p241 = scmp.eq.s32.totalorder %s32, 0
    %p242 = por %p240, %p241
    %p243 = scmp.ne.s32.totalorder %s231, %s232
    %p244 = scmp.eq.s32.totalorder %s33, 1
    %p245 = por %p243, %p244
    %p247 = scmp.ne.s32.totalorder %s232, %s246
    %p248 = scmp.eq.s32.totalorder %s33, 0
    %p249 = por %p247, %p248
    %s251 = sadd.s32 %s250, 1
    %p254 = scmp.eq.s32.totalorder %s27, 1
    %p255 = scmp.ne.s32.totalorder %s250, %s252
    %p256 = scmp.eq.s32.totalorder %s27, 0
    %p257 = por %p255, %p256
    %p258 = scmp.ne.s32.totalorder %s250, %s252
    %p259 = scmp.eq.s32.totalorder %s32, 1
    %p260 = por %p258, %p259
    %p261 = scmp.ne.s32.totalorder %s252, %s253
    %p262 = scmp.eq.s32.totalorder %s32, 0
    %p263 = por %p261, %p262
    %p264 = scmp.ne.s32.totalorder %s252, %s253
    %p265 = scmp.eq.s32.totalorder %s33, 1
    %p266 = por %p264, %p265
    %p268 = scmp.ne.s32.totalorder %s253, %s267
    %p269 = scmp.eq.s32.totalorder %s33, 0
    %p270 = por %p268, %p269
    %s272 = sadd.s32 %s271, 1
    %p275 = scmp.eq.s32.totalorder %s27, 1
    %p276 = scmp.ne.s32.totalorder %s271, %s273
    %p277 = scmp.eq.s32.totalorder %s27, 0
    %p278 = por %p276, %p277
    %p279 = scmp.ne.s32.totalorder %s271, %s273
    %p280 = scmp.eq.s32.totalorder %s32, 1
    %p281 = por %p279, %p280
    %p282 = scmp.ne.s32.totalorder %s273, %s274
    %p283 = scmp.eq.s32.totalorder %s32, 0
    %p284 = por %p282, %p283
    %p285 = scmp.ne.s32.totalorder %s273, %s274
    %p286 = scmp.eq.s32.totalorder %s33, 1
    %p287 = por %p285, %p286
    %p289 = scmp.ne.s32.totalorder %s274, %s288
    %p290 = scmp.eq.s32.totalorder %s33, 0
    %p291 = por %p289, %p290
    %s293 = sadd.s32 %s292, 1
    %p296 = scmp.eq.s32.totalorder %s27, 1
    %p297 = scmp.ne.s32.totalorder %s292, %s294
    %p298 = scmp.eq.s32.totalorder %s27, 0
    %p299 = por %p297, %p298
    %p300 = scmp.ne.s32.totalorder %s292, %s294
    %p301 = scmp.eq.s32.totalorder %s32, 1
    %p302 = por %p300, %p301
    %p303 = scmp.ne.s32.totalorder %s294, %s295
    %p304 = scmp.eq.s32.totalorder %s32, 0
    %p305 = por %p303, %p304
    %p306 = scmp.ne.s32.totalorder %s294, %s295
    %p307 = scmp.eq.s32.totalorder %s33, 1
    %p308 = por %p306, %p307
    %p310 = scmp.ne.s32.totalorder %s295, %s309
    %p311 = scmp.eq.s32.totalorder %s33, 0
    %p312 = por %p310, %p311
    %s314 = sadd.s32 %s313, 1
    %p317 = scmp.eq.s32.totalorder %s27, 1
    %p318 = scmp.ne.s32.totalorder %s313, %s315
    %p319 = scmp.eq.s32.totalorder %s27, 0
    %p320 = por %p318, %p319
    %p321 = scmp.ne.s32.totalorder %s313, %s315
    %p322 = scmp.eq.s32.totalorder %s32, 1
    %p323 = por %p321, %p322
    %p324 = scmp.ne.s32.totalorder %s315, %s316
    %p325 = scmp.eq.s32.totalorder %s32, 0
    %p326 = por %p324, %p325
    %p327 = scmp.ne.s32.totalorder %s315, %s316
    %p328 = scmp.eq.s32.totalorder %s33, 1
    %p329 = por %p327, %p328
    %p331 = scmp.ne.s32.totalorder %s316, %s330
    %p332 = scmp.eq.s32.totalorder %s33, 0
    %p333 = por %p331, %p332
    %s335 = sadd.s32 %s334, 1
    %p338 = scmp.eq.s32.totalorder %s27, 1
    %p339 = scmp.ne.s32.totalorder %s334, %s336
    %p340 = scmp.eq.s32.totalorder %s27, 0
    %p341 = por %p339, %p340
    %p342 = scmp.ne.s32.totalorder %s334, %s336
    %p343 = scmp.eq.s32.totalorder %s32, 1
    %p344 = por %p342, %p343
    %p345 = scmp.ne.s32.totalorder %s336, %s337
    %p346 = scmp.eq.s32.totalorder %s32, 0
    %p347 = por %p345, %p346
    %p348 = scmp.ne.s32.totalorder %s336, %s337
    %p349 = scmp.eq.s32.totalorder %s33, 1
    %p350 = por %p348, %p349
    %p352 = scmp.ne.s32.totalorder %s337, %s351
    %p353 = scmp.eq.s32.totalorder %s33, 0
    %p354 = por %p352, %p353
    %s356 = sadd.s32 %s355, 1
    %p359 = scmp.eq.s32.totalorder %s27, 1
    %p360 = scmp.ne.s32.totalorder %s355, %s357
    %p361 = scmp.eq.s32.totalorder %s27, 0
    %p362 = por %p360, %p361
    %p363 = scmp.ne.s32.totalorder %s355, %s357
    %p364 = scmp.eq.s32.totalorder %s32, 1
    %p365 = por %p363, %p364
    %p366 = scmp.ne.s32.totalorder %s357, %s358
    %p367 = scmp.eq.s32.totalorder %s32, 0
    %p368 = por %p366, %p367
    %p369 = scmp.ne.s32.totalorder %s357, %s358
    %p370 = scmp.eq.s32.totalorder %s33, 1
    %p371 = por %p369, %p370
    %p373 = scmp.ne.s32.totalorder %s358, %s372
    %p374 = scmp.eq.s32.totalorder %s33, 0
    %p375 = por %p373, %p374
    %s377 = sadd.s32 %s376, 1
    %p380 = scmp.eq.s32.totalorder %s27, 1
    %p381 = scmp.ne.s32.totalorder %s376, %s378
    %p382 = scmp.eq.s32.totalorder %s27, 0
    %p383 = por %p381, %p382
    %p384 = scmp.ne.s32.totalorder %s376, %s378
    %p385 = scmp.eq.s32.totalorder %s32, 1
    %p386 = por %p384, %p385
    %p387 = scmp.ne.s32.totalorder %s378, %s379
    %p388 = scmp.eq.s32.totalorder %s32, 0
    %p389 = por %p387, %p388
    %p390 = scmp.ne.s32.totalorder %s378, %s379
    %p391 = scmp.eq.s32.totalorder %s33, 1
    %p392 = por %p390, %p391
    %p394 = scmp.ne.s32.totalorder %s379, %s393
    %p395 = scmp.eq.s32.totalorder %s33, 0
    %p396 = por %p394, %p395
    %s398 = sadd.s32 %s397, 1
    %p401 = scmp.eq.s32.totalorder %s27, 1
    %p402 = scmp.ne.s32.totalorder %s397, %s399
    %p403 = scmp.eq.s32.totalorder %s27, 0
    %p404 = por %p402, %p403
    %p405 = scmp.ne.s32.totalorder %s397, %s399
    %p406 = scmp.eq.s32.totalorder %s32, 1
    %p407 = por %p405, %p406
    %p408 = scmp.ne.s32.totalorder %s399, %s400
    %p409 = scmp.eq.s32.totalorder %s32, 0
    %p410 = por %p408, %p409
    %p411 = scmp.ne.s32.totalorder %s399, %s400
    %p412 = scmp.eq.s32.totalorder %s33, 1
    %p413 = por %p411, %p412
    %p415 = scmp.ne.s32.totalorder %s400, %s414
    %p416 = scmp.eq.s32.totalorder %s33, 0
    %p417 = por %p415, %p416
    %s419 = sadd.s32 %s418, 1
    %p422 = scmp.eq.s32.totalorder %s27, 1
    %p423 = scmp.ne.s32.totalorder %s418, %s420
    %p424 = scmp.eq.s32.totalorder %s27, 0
    %p425 = por %p423, %p424
    %p426 = scmp.ne.s32.totalorder %s418, %s420
    %p427 = scmp.eq.s32.totalorder %s32, 1
    %p428 = por %p426, %p427
    %p429 = scmp.ne.s32.totalorder %s420, %s421
    %p430 = scmp.eq.s32.totalorder %s32, 0
    %p431 = por %p429, %p430
    %p432 = scmp.ne.s32.totalorder %s420, %s421
    %p433 = scmp.eq.s32.totalorder %s33, 1
    %p434 = por %p432, %p433
    %p436 = scmp.ne.s32.totalorder %s421, %s435
    %p437 = scmp.eq.s32.totalorder %s33, 0
    %p438 = por %p436, %p437
    %s440 = sadd.s32 %s439, 1
    %p443 = scmp.eq.s32.totalorder %s27, 1
    %p444 = scmp.ne.s32.totalorder %s439, %s441
    %p445 = scmp.eq.s32.totalorder %s27, 0
    %p446 = por %p444, %p445
    %p447 = scmp.ne.s32.totalorder %s439, %s441
    %p448 = scmp.eq.s32.totalorder %s32, 1
    %p449 = por %p447, %p448
    %p450 = scmp.ne.s32.totalorder %s441, %s442
    %p451 = scmp.eq.s32.totalorder %s32, 0
    %p452 = por %p450, %p451
    %p453 = scmp.ne.s32.totalorder %s441, %s442
    %p454 = scmp.eq.s32.totalorder %s33, 1
    %p455 = por %p453, %p454
    %p457 = scmp.ne.s32.totalorder %s442, %s456
    %p458 = scmp.eq.s32.totalorder %s33, 0
    %p459 = por %p457, %p458
    %s461 = sadd.s32 %s460, 1
    %p464 = scmp.eq.s32.totalorder %s27, 1
    %p465 = scmp.ne.s32.totalorder %s460, %s462
    %p466 = scmp.eq.s32.totalorder %s27, 0
    %p467 = por %p465, %p466
    %p468 = scmp.ne.s32.totalorder %s460, %s462
    %p469 = scmp.eq.s32.totalorder %s32, 1
    %p470 = por %p468, %p469
    %p471 = scmp.ne.s32.totalorder %s462, %s463
    %p472 = scmp.eq.s32.totalorder %s32, 0
    %p473 = por %p471, %p472
    %p474 = scmp.ne.s32.totalorder %s462, %s463
    %p475 = scmp.eq.s32.totalorder %s33, 1
    %p476 = por %p474, %p475
    %p478 = scmp.ne.s32.totalorder %s463, %s477
    %p479 = scmp.eq.s32.totalorder %s33, 0
    %p480 = por %p478, %p479
    %s481 = ssub.s32 %s27, %s34
    %p482 = scmp.eq.s32.totalorder %s481, 0
    %s484 = sadd.s32 %s483, 1
    %s485 = scalar_select %p482, %s483, %s484
    %p488 = pneg %p482
    %p489 = scmp.eq.s32.totalorder %s27, 1
    %p490 = por %p488, %p489
    %p491 = scmp.ne.s32.totalorder %s483, %s486
    %p492 = scmp.eq.s32.totalorder %s27, 0
    %p493 = por %p491, %p492
    %p494 = scmp.ne.s32.totalorder %s483, %s486
    %p495 = scmp.eq.s32.totalorder %s32, 1
    %p496 = por %p494, %p495
    %p497 = scmp.ne.s32.totalorder %s486, %s487
    %p498 = scmp.eq.s32.totalorder %s32, 0
    %p499 = por %p497, %p498
    %p500 = scmp.ne.s32.totalorder %s486, %s487
    %p501 = scmp.eq.s32.totalorder %s33, 1
    %p502 = por %p500, %p501
    %p504 = scmp.ne.s32.totalorder %s487, %s503
    %p505 = scmp.eq.s32.totalorder %s33, 0
    %p506 = por %p504, %p505
    %p507 = scmp.le.s32.totalorder 1, %s27
    %p508 = scmp.lt.s32.totalorder %s27, 3
    %p509 = pnand %p507, %p508
    %p510 = pneg %p509
    // Predicated region
    $region9: #{tpu_custom_call.1} parent=5 // pred_check
      _
    $region10: #{tpu_custom_call.1} parent=5 // pred_check_branch
      %512 = sbr.rel (%p509) target = $region12
    $region11: #{tpu_custom_call.1} parent=5 // pred_region
      %s513 = ssub.s32 %s27, 1
      // Predicated region
      $region13: #{tpu_custom_call.1} parent=11 // pred_check
        %p514 = pneg %p74
      $region14: #{tpu_custom_call.1} parent=11 // pred_check_branch
        %516 = sbr.rel (%p514) target = $region16
      $region15: #{tpu_custom_call.1} parent=11 // pred_region
        _
      $region16: #{tpu_custom_call.1} parent=11 // pred_fallthru
        _
      // Predicated region
      $region17: #{tpu_custom_call.1} parent=11 // pred_check
        %p517 = pneg %p95
      $region18: #{tpu_custom_call.1} parent=11 // pred_check_branch
        %519 = sbr.rel (%p517) target = $region20
      $region19: #{tpu_custom_call.1} parent=11 // pred_region
        _
      $region20: #{tpu_custom_call.1} parent=11 // pred_fallthru
        _
      // Predicated region
      $region21: #{tpu_custom_call.1} parent=11 // pred_check
        %p520 = pneg %p116
      $region22: #{tpu_custom_call.1} parent=11 // pred_check_branch
        %522 = sbr.rel (%p520) target = $region24
      $region23: #{tpu_custom_call.1} parent=11 // pred_region
        _
      $region24: #{tpu_custom_call.1} parent=11 // pred_fallthru
        _
      // Predicated region
      $region25: #{tpu_custom_call.1} parent=11 // pred_check
        %p523 = pneg %p137
      $region26: #{tpu_custom_call.1} parent=11 // pred_check_branch
        %525 = sbr.rel (%p523) target = $region28
      $region27: #{tpu_custom_call.1} parent=11 // pred_region
        _
      $region28: #{tpu_custom_call.1} parent=11 // pred_fallthru
        _
      // Predicated region
      $region29: #{tpu_custom_call.1} parent=11 // pred_check
        %p526 = pneg %p158
      $region30: #{tpu_custom_call.1} parent=11 // pred_check_branch
        %528 = sbr.rel (%p526) target = $region32
      $region31: #{tpu_custom_call.1} parent=11 // pred_region
        _
      $region32: #{tpu_custom_call.1} parent=11 // pred_fallthru
        _
      // Predicated region
      $region33: #{tpu_custom_call.1} parent=11 // pred_check
        %p529 = pneg %p179
      $region34: #{tpu_custom_call.1} parent=11 // pred_check_branch
        %531 = sbr.rel (%p529) target = $region36
      $region35: #{tpu_custom_call.1} parent=11 // pred_region
        _
      $region36: #{tpu_custom_call.1} parent=11 // pred_fallthru
        _
      // Predicated region
      $region37: #{tpu_custom_call.1} parent=11 // pred_check
        %p532 = pneg %p200
      $region38: #{tpu_custom_call.1} parent=11 // pred_check_branch
        %534 = sbr.rel (%p532) target = $region40
      $region39: #{tpu_custom_call.1} parent=11 // pred_region
        _
      $region40: #{tpu_custom_call.1} parent=11 // pred_fallthru
        _
      // Predicated region
      $region41: #{tpu_custom_call.1} parent=11 // pred_check
        %p535 = pneg %p221
      $region42: #{tpu_custom_call.1} parent=11 // pred_check_branch
        %537 = sbr.rel (%p535) target = $region44
      $region43: #{tpu_custom_call.1} parent=11 // pred_region
        _
      $region44: #{tpu_custom_call.1} parent=11 // pred_fallthru
        _
      // Predicated region
      $region45: #{tpu_custom_call.1} parent=11 // pred_check
        %p538 = pneg %p242
      $region46: #{tpu_custom_call.1} parent=11 // pred_check_branch
        %540 = sbr.rel (%p538) target = $region48
      $region47: #{tpu_custom_call.1} parent=11 // pred_region
        _
      $region48: #{tpu_custom_call.1} parent=11 // pred_fallthru
        _
      // Predicated region
      $region49: #{tpu_custom_call.1} parent=11 // pred_check
        %p541 = pneg %p263
      $region50: #{tpu_custom_call.1} parent=11 // pred_check_branch
        %543 = sbr.rel (%p541) target = $region52
      $region51: #{tpu_custom_call.1} parent=11 // pred_region
        _
      $region52: #{tpu_custom_call.1} parent=11 // pred_fallthru
        _
      // Predicated region
      $region53: #{tpu_custom_call.1} parent=11 // pred_check
        %p544 = pneg %p284
      $region54: #{tpu_custom_call.1} parent=11 // pred_check_branch
        %546 = sbr.rel (%p544) target = $region56
      $region55: #{tpu_custom_call.1} parent=11 // pred_region
        _
      $region56: #{tpu_custom_call.1} parent=11 // pred_fallthru
        _
      // Predicated region
      $region57: #{tpu_custom_call.1} parent=11 // pred_check
        %p547 = pneg %p305
      $region58: #{tpu_custom_call.1} parent=11 // pred_check_branch
        %549 = sbr.rel (%p547) target = $region60
      $region59: #{tpu_custom_call.1} parent=11 // pred_region
        _
      $region60: #{tpu_custom_call.1} parent=11 // pred_fallthru
        _
      // Predicated region
      $region61: #{tpu_custom_call.1} parent=11 // pred_check
        %p550 = pneg %p326
      $region62: #{tpu_custom_call.1} parent=11 // pred_check_branch
        %552 = sbr.rel (%p550) target = $region64
      $region63: #{tpu_custom_call.1} parent=11 // pred_region
        _
      $region64: #{tpu_custom_call.1} parent=11 // pred_fallthru
        _
      // Predicated region
      $region65: #{tpu_custom_call.1} parent=11 // pred_check
        %p553 = pneg %p347
      $region66: #{tpu_custom_call.1} parent=11 // pred_check_branch
        %555 = sbr.rel (%p553) target = $region68
      $region67: #{tpu_custom_call.1} parent=11 // pred_region
        _
      $region68: #{tpu_custom_call.1} parent=11 // pred_fallthru
        _
      // Predicated region
      $region69: #{tpu_custom_call.1} parent=11 // pred_check
        %p556 = pneg %p368
      $region70: #{tpu_custom_call.1} parent=11 // pred_check_branch
        %558 = sbr.rel (%p556) target = $region72
      $region71: #{tpu_custom_call.1} parent=11 // pred_region
        _
      $region72: #{tpu_custom_call.1} parent=11 // pred_fallthru
        _
      // Predicated region
      $region73: #{tpu_custom_call.1} parent=11 // pred_check
        %p559 = pneg %p389
      $region74: #{tpu_custom_call.1} parent=11 // pred_check_branch
        %561 = sbr.rel (%p559) target = $region76
      $region75: #{tpu_custom_call.1} parent=11 // pred_region
        _
      $region76: #{tpu_custom_call.1} parent=11 // pred_fallthru
        _
      // Predicated region
      $region77: #{tpu_custom_call.1} parent=11 // pred_check
        %p562 = pneg %p410
      $region78: #{tpu_custom_call.1} parent=11 // pred_check_branch
        %564 = sbr.rel (%p562) target = $region80
      $region79: #{tpu_custom_call.1} parent=11 // pred_region
        _
      $region80: #{tpu_custom_call.1} parent=11 // pred_fallthru
        _
      // Predicated region
      $region81: #{tpu_custom_call.1} parent=11 // pred_check
        %p565 = pneg %p431
      $region82: #{tpu_custom_call.1} parent=11 // pred_check_branch
        %567 = sbr.rel (%p565) target = $region84
      $region83: #{tpu_custom_call.1} parent=11 // pred_region
        _
      $region84: #{tpu_custom_call.1} parent=11 // pred_fallthru
        _
      // Predicated region
      $region85: #{tpu_custom_call.1} parent=11 // pred_check
        %p568 = pneg %p452
      $region86: #{tpu_custom_call.1} parent=11 // pred_check_branch
        %570 = sbr.rel (%p568) target = $region88
      $region87: #{tpu_custom_call.1} parent=11 // pred_region
        _
      $region88: #{tpu_custom_call.1} parent=11 // pred_fallthru
        _
      // Predicated region
      $region89: #{tpu_custom_call.1} parent=11 // pred_check
        %p571 = pneg %p473
      $region90: #{tpu_custom_call.1} parent=11 // pred_check_branch
        %573 = sbr.rel (%p571) target = $region92
      $region91: #{tpu_custom_call.1} parent=11 // pred_region
        _
      $region92: #{tpu_custom_call.1} parent=11 // pred_fallthru
        _
    $region12: #{tpu_custom_call.1} parent=5 // pred_fallthru
      _
    %p574 = scmp.lt.s32.totalorder %s27, 2
    // Predicated region
    $region93: #{tpu_custom_call.1} parent=5 // pred_check
      %p575 = pneg %p574
    $region94: #{tpu_custom_call.1} parent=5 // pred_check_branch
      %577 = sbr.rel (%p575) target = $region96
    $region95: #{tpu_custom_call.1} parent=5 // pred_region
      // Predicated region
      $region97: #{tpu_custom_call.1} parent=95 // pred_check
        %p578 = pneg %p47
      $region98: #{tpu_custom_call.1} parent=95 // pred_check_branch
        %580 = sbr.rel (%p578) target = $region100
      $region99: #{tpu_custom_call.1} parent=95 // pred_region
        %p581 = scmp.lt.s32.totalorder %s27, 1
        %s582 = scalar_select %p581, %s27, 1
        %s583 = smul.addr %s582, 2
        %s584 = smul.addr %s583, 4
        %s585 = scalar_lea.vmem %s0, %s584
      $region100: #{tpu_custom_call.1} parent=95 // pred_fallthru
        _
    $region96: #{tpu_custom_call.1} parent=5 // pred_fallthru
      _
    %p586 = scmp.le.s32.totalorder 1, %s27
    %p587 = scmp.lt.s32.totalorder %s27, 3
    %p588 = pnand %p586, %p587
    %p589 = pneg %p588
    // Predicated region
    $region101: #{tpu_custom_call.1} parent=5 // pred_check
      _
    $region102: #{tpu_custom_call.1} parent=5 // pred_check_branch
      %591 = sbr.rel (%p588) target = $region104
    $region103: #{tpu_custom_call.1} parent=5 // pred_region
      %s592 = ssub.s32 %s27, 1
      %p593 = scmp.lt.s32.totalorder %s32, 1
      %s594 = scalar_select %p593, %s32, 1
      %s595 = smul.addr %s594, 2
      %s596 = smul.addr %s595, 4
      %s597 = scalar_lea.vmem %s0, %s596
      %p598 = pneg %p53
      %p599 = pneg %p50
      %p600 = pneg %p74
      %p601 = pneg %p71
      %p602 = pneg %p95
      %p603 = pneg %p92
      %p604 = pneg %p116
      %p605 = pneg %p113
      %p606 = pneg %p137
      %p607 = pneg %p134
      %p608 = pneg %p158
      %p609 = pneg %p155
      %p610 = pneg %p179
      %p611 = pneg %p176
      %p612 = pneg %p200
      %p613 = pneg %p197
      %p614 = pneg %p221
      %p615 = pneg %p218
      %p616 = pneg %p242
      %p617 = pneg %p239
      %p618 = pneg %p263
      %p619 = pneg %p260
      %p620 = pneg %p284
      %p621 = pneg %p281
      %p622 = pneg %p305
      %p623 = pneg %p302
      %p624 = pneg %p326
      %p625 = pneg %p323
      %p626 = pneg %p347
      %p627 = pneg %p344
      %p628 = pneg %p368
      %p629 = pneg %p365
      %p630 = pneg %p389
      %p631 = pneg %p386
      %p632 = pneg %p410
      %p633 = pneg %p407
      %p634 = pneg %p431
      %p635 = pneg %p428
      %p636 = pneg %p452
      %p637 = pneg %p449
      %p638 = pneg %p473
      %p639 = pneg %p470
      %p640 = pneg %p499
      %p641 = pneg %p496
      %p642 = scmp.lt.s32.totalorder %s32, 1
      %s643 = scalar_select %p642, %s32, 1
      %s644 = smul.addr %s643, 2
      %s645 = smul.addr %s644, 4
      %s646 = scalar_lea.vmem %s21, %s645
      %p647 = scmp.lt.s32.totalorder %s32, 1
      %s648 = scalar_select %p647, %s32, 1
      %s649 = smul.addr %s648, 2
      %s650 = smul.addr %s649, 4
      %s651 = scalar_lea.vmem %s0, %s650
      %p652 = scmp.lt.s32.totalorder %s32, 1
      %s653 = scalar_select %p652, %s32, 1
      %s654 = smul.addr %s653, 2
      %s655 = smul.addr %s654, 4
      %s656 = scalar_lea.vmem %s21, %s655
      %vm657 = vcmask 60416
      %658 = vst.msk [vmem:[#allocation2] sm:$0xf] %vm657, 0.0
      %659 = vst.msk [vmem:[#allocation2 + $0xbd] sm:$0xf] %vm657, 0.0
      %vm660 = vcmask 125952
      %661 = vst.msk [vmem:[#allocation3] sm:$0xf] %vm660, 0.0
      %662 = vst.msk [vmem:[#allocation3 + $0x33] sm:$0xf] %vm660, 0.0
      %663 = vst.msk [vmem:[#allocation4] sm:$0xf] %vm660, 0.0
      %664 = vst.msk [vmem:[#allocation4 + $0x10] sm:$0xf] %vm660, 0.0
      %vm665 = vcmask 191488
      %666 = vst.msk [vmem:[#allocation5] sm:$0xf] %vm665, 0.0
      %667 = vst.msk [vmem:[#allocation5 + $0x7] sm:$0xf] %vm665, 0.0
      %vm668 = vcmask 257024
      %669 = vst.msk [vmem:[#allocation6] sm:$0xf] %vm668, 0.0
      %670 = vst.msk [vmem:[#allocation6 + $0x5] sm:$0xf] %vm668, 0.0
      %671 = vst.msk [vmem:[#allocation7] sm:$0xf] %vm665, 0.0
      %672 = vst.msk [vmem:[#allocation7 + $0x7] sm:$0xf] %vm665, 0.0
      %673 = vst.msk [vmem:[#allocation8] sm:$0xf] %vm660, 0.0
      %674 = vst.msk [vmem:[#allocation8 + $0x10] sm:$0xf] %vm660, 0.0
      %675 = vst.msk [vmem:[#allocation9] sm:$0xf] %vm660, 0.0
      %676 = vst.msk [vmem:[#allocation9 + $0x33] sm:$0xf] %vm660, 0.0
      %677 = vst.msk [vmem:[#allocation10] sm:$0xf] %vm657, 0.0
      %678 = vst.msk [vmem:[#allocation10 + $0xbd] sm:$0xf] %vm657, 0.0
      %v679 = vld [vmem:[%s651] sm:$0x77]
      %v681 = vcombine.high %v679, %v679
      %683 = vxpose.xlu0.b32.start [1/16] %v679, 128
      %684 = vxpose.xlu0.b32.cont [2/16] 0.0, 128
      %685 = vxpose.xlu0.b32.cont [3/16] 0.0, 128
      %686 = vxpose.xlu0.b32.cont [4/16] 0.0, 128
      %687 = vxpose.xlu0.b32.cont [5/16] 0.0, 128
      %688 = vxpose.xlu0.b32.cont [6/16] 0.0, 128
      %689 = vxpose.xlu0.b32.cont [7/16] 0.0, 128
      %690 = vxpose.xlu0.b32.cont [8/16] 0.0, 128
      %691 = vxpose.xlu0.b32.cont [9/16] 0.0, 128
      %692 = vxpose.xlu0.b32.cont [10/16] 0.0, 128
      %693 = vxpose.xlu0.b32.cont [11/16] 0.0, 128
      %694 = vxpose.xlu0.b32.cont [12/16] 0.0, 128
      %695 = vxpose.xlu0.b32.cont [13/16] 0.0, 128
      %696 = vxpose.xlu0.b32.cont [14/16] 0.0, 128
      %697 = vxpose.xlu0.b32.cont [15/16] 0.0, 128
      %698 = vxpose.xlu0.b32.end [16/16] 0.0, 128
      %v699 = vpop.trf.xlu0
      %v700 = vpop.trf.xlu0
      %v701 = vpop.trf.xlu0
      %v702 = vpop.trf.xlu0
      %v703 = vpop.trf.xlu0
      %v704 = vpop.trf.xlu0
      %v705 = vpop.trf.xlu0
      %v706 = vpop.trf.xlu0
      %v707 = vpop.trf.xlu0
      %v708 = vpop.trf.xlu0
      %v709 = vpop.trf.xlu0
      %v710 = vpop.trf.xlu0
      %v711 = vpop.trf.xlu0
      %v712 = vpop.trf.xlu0
      %v713 = vpop.trf.xlu0
      %v714 = vpop.trf.xlu0
      %715 = vxpose.xlu0.b32.start [1/16] %v681, 128
      %716 = vxpose.xlu0.b32.cont [2/16] 0.0, 128
      %717 = vxpose.xlu0.b32.cont [3/16] 0.0, 128
      %718 = vxpose.xlu0.b32.cont [4/16] 0.0, 128
      %719 = vxpose.xlu0.b32.cont [5/16] 0.0, 128
      %720 = vxpose.xlu0.b32.cont [6/16] 0.0, 128
      %721 = vxpose.xlu0.b32.cont [7/16] 0.0, 128
      %722 = vxpose.xlu0.b32.cont [8/16] 0.0, 128
      %723 = vxpose.xlu0.b32.cont [9/16] 0.0, 128
      %724 = vxpose.xlu0.b32.cont [10/16] 0.0, 128
      %725 = vxpose.xlu0.b32.cont [11/16] 0.0, 128
      %726 = vxpose.xlu0.b32.cont [12/16] 0.0, 128
      %727 = vxpose.xlu0.b32.cont [13/16] 0.0, 128
      %728 = vxpose.xlu0.b32.cont [14/16] 0.0, 128
      %729 = vxpose.xlu0.b32.cont [15/16] 0.0, 128
      %730 = vxpose.xlu0.b32.end [16/16] 0.0, 128
      %v731 = vpop.trf.xlu0
      %v732 = vpop.trf.xlu0
      %v733 = vpop.trf.xlu0
      %v734 = vpop.trf.xlu0
      %v735 = vpop.trf.xlu0
      %v736 = vpop.trf.xlu0
      %v737 = vpop.trf.xlu0
      %v738 = vpop.trf.xlu0
      %v739 = vpop.trf.xlu0
      %v740 = vpop.trf.xlu0
      %v741 = vpop.trf.xlu0
      %v742 = vpop.trf.xlu0
      %v743 = vpop.trf.xlu0
      %v744 = vpop.trf.xlu0
      %v745 = vpop.trf.xlu0
      %v746 = vpop.trf.xlu0
      %v747 = vld [vmem:[%s1] sm:$0x7]
      %v748 = vld [vmem:[%s2] sm:$0x1]
      %v750 = vlaneseq
      %v751 = vshrl.u32 %v750, 7
      %v752 = vsub.s32 0, %v751
      %v753 = vrot.slane %v748, %v752
      %vm755 = vcmask 23552
      %v757 = vsel %vm755, %v699, 0
      %v760 = vsel %vm755, %v700, 0
      %v763 = vsel %vm755, %v701, 0
      %v766 = vsel %vm755, %v702, 0
      %v769 = vsel %vm755, %v703, 0
      %v772 = vsel %vm755, %v704, 0
      %v775 = vsel %vm755, %v705, 0
      %v778 = vsel %vm755, %v706, 0
      %v781 = vsel %vm755, %v707, 0
      %v784 = vsel %vm755, %v708, 0
      %v787 = vsel %vm755, %v709, 0
      %v790 = vsel %vm755, %v710, 0
      %v793 = vsel %vm755, %v711, 0
      %v796 = vsel %vm755, %v712, 0
      %v799 = vsel %vm755, %v713, 0
      %v802 = vsel %vm755, %v714, 0
      %v805 = vsel %vm755, %v731, 0
      %v808 = vsel %vm755, %v732, 0
      %v811 = vsel %vm755, %v733, 0
      %v814 = vsel %vm755, %v734, 0
      %v817 = vsel %vm755, %v735, 0
      %v820 = vsel %vm755, %v736, 0
      %v823 = vsel %vm755, %v737, 0
      %v826 = vsel %vm755, %v738, 0
      %vm828 = vcmask 1042432
      %v830 = vsel %vm828, %v747, 0
      %832 = vmatprep.subr.mxu0 0.0
      %833 = vmatpush1.msra.mxu0 %v830
      %834 = vmatprep.subr.mxu0 0.0
      %835 = vmatpush1.msra.mxu0 0.0
      %836 = vmatprep.subr.mxu0 0.0
      %837 = vmatpush1.msra.mxu0 0.0
      %838 = vmatprep.subr.mxu0 0.0
      %839 = vmatpush1.msra.mxu0 0.0
      %840 = vmatprep.subr.mxu0 0.0
      %841 = vmatpush1.msra.mxu0 0.0
      %842 = vmatprep.subr.mxu0 0.0
      %843 = vmatpush1.msra.mxu0 0.0
      %844 = vmatprep.subr.mxu0 0.0
      %845 = vmatpush1.msra.mxu0 0.0
      %846 = vmatprep.subr.mxu0 0.0
      %847 = vmatpush1.msra.mxu0 0.0
      %848 = vmatprep.subr.mxu0 0.0
      %849 = vmatpush1.msra.mxu0 0.0
      %850 = vmatprep.subr.mxu0 0.0
      %851 = vmatpush1.msra.mxu0 0.0
      %852 = vmatprep.subr.mxu0 0.0
      %853 = vmatpush1.msra.mxu0 0.0
      %854 = vmatprep.subr.mxu0 0.0
      %855 = vmatpush1.msra.mxu0 0.0
      %856 = vmatprep.subr.mxu0 0.0
      %857 = vmatpush1.msra.mxu0 0.0
      %858 = vmatprep.subr.mxu0 0.0
      %859 = vmatpush1.msra.mxu0 0.0
      %860 = vmatprep.subr.mxu0 0.0
      %861 = vmatpush1.msra.mxu0 0.0
      %862 = vmatprep.subr.mxu0 0.0
      %863 = vmatpush1.msra.mxu0 0.0
      %864 = vmatprep.subr.mxu0 0.0
      %865 = vmatpush1.msra.mxu0 0.0
      %866 = vmatprep.subr.mxu0 0.0
      %867 = vmatpush1.msra.mxu0 0.0
      %868 = vmatprep.subr.mxu0 0.0
      %869 = vmatpush1.msra.mxu0 0.0
      %870 = vmatprep.subr.mxu0 0.0
      %871 = vmatpush1.msra.mxu0 0.0
      %872 = vmatprep.subr.mxu0 0.0
      %873 = vmatpush1.msra.mxu0 0.0
      %874 = vmatprep.subr.mxu0 0.0
      %875 = vmatpush1.msra.mxu0 0.0
      %876 = vmatprep.subr.mxu0 0.0
      %877 = vmatpush1.msra.mxu0 0.0
      %878 = vmatprep.subr.mxu0 0.0
      %879 = vmatpush1.msra.mxu0 0.0
      %880 = vmatprep.subr.mxu0 0.0
      %881 = vmatpush1.msra.mxu0 0.0
      %882 = vmatprep.subr.mxu0 0.0
      %883 = vmatpush1.msra.mxu0 0.0
      %884 = vmatprep.subr.mxu0 0.0
      %885 = vmatpush1.msra.mxu0 0.0
      %886 = vmatprep.subr.mxu0 0.0
      %887 = vmatpush1.msra.mxu0 0.0
      %888 = vmatprep.subr.mxu0 0.0
      %889 = vmatpush1.msra.mxu0 0.0
      %890 = vmatprep.subr.mxu0 0.0
      %891 = vmatpush1.msra.mxu0 0.0
      %892 = vmatprep.subr.mxu0 0.0
      %893 = vmatpush1.msra.mxu0 0.0
      %894 = vmatprep.subr.mxu0 0.0
      %895 = vmatpush1.msra.mxu0 0.0
      %896 = vmatprep.mubr.f32.mxu0 0.0
      %897 = vmatmul.mubr.f32.gmra.mrb[0].mxu0 %v757
      %v898 = vpop.f32.mrb[0].mxu0
      %v899 = vadd.f32 %v753, %v898
      %v900 = vpop.f32.mrb[0].mxu0
      %901 = vmatprep.mubr.f32.mxu0 0.0
      %902 = vmatmul.mubr.f32.gmra.mrb[0].mxu0 %v760
      %v903 = vpop.f32.mrb[0].mxu0
      %v904 = vadd.f32 %v753, %v903
      %v905 = vpop.f32.mrb[0].mxu0
      %906 = vmatprep.mubr.f32.mxu0 0.0
      %907 = vmatmul.mubr.f32.gmra.mrb[0].mxu0 %v763
      %v908 = vpop.f32.mrb[0].mxu0
      %v909 = vadd.f32 %v753, %v908
      %v910 = vpop.f32.mrb[0].mxu0
      %911 = vmatprep.mubr.f32.mxu0 0.0
      %912 = vmatmul.mubr.f32.gmra.mrb[0].mxu0 %v766
      %v913 = vpop.f32.mrb[0].mxu0
      %v914 = vadd.f32 %v753, %v913
      %v915 = vpop.f32.mrb[0].mxu0
      %916 = vmatprep.mubr.f32.mxu0 0.0
      %917 = vmatmul.mubr.f32.gmra.mrb[0].mxu0 %v769
      %v918 = vpop.f32.mrb[0].mxu0
      %v919 = vadd.f32 %v753, %v918
      %v920 = vpop.f32.mrb[0].mxu0
      %921 = vmatprep.mubr.f32.mxu0 0.0
      %922 = vmatmul.mubr.f32.gmra.mrb[0].mxu0 %v772
      %v923 = vpop.f32.mrb[0].mxu0
      %v924 = vadd.f32 %v753, %v923
      %v925 = vpop.f32.mrb[0].mxu0
      %926 = vmatprep.mubr.f32.mxu0 0.0
      %927 = vmatmul.mubr.f32.gmra.mrb[0].mxu0 %v775
      %v928 = vpop.f32.mrb[0].mxu0
      %v929 = vadd.f32 %v753, %v928
      %v930 = vpop.f32.mrb[0].mxu0
      %931 = vmatprep.mubr.f32.mxu0 0.0
      %932 = vmatmul.mubr.f32.gmra.mrb[0].mxu0 %v778
      %v933 = vpop.f32.mrb[0].mxu0
      %v934 = vadd.f32 %v753, %v933
      %v935 = vpop.f32.mrb[0].mxu0
      %936 = vmatprep.mubr.f32.mxu0 0.0
      %937 = vmatmul.mubr.f32.gmra.mrb[0].mxu0 %v781
      %v938 = vpop.f32.mrb[0].mxu0
      %v939 = vadd.f32 %v753, %v938
      %v940 = vpop.f32.mrb[0].mxu0
      %941 = vmatprep.mubr.f32.mxu0 0.0
      %942 = vmatmul.mubr.f32.gmra.mrb[0].mxu0 %v784
      %v943 = vpop.f32.mrb[0].mxu0
      %v944 = vadd.f32 %v753, %v943
      %v945 = vpop.f32.mrb[0].mxu0
      %946 = vmatprep.mubr.f32.mxu0 0.0
      %947 = vmatmul.mubr.f32.gmra.mrb[0].mxu0 %v787
      %v948 = vpop.f32.mrb[0].mxu0
      %v949 = vadd.f32 %v753, %v948
      %v950 = vpop.f32.mrb[0].mxu0
      %951 = vmatprep.mubr.f32.mxu0 0.0
      %952 = vmatmul.mubr.f32.gmra.mrb[0].mxu0 %v790
      %v953 = vpop.f32.mrb[0].mxu0
      %v954 = vadd.f32 %v753, %v953
      %v955 = vpop.f32.mrb[0].mxu0
      %956 = vmatprep.mubr.f32.mxu0 0.0
      %957 = vmatmul.mubr.f32.gmra.mrb[0].mxu0 %v793
      %v958 = vpop.f32.mrb[0].mxu0
      %v959 = vadd.f32 %v753, %v958
      %v960 = vpop.f32.mrb[0].mxu0
      %961 = vmatprep.mubr.f32.mxu0 0.0
      %962 = vmatmul.mubr.f32.gmra.mrb[0].mxu0 %v796
      %v963 = vpop.f32.mrb[0].mxu0
      %v964 = vadd.f32 %v753, %v963
      %v965 = vpop.f32.mrb[0].mxu0
      %966 = vmatprep.mubr.f32.mxu0 0.0
      %967 = vmatmul.mubr.f32.gmra.mrb[0].mxu0 %v799
      %v968 = vpop.f32.mrb[0].mxu0
      %v969 = vadd.f32 %v753, %v968
      %v970 = vpop.f32.mrb[0].mxu0
      %971 = vmatprep.mubr.f32.mxu0 0.0
      %972 = vmatmul.mubr.f32.gmra.mrb[0].mxu0 %v802
      %v973 = vpop.f32.mrb[0].mxu0
      %v974 = vadd.f32 %v753, %v973
      %v975 = vpop.f32.mrb[0].mxu0
      %976 = vmatprep.mubr.f32.mxu0 0.0
      %977 = vmatmul.mubr.f32.gmra.mrb[0].mxu0 %v805
      %v978 = vpop.f32.mrb[0].mxu0
      %v979 = vadd.f32 %v753, %v978
      %v980 = vpop.f32.mrb[0].mxu0
      %981 = vmatprep.mubr.f32.mxu0 0.0
      %982 = vmatmul.mubr.f32.gmra.mrb[0].mxu0 %v808
      %v983 = vpop.f32.mrb[0].mxu0
      %v984 = vadd.f32 %v753, %v983
      %v985 = vpop.f32.mrb[0].mxu0
      %986 = vmatprep.mubr.f32.mxu0 0.0
      %987 = vmatmul.mubr.f32.gmra.mrb[0].mxu0 %v811
      %v988 = vpop.f32.mrb[0].mxu0
      %v989 = vadd.f32 %v753, %v988
      %v990 = vpop.f32.mrb[0].mxu0
      %991 = vmatprep.mubr.f32.mxu0 0.0
      %992 = vmatmul.mubr.f32.gmra.mrb[0].mxu0 %v814
      %v993 = vpop.f32.mrb[0].mxu0
      %v994 = vadd.f32 %v753, %v993
      %v995 = vpop.f32.mrb[0].mxu0
      %996 = vmatprep.mubr.f32.mxu0 0.0
      %997 = vmatmul.mubr.f32.gmra.mrb[0].mxu0 %v817
      %v998 = vpop.f32.mrb[0].mxu0
      %v999 = vadd.f32 %v753, %v998
      %v1000 = vpop.f32.mrb[0].mxu0
      %1001 = vmatprep.mubr.f32.mxu0 0.0
      %1002 = vmatmul.mubr.f32.gmra.mrb[0].mxu0 %v820
      %v1003 = vpop.f32.mrb[0].mxu0
      %v1004 = vadd.f32 %v753, %v1003
      %v1005 = vpop.f32.mrb[0].mxu0
      %1006 = vmatprep.mubr.f32.mxu0 0.0
      %1007 = vmatmul.mubr.f32.gmra.mrb[0].mxu0 %v823
      %v1008 = vpop.f32.mrb[0].mxu0
      %v1009 = vadd.f32 %v753, %v1008
      %v1010 = vpop.f32.mrb[0].mxu0
      %1011 = vmatprep.mubr.f32.mxu0 0.0
      %1012 = vmatmul.mubr.f32.gmra.mrb[0].mxu0 %v826
      %v1013 = vpop.f32.mrb[0].mxu0
      %v1014 = vadd.f32 %v753, %v1013
      %v1015 = vpop.f32.mrb[0].mxu0
      %1016 = vdwg.mxu0
      %v1017 = vmax.f32 %v899, 0.0
      %v1018 = vmax.f32 %v904, 0.0
      %v1019 = vmax.f32 %v909, 0.0
      %v1020 = vmax.f32 %v914, 0.0
      %v1021 = vmax.f32 %v919, 0.0
      %v1022 = vmax.f32 %v924, 0.0
      %v1023 = vmax.f32 %v929, 0.0
      %v1024 = vmax.f32 %v934, 0.0
      %v1025 = vmax.f32 %v939, 0.0
      %v1026 = vmax.f32 %v944, 0.0
      %v1027 = vmax.f32 %v949, 0.0
      %v1028 = vmax.f32 %v954, 0.0
      %v1029 = vmax.f32 %v959, 0.0
      %v1030 = vmax.f32 %v964, 0.0
      %v1031 = vmax.f32 %v969, 0.0
      %v1032 = vmax.f32 %v974, 0.0
      %v1033 = vmax.f32 %v979, 0.0
      %v1034 = vmax.f32 %v984, 0.0
      %v1035 = vmax.f32 %v989, 0.0
      %v1036 = vmax.f32 %v994, 0.0
      %v1037 = vmax.f32 %v999, 0.0
      %v1038 = vmax.f32 %v1004, 0.0
      %v1039 = vmax.f32 %v1009, 0.0
      %v1040 = vmax.f32 %v1014, 0.0
      %vm1041 = vcmask 64512
      %1042 = vst.msk [vmem:[#allocation2 + $0x4] sm:$0xff] %vm1041, %v1017
      %1043 = vst.msk [vmem:[#allocation2 + $0xc] sm:$0xff] %vm1041, %v1018
      %1044 = vst.msk [vmem:[#allocation2 + $0x14] sm:$0xff] %vm1041, %v1019
      %1045 = vst.msk [vmem:[#allocation2 + $0x1c] sm:$0xff] %vm1041, %v1020
      %1046 = vst.msk [vmem:[#allocation2 + $0x24] sm:$0xff] %vm1041, %v1021
      %1047 = vst.msk [vmem:[#allocation2 + $0x2c] sm:$0xff] %vm1041, %v1022
      %1048 = vst.msk [vmem:[#allocation2 + $0x34] sm:$0xff] %vm1041, %v1023
      %1049 = vst.msk [vmem:[#allocation2 + $0x3c] sm:$0xff] %vm1041, %v1024
      %1050 = vst.msk [vmem:[#allocation2 + $0x44] sm:$0xff] %vm1041, %v1025
      %1051 = vst.msk [vmem:[#allocation2 + $0x4c] sm:$0xff] %vm1041, %v1026
      %1052 = vst.msk [vmem:[#allocation2 + $0x54] sm:$0xff] %vm1041, %v1027
      %1053 = vst.msk [vmem:[#allocation2 + $0x5c] sm:$0xff] %vm1041, %v1028
      %1054 = vst.msk [vmem:[#allocation2 + $0x64] sm:$0xff] %vm1041, %v1029
      %1055 = vst.msk [vmem:[#allocation2 + $0x6c] sm:$0xff] %vm1041, %v1030
      %1056 = vst.msk [vmem:[#allocation2 + $0x74] sm:$0xff] %vm1041, %v1031
      %1057 = vst.msk [vmem:[#allocation2 + $0x7c] sm:$0xff] %vm1041, %v1032
      %1058 = vst.msk [vmem:[#allocation2 + $0x84] sm:$0xff] %vm1041, %v1033
      %1059 = vst.msk [vmem:[#allocation2 + $0x8c] sm:$0xff] %vm1041, %v1034
      %1060 = vst.msk [vmem:[#allocation2 + $0x94] sm:$0xff] %vm1041, %v1035
      %1061 = vst.msk [vmem:[#allocation2 + $0x9c] sm:$0xff] %vm1041, %v1036
      %1062 = vst.msk [vmem:[#allocation2 + $0xa4] sm:$0xff] %vm1041, %v1037
      %1063 = vst.msk [vmem:[#allocation2 + $0xac] sm:$0xff] %vm1041, %v1038
      %1064 = vst.msk [vmem:[#allocation2 + $0xb4] sm:$0xff] %vm1041, %v1039
      %vm1065 = vcmask 57344
      %1066 = vst.msk [vmem:[#allocation2 + $0xbc] sm:$0x1] %vm1065, %v1040
      %v1067 = vld [vmem:[%s4] sm:$0x1]
      %s1068 = scalar_lea.vmem [#allocation2], 1
      %v1069 = vld [vmem:[%s1068] ss:$4 sm:$0xff]
      %s1070 = scalar_lea.vmem [#allocation2], 33
      %v1071 = vld [vmem:[%s1070] ss:$4 sm:$0xff]
      %s1072 = scalar_lea.vmem [#allocation2], 65
      %v1073 = vld [vmem:[%s1072] ss:$4 sm:$0xff]
      %s1074 = scalar_lea.vmem [#allocation2], 97
      %v1075 = vld [vmem:[%s1074] ss:$4 sm:$0xff]
      %s1076 = scalar_lea.vmem [#allocation2], 129
      %v1077 = vld [vmem:[%s1076] ss:$4 sm:$0xff]
      %s1078 = scalar_lea.vmem [#allocation2], 161
      %v1079 = vld [vmem:[%s1078] ss:$4 sm:$0x7f]
      %v1080 = vld [vmem:[%s3] sm:$0xff]
      %s1081 = scalar_lea.vmem [#allocation2], 2
      %v1082 = vld [vmem:[%s1081] ss:$4 sm:$0xff]
      %s1083 = scalar_lea.vmem [#allocation2], 34
      %v1084 = vld [vmem:[%s1083] ss:$4 sm:$0xff]
      %s1085 = scalar_lea.vmem [#allocation2], 66
      %v1086 = vld [vmem:[%s1085] ss:$4 sm:$0xff]
      %s1087 = scalar_lea.vmem [#allocation2], 98
      %v1088 = vld [vmem:[%s1087] ss:$4 sm:$0xff]
      %s1089 = scalar_lea.vmem [#allocation2], 130
      %v1090 = vld [vmem:[%s1089] ss:$4 sm:$0xff]
      %s1091 = scalar_lea.vmem [#allocation2], 162
      %v1092 = vld [vmem:[%s1091] ss:$4 sm:$0x7f]
      %v1093 = vld [vmem:[%s3 + $0x8] sm:$0xff]
      %v1095 = vsel %vm1041, %v1082, 0
      %v1098 = vsel %vm1041, %v1084, 0
      %v1101 = vsel %vm1041, %v1086, 0
      %v1104 = vsel %vm1041, %v1088, 0
      %v1107 = vsel %vm1041, %v1090, 0
      %v1110 = vsel %vm1041, %v1092, 0
      %1112 = vmatprep.subr.mxu0 0.0
      %1113 = vmatpush1.msra.mxu0 %v1093
      %1114 = vmatprep.subr.mxu0 0.0
      %1115 = vmatpush1.msra.mxu0 0.0
      %1116 = vmatprep.subr.mxu0 0.0
      %1117 = vmatpush1.msra.mxu0 0.0
      %1118 = vmatprep.subr.mxu0 0.0
      %1119 = vmatpush1.msra.mxu0 0.0
      %1120 = vmatprep.subr.mxu0 0.0
      %1121 = vmatpush1.msra.mxu0 0.0
      %1122 = vmatprep.subr.mxu0 0.0
      %1123 = vmatpush1.msra.mxu0 0.0
      %1124 = vmatprep.subr.mxu0 0.0
      %1125 = vmatpush1.msra.mxu0 0.0
      %1126 = vmatprep.subr.mxu0 0.0
      %1127 = vmatpush1.msra.mxu0 0.0
      %1128 = vmatprep.subr.mxu0 0.0
      %1129 = vmatpush1.msra.mxu0 0.0
      %1130 = vmatprep.subr.mxu0 0.0
      %1131 = vmatpush1.msra.mxu0 0.0
      %1132 = vmatprep.subr.mxu0 0.0
      %1133 = vmatpush1.msra.mxu0 0.0
      %1134 = vmatprep.subr.mxu0 0.0
      %1135 = vmatpush1.msra.mxu0 0.0
      %1136 = vmatprep.subr.mxu0 0.0
      %1137 = vmatpush1.msra.mxu0 0.0
      %1138 = vmatprep.subr.mxu0 0.0
      %1139 = vmatpush1.msra.mxu0 0.0
      %1140 = vmatprep.subr.mxu0 0.0
      %1141 = vmatpush1.msra.mxu0 0.0
      %1142 = vmatprep.subr.mxu0 0.0
      %1143 = vmatpush1.msra.mxu0 0.0
      %1144 = vmatprep.subr.mxu0 0.0
      %1145 = vmatpush1.msra.mxu0 0.0
      %1146 = vmatprep.subr.mxu0 0.0
      %1147 = vmatpush1.msra.mxu0 0.0
      %1148 = vmatprep.subr.mxu0 0.0
      %1149 = vmatpush1.msra.mxu0 0.0
      %1150 = vmatprep.subr.mxu0 0.0
      %1151 = vmatpush1.msra.mxu0 0.0
      %1152 = vmatprep.subr.mxu0 0.0
      %1153 = vmatpush1.msra.mxu0 0.0
      %1154 = vmatprep.subr.mxu0 0.0
      %1155 = vmatpush1.msra.mxu0 0.0
      %1156 = vmatprep.subr.mxu0 0.0
      %1157 = vmatpush1.msra.mxu0 0.0
      %1158 = vmatprep.subr.mxu0 0.0
      %1159 = vmatpush1.msra.mxu0 0.0
      %1160 = vmatprep.subr.mxu0 0.0
      %1161 = vmatpush1.msra.mxu0 0.0
      %1162 = vmatprep.subr.mxu0 0.0
      %1163 = vmatpush1.msra.mxu0 0.0
      %1164 = vmatprep.subr.mxu0 0.0
      %1165 = vmatpush1.msra.mxu0 0.0
      %1166 = vmatprep.subr.mxu0 0.0
      %1167 = vmatpush1.msra.mxu0 0.0
      %1168 = vmatprep.subr.mxu0 0.0
      %1169 = vmatpush1.msra.mxu0 0.0
      %1170 = vmatprep.subr.mxu0 0.0
      %1171 = vmatpush1.msra.mxu0 0.0
      %1172 = vmatprep.subr.mxu0 0.0
      %1173 = vmatpush1.msra.mxu0 0.0
      %1174 = vmatprep.subr.mxu0 0.0
      %1175 = vmatpush1.msra.mxu0 0.0
      %1176 = vmatprep.mubr.f32.mxu0 0.0
      %1177 = vmatmul.mubr.f32.gmra.mrb[0].mxu0 %v1095
      %v1178 = vpop.f32.mrb[0].mxu0
      %v1179 = vadd.f32 0.0, %v1178
      %v1180 = vpop.f32.mrb[0].mxu0
      %1181 = vmatprep.mubr.f32.mxu0 0.0
      %1182 = vmatmul.mubr.f32.gmra.mrb[0].mxu0 %v1098
      %v1183 = vpop.f32.mrb[0].mxu0
      %v1184 = vadd.f32 0.0, %v1183
      %v1185 = vpop.f32.mrb[0].mxu0
      %1186 = vmatprep.mubr.f32.mxu0 0.0
      %1187 = vmatmul.mubr.f32.gmra.mrb[0].mxu0 %v1101
      %v1188 = vpop.f32.mrb[0].mxu0
      %v1189 = vadd.f32 0.0, %v1188
      %v1190 = vpop.f32.mrb[0].mxu0
      %1191 = vmatprep.mubr.f32.mxu0 0.0
      %1192 = vmatmul.mubr.f32.gmra.mrb[0].mxu0 %v1104
      %v1193 = vpop.f32.mrb[0].mxu0
      %v1194 = vadd.f32 0.0, %v1193
      %v1195 = vpop.f32.mrb[0].mxu0
      %1196 = vmatprep.mubr.f32.mxu0 0.0
      %1197 = vmatmul.mubr.f32.gmra.mrb[0].mxu0 %v1107
      %v1198 = vpop.f32.mrb[0].mxu0
      %v1199 = vadd.f32 0.0, %v1198
      %v1200 = vpop.f32.mrb[0].mxu0
      %1201 = vmatprep.mubr.f32.mxu0 0.0
      %1202 = vmatmul.mubr.f32.gmra.mrb[0].mxu0 %v1110
      %v1203 = vpop.f32.mrb[0].mxu0
      %v1204 = vadd.f32 0.0, %v1203
      %v1205 = vpop.f32.mrb[0].mxu0
      %1206 = vdwg.mxu0
      %v1208 = vsel %vm1041, %v1069, 0
      %v1211 = vsel %vm1041, %v1071, 0
      %v1214 = vsel %vm1041, %v1073, 0
      %v1217 = vsel %vm1041, %v1075, 0
      %v1220 = vsel %vm1041, %v1077, 0
      %v1223 = vsel %vm1041, %v1079, 0
      %1225 = vmatprep.subr.mxu0 0.0
      %1226 = vmatpush1.msra.mxu0 %v1080
      %1227 = vmatprep.subr.mxu0 0.0
      %1228 = vmatpush1.msra.mxu0 0.0
      %1229 = vmatprep.subr.mxu0 0.0
      %1230 = vmatpush1.msra.mxu0 0.0
      %1231 = vmatprep.subr.mxu0 0.0
      %1232 = vmatpush1.msra.mxu0 0.0
      %1233 = vmatprep.subr.mxu0 0.0
      %1234 = vmatpush1.msra.mxu0 0.0
      %1235 = vmatprep.subr.mxu0 0.0
      %1236 = vmatpush1.msra.mxu0 0.0
      %1237 = vmatprep.subr.mxu0 0.0
      %1238 = vmatpush1.msra.mxu0 0.0
      %1239 = vmatprep.subr.mxu0 0.0
      %1240 = vmatpush1.msra.mxu0 0.0
      %1241 = vmatprep.subr.mxu0 0.0
      %1242 = vmatpush1.msra.mxu0 0.0
      %1243 = vmatprep.subr.mxu0 0.0
      %1244 = vmatpush1.msra.mxu0 0.0
      %1245 = vmatprep.subr.mxu0 0.0
      %1246 = vmatpush1.msra.mxu0 0.0
      %1247 = vmatprep.subr.mxu0 0.0
      %1248 = vmatpush1.msra.mxu0 0.0
      %1249 = vmatprep.subr.mxu0 0.0
      %1250 = vmatpush1.msra.mxu0 0.0
      %1251 = vmatprep.subr.mxu0 0.0
      %1252 = vmatpush1.msra.mxu0 0.0
      %1253 = vmatprep.subr.mxu0 0.0
      %1254 = vmatpush1.msra.mxu0 0.0
      %1255 = vmatprep.subr.mxu0 0.0
      %1256 = vmatpush1.msra.mxu0 0.0
      %1257 = vmatprep.subr.mxu0 0.0
      %1258 = vmatpush1.msra.mxu0 0.0
      %1259 = vmatprep.subr.mxu0 0.0
      %1260 = vmatpush1.msra.mxu0 0.0
      %1261 = vmatprep.subr.mxu0 0.0
      %1262 = vmatpush1.msra.mxu0 0.0
      %1263 = vmatprep.subr.mxu0 0.0
      %1264 = vmatpush1.msra.mxu0 0.0
      %1265 = vmatprep.subr.mxu0 0.0
      %1266 = vmatpush1.msra.mxu0 0.0
      %1267 = vmatprep.subr.mxu0 0.0
      %1268 = vmatpush1.msra.mxu0 0.0
      %1269 = vmatprep.subr.mxu0 0.0
      %1270 = vmatpush1.msra.mxu0 0.0
      %1271 = vmatprep.subr.mxu0 0.0
      %1272 = vmatpush1.msra.mxu0 0.0
      %1273 = vmatprep.subr.mxu0 0.0
      %1274 = vmatpush1.msra.mxu0 0.0
      %1275 = vmatprep.subr.mxu0 0.0
      %1276 = vmatpush1.msra.mxu0 0.0
      %1277 = vmatprep.subr.mxu0 0.0
      %1278 = vmatpush1.msra.mxu0 0.0
      %1279 = vmatprep.subr.mxu0 0.0
      %1280 = vmatpush1.msra.mxu0 0.0
      %1281 = vmatprep.subr.mxu0 0.0
      %1282 = vmatpush1.msra.mxu0 0.0
      %1283 = vmatprep.subr.mxu0 0.0
      %1284 = vmatpush1.msra.mxu0 0.0
      %1285 = vmatprep.subr.mxu0 0.0
      %1286 = vmatpush1.msra.mxu0 0.0
      %1287 = vmatprep.subr.mxu0 0.0
      %1288 = vmatpush1.msra.mxu0 0.0
      %1289 = vmatprep.mubr.f32.mxu0 0.0
      %1290 = vmatmul.mubr.f32.gmra.mrb[0].mxu0 %v1208
      %v1291 = vpop.f32.mrb[0].mxu0
      %v1292 = vadd.f32 %v1179, %v1291
      %v1293 = vpop.f32.mrb[0].mxu0
      %1294 = vmatprep.mubr.f32.mxu0 0.0
      %1295 = vmatmul.mubr.f32.gmra.mrb[0].mxu0 %v1211
      %v1296 = vpop.f32.mrb[0].mxu0
      %v1297 = vadd.f32 %v1184, %v1296
      %v1298 = vpop.f32.mrb[0].mxu0
      %1299 = vmatprep.mubr.f32.mxu0 0.0
      %1300 = vmatmul.mubr.f32.gmra.mrb[0].mxu0 %v1214
      %v1301 = vpop.f32.mrb[0].mxu0
      %v1302 = vadd.f32 %v1189, %v1301
      %v1303 = vpop.f32.mrb[0].mxu0
      %1304 = vmatprep.mubr.f32.mxu0 0.0
      %1305 = vmatmul.mubr.f32.gmra.mrb[0].mxu0 %v1217
      %v1306 = vpop.f32.mrb[0].mxu0
      %v1307 = vadd.f32 %v1194, %v1306
      %v1308 = vpop.f32.mrb[0].mxu0
      %1309 = vmatprep.mubr.f32.mxu0 0.0
      %1310 = vmatmul.mubr.f32.gmra.mrb[0].mxu0 %v1220
      %v1311 = vpop.f32.mrb[0].mxu0
      %v1312 = vadd.f32 %v1199, %v1311
      %v1313 = vpop.f32.mrb[0].mxu0
      %1314 = vmatprep.mubr.f32.mxu0 0.0
      %1315 = vmatmul.mubr.f32.gmra.mrb[0].mxu0 %v1223
      %v1316 = vpop.f32.mrb[0].mxu0
      %v1317 = vadd.f32 %v1204, %v1316
      %v1318 = vpop.f32.mrb[0].mxu0
      %1319 = vdwg.mxu0
      %s1320 = scalar_lea.vmem [#allocation2], 3
      %v1321 = vld [vmem:[%s1320] ss:$4 sm:$0xff]
      %s1322 = scalar_lea.vmem [#allocation2], 35
      %v1323 = vld [vmem:[%s1322] ss:$4 sm:$0xff]
      %s1324 = scalar_lea.vmem [#allocation2], 67
      %v1325 = vld [vmem:[%s1324] ss:$4 sm:$0xff]
      %s1326 = scalar_lea.vmem [#allocation2], 99
      %v1327 = vld [vmem:[%s1326] ss:$4 sm:$0xff]
      %s1328 = scalar_lea.vmem [#allocation2], 131
      %v1329 = vld [vmem:[%s1328] ss:$4 sm:$0xff]
      %s1330 = scalar_lea.vmem [#allocation2], 163
      %v1331 = vld [vmem:[%s1330] ss:$4 sm:$0x7f]
      %v1332 = vld [vmem:[%s3 + $0x10] sm:$0xff]
      %v1334 = vsel %vm1041, %v1321, 0
      %v1337 = vsel %vm1041, %v1323, 0
      %v1340 = vsel %vm1041, %v1325, 0
      %v1343 = vsel %vm1041, %v1327, 0
      %v1346 = vsel %vm1041, %v1329, 0
      %v1349 = vsel %vm1041, %v1331, 0
      %1351 = vmatprep.subr.mxu0 0.0
      %1352 = vmatpush1.msra.mxu0 %v1332
      %1353 = vmatprep.subr.mxu0 0.0
      %1354 = vmatpush1.msra.mxu0 0.0
      %1355 = vmatprep.subr.mxu0 0.0
      %1356 = vmatpush1.msra.mxu0 0.0
      %1357 = vmatprep.subr.mxu0 0.0
      %1358 = vmatpush1.msra.mxu0 0.0
      %1359 = vmatprep.subr.mxu0 0.0
      %1360 = vmatpush1.msra.mxu0 0.0
      %1361 = vmatprep.subr.mxu0 0.0
      %1362 = vmatpush1.msra.mxu0 0.0
      %1363 = vmatprep.subr.mxu0 0.0
      %1364 = vmatpush1.msra.mxu0 0.0
      %1365 = vmatprep.subr.mxu0 0.0
      %1366 = vmatpush1.msra.mxu0 0.0
      %1367 = vmatprep.subr.mxu0 0.0
      %1368 = vmatpush1.msra.mxu0 0.0
      %1369 = vmatprep.subr.mxu0 0.0
      %1370 = vmatpush1.msra.mxu0 0.0
      %1371 = vmatprep.subr.mxu0 0.0
      %1372 = vmatpush1.msra.mxu0 0.0
      %1373 = vmatprep.subr.mxu0 0.0
      %1374 = vmatpush1.msra.mxu0 0.0
      %1375 = vmatprep.subr.mxu0 0.0
      %1376 = vmatpush1.msra.mxu0 0.0
      %1377 = vmatprep.subr.mxu0 0.0
      %1378 = vmatpush1.msra.mxu0 0.0
      %1379 = vmatprep.subr.mxu0 0.0
      %1380 = vmatpush1.msra.mxu0 0.0
      %1381 = vmatprep.subr.mxu0 0.0
      %1382 = vmatpush1.msra.mxu0 0.0
      %1383 = vmatprep.subr.mxu0 0.0
      %1384 = vmatpush1.msra.mxu0 0.0
      %1385 = vmatprep.subr.mxu0 0.0
      %1386 = vmatpush1.msra.mxu0 0.0
      %1387 = vmatprep.subr.mxu0 0.0
      %1388 = vmatpush1.msra.mxu0 0.0
      %1389 = vmatprep.subr.mxu0 0.0
      %1390 = vmatpush1.msra.mxu0 0.0
      %1391 = vmatprep.subr.mxu0 0.0
      %1392 = vmatpush1.msra.mxu0 0.0
      %1393 = vmatprep.subr.mxu0 0.0
      %1394 = vmatpush1.msra.mxu0 0.0
      %1395 = vmatprep.subr.mxu0 0.0
      %1396 = vmatpush1.msra.mxu0 0.0
      %1397 = vmatprep.subr.mxu0 0.0
      %1398 = vmatpush1.msra.mxu0 0.0
      %1399 = vmatprep.subr.mxu0 0.0
      %1400 = vmatpush1.msra.mxu0 0.0
      %1401 = vmatprep.subr.mxu0 0.0
      %1402 = vmatpush1.msra.mxu0 0.0
      %1403 = vmatprep.subr.mxu0 0.0
      %1404 = vmatpush1.msra.mxu0 0.0
      %1405 = vmatprep.subr.mxu0 0.0
      %1406 = vmatpush1.msra.mxu0 0.0
      %1407 = vmatprep.subr.mxu0 0.0
      %1408 = vmatpush1.msra.mxu0 0.0
      %1409 = vmatprep.subr.mxu0 0.0
      %1410 = vmatpush1.msra.mxu0 0.0
      %1411 = vmatprep.subr.mxu0 0.0
      %1412 = vmatpush1.msra.mxu0 0.0
      %1413 = vmatprep.subr.mxu0 0.0
      %1414 = vmatpush1.msra.mxu0 0.0
      %1415 = vmatprep.mubr.f32.mxu0 0.0
      %1416 = vmatmul.mubr.f32.gmra.mrb[0].mxu0 %v1334
      %v1417 = vpop.f32.mrb[0].mxu0
      %v1418 = vadd.f32 0.0, %v1417
      %v1419 = vpop.f32.mrb[0].mxu0
      %1420 = vmatprep.mubr.f32.mxu0 0.0
      %1421 = vmatmul.mubr.f32.gmra.mrb[0].mxu0 %v1337
      %v1422 = vpop.f32.mrb[0].mxu0
      %v1423 = vadd.f32 0.0, %v1422
      %v1424 = vpop.f32.mrb[0].mxu0
      %1425 = vmatprep.mubr.f32.mxu0 0.0
      %1426 = vmatmul.mubr.f32.gmra.mrb[0].mxu0 %v1340
      %v1427 = vpop.f32.mrb[0].mxu0
      %v1428 = vadd.f32 0.0, %v1427
      %v1429 = vpop.f32.mrb[0].mxu0
      %1430 = vmatprep.mubr.f32.mxu0 0.0
      %1431 = vmatmul.mubr.f32.gmra.mrb[0].mxu0 %v1343
      %v1432 = vpop.f32.mrb[0].mxu0
      %v1433 = vadd.f32 0.0, %v1432
      %v1434 = vpop.f32.mrb[0].mxu0
      %1435 = vmatprep.mubr.f32.mxu0 0.0
      %1436 = vmatmul.mubr.f32.gmra.mrb[0].mxu0 %v1346
      %v1437 = vpop.f32.mrb[0].mxu0
      %v1438 = vadd.f32 0.0, %v1437
      %v1439 = vpop.f32.mrb[0].mxu0
      %1440 = vmatprep.mubr.f32.mxu0 0.0
      %1441 = vmatmul.mubr.f32.gmra.mrb[0].mxu0 %v1349
      %v1442 = vpop.f32.mrb[0].mxu0
      %v1443 = vadd.f32 0.0, %v1442
      %v1444 = vpop.f32.mrb[0].mxu0
      %1445 = vdwg.mxu0
      %v1446 = vadd.f32 %v1292, %v1418
      %v1447 = vadd.f32 %v1297, %v1423
      %v1448 = vadd.f32 %v1302, %v1428
      %v1449 = vadd.f32 %v1307, %v1433
      %v1450 = vadd.f32 %v1312, %v1438
      %v1451 = vadd.f32 %v1317, %v1443
      %s1452 = scalar_lea.vmem [#allocation2], 4
      %v1453 = vld [vmem:[%s1452] ss:$4 sm:$0xff]
      %s1454 = scalar_lea.vmem [#allocation2], 36
      %v1455 = vld [vmem:[%s1454] ss:$4 sm:$0xff]
      %s1456 = scalar_lea.vmem [#allocation2], 68
      %v1457 = vld [vmem:[%s1456] ss:$4 sm:$0xff]
      %s1458 = scalar_lea.vmem [#allocation2], 100
      %v1459 = vld [vmem:[%s1458] ss:$4 sm:$0xff]
      %s1460 = scalar_lea.vmem [#allocation2], 132
      %v1461 = vld [vmem:[%s1460] ss:$4 sm:$0xff]
      %s1462 = scalar_lea.vmem [#allocation2], 164
      %v1463 = vld [vmem:[%s1462] ss:$4 sm:$0x7f]
      %v1464 = vld [vmem:[%s3 + $0x18] sm:$0xff]
      %v1466 = vsel %vm1041, %v1453, 0
      %v1469 = vsel %vm1041, %v1455, 0
      %v1472 = vsel %vm1041, %v1457, 0
      %v1475 = vsel %vm1041, %v1459, 0
      %v1478 = vsel %vm1041, %v1461, 0
      %v1481 = vsel %vm1041, %v1463, 0
      %1483 = vmatprep.subr.mxu0 0.0
      %1484 = vmatpush1.msra.mxu0 %v1464
      %1485 = vmatprep.subr.mxu0 0.0
      %1486 = vmatpush1.msra.mxu0 0.0
      %1487 = vmatprep.subr.mxu0 0.0
      %1488 = vmatpush1.msra.mxu0 0.0
      %1489 = vmatprep.subr.mxu0 0.0
      %1490 = vmatpush1.msra.mxu0 0.0
      %1491 = vmatprep.subr.mxu0 0.0
      %1492 = vmatpush1.msra.mxu0 0.0
      %1493 = vmatprep.subr.mxu0 0.0
      %1494 = vmatpush1.msra.mxu0 0.0
      %1495 = vmatprep.subr.mxu0 0.0
      %1496 = vmatpush1.msra.mxu0 0.0
      %1497 = vmatprep.subr.mxu0 0.0
      %1498 = vmatpush1.msra.mxu0 0.0
      %1499 = vmatprep.subr.mxu0 0.0
      %1500 = vmatpush1.msra.mxu0 0.0
      %1501 = vmatprep.subr.mxu0 0.0
      %1502 = vmatpush1.msra.mxu0 0.0
      %1503 = vmatprep.subr.mxu0 0.0
      %1504 = vmatpush1.msra.mxu0 0.0
      %1505 = vmatprep.subr.mxu0 0.0
      %1506 = vmatpush1.msra.mxu0 0.0
      %1507 = vmatprep.subr.mxu0 0.0
      %1508 = vmatpush1.msra.mxu0 0.0
      %1509 = vmatprep.subr.mxu0 0.0
      %1510 = vmatpush1.msra.mxu0 0.0
      %1511 = vmatprep.subr.mxu0 0.0
      %1512 = vmatpush1.msra.mxu0 0.0
      %1513 = vmatprep.subr.mxu0 0.0
      %1514 = vmatpush1.msra.mxu0 0.0
      %1515 = vmatprep.subr.mxu0 0.0
      %1516 = vmatpush1.msra.mxu0 0.0
      %1517 = vmatprep.subr.mxu0 0.0
      %1518 = vmatpush1.msra.mxu0 0.0
      %1519 = vmatprep.subr.mxu0 0.0
      %1520 = vmatpush1.msra.mxu0 0.0
      %1521 = vmatprep.subr.mxu0 0.0
      %1522 = vmatpush1.msra.mxu0 0.0
      %1523 = vmatprep.subr.mxu0 0.0
      %1524 = vmatpush1.msra.mxu0 0.0
      %1525 = vmatprep.subr.mxu0 0.0
      %1526 = vmatpush1.msra.mxu0 0.0
      %1527 = vmatprep.subr.mxu0 0.0
      %1528 = vmatpush1.msra.mxu0 0.0
      %1529 = vmatprep.subr.mxu0 0.0
      %1530 = vmatpush1.msra.mxu0 0.0
      %1531 = vmatprep.subr.mxu0 0.0
      %1532 = vmatpush1.msra.mxu0 0.0
      %1533 = vmatprep.subr.mxu0 0.0
      %1534 = vmatpush1.msra.mxu0 0.0
      %1535 = vmatprep.subr.mxu0 0.0
      %1536 = vmatpush1.msra.mxu0 0.0
      %1537 = vmatprep.subr.mxu0 0.0
      %1538 = vmatpush1.msra.mxu0 0.0
      %1539 = vmatprep.subr.mxu0 0.0
      %1540 = vmatpush1.msra.mxu0 0.0
      %1541 = vmatprep.subr.mxu0 0.0
      %1542 = vmatpush1.msra.mxu0 0.0
      %1543 = vmatprep.subr.mxu0 0.0
      %1544 = vmatpush1.msra.mxu0 0.0
      %1545 = vmatprep.subr.mxu0 0.0
      %1546 = vmatpush1.msra.mxu0 0.0
      %1547 = vmatprep.mubr.f32.mxu0 0.0
      %1548 = vmatmul.mubr.f32.gmra.mrb[0].mxu0 %v1466
      %v1549 = vpop.f32.mrb[0].mxu0
      %v1550 = vadd.f32 0.0, %v1549
      %v1551 = vpop.f32.mrb[0].mxu0
      %1552 = vmatprep.mubr.f32.mxu0 0.0
      %1553 = vmatmul.mubr.f32.gmra.mrb[0].mxu0 %v1469
      %v1554 = vpop.f32.mrb[0].mxu0
      %v1555 = vadd.f32 0.0, %v1554
      %v1556 = vpop.f32.mrb[0].mxu0
      %1557 = vmatprep.mubr.f32.mxu0 0.0
      %1558 = vmatmul.mubr.f32.gmra.mrb[0].mxu0 %v1472
      %v1559 = vpop.f32.mrb[0].mxu0
      %v1560 = vadd.f32 0.0, %v1559
      %v1561 = vpop.f32.mrb[0].mxu0
      %1562 = vmatprep.mubr.f32.mxu0 0.0
      %1563 = vmatmul.mubr.f32.gmra.mrb[0].mxu0 %v1475
      %v1564 = vpop.f32.mrb[0].mxu0
      %v1565 = vadd.f32 0.0, %v1564
      %v1566 = vpop.f32.mrb[0].mxu0
      %1567 = vmatprep.mubr.f32.mxu0 0.0
      %1568 = vmatmul.mubr.f32.gmra.mrb[0].mxu0 %v1478
      %v1569 = vpop.f32.mrb[0].mxu0
      %v1570 = vadd.f32 0.0, %v1569
      %v1571 = vpop.f32.mrb[0].mxu0
      %1572 = vmatprep.mubr.f32.mxu0 0.0
      %1573 = vmatmul.mubr.f32.gmra.mrb[0].mxu0 %v1481
      %v1574 = vpop.f32.mrb[0].mxu0
      %v1575 = vadd.f32 0.0, %v1574
      %v1576 = vpop.f32.mrb[0].mxu0
      %1577 = vdwg.mxu0
      %v1578 = vadd.f32 %v1446, %v1550
      %v1579 = vadd.f32 %v1447, %v1555
      %v1580 = vadd.f32 %v1448, %v1560
      %v1581 = vadd.f32 %v1449, %v1565
      %v1582 = vadd.f32 %v1450, %v1570
      %v1583 = vadd.f32 %v1451, %v1575
      %s1584 = scalar_lea.vmem [#allocation2], 5
      %v1585 = vld [vmem:[%s1584] ss:$4 sm:$0xff]
      %s1586 = scalar_lea.vmem [#allocation2], 37
      %v1587 = vld [vmem:[%s1586] ss:$4 sm:$0xff]
      %s1588 = scalar_lea.vmem [#allocation2], 69
      %v1589 = vld [vmem:[%s1588] ss:$4 sm:$0xff]
      %s1590 = scalar_lea.vmem [#allocation2], 101
      %v1591 = vld [vmem:[%s1590] ss:$4 sm:$0xff]
      %s1592 = scalar_lea.vmem [#allocation2], 133
      %v1593 = vld [vmem:[%s1592] ss:$4 sm:$0xff]
      %s1594 = scalar_lea.vmem [#allocation2], 165
      %v1595 = vld [vmem:[%s1594] ss:$4 sm:$0x7f]
      %v1596 = vld [vmem:[%s3 + $0x20] sm:$0xff]
      %v1598 = vsel %vm1041, %v1585, 0
      %v1601 = vsel %vm1041, %v1587, 0
      %v1604 = vsel %vm1041, %v1589, 0
      %v1607 = vsel %vm1041, %v1591, 0
      %v1610 = vsel %vm1041, %v1593, 0
      %v1613 = vsel %vm1041, %v1595, 0
      %1615 = vmatprep.subr.mxu0 0.0
      %1616 = vmatpush1.msra.mxu0 %v1596
      %1617 = vmatprep.subr.mxu0 0.0
      %1618 = vmatpush1.msra.mxu0 0.0
      %1619 = vmatprep.subr.mxu0 0.0
      %1620 = vmatpush1.msra.mxu0 0.0
      %1621 = vmatprep.subr.mxu0 0.0
      %1622 = vmatpush1.msra.mxu0 0.0
      %1623 = vmatprep.subr.mxu0 0.0
      %1624 = vmatpush1.msra.mxu0 0.0
      %1625 = vmatprep.subr.mxu0 0.0
      %1626 = vmatpush1.msra.mxu0 0.0
      %1627 = vmatprep.subr.mxu0 0.0
      %1628 = vmatpush1.msra.mxu0 0.0
      %1629 = vmatprep.subr.mxu0 0.0
      %1630 = vmatpush1.msra.mxu0 0.0
      %1631 = vmatprep.subr.mxu0 0.0
      %1632 = vmatpush1.msra.mxu0 0.0
      %1633 = vmatprep.subr.mxu0 0.0
      %1634 = vmatpush1.msra.mxu0 0.0
      %1635 = vmatprep.subr.mxu0 0.0
      %1636 = vmatpush1.msra.mxu0 0.0
      %1637 = vmatprep.subr.mxu0 0.0
      %1638 = vmatpush1.msra.mxu0 0.0
      %1639 = vmatprep.subr.mxu0 0.0
      %1640 = vmatpush1.msra.mxu0 0.0
      %1641 = vmatprep.subr.mxu0 0.0
      %1642 = vmatpush1.msra.mxu0 0.0
      %1643 = vmatprep.subr.mxu0 0.0
      %1644 = vmatpush1.msra.mxu0 0.0
      %1645 = vmatprep.subr.mxu0 0.0
      %1646 = vmatpush1.msra.mxu0 0.0
      %1647 = vmatprep.subr.mxu0 0.0
      %1648 = vmatpush1.msra.mxu0 0.0
      %1649 = vmatprep.subr.mxu0 0.0
      %1650 = vmatpush1.msra.mxu0 0.0
      %1651 = vmatprep.subr.mxu0 0.0
      %1652 = vmatpush1.msra.mxu0 0.0
      %1653 = vmatprep.subr.mxu0 0.0
      %1654 = vmatpush1.msra.mxu0 0.0
      %1655 = vmatprep.subr.mxu0 0.0
      %1656 = vmatpush1.msra.mxu0 0.0
      %1657 = vmatprep.subr.mxu0 0.0
      %1658 = vmatpush1.msra.mxu0 0.0
      %1659 = vmatprep.subr.mxu0 0.0
      %1660 = vmatpush1.msra.mxu0 0.0
      %1661 = vmatprep.subr.mxu0 0.0
      %1662 = vmatpush1.msra.mxu0 0.0
      %1663 = vmatprep.subr.mxu0 0.0
      %1664 = vmatpush1.msra.mxu0 0.0
      %1665 = vmatprep.subr.mxu0 0.0
      %1666 = vmatpush1.msra.mxu0 0.0
      %1667 = vmatprep.subr.mxu0 0.0
      %1668 = vmatpush1.msra.mxu0 0.0
      %1669 = vmatprep.subr.mxu0 0.0
      %1670 = vmatpush1.msra.mxu0 0.0
      %1671 = vmatprep.subr.mxu0 0.0
      %1672 = vmatpush1.msra.mxu0 0.0
      %1673 = vmatprep.subr.mxu0 0.0
      %1674 = vmatpush1.msra.mxu0 0.0
      %1675 = vmatprep.subr.mxu0 0.0
      %1676 = vmatpush1.msra.mxu0 0.0
      %1677 = vmatprep.subr.mxu0 0.0
      %1678 = vmatpush1.msra.mxu0 0.0
      %1679 = vmatprep.mubr.f32.mxu0 0.0
      %1680 = vmatmul.mubr.f32.gmra.mrb[0].mxu0 %v1598
      %v1681 = vpop.f32.mrb[0].mxu0
      %v1682 = vadd.f32 0.0, %v1681
      %v1683 = vpop.f32.mrb[0].mxu0
      %1684 = vmatprep.mubr.f32.mxu0 0.0
      %1685 = vmatmul.mubr.f32.gmra.mrb[0].mxu0 %v1601
      %v1686 = vpop.f32.mrb[0].mxu0
      %v1687 = vadd.f32 0.0, %v1686
      %v1688 = vpop.f32.mrb[0].mxu0
      %1689 = vmatprep.mubr.f32.mxu0 0.0
      %1690 = vmatmul.mubr.f32.gmra.mrb[0].mxu0 %v1604
      %v1691 = vpop.f32.mrb[0].mxu0
      %v1692 = vadd.f32 0.0, %v1691
      %v1693 = vpop.f32.mrb[0].mxu0
      %1694 = vmatprep.mubr.f32.mxu0 0.0
      %1695 = vmatmul.mubr.f32.gmra.mrb[0].mxu0 %v1607
      %v1696 = vpop.f32.mrb[0].mxu0
      %v1697 = vadd.f32 0.0, %v1696
      %v1698 = vpop.f32.mrb[0].mxu0
      %1699 = vmatprep.mubr.f32.mxu0 0.0
      %1700 = vmatmul.mubr.f32.gmra.mrb[0].mxu0 %v1610
      %v1701 = vpop.f32.mrb[0].mxu0
      %v1702 = vadd.f32 0.0, %v1701
      %v1703 = vpop.f32.mrb[0].mxu0
      %1704 = vmatprep.mubr.f32.mxu0 0.0
      %1705 = vmatmul.mubr.f32.gmra.mrb[0].mxu0 %v1613
      %v1706 = vpop.f32.mrb[0].mxu0
      %v1707 = vadd.f32 0.0, %v1706
      %v1708 = vpop.f32.mrb[0].mxu0
      %1709 = vdwg.mxu0
      %v1710 = vadd.f32 %v1578, %v1682
      %v1711 = vadd.f32 %v1579, %v1687
      %v1712 = vadd.f32 %v1580, %v1692
      %v1713 = vadd.f32 %v1581, %v1697
      %v1714 = vadd.f32 %v1582, %v1702
      %v1715 = vadd.f32 %v1583, %v1707
      %s1716 = scalar_lea.vmem [#allocation2], 6
      %v1717 = vld [vmem:[%s1716] ss:$4 sm:$0xff]
      %s1718 = scalar_lea.vmem [#allocation2], 38
      %v1719 = vld [vmem:[%s1718] ss:$4 sm:$0xff]
      %s1720 = scalar_lea.vmem [#allocation2], 70
      %v1721 = vld [vmem:[%s1720] ss:$4 sm:$0xff]
      %s1722 = scalar_lea.vmem [#allocation2], 102
      %v1723 = vld [vmem:[%s1722] ss:$4 sm:$0xff]
      %s1724 = scalar_lea.vmem [#allocation2], 134
      %v1725 = vld [vmem:[%s1724] ss:$4 sm:$0xff]
      %s1726 = scalar_lea.vmem [#allocation2], 166
      %v1727 = vld [vmem:[%s1726] ss:$4 sm:$0x7f]
      %v1728 = vld [vmem:[%s3 + $0x28] sm:$0xff]
      %v1730 = vsel %vm1041, %v1717, 0
      %v1733 = vsel %vm1041, %v1719, 0
      %v1736 = vsel %vm1041, %v1721, 0
      %v1739 = vsel %vm1041, %v1723, 0
      %v1742 = vsel %vm1041, %v1725, 0
      %v1745 = vsel %vm1041, %v1727, 0
      %1747 = vmatprep.subr.mxu0 0.0
      %1748 = vmatpush1.msra.mxu0 %v1728
      %1749 = vmatprep.subr.mxu0 0.0
      %1750 = vmatpush1.msra.mxu0 0.0
      %1751 = vmatprep.subr.mxu0 0.0
      %1752 = vmatpush1.msra.mxu0 0.0
      %1753 = vmatprep.subr.mxu0 0.0
      %1754 = vmatpush1.msra.mxu0 0.0
      %1755 = vmatprep.subr.mxu0 0.0
      %1756 = vmatpush1.msra.mxu0 0.0
      %1757 = vmatprep.subr.mxu0 0.0
      %1758 = vmatpush1.msra.mxu0 0.0
      %1759 = vmatprep.subr.mxu0 0.0
      %1760 = vmatpush1.msra.mxu0 0.0
      %1761 = vmatprep.subr.mxu0 0.0
      %1762 = vmatpush1.msra.mxu0 0.0
      %1763 = vmatprep.subr.mxu0 0.0
      %1764 = vmatpush1.msra.mxu0 0.0
      %1765 = vmatprep.subr.mxu0 0.0
      %1766 = vmatpush1.msra.mxu0 0.0
      %1767 = vmatprep.subr.mxu0 0.0
      %1768 = vmatpush1.msra.mxu0 0.0
      %1769 = vmatprep.subr.mxu0 0.0
      %1770 = vmatpush1.msra.mxu0 0.0
      %1771 = vmatprep.subr.mxu0 0.0
      %1772 = vmatpush1.msra.mxu0 0.0
      %1773 = vmatprep.subr.mxu0 0.0
      %1774 = vmatpush1.msra.mxu0 0.0
      %1775 = vmatprep.subr.mxu0 0.0
      %1776 = vmatpush1.msra.mxu0 0.0
      %1777 = vmatprep.subr.mxu0 0.0
      %1778 = vmatpush1.msra.mxu0 0.0
      %1779 = vmatprep.subr.mxu0 0.0
      %1780 = vmatpush1.msra.mxu0 0.0
      %1781 = vmatprep.subr.mxu0 0.0
      %1782 = vmatpush1.msra.mxu0 0.0
      %1783 = vmatprep.subr.mxu0 0.0
      %1784 = vmatpush1.msra.mxu0 0.0
      %1785 = vmatprep.subr.mxu0 0.0
      %1786 = vmatpush1.msra.mxu0 0.0
      %1787 = vmatprep.subr.mxu0 0.0
      %1788 = vmatpush1.msra.mxu0 0.0
      %1789 = vmatprep.subr.mxu0 0.0
      %1790 = vmatpush1.msra.mxu0 0.0
      %1791 = vmatprep.subr.mxu0 0.0
      %1792 = vmatpush1.msra.mxu0 0.0
      %1793 = vmatprep.subr.mxu0 0.0
      %1794 = vmatpush1.msra.mxu0 0.0
      %1795 = vmatprep.subr.mxu0 0.0
      %1796 = vmatpush1.msra.mxu0 0.0
      %1797 = vmatprep.subr.mxu0 0.0
      %1798 = vmatpush1.msra.mxu0 0.0
      %1799 = vmatprep.subr.mxu0 0.0
      %1800 = vmatpush1.msra.mxu0 0.0
      %1801 = vmatprep.subr.mxu0 0.0
      %1802 = vmatpush1.msra.mxu0 0.0
      %1803 = vmatprep.subr.mxu0 0.0
      %1804 = vmatpush1.msra.mxu0 0.0
      %1805 = vmatprep.subr.mxu0 0.0
      %1806 = vmatpush1.msra.mxu0 0.0
      %1807 = vmatprep.subr.mxu0 0.0
      %1808 = vmatpush1.msra.mxu0 0.0
      %1809 = vmatprep.subr.mxu0 0.0
      %1810 = vmatpush1.msra.mxu0 0.0
      %1811 = vmatprep.mubr.f32.mxu0 0.0
      %1812 = vmatmul.mubr.f32.gmra.mrb[0].mxu0 %v1730
      %v1813 = vpop.f32.mrb[0].mxu0
      %v1814 = vadd.f32 0.0, %v1813
      %v1815 = vpop.f32.mrb[0].mxu0
      %1816 = vmatprep.mubr.f32.mxu0 0.0
      %1817 = vmatmul.mubr.f32.gmra.mrb[0].mxu0 %v1733
      %v1818 = vpop.f32.mrb[0].mxu0
      %v1819 = vadd.f32 0.0, %v1818
      %v1820 = vpop.f32.mrb[0].mxu0
      %1821 = vmatprep.mubr.f32.mxu0 0.0
      %1822 = vmatmul.mubr.f32.gmra.mrb[0].mxu0 %v1736
      %v1823 = vpop.f32.mrb[0].mxu0
      %v1824 = vadd.f32 0.0, %v1823
      %v1825 = vpop.f32.mrb[0].mxu0
      %1826 = vmatprep.mubr.f32.mxu0 0.0
      %1827 = vmatmul.mubr.f32.gmra.mrb[0].mxu0 %v1739
      %v1828 = vpop.f32.mrb[0].mxu0
      %v1829 = vadd.f32 0.0, %v1828
      %v1830 = vpop.f32.mrb[0].mxu0
      %1831 = vmatprep.mubr.f32.mxu0 0.0
      %1832 = vmatmul.mubr.f32.gmra.mrb[0].mxu0 %v1742
      %v1833 = vpop.f32.mrb[0].mxu0
      %v1834 = vadd.f32 0.0, %v1833
      %v1835 = vpop.f32.mrb[0].mxu0
      %1836 = vmatprep.mubr.f32.mxu0 0.0
      %1837 = vmatmul.mubr.f32.gmra.mrb[0].mxu0 %v1745
      %v1838 = vpop.f32.mrb[0].mxu0
      %v1839 = vadd.f32 0.0, %v1838
      %v1840 = vpop.f32.mrb[0].mxu0
      %1841 = vdwg.mxu0
      %v1842 = vadd.f32 %v1710, %v1814
      %v1843 = vadd.f32 %v1711, %v1819
      %v1844 = vadd.f32 %v1712, %v1824
      %v1845 = vadd.f32 %v1713, %v1829
      %v1846 = vadd.f32 %v1714, %v1834
      %v1847 = vadd.f32 %v1715, %v1839
      %s1848 = scalar_lea.vmem [#allocation2], 7
      %v1849 = vld [vmem:[%s1848] ss:$4 sm:$0xff]
      %s1850 = scalar_lea.vmem [#allocation2], 39
      %v1851 = vld [vmem:[%s1850] ss:$4 sm:$0xff]
      %s1852 = scalar_lea.vmem [#allocation2], 71
      %v1853 = vld [vmem:[%s1852] ss:$4 sm:$0xff]
      %s1854 = scalar_lea.vmem [#allocation2], 103
      %v1855 = vld [vmem:[%s1854] ss:$4 sm:$0xff]
      %s1856 = scalar_lea.vmem [#allocation2], 135
      %v1857 = vld [vmem:[%s1856] ss:$4 sm:$0xff]
      %s1858 = scalar_lea.vmem [#allocation2], 167
      %v1859 = vld [vmem:[%s1858] ss:$4 sm:$0x7f]
      %v1860 = vld [vmem:[%s3 + $0x30] sm:$0xff]
      %v1862 = vsel %vm1041, %v1849, 0
      %v1865 = vsel %vm1041, %v1851, 0
      %v1868 = vsel %vm1041, %v1853, 0
      %v1871 = vsel %vm1041, %v1855, 0
      %v1874 = vsel %vm1041, %v1857, 0
      %v1877 = vsel %vm1041, %v1859, 0
      %1879 = vmatprep.subr.mxu0 0.0
      %1880 = vmatpush1.msra.mxu0 %v1860
      %1881 = vmatprep.subr.mxu0 0.0
      %1882 = vmatpush1.msra.mxu0 0.0
      %1883 = vmatprep.subr.mxu0 0.0
      %1884 = vmatpush1.msra.mxu0 0.0
      %1885 = vmatprep.subr.mxu0 0.0
      %1886 = vmatpush1.msra.mxu0 0.0
      %1887 = vmatprep.subr.mxu0 0.0
      %1888 = vmatpush1.msra.mxu0 0.0
      %1889 = vmatprep.subr.mxu0 0.0
      %1890 = vmatpush1.msra.mxu0 0.0
      %1891 = vmatprep.subr.mxu0 0.0
      %1892 = vmatpush1.msra.mxu0 0.0
      %1893 = vmatprep.subr.mxu0 0.0
      %1894 = vmatpush1.msra.mxu0 0.0
      %1895 = vmatprep.subr.mxu0 0.0
      %1896 = vmatpush1.msra.mxu0 0.0
      %1897 = vmatprep.subr.mxu0 0.0
      %1898 = vmatpush1.msra.mxu0 0.0
      %1899 = vmatprep.subr.mxu0 0.0
      %1900 = vmatpush1.msra.mxu0 0.0
      %1901 = vmatprep.subr.mxu0 0.0
      %1902 = vmatpush1.msra.mxu0 0.0
      %1903 = vmatprep.subr.mxu0 0.0
      %1904 = vmatpush1.msra.mxu0 0.0
      %1905 = vmatprep.subr.mxu0 0.0
      %1906 = vmatpush1.msra.mxu0 0.0
      %1907 = vmatprep.subr.mxu0 0.0
      %1908 = vmatpush1.msra.mxu0 0.0
      %1909 = vmatprep.subr.mxu0 0.0
      %1910 = vmatpush1.msra.mxu0 0.0
      %1911 = vmatprep.subr.mxu0 0.0
      %1912 = vmatpush1.msra.mxu0 0.0
      %1913 = vmatprep.subr.mxu0 0.0
      %1914 = vmatpush1.msra.mxu0 0.0
      %1915 = vmatprep.subr.mxu0 0.0
      %1916 = vmatpush1.msra.mxu0 0.0
      %1917 = vmatprep.subr.mxu0 0.0
      %1918 = vmatpush1.msra.mxu0 0.0
      %1919 = vmatprep.subr.mxu0 0.0
      %1920 = vmatpush1.msra.mxu0 0.0
      %1921 = vmatprep.subr.mxu0 0.0
      %1922 = vmatpush1.msra.mxu0 0.0
      %1923 = vmatprep.subr.mxu0 0.0
      %1924 = vmatpush1.msra.mxu0 0.0
      %1925 = vmatprep.subr.mxu0 0.0
      %1926 = vmatpush1.msra.mxu0 0.0
      %1927 = vmatprep.subr.mxu0 0.0
      %1928 = vmatpush1.msra.mxu0 0.0
      %1929 = vmatprep.subr.mxu0 0.0
      %1930 = vmatpush1.msra.mxu0 0.0
      %1931 = vmatprep.subr.mxu0 0.0
      %1932 = vmatpush1.msra.mxu0 0.0
      %1933 = vmatprep.subr.mxu0 0.0
      %1934 = vmatpush1.msra.mxu0 0.0
      %1935 = vmatprep.subr.mxu0 0.0
      %1936 = vmatpush1.msra.mxu0 0.0
      %1937 = vmatprep.subr.mxu0 0.0
      %1938 = vmatpush1.msra.mxu0 0.0
      %1939 = vmatprep.subr.mxu0 0.0
      %1940 = vmatpush1.msra.mxu0 0.0
      %1941 = vmatprep.subr.mxu0 0.0
      %1942 = vmatpush1.msra.mxu0 0.0
      %1943 = vmatprep.mubr.f32.mxu0 0.0
      %1944 = vmatmul.mubr.f32.gmra.mrb[0].mxu0 %v1862
      %v1945 = vpop.f32.mrb[0].mxu0
      %v1946 = vadd.f32 0.0, %v1945
      %v1947 = vpop.f32.mrb[0].mxu0
      %1948 = vmatprep.mubr.f32.mxu0 0.0
      %1949 = vmatmul.mubr.f32.gmra.mrb[0].mxu0 %v1865
      %v1950 = vpop.f32.mrb[0].mxu0
      %v1951 = vadd.f32 0.0, %v1950
      %v1952 = vpop.f32.mrb[0].mxu0
      %1953 = vmatprep.mubr.f32.mxu0 0.0
      %1954 = vmatmul.mubr.f32.gmra.mrb[0].mxu0 %v1868
      %v1955 = vpop.f32.mrb[0].mxu0
      %v1956 = vadd.f32 0.0, %v1955
      %v1957 = vpop.f32.mrb[0].mxu0
      %1958 = vmatprep.mubr.f32.mxu0 0.0
      %1959 = vmatmul.mubr.f32.gmra.mrb[0].mxu0 %v1871
      %v1960 = vpop.f32.mrb[0].mxu0
      %v1961 = vadd.f32 0.0, %v1960
      %v1962 = vpop.f32.mrb[0].mxu0
      %1963 = vmatprep.mubr.f32.mxu0 0.0
      %1964 = vmatmul.mubr.f32.gmra.mrb[0].mxu0 %v1874
      %v1965 = vpop.f32.mrb[0].mxu0
      %v1966 = vadd.f32 0.0, %v1965
      %v1967 = vpop.f32.mrb[0].mxu0
      %1968 = vmatprep.mubr.f32.mxu0 0.0
      %1969 = vmatmul.mubr.f32.gmra.mrb[0].mxu0 %v1877
      %v1970 = vpop.f32.mrb[0].mxu0
      %v1971 = vadd.f32 0.0, %v1970
      %v1972 = vpop.f32.mrb[0].mxu0
      %1973 = vdwg.mxu0
      %v1974 = vadd.f32 %v1842, %v1946
      %v1975 = vadd.f32 %v1843, %v1951
      %v1976 = vadd.f32 %v1844, %v1956
      %v1977 = vadd.f32 %v1845, %v1961
      %v1978 = vadd.f32 %v1846, %v1966
      %v1979 = vadd.f32 %v1847, %v1971
      %v1981 = vlaneseq
      %v1982 = vshrl.u32 %v1981, 7
      %v1983 = vsub.s32 0, %v1982
      %v1984 = vrot.slane %v1067, %v1983
      %v1986 = vadd.f32 %v1974, %v1984
      %v1987 = vadd.f32 %v1975, %v1984
      %v1988 = vadd.f32 %v1976, %v1984
      %v1989 = vadd.f32 %v1977, %v1984
      %v1990 = vadd.f32 %v1978, %v1984
      %v1991 = vadd.f32 %v1979, %v1984
      %v1992 = vmax.f32 %v1986, 0.0
      %v1993 = vmax.f32 %v1987, 0.0
      %v1994 = vmax.f32 %v1988, 0.0
      %v1995 = vmax.f32 %v1989, 0.0
      %v1996 = vmax.f32 %v1990, 0.0
      %v1997 = vmax.f32 %v1991, 0.0
      %vm1998 = vcmask 130048
      %1999 = vst.msk [vmem:[#allocation3 + $0x4] sm:$0xff] %vm1998, %v1992
      %2000 = vst.msk [vmem:[#allocation3 + $0xc] sm:$0xff] %vm1998, %v1993
      %2001 = vst.msk [vmem:[#allocation3 + $0x14] sm:$0xff] %vm1998, %v1994
      %2002 = vst.msk [vmem:[#allocation3 + $0x1c] sm:$0xff] %vm1998, %v1995
      %2003 = vst.msk [vmem:[#allocation3 + $0x24] sm:$0xff] %vm1998, %v1996
      %vm2004 = vcmask 129024
      %2005 = vst.msk [vmem:[#allocation3 + $0x2c] sm:$0x7f] %vm2004, %v1997
      %v2006 = vld [vmem:[%s6] sm:$0x1]
      %s2007 = scalar_lea.vmem [#allocation3], 1
      %v2008 = vld [vmem:[%s2007] ss:$4 sm:$0xff]
      %s2009 = scalar_lea.vmem [#allocation3], 33
      %v2010 = vld [vmem:[%s2009] ss:$4 sm:$0xf]
      %v2011 = vld [vmem:[%s5] sm:$0xff]
      %v2012 = vld [vmem:[%s5 + $0x8] sm:$0xff]
      %s2013 = scalar_lea.vmem [#allocation3], 2
      %v2014 = vld [vmem:[%s2013] ss:$4 sm:$0xff]
      %s2015 = scalar_lea.vmem [#allocation3], 34
      %v2016 = vld [vmem:[%s2015] ss:$4 sm:$0xf]
      %v2017 = vld [vmem:[%s5 + $0x10] sm:$0xff]
      %v2018 = vld [vmem:[%s5 + $0x18] sm:$0xff]
      %v2020 = vsel %vm1998, %v2014, 0
      %v2023 = vsel %vm1998, %v2016, 0
      %2025 = vmatprep.subr.mxu0 0.0
      %2026 = vmatpush1.msra.mxu0 %v2017
      %2027 = vmatprep.subr.mxu0 0.0
      %2028 = vmatpush1.msra.mxu0 %v2018
      %2029 = vmatprep.subr.mxu0 0.0
      %2030 = vmatpush1.msra.mxu0 0.0
      %2031 = vmatprep.subr.mxu0 0.0
      %2032 = vmatpush1.msra.mxu0 0.0
      %2033 = vmatprep.subr.mxu0 0.0
      %2034 = vmatpush1.msra.mxu0 0.0
      %2035 = vmatprep.subr.mxu0 0.0
      %2036 = vmatpush1.msra.mxu0 0.0
      %2037 = vmatprep.subr.mxu0 0.0
      %2038 = vmatpush1.msra.mxu0 0.0
      %2039 = vmatprep.subr.mxu0 0.0
      %2040 = vmatpush1.msra.mxu0 0.0
      %2041 = vmatprep.subr.mxu0 0.0
      %2042 = vmatpush1.msra.mxu0 0.0
      %2043 = vmatprep.subr.mxu0 0.0
      %2044 = vmatpush1.msra.mxu0 0.0
      %2045 = vmatprep.subr.mxu0 0.0
      %2046 = vmatpush1.msra.mxu0 0.0
      %2047 = vmatprep.subr.mxu0 0.0
      %2048 = vmatpush1.msra.mxu0 0.0
      %2049 = vmatprep.subr.mxu0 0.0
      %2050 = vmatpush1.msra.mxu0 0.0
      %2051 = vmatprep.subr.mxu0 0.0
      %2052 = vmatpush1.msra.mxu0 0.0
      %2053 = vmatprep.subr.mxu0 0.0
      %2054 = vmatpush1.msra.mxu0 0.0
      %2055 = vmatprep.subr.mxu0 0.0
      %2056 = vmatpush1.msra.mxu0 0.0
      %2057 = vmatprep.subr.mxu0 0.0
      %2058 = vmatpush1.msra.mxu0 0.0
      %2059 = vmatprep.subr.mxu0 0.0
      %2060 = vmatpush1.msra.mxu0 0.0
      %2061 = vmatprep.subr.mxu0 0.0
      %2062 = vmatpush1.msra.mxu0 0.0
      %2063 = vmatprep.subr.mxu0 0.0
      %2064 = vmatpush1.msra.mxu0 0.0
      %2065 = vmatprep.subr.mxu0 0.0
      %2066 = vmatpush1.msra.mxu0 0.0
      %2067 = vmatprep.subr.mxu0 0.0
      %2068 = vmatpush1.msra.mxu0 0.0
      %2069 = vmatprep.subr.mxu0 0.0
      %2070 = vmatpush1.msra.mxu0 0.0
      %2071 = vmatprep.subr.mxu0 0.0
      %2072 = vmatpush1.msra.mxu0 0.0
      %2073 = vmatprep.subr.mxu0 0.0
      %2074 = vmatpush1.msra.mxu0 0.0
      %2075 = vmatprep.subr.mxu0 0.0
      %2076 = vmatpush1.msra.mxu0 0.0
      %2077 = vmatprep.subr.mxu0 0.0
      %2078 = vmatpush1.msra.mxu0 0.0
      %2079 = vmatprep.subr.mxu0 0.0
      %2080 = vmatpush1.msra.mxu0 0.0
      %2081 = vmatprep.subr.mxu0 0.0
      %2082 = vmatpush1.msra.mxu0 0.0
      %2083 = vmatprep.subr.mxu0 0.0
      %2084 = vmatpush1.msra.mxu0 0.0
      %2085 = vmatprep.subr.mxu0 0.0
      %2086 = vmatpush1.msra.mxu0 0.0
      %2087 = vmatprep.subr.mxu0 0.0
      %2088 = vmatpush1.msra.mxu0 0.0
      %2089 = vmatprep.mubr.f32.mxu0 0.0
      %2090 = vmatmul.mubr.f32.gmra.mrb[0].mxu0 %v2020
      %v2091 = vpop.f32.mrb[0].mxu0
      %v2092 = vadd.f32 0.0, %v2091
      %v2093 = vpop.f32.mrb[0].mxu0
      %2094 = vmatprep.mubr.f32.mxu0 0.0
      %2095 = vmatmul.mubr.f32.gmra.mrb[0].mxu0 %v2023
      %v2096 = vpop.f32.mrb[0].mxu0
      %v2097 = vadd.f32 0.0, %v2096
      %v2098 = vpop.f32.mrb[0].mxu0
      %2099 = vdwg.mxu0
      %v2101 = vsel %vm1998, %v2008, 0
      %v2104 = vsel %vm1998, %v2010, 0
      %2106 = vmatprep.subr.mxu0 0.0
      %2107 = vmatpush1.msra.mxu0 %v2011
      %2108 = vmatprep.subr.mxu0 0.0
      %2109 = vmatpush1.msra.mxu0 %v2012
      %2110 = vmatprep.subr.mxu0 0.0
      %2111 = vmatpush1.msra.mxu0 0.0
      %2112 = vmatprep.subr.mxu0 0.0
      %2113 = vmatpush1.msra.mxu0 0.0
      %2114 = vmatprep.subr.mxu0 0.0
      %2115 = vmatpush1.msra.mxu0 0.0
      %2116 = vmatprep.subr.mxu0 0.0
      %2117 = vmatpush1.msra.mxu0 0.0
      %2118 = vmatprep.subr.mxu0 0.0
      %2119 = vmatpush1.msra.mxu0 0.0
      %2120 = vmatprep.subr.mxu0 0.0
      %2121 = vmatpush1.msra.mxu0 0.0
      %2122 = vmatprep.subr.mxu0 0.0
      %2123 = vmatpush1.msra.mxu0 0.0
      %2124 = vmatprep.subr.mxu0 0.0
      %2125 = vmatpush1.msra.mxu0 0.0
      %2126 = vmatprep.subr.mxu0 0.0
      %2127 = vmatpush1.msra.mxu0 0.0
      %2128 = vmatprep.subr.mxu0 0.0
      %2129 = vmatpush1.msra.mxu0 0.0
      %2130 = vmatprep.subr.mxu0 0.0
      %2131 = vmatpush1.msra.mxu0 0.0
      %2132 = vmatprep.subr.mxu0 0.0
      %2133 = vmatpush1.msra.mxu0 0.0
      %2134 = vmatprep.subr.mxu0 0.0
      %2135 = vmatpush1.msra.mxu0 0.0
      %2136 = vmatprep.subr.mxu0 0.0
      %2137 = vmatpush1.msra.mxu0 0.0
      %2138 = vmatprep.subr.mxu0 0.0
      %2139 = vmatpush1.msra.mxu0 0.0
      %2140 = vmatprep.subr.mxu0 0.0
      %2141 = vmatpush1.msra.mxu0 0.0
      %2142 = vmatprep.subr.mxu0 0.0
      %2143 = vmatpush1.msra.mxu0 0.0
      %2144 = vmatprep.subr.mxu0 0.0
      %2145 = vmatpush1.msra.mxu0 0.0
      %2146 = vmatprep.subr.mxu0 0.0
      %2147 = vmatpush1.msra.mxu0 0.0
      %2148 = vmatprep.subr.mxu0 0.0
      %2149 = vmatpush1.msra.mxu0 0.0
      %2150 = vmatprep.subr.mxu0 0.0
      %2151 = vmatpush1.msra.mxu0 0.0
      %2152 = vmatprep.subr.mxu0 0.0
      %2153 = vmatpush1.msra.mxu0 0.0
      %2154 = vmatprep.subr.mxu0 0.0
      %2155 = vmatpush1.msra.mxu0 0.0
      %2156 = vmatprep.subr.mxu0 0.0
      %2157 = vmatpush1.msra.mxu0 0.0
      %2158 = vmatprep.subr.mxu0 0.0
      %2159 = vmatpush1.msra.mxu0 0.0
      %2160 = vmatprep.subr.mxu0 0.0
      %2161 = vmatpush1.msra.mxu0 0.0
      %2162 = vmatprep.subr.mxu0 0.0
      %2163 = vmatpush1.msra.mxu0 0.0
      %2164 = vmatprep.subr.mxu0 0.0
      %2165 = vmatpush1.msra.mxu0 0.0
      %2166 = vmatprep.subr.mxu0 0.0
      %2167 = vmatpush1.msra.mxu0 0.0
      %2168 = vmatprep.subr.mxu0 0.0
      %2169 = vmatpush1.msra.mxu0 0.0
      %2170 = vmatprep.mubr.f32.mxu0 0.0
      %2171 = vmatmul.mubr.f32.gmra.mrb[0].mxu0 %v2101
      %v2172 = vpop.f32.mrb[0].mxu0
      %v2173 = vadd.f32 %v2092, %v2172
      %v2174 = vpop.f32.mrb[0].mxu0
      %2175 = vmatprep.mubr.f32.mxu0 0.0
      %2176 = vmatmul.mubr.f32.gmra.mrb[0].mxu0 %v2104
      %v2177 = vpop.f32.mrb[0].mxu0
      %v2178 = vadd.f32 %v2097, %v2177
      %v2179 = vpop.f32.mrb[0].mxu0
      %2180 = vdwg.mxu0
      %s2181 = scalar_lea.vmem [#allocation3], 3
      %v2182 = vld [vmem:[%s2181] ss:$4 sm:$0xff]
      %s2183 = scalar_lea.vmem [#allocation3], 35
      %v2184 = vld [vmem:[%s2183] ss:$4 sm:$0xf]
      %v2185 = vld [vmem:[%s5 + $0x20] sm:$0xff]
      %v2186 = vld [vmem:[%s5 + $0x28] sm:$0xff]
      %v2188 = vsel %vm1998, %v2182, 0
      %v2191 = vsel %vm1998, %v2184, 0
      %2193 = vmatprep.subr.mxu0 0.0
      %2194 = vmatpush1.msra.mxu0 %v2185
      %2195 = vmatprep.subr.mxu0 0.0
      %2196 = vmatpush1.msra.mxu0 %v2186
      %2197 = vmatprep.subr.mxu0 0.0
      %2198 = vmatpush1.msra.mxu0 0.0
      %2199 = vmatprep.subr.mxu0 0.0
      %2200 = vmatpush1.msra.mxu0 0.0
      %2201 = vmatprep.subr.mxu0 0.0
      %2202 = vmatpush1.msra.mxu0 0.0
      %2203 = vmatprep.subr.mxu0 0.0
      %2204 = vmatpush1.msra.mxu0 0.0
      %2205 = vmatprep.subr.mxu0 0.0
      %2206 = vmatpush1.msra.mxu0 0.0
      %2207 = vmatprep.subr.mxu0 0.0
      %2208 = vmatpush1.msra.mxu0 0.0
      %2209 = vmatprep.subr.mxu0 0.0
      %2210 = vmatpush1.msra.mxu0 0.0
      %2211 = vmatprep.subr.mxu0 0.0
      %2212 = vmatpush1.msra.mxu0 0.0
      %2213 = vmatprep.subr.mxu0 0.0
      %2214 = vmatpush1.msra.mxu0 0.0
      %2215 = vmatprep.subr.mxu0 0.0
      %2216 = vmatpush1.msra.mxu0 0.0
      %2217 = vmatprep.subr.mxu0 0.0
      %2218 = vmatpush1.msra.mxu0 0.0
      %2219 = vmatprep.subr.mxu0 0.0
      %2220 = vmatpush1.msra.mxu0 0.0
      %2221 = vmatprep.subr.mxu0 0.0
      %2222 = vmatpush1.msra.mxu0 0.0
      %2223 = vmatprep.subr.mxu0 0.0
      %2224 = vmatpush1.msra.mxu0 0.0
      %2225 = vmatprep.subr.mxu0 0.0
      %2226 = vmatpush1.msra.mxu0 0.0
      %2227 = vmatprep.subr.mxu0 0.0
      %2228 = vmatpush1.msra.mxu0 0.0
      %2229 = vmatprep.subr.mxu0 0.0
      %2230 = vmatpush1.msra.mxu0 0.0
      %2231 = vmatprep.subr.mxu0 0.0
      %2232 = vmatpush1.msra.mxu0 0.0
      %2233 = vmatprep.subr.mxu0 0.0
      %2234 = vmatpush1.msra.mxu0 0.0
      %2235 = vmatprep.subr.mxu0 0.0
      %2236 = vmatpush1.msra.mxu0 0.0
      %2237 = vmatprep.subr.mxu0 0.0
      %2238 = vmatpush1.msra.mxu0 0.0
      %2239 = vmatprep.subr.mxu0 0.0
      %2240 = vmatpush1.msra.mxu0 0.0
      %2241 = vmatprep.subr.mxu0 0.0
      %2242 = vmatpush1.msra.mxu0 0.0
      %2243 = vmatprep.subr.mxu0 0.0
      %2244 = vmatpush1.msra.mxu0 0.0
      %2245 = vmatprep.subr.mxu0 0.0
      %2246 = vmatpush1.msra.mxu0 0.0
      %2247 = vmatprep.subr.mxu0 0.0
      %2248 = vmatpush1.msra.mxu0 0.0
      %2249 = vmatprep.subr.mxu0 0.0
      %2250 = vmatpush1.msra.mxu0 0.0
      %2251 = vmatprep.subr.mxu0 0.0
      %2252 = vmatpush1.msra.mxu0 0.0
      %2253 = vmatprep.subr.mxu0 0.0
      %2254 = vmatpush1.msra.mxu0 0.0
      %2255 = vmatprep.subr.mxu0 0.0
      %2256 = vmatpush1.msra.mxu0 0.0
      %2257 = vmatprep.mubr.f32.mxu0 0.0
      %2258 = vmatmul.mubr.f32.gmra.mrb[0].mxu0 %v2188
      %v2259 = vpop.f32.mrb[0].mxu0
      %v2260 = vadd.f32 0.0, %v2259
      %v2261 = vpop.f32.mrb[0].mxu0
      %2262 = vmatprep.mubr.f32.mxu0 0.0
      %2263 = vmatmul.mubr.f32.gmra.mrb[0].mxu0 %v2191
      %v2264 = vpop.f32.mrb[0].mxu0
      %v2265 = vadd.f32 0.0, %v2264
      %v2266 = vpop.f32.mrb[0].mxu0
      %2267 = vdwg.mxu0
      %v2268 = vadd.f32 %v2173, %v2260
      %v2269 = vadd.f32 %v2178, %v2265
      %s2270 = scalar_lea.vmem [#allocation3], 4
      %v2271 = vld [vmem:[%s2270] ss:$4 sm:$0xff]
      %s2272 = scalar_lea.vmem [#allocation3], 36
      %v2273 = vld [vmem:[%s2272] ss:$4 sm:$0xf]
      %v2274 = vld [vmem:[%s5 + $0x30] sm:$0xff]
      %v2275 = vld [vmem:[%s5 + $0x38] sm:$0xff]
      %v2277 = vsel %vm1998, %v2271, 0
      %v2280 = vsel %vm1998, %v2273, 0
      %2282 = vmatprep.subr.mxu0 0.0
      %2283 = vmatpush1.msra.mxu0 %v2274
      %2284 = vmatprep.subr.mxu0 0.0
      %2285 = vmatpush1.msra.mxu0 %v2275
      %2286 = vmatprep.subr.mxu0 0.0
      %2287 = vmatpush1.msra.mxu0 0.0
      %2288 = vmatprep.subr.mxu0 0.0
      %2289 = vmatpush1.msra.mxu0 0.0
      %2290 = vmatprep.subr.mxu0 0.0
      %2291 = vmatpush1.msra.mxu0 0.0
      %2292 = vmatprep.subr.mxu0 0.0
      %2293 = vmatpush1.msra.mxu0 0.0
      %2294 = vmatprep.subr.mxu0 0.0
      %2295 = vmatpush1.msra.mxu0 0.0
      %2296 = vmatprep.subr.mxu0 0.0
      %2297 = vmatpush1.msra.mxu0 0.0
      %2298 = vmatprep.subr.mxu0 0.0
      %2299 = vmatpush1.msra.mxu0 0.0
      %2300 = vmatprep.subr.mxu0 0.0
      %2301 = vmatpush1.msra.mxu0 0.0
      %2302 = vmatprep.subr.mxu0 0.0
      %2303 = vmatpush1.msra.mxu0 0.0
      %2304 = vmatprep.subr.mxu0 0.0
      %2305 = vmatpush1.msra.mxu0 0.0
      %2306 = vmatprep.subr.mxu0 0.0
      %2307 = vmatpush1.msra.mxu0 0.0
      %2308 = vmatprep.subr.mxu0 0.0
      %2309 = vmatpush1.msra.mxu0 0.0
      %2310 = vmatprep.subr.mxu0 0.0
      %2311 = vmatpush1.msra.mxu0 0.0
      %2312 = vmatprep.subr.mxu0 0.0
      %2313 = vmatpush1.msra.mxu0 0.0
      %2314 = vmatprep.subr.mxu0 0.0
      %2315 = vmatpush1.msra.mxu0 0.0
      %2316 = vmatprep.subr.mxu0 0.0
      %2317 = vmatpush1.msra.mxu0 0.0
      %2318 = vmatprep.subr.mxu0 0.0
      %2319 = vmatpush1.msra.mxu0 0.0
      %2320 = vmatprep.subr.mxu0 0.0
      %2321 = vmatpush1.msra.mxu0 0.0
      %2322 = vmatprep.subr.mxu0 0.0
      %2323 = vmatpush1.msra.mxu0 0.0
      %2324 = vmatprep.subr.mxu0 0.0
      %2325 = vmatpush1.msra.mxu0 0.0
      %2326 = vmatprep.subr.mxu0 0.0
      %2327 = vmatpush1.msra.mxu0 0.0
      %2328 = vmatprep.subr.mxu0 0.0
      %2329 = vmatpush1.msra.mxu0 0.0
      %2330 = vmatprep.subr.mxu0 0.0
      %2331 = vmatpush1.msra.mxu0 0.0
      %2332 = vmatprep.subr.mxu0 0.0
      %2333 = vmatpush1.msra.mxu0 0.0
      %2334 = vmatprep.subr.mxu0 0.0
      %2335 = vmatpush1.msra.mxu0 0.0
      %2336 = vmatprep.subr.mxu0 0.0
      %2337 = vmatpush1.msra.mxu0 0.0
      %2338 = vmatprep.subr.mxu0 0.0
      %2339 = vmatpush1.msra.mxu0 0.0
      %2340 = vmatprep.subr.mxu0 0.0
      %2341 = vmatpush1.msra.mxu0 0.0
      %2342 = vmatprep.subr.mxu0 0.0
      %2343 = vmatpush1.msra.mxu0 0.0
      %2344 = vmatprep.subr.mxu0 0.0
      %2345 = vmatpush1.msra.mxu0 0.0
      %2346 = vmatprep.mubr.f32.mxu0 0.0
      %2347 = vmatmul.mubr.f32.gmra.mrb[0].mxu0 %v2277
      %v2348 = vpop.f32.mrb[0].mxu0
      %v2349 = vadd.f32 0.0, %v2348
      %v2350 = vpop.f32.mrb[0].mxu0
      %2351 = vmatprep.mubr.f32.mxu0 0.0
      %2352 = vmatmul.mubr.f32.gmra.mrb[0].mxu0 %v2280
      %v2353 = vpop.f32.mrb[0].mxu0
      %v2354 = vadd.f32 0.0, %v2353
      %v2355 = vpop.f32.mrb[0].mxu0
      %2356 = vdwg.mxu0
      %v2357 = vadd.f32 %v2268, %v2349
      %v2358 = vadd.f32 %v2269, %v2354
      %s2359 = scalar_lea.vmem [#allocation3], 5
      %v2360 = vld [vmem:[%s2359] ss:$4 sm:$0xff]
      %s2361 = scalar_lea.vmem [#allocation3], 37
      %v2362 = vld [vmem:[%s2361] ss:$4 sm:$0xf]
      %v2363 = vld [vmem:[%s5 + $0x40] sm:$0xff]
      %v2364 = vld [vmem:[%s5 + $0x48] sm:$0xff]
      %v2366 = vsel %vm1998, %v2360, 0
      %v2369 = vsel %vm1998, %v2362, 0
      %2371 = vmatprep.subr.mxu0 0.0
      %2372 = vmatpush1.msra.mxu0 %v2363
      %2373 = vmatprep.subr.mxu0 0.0
      %2374 = vmatpush1.msra.mxu0 %v2364
      %2375 = vmatprep.subr.mxu0 0.0
      %2376 = vmatpush1.msra.mxu0 0.0
      %2377 = vmatprep.subr.mxu0 0.0
      %2378 = vmatpush1.msra.mxu0 0.0
      %2379 = vmatprep.subr.mxu0 0.0
      %2380 = vmatpush1.msra.mxu0 0.0
      %2381 = vmatprep.subr.mxu0 0.0
      %2382 = vmatpush1.msra.mxu0 0.0
      %2383 = vmatprep.subr.mxu0 0.0
      %2384 = vmatpush1.msra.mxu0 0.0
      %2385 = vmatprep.subr.mxu0 0.0
      %2386 = vmatpush1.msra.mxu0 0.0
      %2387 = vmatprep.subr.mxu0 0.0
      %2388 = vmatpush1.msra.mxu0 0.0
      %2389 = vmatprep.subr.mxu0 0.0
      %2390 = vmatpush1.msra.mxu0 0.0
      %2391 = vmatprep.subr.mxu0 0.0
      %2392 = vmatpush1.msra.mxu0 0.0
      %2393 = vmatprep.subr.mxu0 0.0
      %2394 = vmatpush1.msra.mxu0 0.0
      %2395 = vmatprep.subr.mxu0 0.0
      %2396 = vmatpush1.msra.mxu0 0.0
      %2397 = vmatprep.subr.mxu0 0.0
      %2398 = vmatpush1.msra.mxu0 0.0
      %2399 = vmatprep.subr.mxu0 0.0
      %2400 = vmatpush1.msra.mxu0 0.0
      %2401 = vmatprep.subr.mxu0 0.0
      %2402 = vmatpush1.msra.mxu0 0.0
      %2403 = vmatprep.subr.mxu0 0.0
      %2404 = vmatpush1.msra.mxu0 0.0
      %2405 = vmatprep.subr.mxu0 0.0
      %2406 = vmatpush1.msra.mxu0 0.0
      %2407 = vmatprep.subr.mxu0 0.0
      %2408 = vmatpush1.msra.mxu0 0.0
      %2409 = vmatprep.subr.mxu0 0.0
      %2410 = vmatpush1.msra.mxu0 0.0
      %2411 = vmatprep.subr.mxu0 0.0
      %2412 = vmatpush1.msra.mxu0 0.0
      %2413 = vmatprep.subr.mxu0 0.0
      %2414 = vmatpush1.msra.mxu0 0.0
      %2415 = vmatprep.subr.mxu0 0.0
      %2416 = vmatpush1.msra.mxu0 0.0
      %2417 = vmatprep.subr.mxu0 0.0
      %2418 = vmatpush1.msra.mxu0 0.0
      %2419 = vmatprep.subr.mxu0 0.0
      %2420 = vmatpush1.msra.mxu0 0.0
      %2421 = vmatprep.subr.mxu0 0.0
      %2422 = vmatpush1.msra.mxu0 0.0
      %2423 = vmatprep.subr.mxu0 0.0
      %2424 = vmatpush1.msra.mxu0 0.0
      %2425 = vmatprep.subr.mxu0 0.0
      %2426 = vmatpush1.msra.mxu0 0.0
      %2427 = vmatprep.subr.mxu0 0.0
      %2428 = vmatpush1.msra.mxu0 0.0
      %2429 = vmatprep.subr.mxu0 0.0
      %2430 = vmatpush1.msra.mxu0 0.0
      %2431 = vmatprep.subr.mxu0 0.0
      %2432 = vmatpush1.msra.mxu0 0.0
      %2433 = vmatprep.subr.mxu0 0.0
      %2434 = vmatpush1.msra.mxu0 0.0
      %2435 = vmatprep.mubr.f32.mxu0 0.0
      %2436 = vmatmul.mubr.f32.gmra.mrb[0].mxu0 %v2366
      %v2437 = vpop.f32.mrb[0].mxu0
      %v2438 = vadd.f32 0.0, %v2437
      %v2439 = vpop.f32.mrb[0].mxu0
      %2440 = vmatprep.mubr.f32.mxu0 0.0
      %2441 = vmatmul.mubr.f32.gmra.mrb[0].mxu0 %v2369
      %v2442 = vpop.f32.mrb[0].mxu0
      %v2443 = vadd.f32 0.0, %v2442
      %v2444 = vpop.f32.mrb[0].mxu0
      %2445 = vdwg.mxu0
      %v2446 = vadd.f32 %v2357, %v2438
      %v2447 = vadd.f32 %v2358, %v2443
      %s2448 = scalar_lea.vmem [#allocation3], 6
      %v2449 = vld [vmem:[%s2448] ss:$4 sm:$0xff]
      %s2450 = scalar_lea.vmem [#allocation3], 38
      %v2451 = vld [vmem:[%s2450] ss:$4 sm:$0xf]
      %v2452 = vld [vmem:[%s5 + $0x50] sm:$0xff]
      %v2453 = vld [vmem:[%s5 + $0x58] sm:$0xff]
      %v2455 = vsel %vm1998, %v2449, 0
      %v2458 = vsel %vm1998, %v2451, 0
      %2460 = vmatprep.subr.mxu0 0.0
      %2461 = vmatpush1.msra.mxu0 %v2452
      %2462 = vmatprep.subr.mxu0 0.0
      %2463 = vmatpush1.msra.mxu0 %v2453
      %2464 = vmatprep.subr.mxu0 0.0
      %2465 = vmatpush1.msra.mxu0 0.0
      %2466 = vmatprep.subr.mxu0 0.0
      %2467 = vmatpush1.msra.mxu0 0.0
      %2468 = vmatprep.subr.mxu0 0.0
      %2469 = vmatpush1.msra.mxu0 0.0
      %2470 = vmatprep.subr.mxu0 0.0
      %2471 = vmatpush1.msra.mxu0 0.0
      %2472 = vmatprep.subr.mxu0 0.0
      %2473 = vmatpush1.msra.mxu0 0.0
      %2474 = vmatprep.subr.mxu0 0.0
      %2475 = vmatpush1.msra.mxu0 0.0
      %2476 = vmatprep.subr.mxu0 0.0
      %2477 = vmatpush1.msra.mxu0 0.0
      %2478 = vmatprep.subr.mxu0 0.0
      %2479 = vmatpush1.msra.mxu0 0.0
      %2480 = vmatprep.subr.mxu0 0.0
      %2481 = vmatpush1.msra.mxu0 0.0
      %2482 = vmatprep.subr.mxu0 0.0
      %2483 = vmatpush1.msra.mxu0 0.0
      %2484 = vmatprep.subr.mxu0 0.0
      %2485 = vmatpush1.msra.mxu0 0.0
      %2486 = vmatprep.subr.mxu0 0.0
      %2487 = vmatpush1.msra.mxu0 0.0
      %2488 = vmatprep.subr.mxu0 0.0
      %2489 = vmatpush1.msra.mxu0 0.0
      %2490 = vmatprep.subr.mxu0 0.0
      %2491 = vmatpush1.msra.mxu0 0.0
      %2492 = vmatprep.subr.mxu0 0.0
      %2493 = vmatpush1.msra.mxu0 0.0
      %2494 = vmatprep.subr.mxu0 0.0
      %2495 = vmatpush1.msra.mxu0 0.0
      %2496 = vmatprep.subr.mxu0 0.0
      %2497 = vmatpush1.msra.mxu0 0.0
      %2498 = vmatprep.subr.mxu0 0.0
      %2499 = vmatpush1.msra.mxu0 0.0
      %2500 = vmatprep.subr.mxu0 0.0
      %2501 = vmatpush1.msra.mxu0 0.0
      %2502 = vmatprep.subr.mxu0 0.0
      %2503 = vmatpush1.msra.mxu0 0.0
      %2504 = vmatprep.subr.mxu0 0.0
      %2505 = vmatpush1.msra.mxu0 0.0
      %2506 = vmatprep.subr.mxu0 0.0
      %2507 = vmatpush1.msra.mxu0 0.0
      %2508 = vmatprep.subr.mxu0 0.0
      %2509 = vmatpush1.msra.mxu0 0.0
      %2510 = vmatprep.subr.mxu0 0.0
      %2511 = vmatpush1.msra.mxu0 0.0
      %2512 = vmatprep.subr.mxu0 0.0
      %2513 = vmatpush1.msra.mxu0 0.0
      %2514 = vmatprep.subr.mxu0 0.0
      %2515 = vmatpush1.msra.mxu0 0.0
      %2516 = vmatprep.subr.mxu0 0.0
      %2517 = vmatpush1.msra.mxu0 0.0
      %2518 = vmatprep.subr.mxu0 0.0
      %2519 = vmatpush1.msra.mxu0 0.0
      %2520 = vmatprep.subr.mxu0 0.0
      %2521 = vmatpush1.msra.mxu0 0.0
      %2522 = vmatprep.subr.mxu0 0.0
      %2523 = vmatpush1.msra.mxu0 0.0
      %2524 = vmatprep.mubr.f32.mxu0 0.0
      %2525 = vmatmul.mubr.f32.gmra.mrb[0].mxu0 %v2455
      %v2526 = vpop.f32.mrb[0].mxu0
      %v2527 = vadd.f32 0.0, %v2526
      %v2528 = vpop.f32.mrb[0].mxu0
      %2529 = vmatprep.mubr.f32.mxu0 0.0
      %2530 = vmatmul.mubr.f32.gmra.mrb[0].mxu0 %v2458
      %v2531 = vpop.f32.mrb[0].mxu0
      %v2532 = vadd.f32 0.0, %v2531
      %v2533 = vpop.f32.mrb[0].mxu0
      %2534 = vdwg.mxu0
      %v2535 = vadd.f32 %v2446, %v2527
      %v2536 = vadd.f32 %v2447, %v2532
      %s2537 = scalar_lea.vmem [#allocation3], 7
      %v2538 = vld [vmem:[%s2537] ss:$4 sm:$0xff]
      %s2539 = scalar_lea.vmem [#allocation3], 39
      %v2540 = vld [vmem:[%s2539] ss:$4 sm:$0xf]
      %v2541 = vld [vmem:[%s5 + $0x60] sm:$0xff]
      %v2542 = vld [vmem:[%s5 + $0x68] sm:$0xff]
      %v2544 = vsel %vm1998, %v2538, 0
      %v2547 = vsel %vm1998, %v2540, 0
      %2549 = vmatprep.subr.mxu0 0.0
      %2550 = vmatpush1.msra.mxu0 %v2541
      %2551 = vmatprep.subr.mxu0 0.0
      %2552 = vmatpush1.msra.mxu0 %v2542
      %2553 = vmatprep.subr.mxu0 0.0
      %2554 = vmatpush1.msra.mxu0 0.0
      %2555 = vmatprep.subr.mxu0 0.0
      %2556 = vmatpush1.msra.mxu0 0.0
      %2557 = vmatprep.subr.mxu0 0.0
      %2558 = vmatpush1.msra.mxu0 0.0
      %2559 = vmatprep.subr.mxu0 0.0
      %2560 = vmatpush1.msra.mxu0 0.0
      %2561 = vmatprep.subr.mxu0 0.0
      %2562 = vmatpush1.msra.mxu0 0.0
      %2563 = vmatprep.subr.mxu0 0.0
      %2564 = vmatpush1.msra.mxu0 0.0
      %2565 = vmatprep.subr.mxu0 0.0
      %2566 = vmatpush1.msra.mxu0 0.0
      %2567 = vmatprep.subr.mxu0 0.0
      %2568 = vmatpush1.msra.mxu0 0.0
      %2569 = vmatprep.subr.mxu0 0.0
      %2570 = vmatpush1.msra.mxu0 0.0
      %2571 = vmatprep.subr.mxu0 0.0
      %2572 = vmatpush1.msra.mxu0 0.0
      %2573 = vmatprep.subr.mxu0 0.0
      %2574 = vmatpush1.msra.mxu0 0.0
      %2575 = vmatprep.subr.mxu0 0.0
      %2576 = vmatpush1.msra.mxu0 0.0
      %2577 = vmatprep.subr.mxu0 0.0
      %2578 = vmatpush1.msra.mxu0 0.0
      %2579 = vmatprep.subr.mxu0 0.0
      %2580 = vmatpush1.msra.mxu0 0.0
      %2581 = vmatprep.subr.mxu0 0.0
      %2582 = vmatpush1.msra.mxu0 0.0
      %2583 = vmatprep.subr.mxu0 0.0
      %2584 = vmatpush1.msra.mxu0 0.0
      %2585 = vmatprep.subr.mxu0 0.0
      %2586 = vmatpush1.msra.mxu0 0.0
      %2587 = vmatprep.subr.mxu0 0.0
      %2588 = vmatpush1.msra.mxu0 0.0
      %2589 = vmatprep.subr.mxu0 0.0
      %2590 = vmatpush1.msra.mxu0 0.0
      %2591 = vmatprep.subr.mxu0 0.0
      %2592 = vmatpush1.msra.mxu0 0.0
      %2593 = vmatprep.subr.mxu0 0.0
      %2594 = vmatpush1.msra.mxu0 0.0
      %2595 = vmatprep.subr.mxu0 0.0
      %2596 = vmatpush1.msra.mxu0 0.0
      %2597 = vmatprep.subr.mxu0 0.0
      %2598 = vmatpush1.msra.mxu0 0.0
      %2599 = vmatprep.subr.mxu0 0.0
      %2600 = vmatpush1.msra.mxu0 0.0
      %2601 = vmatprep.subr.mxu0 0.0
      %2602 = vmatpush1.msra.mxu0 0.0
      %2603 = vmatprep.subr.mxu0 0.0
      %2604 = vmatpush1.msra.mxu0 0.0
      %2605 = vmatprep.subr.mxu0 0.0
      %2606 = vmatpush1.msra.mxu0 0.0
      %2607 = vmatprep.subr.mxu0 0.0
      %2608 = vmatpush1.msra.mxu0 0.0
      %2609 = vmatprep.subr.mxu0 0.0
      %2610 = vmatpush1.msra.mxu0 0.0
      %2611 = vmatprep.subr.mxu0 0.0
      %2612 = vmatpush1.msra.mxu0 0.0
      %2613 = vmatprep.mubr.f32.mxu0 0.0
      %2614 = vmatmul.mubr.f32.gmra.mrb[0].mxu0 %v2544
      %v2615 = vpop.f32.mrb[0].mxu0
      %v2616 = vadd.f32 0.0, %v2615
      %v2617 = vpop.f32.mrb[0].mxu0
      %2618 = vmatprep.mubr.f32.mxu0 0.0
      %2619 = vmatmul.mubr.f32.gmra.mrb[0].mxu0 %v2547
      %v2620 = vpop.f32.mrb[0].mxu0
      %v2621 = vadd.f32 0.0, %v2620
      %v2622 = vpop.f32.mrb[0].mxu0
      %2623 = vdwg.mxu0
      %v2624 = vadd.f32 %v2535, %v2616
      %v2625 = vadd.f32 %v2536, %v2621
      %v2627 = vlaneseq
      %v2628 = vshrl.u32 %v2627, 7
      %v2629 = vsub.s32 0, %v2628
      %v2630 = vrot.slane %v2006, %v2629
      %v2632 = vadd.f32 %v2624, %v2630
      %v2633 = vadd.f32 %v2625, %v2630
      %v2634 = vmax.f32 %v2632, 0.0
      %v2635 = vmax.f32 %v2633, 0.0
      %2636 = vst.msk [vmem:[#allocation4 + $0x4] sm:$0xff] %vm1998, %v2634
      %2637 = vst.msk [vmem:[#allocation4 + $0xc] sm:$0xf] %vm660, %v2635
      %v2638 = vld [vmem:[%s8] sm:$0x1]
      %s2639 = scalar_lea.vmem [#allocation4], 1
      %v2640 = vld [vmem:[%s2639] ss:$4 sm:$0x7]
      %v2641 = vld [vmem:[%s7] sm:$0xff]
      %v2642 = vld [vmem:[%s7 + $0x8] sm:$0xff]
      %s2643 = scalar_lea.vmem [#allocation4], 2
      %v2644 = vld [vmem:[%s2643] ss:$4 sm:$0x7]
      %v2645 = vld [vmem:[%s7 + $0x10] sm:$0xff]
      %v2646 = vld [vmem:[%s7 + $0x18] sm:$0xff]
      %v2648 = vsel %vm1998, %v2644, 0
      %2650 = vmatprep.subr.mxu0 0.0
      %2651 = vmatpush1.msra.mxu0 %v2645
      %2652 = vmatprep.subr.mxu0 0.0
      %2653 = vmatpush1.msra.mxu0 %v2646
      %2654 = vmatprep.subr.mxu0 0.0
      %2655 = vmatpush1.msra.mxu0 0.0
      %2656 = vmatprep.subr.mxu0 0.0
      %2657 = vmatpush1.msra.mxu0 0.0
      %2658 = vmatprep.subr.mxu0 0.0
      %2659 = vmatpush1.msra.mxu0 0.0
      %2660 = vmatprep.subr.mxu0 0.0
      %2661 = vmatpush1.msra.mxu0 0.0
      %2662 = vmatprep.subr.mxu0 0.0
      %2663 = vmatpush1.msra.mxu0 0.0
      %2664 = vmatprep.subr.mxu0 0.0
      %2665 = vmatpush1.msra.mxu0 0.0
      %2666 = vmatprep.subr.mxu0 0.0
      %2667 = vmatpush1.msra.mxu0 0.0
      %2668 = vmatprep.subr.mxu0 0.0
      %2669 = vmatpush1.msra.mxu0 0.0
      %2670 = vmatprep.subr.mxu0 0.0
      %2671 = vmatpush1.msra.mxu0 0.0
      %2672 = vmatprep.subr.mxu0 0.0
      %2673 = vmatpush1.msra.mxu0 0.0
      %2674 = vmatprep.subr.mxu0 0.0
      %2675 = vmatpush1.msra.mxu0 0.0
      %2676 = vmatprep.subr.mxu0 0.0
      %2677 = vmatpush1.msra.mxu0 0.0
      %2678 = vmatprep.subr.mxu0 0.0
      %2679 = vmatpush1.msra.mxu0 0.0
      %2680 = vmatprep.subr.mxu0 0.0
      %2681 = vmatpush1.msra.mxu0 0.0
      %2682 = vmatprep.subr.mxu0 0.0
      %2683 = vmatpush1.msra.mxu0 0.0
      %2684 = vmatprep.subr.mxu0 0.0
      %2685 = vmatpush1.msra.mxu0 0.0
      %2686 = vmatprep.subr.mxu0 0.0
      %2687 = vmatpush1.msra.mxu0 0.0
      %2688 = vmatprep.subr.mxu0 0.0
      %2689 = vmatpush1.msra.mxu0 0.0
      %2690 = vmatprep.subr.mxu0 0.0
      %2691 = vmatpush1.msra.mxu0 0.0
      %2692 = vmatprep.subr.mxu0 0.0
      %2693 = vmatpush1.msra.mxu0 0.0
      %2694 = vmatprep.subr.mxu0 0.0
      %2695 = vmatpush1.msra.mxu0 0.0
      %2696 = vmatprep.subr.mxu0 0.0
      %2697 = vmatpush1.msra.mxu0 0.0
      %2698 = vmatprep.subr.mxu0 0.0
      %2699 = vmatpush1.msra.mxu0 0.0
      %2700 = vmatprep.subr.mxu0 0.0
      %2701 = vmatpush1.msra.mxu0 0.0
      %2702 = vmatprep.subr.mxu0 0.0
      %2703 = vmatpush1.msra.mxu0 0.0
      %2704 = vmatprep.subr.mxu0 0.0
      %2705 = vmatpush1.msra.mxu0 0.0
      %2706 = vmatprep.subr.mxu0 0.0
      %2707 = vmatpush1.msra.mxu0 0.0
      %2708 = vmatprep.subr.mxu0 0.0
      %2709 = vmatpush1.msra.mxu0 0.0
      %2710 = vmatprep.subr.mxu0 0.0
      %2711 = vmatpush1.msra.mxu0 0.0
      %2712 = vmatprep.subr.mxu0 0.0
      %2713 = vmatpush1.msra.mxu0 0.0
      %2714 = vmatprep.mubr.f32.mxu0 0.0
      %2715 = vmatmul.mubr.f32.gmra.mrb[0].mxu0 %v2648
      %v2716 = vpop.f32.mrb[0].mxu0
      %v2717 = vadd.f32 0.0, %v2716
      %v2718 = vpop.f32.mrb[0].mxu0
      %2719 = vdwg.mxu0
      %v2721 = vsel %vm1998, %v2640, 0
      %2723 = vmatprep.subr.mxu0 0.0
      %2724 = vmatpush1.msra.mxu0 %v2641
      %2725 = vmatprep.subr.mxu0 0.0
      %2726 = vmatpush1.msra.mxu0 %v2642
      %2727 = vmatprep.subr.mxu0 0.0
      %2728 = vmatpush1.msra.mxu0 0.0
      %2729 = vmatprep.subr.mxu0 0.0
      %2730 = vmatpush1.msra.mxu0 0.0
      %2731 = vmatprep.subr.mxu0 0.0
      %2732 = vmatpush1.msra.mxu0 0.0
      %2733 = vmatprep.subr.mxu0 0.0
      %2734 = vmatpush1.msra.mxu0 0.0
      %2735 = vmatprep.subr.mxu0 0.0
      %2736 = vmatpush1.msra.mxu0 0.0
      %2737 = vmatprep.subr.mxu0 0.0
      %2738 = vmatpush1.msra.mxu0 0.0
      %2739 = vmatprep.subr.mxu0 0.0
      %2740 = vmatpush1.msra.mxu0 0.0
      %2741 = vmatprep.subr.mxu0 0.0
      %2742 = vmatpush1.msra.mxu0 0.0
      %2743 = vmatprep.subr.mxu0 0.0
      %2744 = vmatpush1.msra.mxu0 0.0
      %2745 = vmatprep.subr.mxu0 0.0
      %2746 = vmatpush1.msra.mxu0 0.0
      %2747 = vmatprep.subr.mxu0 0.0
      %2748 = vmatpush1.msra.mxu0 0.0
      %2749 = vmatprep.subr.mxu0 0.0
      %2750 = vmatpush1.msra.mxu0 0.0
      %2751 = vmatprep.subr.mxu0 0.0
      %2752 = vmatpush1.msra.mxu0 0.0
      %2753 = vmatprep.subr.mxu0 0.0
      %2754 = vmatpush1.msra.mxu0 0.0
      %2755 = vmatprep.subr.mxu0 0.0
      %2756 = vmatpush1.msra.mxu0 0.0
      %2757 = vmatprep.subr.mxu0 0.0
      %2758 = vmatpush1.msra.mxu0 0.0
      %2759 = vmatprep.subr.mxu0 0.0
      %2760 = vmatpush1.msra.mxu0 0.0
      %2761 = vmatprep.subr.mxu0 0.0
      %2762 = vmatpush1.msra.mxu0 0.0
      %2763 = vmatprep.subr.mxu0 0.0
      %2764 = vmatpush1.msra.mxu0 0.0
      %2765 = vmatprep.subr.mxu0 0.0
      %2766 = vmatpush1.msra.mxu0 0.0
      %2767 = vmatprep.subr.mxu0 0.0
      %2768 = vmatpush1.msra.mxu0 0.0
      %2769 = vmatprep.subr.mxu0 0.0
      %2770 = vmatpush1.msra.mxu0 0.0
      %2771 = vmatprep.subr.mxu0 0.0
      %2772 = vmatpush1.msra.mxu0 0.0
      %2773 = vmatprep.subr.mxu0 0.0
      %2774 = vmatpush1.msra.mxu0 0.0
      %2775 = vmatprep.subr.mxu0 0.0
      %2776 = vmatpush1.msra.mxu0 0.0
      %2777 = vmatprep.subr.mxu0 0.0
      %2778 = vmatpush1.msra.mxu0 0.0
      %2779 = vmatprep.subr.mxu0 0.0
      %2780 = vmatpush1.msra.mxu0 0.0
      %2781 = vmatprep.subr.mxu0 0.0
      %2782 = vmatpush1.msra.mxu0 0.0
      %2783 = vmatprep.subr.mxu0 0.0
      %2784 = vmatpush1.msra.mxu0 0.0
      %2785 = vmatprep.subr.mxu0 0.0
      %2786 = vmatpush1.msra.mxu0 0.0
      %2787 = vmatprep.mubr.f32.mxu0 0.0
      %2788 = vmatmul.mubr.f32.gmra.mrb[0].mxu0 %v2721
      %v2789 = vpop.f32.mrb[0].mxu0
      %v2790 = vadd.f32 %v2717, %v2789
      %v2791 = vpop.f32.mrb[0].mxu0
      %2792 = vdwg.mxu0
      %s2793 = scalar_lea.vmem [#allocation4], 3
      %v2794 = vld [vmem:[%s2793] ss:$4 sm:$0x7]
      %v2795 = vld [vmem:[%s7 + $0x20] sm:$0xff]
      %v2796 = vld [vmem:[%s7 + $0x28] sm:$0xff]
      %v2798 = vsel %vm1998, %v2794, 0
      %2800 = vmatprep.subr.mxu0 0.0
      %2801 = vmatpush1.msra.mxu0 %v2795
      %2802 = vmatprep.subr.mxu0 0.0
      %2803 = vmatpush1.msra.mxu0 %v2796
      %2804 = vmatprep.subr.mxu0 0.0
      %2805 = vmatpush1.msra.mxu0 0.0
      %2806 = vmatprep.subr.mxu0 0.0
      %2807 = vmatpush1.msra.mxu0 0.0
      %2808 = vmatprep.subr.mxu0 0.0
      %2809 = vmatpush1.msra.mxu0 0.0
      %2810 = vmatprep.subr.mxu0 0.0
      %2811 = vmatpush1.msra.mxu0 0.0
      %2812 = vmatprep.subr.mxu0 0.0
      %2813 = vmatpush1.msra.mxu0 0.0
      %2814 = vmatprep.subr.mxu0 0.0
      %2815 = vmatpush1.msra.mxu0 0.0
      %2816 = vmatprep.subr.mxu0 0.0
      %2817 = vmatpush1.msra.mxu0 0.0
      %2818 = vmatprep.subr.mxu0 0.0
      %2819 = vmatpush1.msra.mxu0 0.0
      %2820 = vmatprep.subr.mxu0 0.0
      %2821 = vmatpush1.msra.mxu0 0.0
      %2822 = vmatprep.subr.mxu0 0.0
      %2823 = vmatpush1.msra.mxu0 0.0
      %2824 = vmatprep.subr.mxu0 0.0
      %2825 = vmatpush1.msra.mxu0 0.0
      %2826 = vmatprep.subr.mxu0 0.0
      %2827 = vmatpush1.msra.mxu0 0.0
      %2828 = vmatprep.subr.mxu0 0.0
      %2829 = vmatpush1.msra.mxu0 0.0
      %2830 = vmatprep.subr.mxu0 0.0
      %2831 = vmatpush1.msra.mxu0 0.0
      %2832 = vmatprep.subr.mxu0 0.0
      %2833 = vmatpush1.msra.mxu0 0.0
      %2834 = vmatprep.subr.mxu0 0.0
      %2835 = vmatpush1.msra.mxu0 0.0
      %2836 = vmatprep.subr.mxu0 0.0
      %2837 = vmatpush1.msra.mxu0 0.0
      %2838 = vmatprep.subr.mxu0 0.0
      %2839 = vmatpush1.msra.mxu0 0.0
      %2840 = vmatprep.subr.mxu0 0.0
      %2841 = vmatpush1.msra.mxu0 0.0
      %2842 = vmatprep.subr.mxu0 0.0
      %2843 = vmatpush1.msra.mxu0 0.0
      %2844 = vmatprep.subr.mxu0 0.0
      %2845 = vmatpush1.msra.mxu0 0.0
      %2846 = vmatprep.subr.mxu0 0.0
      %2847 = vmatpush1.msra.mxu0 0.0
      %2848 = vmatprep.subr.mxu0 0.0
      %2849 = vmatpush1.msra.mxu0 0.0
      %2850 = vmatprep.subr.mxu0 0.0
      %2851 = vmatpush1.msra.mxu0 0.0
      %2852 = vmatprep.subr.mxu0 0.0
      %2853 = vmatpush1.msra.mxu0 0.0
      %2854 = vmatprep.subr.mxu0 0.0
      %2855 = vmatpush1.msra.mxu0 0.0
      %2856 = vmatprep.subr.mxu0 0.0
      %2857 = vmatpush1.msra.mxu0 0.0
      %2858 = vmatprep.subr.mxu0 0.0
      %2859 = vmatpush1.msra.mxu0 0.0
      %2860 = vmatprep.subr.mxu0 0.0
      %2861 = vmatpush1.msra.mxu0 0.0
      %2862 = vmatprep.subr.mxu0 0.0
      %2863 = vmatpush1.msra.mxu0 0.0
      %2864 = vmatprep.mubr.f32.mxu0 0.0
      %2865 = vmatmul.mubr.f32.gmra.mrb[0].mxu0 %v2798
      %v2866 = vpop.f32.mrb[0].mxu0
      %v2867 = vadd.f32 0.0, %v2866
      %v2868 = vpop.f32.mrb[0].mxu0
      %2869 = vdwg.mxu0
      %v2870 = vadd.f32 %v2790, %v2867
      %s2871 = scalar_lea.vmem [#allocation4], 4
      %v2872 = vld [vmem:[%s2871] ss:$4 sm:$0x7]
      %v2873 = vld [vmem:[%s7 + $0x30] sm:$0xff]
      %v2874 = vld [vmem:[%s7 + $0x38] sm:$0xff]
      %v2876 = vsel %vm1998, %v2872, 0
      %2878 = vmatprep.subr.mxu0 0.0
      %2879 = vmatpush1.msra.mxu0 %v2873
      %2880 = vmatprep.subr.mxu0 0.0
      %2881 = vmatpush1.msra.mxu0 %v2874
      %2882 = vmatprep.subr.mxu0 0.0
      %2883 = vmatpush1.msra.mxu0 0.0
      %2884 = vmatprep.subr.mxu0 0.0
      %2885 = vmatpush1.msra.mxu0 0.0
      %2886 = vmatprep.subr.mxu0 0.0
      %2887 = vmatpush1.msra.mxu0 0.0
      %2888 = vmatprep.subr.mxu0 0.0
      %2889 = vmatpush1.msra.mxu0 0.0
      %2890 = vmatprep.subr.mxu0 0.0
      %2891 = vmatpush1.msra.mxu0 0.0
      %2892 = vmatprep.subr.mxu0 0.0
      %2893 = vmatpush1.msra.mxu0 0.0
      %2894 = vmatprep.subr.mxu0 0.0
      %2895 = vmatpush1.msra.mxu0 0.0
      %2896 = vmatprep.subr.mxu0 0.0
      %2897 = vmatpush1.msra.mxu0 0.0
      %2898 = vmatprep.subr.mxu0 0.0
      %2899 = vmatpush1.msra.mxu0 0.0
      %2900 = vmatprep.subr.mxu0 0.0
      %2901 = vmatpush1.msra.mxu0 0.0
      %2902 = vmatprep.subr.mxu0 0.0
      %2903 = vmatpush1.msra.mxu0 0.0
      %2904 = vmatprep.subr.mxu0 0.0
      %2905 = vmatpush1.msra.mxu0 0.0
      %2906 = vmatprep.subr.mxu0 0.0
      %2907 = vmatpush1.msra.mxu0 0.0
      %2908 = vmatprep.subr.mxu0 0.0
      %2909 = vmatpush1.msra.mxu0 0.0
      %2910 = vmatprep.subr.mxu0 0.0
      %2911 = vmatpush1.msra.mxu0 0.0
      %2912 = vmatprep.subr.mxu0 0.0
      %2913 = vmatpush1.msra.mxu0 0.0
      %2914 = vmatprep.subr.mxu0 0.0
      %2915 = vmatpush1.msra.mxu0 0.0
      %2916 = vmatprep.subr.mxu0 0.0
      %2917 = vmatpush1.msra.mxu0 0.0
      %2918 = vmatprep.subr.mxu0 0.0
      %2919 = vmatpush1.msra.mxu0 0.0
      %2920 = vmatprep.subr.mxu0 0.0
      %2921 = vmatpush1.msra.mxu0 0.0
      %2922 = vmatprep.subr.mxu0 0.0
      %2923 = vmatpush1.msra.mxu0 0.0
      %2924 = vmatprep.subr.mxu0 0.0
      %2925 = vmatpush1.msra.mxu0 0.0
      %2926 = vmatprep.subr.mxu0 0.0
      %2927 = vmatpush1.msra.mxu0 0.0
      %2928 = vmatprep.subr.mxu0 0.0
      %2929 = vmatpush1.msra.mxu0 0.0
      %2930 = vmatprep.subr.mxu0 0.0
      %2931 = vmatpush1.msra.mxu0 0.0
      %2932 = vmatprep.subr.mxu0 0.0
      %2933 = vmatpush1.msra.mxu0 0.0
      %2934 = vmatprep.subr.mxu0 0.0
      %2935 = vmatpush1.msra.mxu0 0.0
      %2936 = vmatprep.subr.mxu0 0.0
      %2937 = vmatpush1.msra.mxu0 0.0
      %2938 = vmatprep.subr.mxu0 0.0
      %2939 = vmatpush1.msra.mxu0 0.0
      %2940 = vmatprep.subr.mxu0 0.0
      %2941 = vmatpush1.msra.mxu0 0.0
      %2942 = vmatprep.mubr.f32.mxu0 0.0
      %2943 = vmatmul.mubr.f32.gmra.mrb[0].mxu0 %v2876
      %v2944 = vpop.f32.mrb[0].mxu0
      %v2945 = vadd.f32 0.0, %v2944
      %v2946 = vpop.f32.mrb[0].mxu0
      %2947 = vdwg.mxu0
      %v2948 = vadd.f32 %v2870, %v2945
      %s2949 = scalar_lea.vmem [#allocation4], 5
      %v2950 = vld [vmem:[%s2949] ss:$4 sm:$0x7]
      %v2951 = vld [vmem:[%s7 + $0x40] sm:$0xff]
      %v2952 = vld [vmem:[%s7 + $0x48] sm:$0xff]
      %v2954 = vsel %vm1998, %v2950, 0
      %2956 = vmatprep.subr.mxu0 0.0
      %2957 = vmatpush1.msra.mxu0 %v2951
      %2958 = vmatprep.subr.mxu0 0.0
      %2959 = vmatpush1.msra.mxu0 %v2952
      %2960 = vmatprep.subr.mxu0 0.0
      %2961 = vmatpush1.msra.mxu0 0.0
      %2962 = vmatprep.subr.mxu0 0.0
      %2963 = vmatpush1.msra.mxu0 0.0
      %2964 = vmatprep.subr.mxu0 0.0
      %2965 = vmatpush1.msra.mxu0 0.0
      %2966 = vmatprep.subr.mxu0 0.0
      %2967 = vmatpush1.msra.mxu0 0.0
      %2968 = vmatprep.subr.mxu0 0.0
      %2969 = vmatpush1.msra.mxu0 0.0
      %2970 = vmatprep.subr.mxu0 0.0
      %2971 = vmatpush1.msra.mxu0 0.0
      %2972 = vmatprep.subr.mxu0 0.0
      %2973 = vmatpush1.msra.mxu0 0.0
      %2974 = vmatprep.subr.mxu0 0.0
      %2975 = vmatpush1.msra.mxu0 0.0
      %2976 = vmatprep.subr.mxu0 0.0
      %2977 = vmatpush1.msra.mxu0 0.0
      %2978 = vmatprep.subr.mxu0 0.0
      %2979 = vmatpush1.msra.mxu0 0.0
      %2980 = vmatprep.subr.mxu0 0.0
      %2981 = vmatpush1.msra.mxu0 0.0
      %2982 = vmatprep.subr.mxu0 0.0
      %2983 = vmatpush1.msra.mxu0 0.0
      %2984 = vmatprep.subr.mxu0 0.0
      %2985 = vmatpush1.msra.mxu0 0.0
      %2986 = vmatprep.subr.mxu0 0.0
      %2987 = vmatpush1.msra.mxu0 0.0
      %2988 = vmatprep.subr.mxu0 0.0
      %2989 = vmatpush1.msra.mxu0 0.0
      %2990 = vmatprep.subr.mxu0 0.0
      %2991 = vmatpush1.msra.mxu0 0.0
      %2992 = vmatprep.subr.mxu0 0.0
      %2993 = vmatpush1.msra.mxu0 0.0
      %2994 = vmatprep.subr.mxu0 0.0
      %2995 = vmatpush1.msra.mxu0 0.0
      %2996 = vmatprep.subr.mxu0 0.0
      %2997 = vmatpush1.msra.mxu0 0.0
      %2998 = vmatprep.subr.mxu0 0.0
      %2999 = vmatpush1.msra.mxu0 0.0
      %3000 = vmatprep.subr.mxu0 0.0
      %3001 = vmatpush1.msra.mxu0 0.0
      %3002 = vmatprep.subr.mxu0 0.0
      %3003 = vmatpush1.msra.mxu0 0.0
      %3004 = vmatprep.subr.mxu0 0.0
      %3005 = vmatpush1.msra.mxu0 0.0
      %3006 = vmatprep.subr.mxu0 0.0
      %3007 = vmatpush1.msra.mxu0 0.0
      %3008 = vmatprep.subr.mxu0 0.0
      %3009 = vmatpush1.msra.mxu0 0.0
      %3010 = vmatprep.subr.mxu0 0.0
      %3011 = vmatpush1.msra.mxu0 0.0
      %3012 = vmatprep.subr.mxu0 0.0
      %3013 = vmatpush1.msra.mxu0 0.0
      %3014 = vmatprep.subr.mxu0 0.0
      %3015 = vmatpush1.msra.mxu0 0.0
      %3016 = vmatprep.subr.mxu0 0.0
      %3017 = vmatpush1.msra.mxu0 0.0
      %3018 = vmatprep.subr.mxu0 0.0
      %3019 = vmatpush1.msra.mxu0 0.0
      %3020 = vmatprep.mubr.f32.mxu0 0.0
      %3021 = vmatmul.mubr.f32.gmra.mrb[0].mxu0 %v2954
      %v3022 = vpop.f32.mrb[0].mxu0
      %v3023 = vadd.f32 0.0, %v3022
      %v3024 = vpop.f32.mrb[0].mxu0
      %3025 = vdwg.mxu0
      %v3026 = vadd.f32 %v2948, %v3023
      %s3027 = scalar_lea.vmem [#allocation4], 6
      %v3028 = vld [vmem:[%s3027] ss:$4 sm:$0x7]
      %v3029 = vld [vmem:[%s7 + $0x50] sm:$0xff]
      %v3030 = vld [vmem:[%s7 + $0x58] sm:$0xff]
      %v3032 = vsel %vm1998, %v3028, 0
      %3034 = vmatprep.subr.mxu0 0.0
      %3035 = vmatpush1.msra.mxu0 %v3029
      %3036 = vmatprep.subr.mxu0 0.0
      %3037 = vmatpush1.msra.mxu0 %v3030
      %3038 = vmatprep.subr.mxu0 0.0
      %3039 = vmatpush1.msra.mxu0 0.0
      %3040 = vmatprep.subr.mxu0 0.0
      %3041 = vmatpush1.msra.mxu0 0.0
      %3042 = vmatprep.subr.mxu0 0.0
      %3043 = vmatpush1.msra.mxu0 0.0
      %3044 = vmatprep.subr.mxu0 0.0
      %3045 = vmatpush1.msra.mxu0 0.0
      %3046 = vmatprep.subr.mxu0 0.0
      %3047 = vmatpush1.msra.mxu0 0.0
      %3048 = vmatprep.subr.mxu0 0.0
      %3049 = vmatpush1.msra.mxu0 0.0
      %3050 = vmatprep.subr.mxu0 0.0
      %3051 = vmatpush1.msra.mxu0 0.0
      %3052 = vmatprep.subr.mxu0 0.0
      %3053 = vmatpush1.msra.mxu0 0.0
      %3054 = vmatprep.subr.mxu0 0.0
      %3055 = vmatpush1.msra.mxu0 0.0
      %3056 = vmatprep.subr.mxu0 0.0
      %3057 = vmatpush1.msra.mxu0 0.0
      %3058 = vmatprep.subr.mxu0 0.0
      %3059 = vmatpush1.msra.mxu0 0.0
      %3060 = vmatprep.subr.mxu0 0.0
      %3061 = vmatpush1.msra.mxu0 0.0
      %3062 = vmatprep.subr.mxu0 0.0
      %3063 = vmatpush1.msra.mxu0 0.0
      %3064 = vmatprep.subr.mxu0 0.0
      %3065 = vmatpush1.msra.mxu0 0.0
      %3066 = vmatprep.subr.mxu0 0.0
      %3067 = vmatpush1.msra.mxu0 0.0
      %3068 = vmatprep.subr.mxu0 0.0
      %3069 = vmatpush1.msra.mxu0 0.0
      %3070 = vmatprep.subr.mxu0 0.0
      %3071 = vmatpush1.msra.mxu0 0.0
      %3072 = vmatprep.subr.mxu0 0.0
      %3073 = vmatpush1.msra.mxu0 0.0
      %3074 = vmatprep.subr.mxu0 0.0
      %3075 = vmatpush1.msra.mxu0 0.0
      %3076 = vmatprep.subr.mxu0 0.0
      %3077 = vmatpush1.msra.mxu0 0.0
      %3078 = vmatprep.subr.mxu0 0.0
      %3079 = vmatpush1.msra.mxu0 0.0
      %3080 = vmatprep.subr.mxu0 0.0
      %3081 = vmatpush1.msra.mxu0 0.0
      %3082 = vmatprep.subr.mxu0 0.0
      %3083 = vmatpush1.msra.mxu0 0.0
      %3084 = vmatprep.subr.mxu0 0.0
      %3085 = vmatpush1.msra.mxu0 0.0
      %3086 = vmatprep.subr.mxu0 0.0
      %3087 = vmatpush1.msra.mxu0 0.0
      %3088 = vmatprep.subr.mxu0 0.0
      %3089 = vmatpush1.msra.mxu0 0.0
      %3090 = vmatprep.subr.mxu0 0.0
      %3091 = vmatpush1.msra.mxu0 0.0
      %3092 = vmatprep.subr.mxu0 0.0
      %3093 = vmatpush1.msra.mxu0 0.0
      %3094 = vmatprep.subr.mxu0 0.0
      %3095 = vmatpush1.msra.mxu0 0.0
      %3096 = vmatprep.subr.mxu0 0.0
      %3097 = vmatpush1.msra.mxu0 0.0
      %3098 = vmatprep.mubr.f32.mxu0 0.0
      %3099 = vmatmul.mubr.f32.gmra.mrb[0].mxu0 %v3032
      %v3100 = vpop.f32.mrb[0].mxu0
      %v3101 = vadd.f32 0.0, %v3100
      %v3102 = vpop.f32.mrb[0].mxu0
      %3103 = vdwg.mxu0
      %v3104 = vadd.f32 %v3026, %v3101
      %s3105 = scalar_lea.vmem [#allocation4], 7
      %v3106 = vld [vmem:[%s3105] ss:$4 sm:$0x7]
      %v3107 = vld [vmem:[%s7 + $0x60] sm:$0xff]
      %v3108 = vld [vmem:[%s7 + $0x68] sm:$0xff]
      %v3110 = vsel %vm1998, %v3106, 0
      %3112 = vmatprep.subr.mxu0 0.0
      %3113 = vmatpush1.msra.mxu0 %v3107
      %3114 = vmatprep.subr.mxu0 0.0
      %3115 = vmatpush1.msra.mxu0 %v3108
      %3116 = vmatprep.subr.mxu0 0.0
      %3117 = vmatpush1.msra.mxu0 0.0
      %3118 = vmatprep.subr.mxu0 0.0
      %3119 = vmatpush1.msra.mxu0 0.0
      %3120 = vmatprep.subr.mxu0 0.0
      %3121 = vmatpush1.msra.mxu0 0.0
      %3122 = vmatprep.subr.mxu0 0.0
      %3123 = vmatpush1.msra.mxu0 0.0
      %3124 = vmatprep.subr.mxu0 0.0
      %3125 = vmatpush1.msra.mxu0 0.0
      %3126 = vmatprep.subr.mxu0 0.0
      %3127 = vmatpush1.msra.mxu0 0.0
      %3128 = vmatprep.subr.mxu0 0.0
      %3129 = vmatpush1.msra.mxu0 0.0
      %3130 = vmatprep.subr.mxu0 0.0
      %3131 = vmatpush1.msra.mxu0 0.0
      %3132 = vmatprep.subr.mxu0 0.0
      %3133 = vmatpush1.msra.mxu0 0.0
      %3134 = vmatprep.subr.mxu0 0.0
      %3135 = vmatpush1.msra.mxu0 0.0
      %3136 = vmatprep.subr.mxu0 0.0
      %3137 = vmatpush1.msra.mxu0 0.0
      %3138 = vmatprep.subr.mxu0 0.0
      %3139 = vmatpush1.msra.mxu0 0.0
      %3140 = vmatprep.subr.mxu0 0.0
      %3141 = vmatpush1.msra.mxu0 0.0
      %3142 = vmatprep.subr.mxu0 0.0
      %3143 = vmatpush1.msra.mxu0 0.0
      %3144 = vmatprep.subr.mxu0 0.0
      %3145 = vmatpush1.msra.mxu0 0.0
      %3146 = vmatprep.subr.mxu0 0.0
      %3147 = vmatpush1.msra.mxu0 0.0
      %3148 = vmatprep.subr.mxu0 0.0
      %3149 = vmatpush1.msra.mxu0 0.0
      %3150 = vmatprep.subr.mxu0 0.0
      %3151 = vmatpush1.msra.mxu0 0.0
      %3152 = vmatprep.subr.mxu0 0.0
      %3153 = vmatpush1.msra.mxu0 0.0
      %3154 = vmatprep.subr.mxu0 0.0
      %3155 = vmatpush1.msra.mxu0 0.0
      %3156 = vmatprep.subr.mxu0 0.0
      %3157 = vmatpush1.msra.mxu0 0.0
      %3158 = vmatprep.subr.mxu0 0.0
      %3159 = vmatpush1.msra.mxu0 0.0
      %3160 = vmatprep.subr.mxu0 0.0
      %3161 = vmatpush1.msra.mxu0 0.0
      %3162 = vmatprep.subr.mxu0 0.0
      %3163 = vmatpush1.msra.mxu0 0.0
      %3164 = vmatprep.subr.mxu0 0.0
      %3165 = vmatpush1.msra.mxu0 0.0
      %3166 = vmatprep.subr.mxu0 0.0
      %3167 = vmatpush1.msra.mxu0 0.0
      %3168 = vmatprep.subr.mxu0 0.0
      %3169 = vmatpush1.msra.mxu0 0.0
      %3170 = vmatprep.subr.mxu0 0.0
      %3171 = vmatpush1.msra.mxu0 0.0
      %3172 = vmatprep.subr.mxu0 0.0
      %3173 = vmatpush1.msra.mxu0 0.0
      %3174 = vmatprep.subr.mxu0 0.0
      %3175 = vmatpush1.msra.mxu0 0.0
      %3176 = vmatprep.mubr.f32.mxu0 0.0
      %3177 = vmatmul.mubr.f32.gmra.mrb[0].mxu0 %v3110
      %v3178 = vpop.f32.mrb[0].mxu0
      %v3179 = vadd.f32 0.0, %v3178
      %v3180 = vpop.f32.mrb[0].mxu0
      %3181 = vdwg.mxu0
      %v3182 = vadd.f32 %v3104, %v3179
      %v3184 = vlaneseq
      %v3185 = vshrl.u32 %v3184, 7
      %v3186 = vsub.s32 0, %v3185
      %v3187 = vrot.slane %v2638, %v3186
      %v3189 = vadd.f32 %v3182, %v3187
      %v3190 = vmax.f32 %v3189, 0.0
      %vm3191 = vcmask 190464
      %3192 = vst.msk [vmem:[#allocation5 + $0x4] sm:$0x7] %vm3191, %v3190
      %v3193 = vld [vmem:[%s10] sm:$0x1]
      %s3194 = scalar_lea.vmem [#allocation5], 1
      %v3195 = vld [vmem:[%s3194] ss:$4 sm:$0x1]
      %v3196 = vld [vmem:[%s9] sm:$0xff]
      %v3197 = vld [vmem:[%s9 + $0x8] sm:$0xff]
      %v3198 = vld [vmem:[%s9 + $0x10] sm:$0xff]
      %s3199 = scalar_lea.vmem [#allocation5], 2
      %v3200 = vld [vmem:[%s3199] ss:$4 sm:$0x1]
      %v3201 = vld [vmem:[%s9 + $0x18] sm:$0xff]
      %v3202 = vld [vmem:[%s9 + $0x20] sm:$0xff]
      %v3203 = vld [vmem:[%s9 + $0x28] sm:$0xff]
      %vm3204 = vcmask 195584
      %v3206 = vsel %vm3204, %v3200, 0
      %3208 = vmatprep.subr.mxu0 0.0
      %3209 = vmatpush1.msra.mxu0 %v3201
      %3210 = vmatprep.subr.mxu0 0.0
      %3211 = vmatpush1.msra.mxu0 %v3202
      %3212 = vmatprep.subr.mxu0 0.0
      %3213 = vmatpush1.msra.mxu0 %v3203
      %3214 = vmatprep.subr.mxu0 0.0
      %3215 = vmatpush1.msra.mxu0 0.0
      %3216 = vmatprep.subr.mxu0 0.0
      %3217 = vmatpush1.msra.mxu0 0.0
      %3218 = vmatprep.subr.mxu0 0.0
      %3219 = vmatpush1.msra.mxu0 0.0
      %3220 = vmatprep.subr.mxu0 0.0
      %3221 = vmatpush1.msra.mxu0 0.0
      %3222 = vmatprep.subr.mxu0 0.0
      %3223 = vmatpush1.msra.mxu0 0.0
      %3224 = vmatprep.subr.mxu0 0.0
      %3225 = vmatpush1.msra.mxu0 0.0
      %3226 = vmatprep.subr.mxu0 0.0
      %3227 = vmatpush1.msra.mxu0 0.0
      %3228 = vmatprep.subr.mxu0 0.0
      %3229 = vmatpush1.msra.mxu0 0.0
      %3230 = vmatprep.subr.mxu0 0.0
      %3231 = vmatpush1.msra.mxu0 0.0
      %3232 = vmatprep.subr.mxu0 0.0
      %3233 = vmatpush1.msra.mxu0 0.0
      %3234 = vmatprep.subr.mxu0 0.0
      %3235 = vmatpush1.msra.mxu0 0.0
      %3236 = vmatprep.subr.mxu0 0.0
      %3237 = vmatpush1.msra.mxu0 0.0
      %3238 = vmatprep.subr.mxu0 0.0
      %3239 = vmatpush1.msra.mxu0 0.0
      %3240 = vmatprep.subr.mxu0 0.0
      %3241 = vmatpush1.msra.mxu0 0.0
      %3242 = vmatprep.subr.mxu0 0.0
      %3243 = vmatpush1.msra.mxu0 0.0
      %3244 = vmatprep.subr.mxu0 0.0
      %3245 = vmatpush1.msra.mxu0 0.0
      %3246 = vmatprep.subr.mxu0 0.0
      %3247 = vmatpush1.msra.mxu0 0.0
      %3248 = vmatprep.subr.mxu0 0.0
      %3249 = vmatpush1.msra.mxu0 0.0
      %3250 = vmatprep.subr.mxu0 0.0
      %3251 = vmatpush1.msra.mxu0 0.0
      %3252 = vmatprep.subr.mxu0 0.0
      %3253 = vmatpush1.msra.mxu0 0.0
      %3254 = vmatprep.subr.mxu0 0.0
      %3255 = vmatpush1.msra.mxu0 0.0
      %3256 = vmatprep.subr.mxu0 0.0
      %3257 = vmatpush1.msra.mxu0 0.0
      %3258 = vmatprep.subr.mxu0 0.0
      %3259 = vmatpush1.msra.mxu0 0.0
      %3260 = vmatprep.subr.mxu0 0.0
      %3261 = vmatpush1.msra.mxu0 0.0
      %3262 = vmatprep.subr.mxu0 0.0
      %3263 = vmatpush1.msra.mxu0 0.0
      %3264 = vmatprep.subr.mxu0 0.0
      %3265 = vmatpush1.msra.mxu0 0.0
      %3266 = vmatprep.subr.mxu0 0.0
      %3267 = vmatpush1.msra.mxu0 0.0
      %3268 = vmatprep.subr.mxu0 0.0
      %3269 = vmatpush1.msra.mxu0 0.0
      %3270 = vmatprep.subr.mxu0 0.0
      %3271 = vmatpush1.msra.mxu0 0.0
      %3272 = vmatprep.mubr.f32.mxu0 0.0
      %3273 = vmatmul.mubr.f32.gmra.mrb[0].mxu0 %v3206
      %v3274 = vpop.f32.mrb[0].mxu0
      %v3275 = vadd.f32 0.0, %v3274
      %v3276 = vpop.f32.mrb[0].mxu0
      %3277 = vdwg.mxu0
      %v3279 = vsel %vm3204, %v3195, 0
      %3281 = vmatprep.subr.mxu0 0.0
      %3282 = vmatpush1.msra.mxu0 %v3196
      %3283 = vmatprep.subr.mxu0 0.0
      %3284 = vmatpush1.msra.mxu0 %v3197
      %3285 = vmatprep.subr.mxu0 0.0
      %3286 = vmatpush1.msra.mxu0 %v3198
      %3287 = vmatprep.subr.mxu0 0.0
      %3288 = vmatpush1.msra.mxu0 0.0
      %3289 = vmatprep.subr.mxu0 0.0
      %3290 = vmatpush1.msra.mxu0 0.0
      %3291 = vmatprep.subr.mxu0 0.0
      %3292 = vmatpush1.msra.mxu0 0.0
      %3293 = vmatprep.subr.mxu0 0.0
      %3294 = vmatpush1.msra.mxu0 0.0
      %3295 = vmatprep.subr.mxu0 0.0
      %3296 = vmatpush1.msra.mxu0 0.0
      %3297 = vmatprep.subr.mxu0 0.0
      %3298 = vmatpush1.msra.mxu0 0.0
      %3299 = vmatprep.subr.mxu0 0.0
      %3300 = vmatpush1.msra.mxu0 0.0
      %3301 = vmatprep.subr.mxu0 0.0
      %3302 = vmatpush1.msra.mxu0 0.0
      %3303 = vmatprep.subr.mxu0 0.0
      %3304 = vmatpush1.msra.mxu0 0.0
      %3305 = vmatprep.subr.mxu0 0.0
      %3306 = vmatpush1.msra.mxu0 0.0
      %3307 = vmatprep.subr.mxu0 0.0
      %3308 = vmatpush1.msra.mxu0 0.0
      %3309 = vmatprep.subr.mxu0 0.0
      %3310 = vmatpush1.msra.mxu0 0.0
      %3311 = vmatprep.subr.mxu0 0.0
      %3312 = vmatpush1.msra.mxu0 0.0
      %3313 = vmatprep.subr.mxu0 0.0
      %3314 = vmatpush1.msra.mxu0 0.0
      %3315 = vmatprep.subr.mxu0 0.0
      %3316 = vmatpush1.msra.mxu0 0.0
      %3317 = vmatprep.subr.mxu0 0.0
      %3318 = vmatpush1.msra.mxu0 0.0
      %3319 = vmatprep.subr.mxu0 0.0
      %3320 = vmatpush1.msra.mxu0 0.0
      %3321 = vmatprep.subr.mxu0 0.0
      %3322 = vmatpush1.msra.mxu0 0.0
      %3323 = vmatprep.subr.mxu0 0.0
      %3324 = vmatpush1.msra.mxu0 0.0
      %3325 = vmatprep.subr.mxu0 0.0
      %3326 = vmatpush1.msra.mxu0 0.0
      %3327 = vmatprep.subr.mxu0 0.0
      %3328 = vmatpush1.msra.mxu0 0.0
      %3329 = vmatprep.subr.mxu0 0.0
      %3330 = vmatpush1.msra.mxu0 0.0
      %3331 = vmatprep.subr.mxu0 0.0
      %3332 = vmatpush1.msra.mxu0 0.0
      %3333 = vmatprep.subr.mxu0 0.0
      %3334 = vmatpush1.msra.mxu0 0.0
      %3335 = vmatprep.subr.mxu0 0.0
      %3336 = vmatpush1.msra.mxu0 0.0
      %3337 = vmatprep.subr.mxu0 0.0
      %3338 = vmatpush1.msra.mxu0 0.0
      %3339 = vmatprep.subr.mxu0 0.0
      %3340 = vmatpush1.msra.mxu0 0.0
      %3341 = vmatprep.subr.mxu0 0.0
      %3342 = vmatpush1.msra.mxu0 0.0
      %3343 = vmatprep.subr.mxu0 0.0
      %3344 = vmatpush1.msra.mxu0 0.0
      %3345 = vmatprep.mubr.f32.mxu0 0.0
      %3346 = vmatmul.mubr.f32.gmra.mrb[0].mxu0 %v3279
      %v3347 = vpop.f32.mrb[0].mxu0
      %v3348 = vadd.f32 %v3275, %v3347
      %v3349 = vpop.f32.mrb[0].mxu0
      %3350 = vdwg.mxu0
      %s3351 = scalar_lea.vmem [#allocation5], 3
      %v3352 = vld [vmem:[%s3351] ss:$4 sm:$0x1]
      %v3353 = vld [vmem:[%s9 + $0x30] sm:$0xff]
      %v3354 = vld [vmem:[%s9 + $0x38] sm:$0xff]
      %v3355 = vld [vmem:[%s9 + $0x40] sm:$0xff]
      %v3357 = vsel %vm3204, %v3352, 0
      %3359 = vmatprep.subr.mxu0 0.0
      %3360 = vmatpush1.msra.mxu0 %v3353
      %3361 = vmatprep.subr.mxu0 0.0
      %3362 = vmatpush1.msra.mxu0 %v3354
      %3363 = vmatprep.subr.mxu0 0.0
      %3364 = vmatpush1.msra.mxu0 %v3355
      %3365 = vmatprep.subr.mxu0 0.0
      %3366 = vmatpush1.msra.mxu0 0.0
      %3367 = vmatprep.subr.mxu0 0.0
      %3368 = vmatpush1.msra.mxu0 0.0
      %3369 = vmatprep.subr.mxu0 0.0
      %3370 = vmatpush1.msra.mxu0 0.0
      %3371 = vmatprep.subr.mxu0 0.0
      %3372 = vmatpush1.msra.mxu0 0.0
      %3373 = vmatprep.subr.mxu0 0.0
      %3374 = vmatpush1.msra.mxu0 0.0
      %3375 = vmatprep.subr.mxu0 0.0
      %3376 = vmatpush1.msra.mxu0 0.0
      %3377 = vmatprep.subr.mxu0 0.0
      %3378 = vmatpush1.msra.mxu0 0.0
      %3379 = vmatprep.subr.mxu0 0.0
      %3380 = vmatpush1.msra.mxu0 0.0
      %3381 = vmatprep.subr.mxu0 0.0
      %3382 = vmatpush1.msra.mxu0 0.0
      %3383 = vmatprep.subr.mxu0 0.0
      %3384 = vmatpush1.msra.mxu0 0.0
      %3385 = vmatprep.subr.mxu0 0.0
      %3386 = vmatpush1.msra.mxu0 0.0
      %3387 = vmatprep.subr.mxu0 0.0
      %3388 = vmatpush1.msra.mxu0 0.0
      %3389 = vmatprep.subr.mxu0 0.0
      %3390 = vmatpush1.msra.mxu0 0.0
      %3391 = vmatprep.subr.mxu0 0.0
      %3392 = vmatpush1.msra.mxu0 0.0
      %3393 = vmatprep.subr.mxu0 0.0
      %3394 = vmatpush1.msra.mxu0 0.0
      %3395 = vmatprep.subr.mxu0 0.0
      %3396 = vmatpush1.msra.mxu0 0.0
      %3397 = vmatprep.subr.mxu0 0.0
      %3398 = vmatpush1.msra.mxu0 0.0
      %3399 = vmatprep.subr.mxu0 0.0
      %3400 = vmatpush1.msra.mxu0 0.0
      %3401 = vmatprep.subr.mxu0 0.0
      %3402 = vmatpush1.msra.mxu0 0.0
      %3403 = vmatprep.subr.mxu0 0.0
      %3404 = vmatpush1.msra.mxu0 0.0
      %3405 = vmatprep.subr.mxu0 0.0
      %3406 = vmatpush1.msra.mxu0 0.0
      %3407 = vmatprep.subr.mxu0 0.0
      %3408 = vmatpush1.msra.mxu0 0.0
      %3409 = vmatprep.subr.mxu0 0.0
      %3410 = vmatpush1.msra.mxu0 0.0
      %3411 = vmatprep.subr.mxu0 0.0
      %3412 = vmatpush1.msra.mxu0 0.0
      %3413 = vmatprep.subr.mxu0 0.0
      %3414 = vmatpush1.msra.mxu0 0.0
      %3415 = vmatprep.subr.mxu0 0.0
      %3416 = vmatpush1.msra.mxu0 0.0
      %3417 = vmatprep.subr.mxu0 0.0
      %3418 = vmatpush1.msra.mxu0 0.0
      %3419 = vmatprep.subr.mxu0 0.0
      %3420 = vmatpush1.msra.mxu0 0.0
      %3421 = vmatprep.subr.mxu0 0.0
      %3422 = vmatpush1.msra.mxu0 0.0
      %3423 = vmatprep.mubr.f32.mxu0 0.0
      %3424 = vmatmul.mubr.f32.gmra.mrb[0].mxu0 %v3357
      %v3425 = vpop.f32.mrb[0].mxu0
      %v3426 = vadd.f32 0.0, %v3425
      %v3427 = vpop.f32.mrb[0].mxu0
      %3428 = vdwg.mxu0
      %v3429 = vadd.f32 %v3348, %v3426
      %s3430 = scalar_lea.vmem [#allocation5], 4
      %v3431 = vld [vmem:[%s3430] ss:$4 sm:$0x1]
      %v3432 = vld [vmem:[%s9 + $0x48] sm:$0xff]
      %v3433 = vld [vmem:[%s9 + $0x50] sm:$0xff]
      %v3434 = vld [vmem:[%s9 + $0x58] sm:$0xff]
      %v3436 = vsel %vm3204, %v3431, 0
      %3438 = vmatprep.subr.mxu0 0.0
      %3439 = vmatpush1.msra.mxu0 %v3432
      %3440 = vmatprep.subr.mxu0 0.0
      %3441 = vmatpush1.msra.mxu0 %v3433
      %3442 = vmatprep.subr.mxu0 0.0
      %3443 = vmatpush1.msra.mxu0 %v3434
      %3444 = vmatprep.subr.mxu0 0.0
      %3445 = vmatpush1.msra.mxu0 0.0
      %3446 = vmatprep.subr.mxu0 0.0
      %3447 = vmatpush1.msra.mxu0 0.0
      %3448 = vmatprep.subr.mxu0 0.0
      %3449 = vmatpush1.msra.mxu0 0.0
      %3450 = vmatprep.subr.mxu0 0.0
      %3451 = vmatpush1.msra.mxu0 0.0
      %3452 = vmatprep.subr.mxu0 0.0
      %3453 = vmatpush1.msra.mxu0 0.0
      %3454 = vmatprep.subr.mxu0 0.0
      %3455 = vmatpush1.msra.mxu0 0.0
      %3456 = vmatprep.subr.mxu0 0.0
      %3457 = vmatpush1.msra.mxu0 0.0
      %3458 = vmatprep.subr.mxu0 0.0
      %3459 = vmatpush1.msra.mxu0 0.0
      %3460 = vmatprep.subr.mxu0 0.0
      %3461 = vmatpush1.msra.mxu0 0.0
      %3462 = vmatprep.subr.mxu0 0.0
      %3463 = vmatpush1.msra.mxu0 0.0
      %3464 = vmatprep.subr.mxu0 0.0
      %3465 = vmatpush1.msra.mxu0 0.0
      %3466 = vmatprep.subr.mxu0 0.0
      %3467 = vmatpush1.msra.mxu0 0.0
      %3468 = vmatprep.subr.mxu0 0.0
      %3469 = vmatpush1.msra.mxu0 0.0
      %3470 = vmatprep.subr.mxu0 0.0
      %3471 = vmatpush1.msra.mxu0 0.0
      %3472 = vmatprep.subr.mxu0 0.0
      %3473 = vmatpush1.msra.mxu0 0.0
      %3474 = vmatprep.subr.mxu0 0.0
      %3475 = vmatpush1.msra.mxu0 0.0
      %3476 = vmatprep.subr.mxu0 0.0
      %3477 = vmatpush1.msra.mxu0 0.0
      %3478 = vmatprep.subr.mxu0 0.0
      %3479 = vmatpush1.msra.mxu0 0.0
      %3480 = vmatprep.subr.mxu0 0.0
      %3481 = vmatpush1.msra.mxu0 0.0
      %3482 = vmatprep.subr.mxu0 0.0
      %3483 = vmatpush1.msra.mxu0 0.0
      %3484 = vmatprep.subr.mxu0 0.0
      %3485 = vmatpush1.msra.mxu0 0.0
      %3486 = vmatprep.subr.mxu0 0.0
      %3487 = vmatpush1.msra.mxu0 0.0
      %3488 = vmatprep.subr.mxu0 0.0
      %3489 = vmatpush1.msra.mxu0 0.0
      %3490 = vmatprep.subr.mxu0 0.0
      %3491 = vmatpush1.msra.mxu0 0.0
      %3492 = vmatprep.subr.mxu0 0.0
      %3493 = vmatpush1.msra.mxu0 0.0
      %3494 = vmatprep.subr.mxu0 0.0
      %3495 = vmatpush1.msra.mxu0 0.0
      %3496 = vmatprep.subr.mxu0 0.0
      %3497 = vmatpush1.msra.mxu0 0.0
      %3498 = vmatprep.subr.mxu0 0.0
      %3499 = vmatpush1.msra.mxu0 0.0
      %3500 = vmatprep.subr.mxu0 0.0
      %3501 = vmatpush1.msra.mxu0 0.0
      %3502 = vmatprep.mubr.f32.mxu0 0.0
      %3503 = vmatmul.mubr.f32.gmra.mrb[0].mxu0 %v3436
      %v3504 = vpop.f32.mrb[0].mxu0
      %v3505 = vadd.f32 0.0, %v3504
      %v3506 = vpop.f32.mrb[0].mxu0
      %3507 = vdwg.mxu0
      %v3508 = vadd.f32 %v3429, %v3505
      %s3509 = scalar_lea.vmem [#allocation5], 5
      %v3510 = vld [vmem:[%s3509] ss:$4 sm:$0x1]
      %v3511 = vld [vmem:[%s9 + $0x60] sm:$0xff]
      %v3512 = vld [vmem:[%s9 + $0x68] sm:$0xff]
      %v3513 = vld [vmem:[%s9 + $0x70] sm:$0xff]
      %v3515 = vsel %vm3204, %v3510, 0
      %3517 = vmatprep.subr.mxu0 0.0
      %3518 = vmatpush1.msra.mxu0 %v3511
      %3519 = vmatprep.subr.mxu0 0.0
      %3520 = vmatpush1.msra.mxu0 %v3512
      %3521 = vmatprep.subr.mxu0 0.0
      %3522 = vmatpush1.msra.mxu0 %v3513
      %3523 = vmatprep.subr.mxu0 0.0
      %3524 = vmatpush1.msra.mxu0 0.0
      %3525 = vmatprep.subr.mxu0 0.0
      %3526 = vmatpush1.msra.mxu0 0.0
      %3527 = vmatprep.subr.mxu0 0.0
      %3528 = vmatpush1.msra.mxu0 0.0
      %3529 = vmatprep.subr.mxu0 0.0
      %3530 = vmatpush1.msra.mxu0 0.0
      %3531 = vmatprep.subr.mxu0 0.0
      %3532 = vmatpush1.msra.mxu0 0.0
      %3533 = vmatprep.subr.mxu0 0.0
      %3534 = vmatpush1.msra.mxu0 0.0
      %3535 = vmatprep.subr.mxu0 0.0
      %3536 = vmatpush1.msra.mxu0 0.0
      %3537 = vmatprep.subr.mxu0 0.0
      %3538 = vmatpush1.msra.mxu0 0.0
      %3539 = vmatprep.subr.mxu0 0.0
      %3540 = vmatpush1.msra.mxu0 0.0
      %3541 = vmatprep.subr.mxu0 0.0
      %3542 = vmatpush1.msra.mxu0 0.0
      %3543 = vmatprep.subr.mxu0 0.0
      %3544 = vmatpush1.msra.mxu0 0.0
      %3545 = vmatprep.subr.mxu0 0.0
      %3546 = vmatpush1.msra.mxu0 0.0
      %3547 = vmatprep.subr.mxu0 0.0
      %3548 = vmatpush1.msra.mxu0 0.0
      %3549 = vmatprep.subr.mxu0 0.0
      %3550 = vmatpush1.msra.mxu0 0.0
      %3551 = vmatprep.subr.mxu0 0.0
      %3552 = vmatpush1.msra.mxu0 0.0
      %3553 = vmatprep.subr.mxu0 0.0
      %3554 = vmatpush1.msra.mxu0 0.0
      %3555 = vmatprep.subr.mxu0 0.0
      %3556 = vmatpush1.msra.mxu0 0.0
      %3557 = vmatprep.subr.mxu0 0.0
      %3558 = vmatpush1.msra.mxu0 0.0
      %3559 = vmatprep.subr.mxu0 0.0
      %3560 = vmatpush1.msra.mxu0 0.0
      %3561 = vmatprep.subr.mxu0 0.0
      %3562 = vmatpush1.msra.mxu0 0.0
      %3563 = vmatprep.subr.mxu0 0.0
      %3564 = vmatpush1.msra.mxu0 0.0
      %3565 = vmatprep.subr.mxu0 0.0
      %3566 = vmatpush1.msra.mxu0 0.0
      %3567 = vmatprep.subr.mxu0 0.0
      %3568 = vmatpush1.msra.mxu0 0.0
      %3569 = vmatprep.subr.mxu0 0.0
      %3570 = vmatpush1.msra.mxu0 0.0
      %3571 = vmatprep.subr.mxu0 0.0
      %3572 = vmatpush1.msra.mxu0 0.0
      %3573 = vmatprep.subr.mxu0 0.0
      %3574 = vmatpush1.msra.mxu0 0.0
      %3575 = vmatprep.subr.mxu0 0.0
      %3576 = vmatpush1.msra.mxu0 0.0
      %3577 = vmatprep.subr.mxu0 0.0
      %3578 = vmatpush1.msra.mxu0 0.0
      %3579 = vmatprep.subr.mxu0 0.0
      %3580 = vmatpush1.msra.mxu0 0.0
      %3581 = vmatprep.mubr.f32.mxu0 0.0
      %3582 = vmatmul.mubr.f32.gmra.mrb[0].mxu0 %v3515
      %v3583 = vpop.f32.mrb[0].mxu0
      %v3584 = vadd.f32 0.0, %v3583
      %v3585 = vpop.f32.mrb[0].mxu0
      %3586 = vdwg.mxu0
      %v3587 = vadd.f32 %v3508, %v3584
      %s3588 = scalar_lea.vmem [#allocation5], 6
      %v3589 = vld [vmem:[%s3588] ss:$4 sm:$0x1]
      %v3590 = vld [vmem:[%s9 + $0x78] sm:$0xff]
      %v3591 = vld [vmem:[%s9 + $0x80] sm:$0xff]
      %v3592 = vld [vmem:[%s9 + $0x88] sm:$0xff]
      %v3594 = vsel %vm3204, %v3589, 0
      %3596 = vmatprep.subr.mxu0 0.0
      %3597 = vmatpush1.msra.mxu0 %v3590
      %3598 = vmatprep.subr.mxu0 0.0
      %3599 = vmatpush1.msra.mxu0 %v3591
      %3600 = vmatprep.subr.mxu0 0.0
      %3601 = vmatpush1.msra.mxu0 %v3592
      %3602 = vmatprep.subr.mxu0 0.0
      %3603 = vmatpush1.msra.mxu0 0.0
      %3604 = vmatprep.subr.mxu0 0.0
      %3605 = vmatpush1.msra.mxu0 0.0
      %3606 = vmatprep.subr.mxu0 0.0
      %3607 = vmatpush1.msra.mxu0 0.0
      %3608 = vmatprep.subr.mxu0 0.0
      %3609 = vmatpush1.msra.mxu0 0.0
      %3610 = vmatprep.subr.mxu0 0.0
      %3611 = vmatpush1.msra.mxu0 0.0
      %3612 = vmatprep.subr.mxu0 0.0
      %3613 = vmatpush1.msra.mxu0 0.0
      %3614 = vmatprep.subr.mxu0 0.0
      %3615 = vmatpush1.msra.mxu0 0.0
      %3616 = vmatprep.subr.mxu0 0.0
      %3617 = vmatpush1.msra.mxu0 0.0
      %3618 = vmatprep.subr.mxu0 0.0
      %3619 = vmatpush1.msra.mxu0 0.0
      %3620 = vmatprep.subr.mxu0 0.0
      %3621 = vmatpush1.msra.mxu0 0.0
      %3622 = vmatprep.subr.mxu0 0.0
      %3623 = vmatpush1.msra.mxu0 0.0
      %3624 = vmatprep.subr.mxu0 0.0
      %3625 = vmatpush1.msra.mxu0 0.0
      %3626 = vmatprep.subr.mxu0 0.0
      %3627 = vmatpush1.msra.mxu0 0.0
      %3628 = vmatprep.subr.mxu0 0.0
      %3629 = vmatpush1.msra.mxu0 0.0
      %3630 = vmatprep.subr.mxu0 0.0
      %3631 = vmatpush1.msra.mxu0 0.0
      %3632 = vmatprep.subr.mxu0 0.0
      %3633 = vmatpush1.msra.mxu0 0.0
      %3634 = vmatprep.subr.mxu0 0.0
      %3635 = vmatpush1.msra.mxu0 0.0
      %3636 = vmatprep.subr.mxu0 0.0
      %3637 = vmatpush1.msra.mxu0 0.0
      %3638 = vmatprep.subr.mxu0 0.0
      %3639 = vmatpush1.msra.mxu0 0.0
      %3640 = vmatprep.subr.mxu0 0.0
      %3641 = vmatpush1.msra.mxu0 0.0
      %3642 = vmatprep.subr.mxu0 0.0
      %3643 = vmatpush1.msra.mxu0 0.0
      %3644 = vmatprep.subr.mxu0 0.0
      %3645 = vmatpush1.msra.mxu0 0.0
      %3646 = vmatprep.subr.mxu0 0.0
      %3647 = vmatpush1.msra.mxu0 0.0
      %3648 = vmatprep.subr.mxu0 0.0
      %3649 = vmatpush1.msra.mxu0 0.0
      %3650 = vmatprep.subr.mxu0 0.0
      %3651 = vmatpush1.msra.mxu0 0.0
      %3652 = vmatprep.subr.mxu0 0.0
      %3653 = vmatpush1.msra.mxu0 0.0
      %3654 = vmatprep.subr.mxu0 0.0
      %3655 = vmatpush1.msra.mxu0 0.0
      %3656 = vmatprep.subr.mxu0 0.0
      %3657 = vmatpush1.msra.mxu0 0.0
      %3658 = vmatprep.subr.mxu0 0.0
      %3659 = vmatpush1.msra.mxu0 0.0
      %3660 = vmatprep.mubr.f32.mxu0 0.0
      %3661 = vmatmul.mubr.f32.gmra.mrb[0].mxu0 %v3594
      %v3662 = vpop.f32.mrb[0].mxu0
      %v3663 = vadd.f32 0.0, %v3662
      %v3664 = vpop.f32.mrb[0].mxu0
      %3665 = vdwg.mxu0
      %v3666 = vadd.f32 %v3587, %v3663
      %s3667 = scalar_lea.vmem [#allocation5], 7
      %v3668 = vld [vmem:[%s3667] ss:$4 sm:$0x1]
      %v3669 = vld [vmem:[%s9 + $0x90] sm:$0xff]
      %v3670 = vld [vmem:[%s9 + $0x98] sm:$0xff]
      %v3671 = vld [vmem:[%s9 + $0xa0] sm:$0xff]
      %v3673 = vsel %vm3204, %v3668, 0
      %3675 = vmatprep.subr.mxu0 0.0
      %3676 = vmatpush1.msra.mxu0 %v3669
      %3677 = vmatprep.subr.mxu0 0.0
      %3678 = vmatpush1.msra.mxu0 %v3670
      %3679 = vmatprep.subr.mxu0 0.0
      %3680 = vmatpush1.msra.mxu0 %v3671
      %3681 = vmatprep.subr.mxu0 0.0
      %3682 = vmatpush1.msra.mxu0 0.0
      %3683 = vmatprep.subr.mxu0 0.0
      %3684 = vmatpush1.msra.mxu0 0.0
      %3685 = vmatprep.subr.mxu0 0.0
      %3686 = vmatpush1.msra.mxu0 0.0
      %3687 = vmatprep.subr.mxu0 0.0
      %3688 = vmatpush1.msra.mxu0 0.0
      %3689 = vmatprep.subr.mxu0 0.0
      %3690 = vmatpush1.msra.mxu0 0.0
      %3691 = vmatprep.subr.mxu0 0.0
      %3692 = vmatpush1.msra.mxu0 0.0
      %3693 = vmatprep.subr.mxu0 0.0
      %3694 = vmatpush1.msra.mxu0 0.0
      %3695 = vmatprep.subr.mxu0 0.0
      %3696 = vmatpush1.msra.mxu0 0.0
      %3697 = vmatprep.subr.mxu0 0.0
      %3698 = vmatpush1.msra.mxu0 0.0
      %3699 = vmatprep.subr.mxu0 0.0
      %3700 = vmatpush1.msra.mxu0 0.0
      %3701 = vmatprep.subr.mxu0 0.0
      %3702 = vmatpush1.msra.mxu0 0.0
      %3703 = vmatprep.subr.mxu0 0.0
      %3704 = vmatpush1.msra.mxu0 0.0
      %3705 = vmatprep.subr.mxu0 0.0
      %3706 = vmatpush1.msra.mxu0 0.0
      %3707 = vmatprep.subr.mxu0 0.0
      %3708 = vmatpush1.msra.mxu0 0.0
      %3709 = vmatprep.subr.mxu0 0.0
      %3710 = vmatpush1.msra.mxu0 0.0
      %3711 = vmatprep.subr.mxu0 0.0
      %3712 = vmatpush1.msra.mxu0 0.0
      %3713 = vmatprep.subr.mxu0 0.0
      %3714 = vmatpush1.msra.mxu0 0.0
      %3715 = vmatprep.subr.mxu0 0.0
      %3716 = vmatpush1.msra.mxu0 0.0
      %3717 = vmatprep.subr.mxu0 0.0
      %3718 = vmatpush1.msra.mxu0 0.0
      %3719 = vmatprep.subr.mxu0 0.0
      %3720 = vmatpush1.msra.mxu0 0.0
      %3721 = vmatprep.subr.mxu0 0.0
      %3722 = vmatpush1.msra.mxu0 0.0
      %3723 = vmatprep.subr.mxu0 0.0
      %3724 = vmatpush1.msra.mxu0 0.0
      %3725 = vmatprep.subr.mxu0 0.0
      %3726 = vmatpush1.msra.mxu0 0.0
      %3727 = vmatprep.subr.mxu0 0.0
      %3728 = vmatpush1.msra.mxu0 0.0
      %3729 = vmatprep.subr.mxu0 0.0
      %3730 = vmatpush1.msra.mxu0 0.0
      %3731 = vmatprep.subr.mxu0 0.0
      %3732 = vmatpush1.msra.mxu0 0.0
      %3733 = vmatprep.subr.mxu0 0.0
      %3734 = vmatpush1.msra.mxu0 0.0
      %3735 = vmatprep.subr.mxu0 0.0
      %3736 = vmatpush1.msra.mxu0 0.0
      %3737 = vmatprep.subr.mxu0 0.0
      %3738 = vmatpush1.msra.mxu0 0.0
      %3739 = vmatprep.mubr.f32.mxu0 0.0
      %3740 = vmatmul.mubr.f32.gmra.mrb[0].mxu0 %v3673
      %v3741 = vpop.f32.mrb[0].mxu0
      %v3742 = vadd.f32 0.0, %v3741
      %v3743 = vpop.f32.mrb[0].mxu0
      %3744 = vdwg.mxu0
      %v3745 = vadd.f32 %v3666, %v3742
      %v3746 = vadd.f32 %v3745, %v3193
      %v3747 = vmax.f32 %v3746, 0.0
      %vm3748 = vcmask 253952
      %3749 = vst.msk [vmem:[#allocation6 + $0x4] sm:$0x1] %vm3748, %v3747
      %v3750 = vld [vmem:[%s12] sm:$0x1]
      %v3751 = vld [vmem:[%s11 + $0x40] sm:$0xff]
      %v3752 = vld [vmem:[%s11 + $0x48] sm:$0xff]
      %v3753 = vld [vmem:[%s11 + $0x50] sm:$0xff]
      %v3754 = vld [vmem:[%s11 + $0x58] sm:$0xff]
      %v3755 = vld [vmem:[#allocation6 + $0x4] sm:$0x1]
      %v3756 = vld [vmem:[%s11 + $0xc0] sm:$0xff]
      %v3757 = vld [vmem:[%s11 + $0xc8] sm:$0xff]
      %v3758 = vld [vmem:[%s11 + $0xd0] sm:$0xff]
      %v3759 = vld [vmem:[%s11 + $0xd8] sm:$0xff]
      %v3760 = vld [vmem:[#allocation6 + $0x3] sm:$0x1]
      %vm3761 = vcmask 261120
      %v3763 = vsel %vm3761, %v3760, 0
      %3765 = vmatprep.subr.mxu0 0.0
      %3766 = vmatpush1.msra.mxu0 %v3756
      %3767 = vmatprep.subr.mxu0 0.0
      %3768 = vmatpush1.msra.mxu0 %v3757
      %3769 = vmatprep.subr.mxu0 0.0
      %3770 = vmatpush1.msra.mxu0 %v3758
      %3771 = vmatprep.subr.mxu0 0.0
      %3772 = vmatpush1.msra.mxu0 %v3759
      %3773 = vmatprep.subr.mxu0 0.0
      %3774 = vmatpush1.msra.mxu0 0.0
      %3775 = vmatprep.subr.mxu0 0.0
      %3776 = vmatpush1.msra.mxu0 0.0
      %3777 = vmatprep.subr.mxu0 0.0
      %3778 = vmatpush1.msra.mxu0 0.0
      %3779 = vmatprep.subr.mxu0 0.0
      %3780 = vmatpush1.msra.mxu0 0.0
      %3781 = vmatprep.subr.mxu0 0.0
      %3782 = vmatpush1.msra.mxu0 0.0
      %3783 = vmatprep.subr.mxu0 0.0
      %3784 = vmatpush1.msra.mxu0 0.0
      %3785 = vmatprep.subr.mxu0 0.0
      %3786 = vmatpush1.msra.mxu0 0.0
      %3787 = vmatprep.subr.mxu0 0.0
      %3788 = vmatpush1.msra.mxu0 0.0
      %3789 = vmatprep.subr.mxu0 0.0
      %3790 = vmatpush1.msra.mxu0 0.0
      %3791 = vmatprep.subr.mxu0 0.0
      %3792 = vmatpush1.msra.mxu0 0.0
      %3793 = vmatprep.subr.mxu0 0.0
      %3794 = vmatpush1.msra.mxu0 0.0
      %3795 = vmatprep.subr.mxu0 0.0
      %3796 = vmatpush1.msra.mxu0 0.0
      %3797 = vmatprep.subr.mxu0 0.0
      %3798 = vmatpush1.msra.mxu0 0.0
      %3799 = vmatprep.subr.mxu0 0.0
      %3800 = vmatpush1.msra.mxu0 0.0
      %3801 = vmatprep.subr.mxu0 0.0
      %3802 = vmatpush1.msra.mxu0 0.0
      %3803 = vmatprep.subr.mxu0 0.0
      %3804 = vmatpush1.msra.mxu0 0.0
      %3805 = vmatprep.subr.mxu0 0.0
      %3806 = vmatpush1.msra.mxu0 0.0
      %3807 = vmatprep.subr.mxu0 0.0
      %3808 = vmatpush1.msra.mxu0 0.0
      %3809 = vmatprep.subr.mxu0 0.0
      %3810 = vmatpush1.msra.mxu0 0.0
      %3811 = vmatprep.subr.mxu0 0.0
      %3812 = vmatpush1.msra.mxu0 0.0
      %3813 = vmatprep.subr.mxu0 0.0
      %3814 = vmatpush1.msra.mxu0 0.0
      %3815 = vmatprep.subr.mxu0 0.0
      %3816 = vmatpush1.msra.mxu0 0.0
      %3817 = vmatprep.subr.mxu0 0.0
      %3818 = vmatpush1.msra.mxu0 0.0
      %3819 = vmatprep.subr.mxu0 0.0
      %3820 = vmatpush1.msra.mxu0 0.0
      %3821 = vmatprep.subr.mxu0 0.0
      %3822 = vmatpush1.msra.mxu0 0.0
      %3823 = vmatprep.subr.mxu0 0.0
      %3824 = vmatpush1.msra.mxu0 0.0
      %3825 = vmatprep.subr.mxu0 0.0
      %3826 = vmatpush1.msra.mxu0 0.0
      %3827 = vmatprep.subr.mxu0 0.0
      %3828 = vmatpush1.msra.mxu0 0.0
      %3829 = vmatprep.mubr.f32.mxu0 0.0
      %3830 = vmatmul.mubr.f32.gmra.mrb[0].mxu0 %v3763
      %v3831 = vpop.f32.mrb[0].mxu0
      %v3832 = vadd.f32 0.0, %v3831
      %v3833 = vpop.f32.mrb[0].mxu0
      %3834 = vdwg.mxu0
      %v3836 = vsel %vm3761, %v3755, 0
      %3838 = vmatprep.subr.mxu0 0.0
      %3839 = vmatpush1.msra.mxu0 %v3751
      %3840 = vmatprep.subr.mxu0 0.0
      %3841 = vmatpush1.msra.mxu0 %v3752
      %3842 = vmatprep.subr.mxu0 0.0
      %3843 = vmatpush1.msra.mxu0 %v3753
      %3844 = vmatprep.subr.mxu0 0.0
      %3845 = vmatpush1.msra.mxu0 %v3754
      %3846 = vmatprep.subr.mxu0 0.0
      %3847 = vmatpush1.msra.mxu0 0.0
      %3848 = vmatprep.subr.mxu0 0.0
      %3849 = vmatpush1.msra.mxu0 0.0
      %3850 = vmatprep.subr.mxu0 0.0
      %3851 = vmatpush1.msra.mxu0 0.0
      %3852 = vmatprep.subr.mxu0 0.0
      %3853 = vmatpush1.msra.mxu0 0.0
      %3854 = vmatprep.subr.mxu0 0.0
      %3855 = vmatpush1.msra.mxu0 0.0
      %3856 = vmatprep.subr.mxu0 0.0
      %3857 = vmatpush1.msra.mxu0 0.0
      %3858 = vmatprep.subr.mxu0 0.0
      %3859 = vmatpush1.msra.mxu0 0.0
      %3860 = vmatprep.subr.mxu0 0.0
      %3861 = vmatpush1.msra.mxu0 0.0
      %3862 = vmatprep.subr.mxu0 0.0
      %3863 = vmatpush1.msra.mxu0 0.0
      %3864 = vmatprep.subr.mxu0 0.0
      %3865 = vmatpush1.msra.mxu0 0.0
      %3866 = vmatprep.subr.mxu0 0.0
      %3867 = vmatpush1.msra.mxu0 0.0
      %3868 = vmatprep.subr.mxu0 0.0
      %3869 = vmatpush1.msra.mxu0 0.0
      %3870 = vmatprep.subr.mxu0 0.0
      %3871 = vmatpush1.msra.mxu0 0.0
      %3872 = vmatprep.subr.mxu0 0.0
      %3873 = vmatpush1.msra.mxu0 0.0
      %3874 = vmatprep.subr.mxu0 0.0
      %3875 = vmatpush1.msra.mxu0 0.0
      %3876 = vmatprep.subr.mxu0 0.0
      %3877 = vmatpush1.msra.mxu0 0.0
      %3878 = vmatprep.subr.mxu0 0.0
      %3879 = vmatpush1.msra.mxu0 0.0
      %3880 = vmatprep.subr.mxu0 0.0
      %3881 = vmatpush1.msra.mxu0 0.0
      %3882 = vmatprep.subr.mxu0 0.0
      %3883 = vmatpush1.msra.mxu0 0.0
      %3884 = vmatprep.subr.mxu0 0.0
      %3885 = vmatpush1.msra.mxu0 0.0
      %3886 = vmatprep.subr.mxu0 0.0
      %3887 = vmatpush1.msra.mxu0 0.0
      %3888 = vmatprep.subr.mxu0 0.0
      %3889 = vmatpush1.msra.mxu0 0.0
      %3890 = vmatprep.subr.mxu0 0.0
      %3891 = vmatpush1.msra.mxu0 0.0
      %3892 = vmatprep.subr.mxu0 0.0
      %3893 = vmatpush1.msra.mxu0 0.0
      %3894 = vmatprep.subr.mxu0 0.0
      %3895 = vmatpush1.msra.mxu0 0.0
      %3896 = vmatprep.subr.mxu0 0.0
      %3897 = vmatpush1.msra.mxu0 0.0
      %3898 = vmatprep.subr.mxu0 0.0
      %3899 = vmatpush1.msra.mxu0 0.0
      %3900 = vmatprep.subr.mxu0 0.0
      %3901 = vmatpush1.msra.mxu0 0.0
      %3902 = vmatprep.mubr.f32.mxu0 0.0
      %3903 = vmatmul.mubr.f32.gmra.mrb[0].mxu0 %v3836
      %v3904 = vpop.f32.mrb[0].mxu0
      %v3905 = vadd.f32 %v3832, %v3904
      %v3906 = vpop.f32.mrb[0].mxu0
      %3907 = vdwg.mxu0
      %v3908 = vadd.f32 %v3905, %v3750
      %v3909 = vmax.f32 %v3908, 0.0
      %s3910 = scalar_lea.vmem [#allocation7], 4
      %3911 = vst [vmem:[%s3910] ss:$4 sm:$0x1] %v3909
      %v3912 = vld [vmem:[%s11 + $0x60] sm:$0xff]
      %v3913 = vld [vmem:[%s11 + $0x68] sm:$0xff]
      %v3914 = vld [vmem:[%s11 + $0x70] sm:$0xff]
      %v3915 = vld [vmem:[%s11 + $0x78] sm:$0xff]
      %v3916 = vld [vmem:[#allocation6 + $0x4] sm:$0x1]
      %v3918 = vsel %vm3761, %v3916, 0
      %3920 = vmatprep.subr.mxu0 0.0
      %3921 = vmatpush1.msra.mxu0 %v3912
      %3922 = vmatprep.subr.mxu0 0.0
      %3923 = vmatpush1.msra.mxu0 %v3913
      %3924 = vmatprep.subr.mxu0 0.0
      %3925 = vmatpush1.msra.mxu0 %v3914
      %3926 = vmatprep.subr.mxu0 0.0
      %3927 = vmatpush1.msra.mxu0 %v3915
      %3928 = vmatprep.subr.mxu0 0.0
      %3929 = vmatpush1.msra.mxu0 0.0
      %3930 = vmatprep.subr.mxu0 0.0
      %3931 = vmatpush1.msra.mxu0 0.0
      %3932 = vmatprep.subr.mxu0 0.0
      %3933 = vmatpush1.msra.mxu0 0.0
      %3934 = vmatprep.subr.mxu0 0.0
      %3935 = vmatpush1.msra.mxu0 0.0
      %3936 = vmatprep.subr.mxu0 0.0
      %3937 = vmatpush1.msra.mxu0 0.0
      %3938 = vmatprep.subr.mxu0 0.0
      %3939 = vmatpush1.msra.mxu0 0.0
      %3940 = vmatprep.subr.mxu0 0.0
      %3941 = vmatpush1.msra.mxu0 0.0
      %3942 = vmatprep.subr.mxu0 0.0
      %3943 = vmatpush1.msra.mxu0 0.0
      %3944 = vmatprep.subr.mxu0 0.0
      %3945 = vmatpush1.msra.mxu0 0.0
      %3946 = vmatprep.subr.mxu0 0.0
      %3947 = vmatpush1.msra.mxu0 0.0
      %3948 = vmatprep.subr.mxu0 0.0
      %3949 = vmatpush1.msra.mxu0 0.0
      %3950 = vmatprep.subr.mxu0 0.0
      %3951 = vmatpush1.msra.mxu0 0.0
      %3952 = vmatprep.subr.mxu0 0.0
      %3953 = vmatpush1.msra.mxu0 0.0
      %3954 = vmatprep.subr.mxu0 0.0
      %3955 = vmatpush1.msra.mxu0 0.0
      %3956 = vmatprep.subr.mxu0 0.0
      %3957 = vmatpush1.msra.mxu0 0.0
      %3958 = vmatprep.subr.mxu0 0.0
      %3959 = vmatpush1.msra.mxu0 0.0
      %3960 = vmatprep.subr.mxu0 0.0
      %3961 = vmatpush1.msra.mxu0 0.0
      %3962 = vmatprep.subr.mxu0 0.0
      %3963 = vmatpush1.msra.mxu0 0.0
      %3964 = vmatprep.subr.mxu0 0.0
      %3965 = vmatpush1.msra.mxu0 0.0
      %3966 = vmatprep.subr.mxu0 0.0
      %3967 = vmatpush1.msra.mxu0 0.0
      %3968 = vmatprep.subr.mxu0 0.0
      %3969 = vmatpush1.msra.mxu0 0.0
      %3970 = vmatprep.subr.mxu0 0.0
      %3971 = vmatpush1.msra.mxu0 0.0
      %3972 = vmatprep.subr.mxu0 0.0
      %3973 = vmatpush1.msra.mxu0 0.0
      %3974 = vmatprep.subr.mxu0 0.0
      %3975 = vmatpush1.msra.mxu0 0.0
      %3976 = vmatprep.subr.mxu0 0.0
      %3977 = vmatpush1.msra.mxu0 0.0
      %3978 = vmatprep.subr.mxu0 0.0
      %3979 = vmatpush1.msra.mxu0 0.0
      %3980 = vmatprep.subr.mxu0 0.0
      %3981 = vmatpush1.msra.mxu0 0.0
      %3982 = vmatprep.subr.mxu0 0.0
      %3983 = vmatpush1.msra.mxu0 0.0
      %3984 = vmatprep.mubr.f32.mxu0 0.0
      %3985 = vmatmul.mubr.f32.gmra.mrb[0].mxu0 %v3918
      %v3986 = vpop.f32.mrb[0].mxu0
      %v3987 = vadd.f32 %v3750, %v3986
      %v3988 = vpop.f32.mrb[0].mxu0
      %3989 = vdwg.mxu0
      %v3990 = vmax.f32 %v3987, 0.0
      %s3991 = scalar_lea.vmem [#allocation7], 5
      %3992 = vst [vmem:[%s3991] ss:$4 sm:$0x1] %v3990
      %v3993 = vld [vmem:[%s11] sm:$0xff]
      %v3994 = vld [vmem:[%s11 + $0x8] sm:$0xff]
      %v3995 = vld [vmem:[%s11 + $0x10] sm:$0xff]
      %v3996 = vld [vmem:[%s11 + $0x18] sm:$0xff]
      %v3997 = vld [vmem:[#allocation6 + $0x5] sm:$0x1]
      %v3998 = vld [vmem:[%s11 + $0x80] sm:$0xff]
      %v3999 = vld [vmem:[%s11 + $0x88] sm:$0xff]
      %v4000 = vld [vmem:[%s11 + $0x90] sm:$0xff]
      %v4001 = vld [vmem:[%s11 + $0x98] sm:$0xff]
      %v4002 = vld [vmem:[#allocation6 + $0x4] sm:$0x1]
      %v4004 = vsel %vm3761, %v4002, 0
      %4006 = vmatprep.subr.mxu0 0.0
      %4007 = vmatpush1.msra.mxu0 %v3998
      %4008 = vmatprep.subr.mxu0 0.0
      %4009 = vmatpush1.msra.mxu0 %v3999
      %4010 = vmatprep.subr.mxu0 0.0
      %4011 = vmatpush1.msra.mxu0 %v4000
      %4012 = vmatprep.subr.mxu0 0.0
      %4013 = vmatpush1.msra.mxu0 %v4001
      %4014 = vmatprep.subr.mxu0 0.0
      %4015 = vmatpush1.msra.mxu0 0.0
      %4016 = vmatprep.subr.mxu0 0.0
      %4017 = vmatpush1.msra.mxu0 0.0
      %4018 = vmatprep.subr.mxu0 0.0
      %4019 = vmatpush1.msra.mxu0 0.0
      %4020 = vmatprep.subr.mxu0 0.0
      %4021 = vmatpush1.msra.mxu0 0.0
      %4022 = vmatprep.subr.mxu0 0.0
      %4023 = vmatpush1.msra.mxu0 0.0
      %4024 = vmatprep.subr.mxu0 0.0
      %4025 = vmatpush1.msra.mxu0 0.0
      %4026 = vmatprep.subr.mxu0 0.0
      %4027 = vmatpush1.msra.mxu0 0.0
      %4028 = vmatprep.subr.mxu0 0.0
      %4029 = vmatpush1.msra.mxu0 0.0
      %4030 = vmatprep.subr.mxu0 0.0
      %4031 = vmatpush1.msra.mxu0 0.0
      %4032 = vmatprep.subr.mxu0 0.0
      %4033 = vmatpush1.msra.mxu0 0.0
      %4034 = vmatprep.subr.mxu0 0.0
      %4035 = vmatpush1.msra.mxu0 0.0
      %4036 = vmatprep.subr.mxu0 0.0
      %4037 = vmatpush1.msra.mxu0 0.0
      %4038 = vmatprep.subr.mxu0 0.0
      %4039 = vmatpush1.msra.mxu0 0.0
      %4040 = vmatprep.subr.mxu0 0.0
      %4041 = vmatpush1.msra.mxu0 0.0
      %4042 = vmatprep.subr.mxu0 0.0
      %4043 = vmatpush1.msra.mxu0 0.0
      %4044 = vmatprep.subr.mxu0 0.0
      %4045 = vmatpush1.msra.mxu0 0.0
      %4046 = vmatprep.subr.mxu0 0.0
      %4047 = vmatpush1.msra.mxu0 0.0
      %4048 = vmatprep.subr.mxu0 0.0
      %4049 = vmatpush1.msra.mxu0 0.0
      %4050 = vmatprep.subr.mxu0 0.0
      %4051 = vmatpush1.msra.mxu0 0.0
      %4052 = vmatprep.subr.mxu0 0.0
      %4053 = vmatpush1.msra.mxu0 0.0
      %4054 = vmatprep.subr.mxu0 0.0
      %4055 = vmatpush1.msra.mxu0 0.0
      %4056 = vmatprep.subr.mxu0 0.0
      %4057 = vmatpush1.msra.mxu0 0.0
      %4058 = vmatprep.subr.mxu0 0.0
      %4059 = vmatpush1.msra.mxu0 0.0
      %4060 = vmatprep.subr.mxu0 0.0
      %4061 = vmatpush1.msra.mxu0 0.0
      %4062 = vmatprep.subr.mxu0 0.0
      %4063 = vmatpush1.msra.mxu0 0.0
      %4064 = vmatprep.subr.mxu0 0.0
      %4065 = vmatpush1.msra.mxu0 0.0
      %4066 = vmatprep.subr.mxu0 0.0
      %4067 = vmatpush1.msra.mxu0 0.0
      %4068 = vmatprep.subr.mxu0 0.0
      %4069 = vmatpush1.msra.mxu0 0.0
      %4070 = vmatprep.mubr.f32.mxu0 0.0
      %4071 = vmatmul.mubr.f32.gmra.mrb[0].mxu0 %v4004
      %v4072 = vpop.f32.mrb[0].mxu0
      %v4073 = vadd.f32 0.0, %v4072
      %v4074 = vpop.f32.mrb[0].mxu0
      %4075 = vdwg.mxu0
      %v4077 = vsel %vm3761, %v3997, 0
      %4079 = vmatprep.subr.mxu0 0.0
      %4080 = vmatpush1.msra.mxu0 %v3993
      %4081 = vmatprep.subr.mxu0 0.0
      %4082 = vmatpush1.msra.mxu0 %v3994
      %4083 = vmatprep.subr.mxu0 0.0
      %4084 = vmatpush1.msra.mxu0 %v3995
      %4085 = vmatprep.subr.mxu0 0.0
      %4086 = vmatpush1.msra.mxu0 %v3996
      %4087 = vmatprep.subr.mxu0 0.0
      %4088 = vmatpush1.msra.mxu0 0.0
      %4089 = vmatprep.subr.mxu0 0.0
      %4090 = vmatpush1.msra.mxu0 0.0
      %4091 = vmatprep.subr.mxu0 0.0
      %4092 = vmatpush1.msra.mxu0 0.0
      %4093 = vmatprep.subr.mxu0 0.0
      %4094 = vmatpush1.msra.mxu0 0.0
      %4095 = vmatprep.subr.mxu0 0.0
      %4096 = vmatpush1.msra.mxu0 0.0
      %4097 = vmatprep.subr.mxu0 0.0
      %4098 = vmatpush1.msra.mxu0 0.0
      %4099 = vmatprep.subr.mxu0 0.0
      %4100 = vmatpush1.msra.mxu0 0.0
      %4101 = vmatprep.subr.mxu0 0.0
      %4102 = vmatpush1.msra.mxu0 0.0
      %4103 = vmatprep.subr.mxu0 0.0
      %4104 = vmatpush1.msra.mxu0 0.0
      %4105 = vmatprep.subr.mxu0 0.0
      %4106 = vmatpush1.msra.mxu0 0.0
      %4107 = vmatprep.subr.mxu0 0.0
      %4108 = vmatpush1.msra.mxu0 0.0
      %4109 = vmatprep.subr.mxu0 0.0
      %4110 = vmatpush1.msra.mxu0 0.0
      %4111 = vmatprep.subr.mxu0 0.0
      %4112 = vmatpush1.msra.mxu0 0.0
      %4113 = vmatprep.subr.mxu0 0.0
      %4114 = vmatpush1.msra.mxu0 0.0
      %4115 = vmatprep.subr.mxu0 0.0
      %4116 = vmatpush1.msra.mxu0 0.0
      %4117 = vmatprep.subr.mxu0 0.0
      %4118 = vmatpush1.msra.mxu0 0.0
      %4119 = vmatprep.subr.mxu0 0.0
      %4120 = vmatpush1.msra.mxu0 0.0
      %4121 = vmatprep.subr.mxu0 0.0
      %4122 = vmatpush1.msra.mxu0 0.0
      %4123 = vmatprep.subr.mxu0 0.0
      %4124 = vmatpush1.msra.mxu0 0.0
      %4125 = vmatprep.subr.mxu0 0.0
      %4126 = vmatpush1.msra.mxu0 0.0
      %4127 = vmatprep.subr.mxu0 0.0
      %4128 = vmatpush1.msra.mxu0 0.0
      %4129 = vmatprep.subr.mxu0 0.0
      %4130 = vmatpush1.msra.mxu0 0.0
      %4131 = vmatprep.subr.mxu0 0.0
      %4132 = vmatpush1.msra.mxu0 0.0
      %4133 = vmatprep.subr.mxu0 0.0
      %4134 = vmatpush1.msra.mxu0 0.0
      %4135 = vmatprep.subr.mxu0 0.0
      %4136 = vmatpush1.msra.mxu0 0.0
      %4137 = vmatprep.subr.mxu0 0.0
      %4138 = vmatpush1.msra.mxu0 0.0
      %4139 = vmatprep.subr.mxu0 0.0
      %4140 = vmatpush1.msra.mxu0 0.0
      %4141 = vmatprep.subr.mxu0 0.0
      %4142 = vmatpush1.msra.mxu0 0.0
      %4143 = vmatprep.mubr.f32.mxu0 0.0
      %4144 = vmatmul.mubr.f32.gmra.mrb[0].mxu0 %v4077
      %v4145 = vpop.f32.mrb[0].mxu0
      %v4146 = vadd.f32 %v4073, %v4145
      %v4147 = vpop.f32.mrb[0].mxu0
      %4148 = vdwg.mxu0
      %v4149 = vadd.f32 %v4146, %v3750
      %v4150 = vmax.f32 %v4149, 0.0
      %s4151 = scalar_lea.vmem [#allocation7], 6
      %4152 = vst [vmem:[%s4151] ss:$4 sm:$0x1] %v4150
      %v4153 = vld [vmem:[%s14] sm:$0x1]
      %v4154 = vld [vmem:[%s13 + $0x60] sm:$0xff]
      %v4155 = vld [vmem:[%s13 + $0x68] sm:$0xff]
      %v4156 = vld [vmem:[%s13 + $0x70] sm:$0xff]
      %v4157 = vld [vmem:[#allocation7 + $0x4] sm:$0x7]
      %v4158 = vld [vmem:[%s13 + $0x78] sm:$0xff]
      %v4159 = vld [vmem:[%s13 + $0x80] sm:$0xff]
      %v4160 = vld [vmem:[%s13 + $0x88] sm:$0xff]
      %v4161 = vld [vmem:[#allocation5 + $0x4] sm:$0x7]
      %v4163 = vsel %vm3204, %v4161, 0
      %4165 = vmatprep.subr.mxu0 0.0
      %4166 = vmatpush1.msra.mxu0 %v4158
      %4167 = vmatprep.subr.mxu0 0.0
      %4168 = vmatpush1.msra.mxu0 %v4159
      %4169 = vmatprep.subr.mxu0 0.0
      %4170 = vmatpush1.msra.mxu0 %v4160
      %4171 = vmatprep.subr.mxu0 0.0
      %4172 = vmatpush1.msra.mxu0 0.0
      %4173 = vmatprep.subr.mxu0 0.0
      %4174 = vmatpush1.msra.mxu0 0.0
      %4175 = vmatprep.subr.mxu0 0.0
      %4176 = vmatpush1.msra.mxu0 0.0
      %4177 = vmatprep.subr.mxu0 0.0
      %4178 = vmatpush1.msra.mxu0 0.0
      %4179 = vmatprep.subr.mxu0 0.0
      %4180 = vmatpush1.msra.mxu0 0.0
      %4181 = vmatprep.subr.mxu0 0.0
      %4182 = vmatpush1.msra.mxu0 0.0
      %4183 = vmatprep.subr.mxu0 0.0
      %4184 = vmatpush1.msra.mxu0 0.0
      %4185 = vmatprep.subr.mxu0 0.0
      %4186 = vmatpush1.msra.mxu0 0.0
      %4187 = vmatprep.subr.mxu0 0.0
      %4188 = vmatpush1.msra.mxu0 0.0
      %4189 = vmatprep.subr.mxu0 0.0
      %4190 = vmatpush1.msra.mxu0 0.0
      %4191 = vmatprep.subr.mxu0 0.0
      %4192 = vmatpush1.msra.mxu0 0.0
      %4193 = vmatprep.subr.mxu0 0.0
      %4194 = vmatpush1.msra.mxu0 0.0
      %4195 = vmatprep.subr.mxu0 0.0
      %4196 = vmatpush1.msra.mxu0 0.0
      %4197 = vmatprep.subr.mxu0 0.0
      %4198 = vmatpush1.msra.mxu0 0.0
      %4199 = vmatprep.subr.mxu0 0.0
      %4200 = vmatpush1.msra.mxu0 0.0
      %4201 = vmatprep.subr.mxu0 0.0
      %4202 = vmatpush1.msra.mxu0 0.0
      %4203 = vmatprep.subr.mxu0 0.0
      %4204 = vmatpush1.msra.mxu0 0.0
      %4205 = vmatprep.subr.mxu0 0.0
      %4206 = vmatpush1.msra.mxu0 0.0
      %4207 = vmatprep.subr.mxu0 0.0
      %4208 = vmatpush1.msra.mxu0 0.0
      %4209 = vmatprep.subr.mxu0 0.0
      %4210 = vmatpush1.msra.mxu0 0.0
      %4211 = vmatprep.subr.mxu0 0.0
      %4212 = vmatpush1.msra.mxu0 0.0
      %4213 = vmatprep.subr.mxu0 0.0
      %4214 = vmatpush1.msra.mxu0 0.0
      %4215 = vmatprep.subr.mxu0 0.0
      %4216 = vmatpush1.msra.mxu0 0.0
      %4217 = vmatprep.subr.mxu0 0.0
      %4218 = vmatpush1.msra.mxu0 0.0
      %4219 = vmatprep.subr.mxu0 0.0
      %4220 = vmatpush1.msra.mxu0 0.0
      %4221 = vmatprep.subr.mxu0 0.0
      %4222 = vmatpush1.msra.mxu0 0.0
      %4223 = vmatprep.subr.mxu0 0.0
      %4224 = vmatpush1.msra.mxu0 0.0
      %4225 = vmatprep.subr.mxu0 0.0
      %4226 = vmatpush1.msra.mxu0 0.0
      %4227 = vmatprep.subr.mxu0 0.0
      %4228 = vmatpush1.msra.mxu0 0.0
      %4229 = vmatprep.mubr.f32.mxu0 0.0
      %4230 = vmatmul.mubr.f32.gmra.mrb[0].mxu0 %v4163
      %v4231 = vpop.f32.mrb[0].mxu0
      %v4232 = vadd.f32 0.0, %v4231
      %v4233 = vpop.f32.mrb[0].mxu0
      %4234 = vdwg.mxu0
      %v4236 = vsel %vm3204, %v4157, 0
      %4238 = vmatprep.subr.mxu0 0.0
      %4239 = vmatpush1.msra.mxu0 %v4154
      %4240 = vmatprep.subr.mxu0 0.0
      %4241 = vmatpush1.msra.mxu0 %v4155
      %4242 = vmatprep.subr.mxu0 0.0
      %4243 = vmatpush1.msra.mxu0 %v4156
      %4244 = vmatprep.subr.mxu0 0.0
      %4245 = vmatpush1.msra.mxu0 0.0
      %4246 = vmatprep.subr.mxu0 0.0
      %4247 = vmatpush1.msra.mxu0 0.0
      %4248 = vmatprep.subr.mxu0 0.0
      %4249 = vmatpush1.msra.mxu0 0.0
      %4250 = vmatprep.subr.mxu0 0.0
      %4251 = vmatpush1.msra.mxu0 0.0
      %4252 = vmatprep.subr.mxu0 0.0
      %4253 = vmatpush1.msra.mxu0 0.0
      %4254 = vmatprep.subr.mxu0 0.0
      %4255 = vmatpush1.msra.mxu0 0.0
      %4256 = vmatprep.subr.mxu0 0.0
      %4257 = vmatpush1.msra.mxu0 0.0
      %4258 = vmatprep.subr.mxu0 0.0
      %4259 = vmatpush1.msra.mxu0 0.0
      %4260 = vmatprep.subr.mxu0 0.0
      %4261 = vmatpush1.msra.mxu0 0.0
      %4262 = vmatprep.subr.mxu0 0.0
      %4263 = vmatpush1.msra.mxu0 0.0
      %4264 = vmatprep.subr.mxu0 0.0
      %4265 = vmatpush1.msra.mxu0 0.0
      %4266 = vmatprep.subr.mxu0 0.0
      %4267 = vmatpush1.msra.mxu0 0.0
      %4268 = vmatprep.subr.mxu0 0.0
      %4269 = vmatpush1.msra.mxu0 0.0
      %4270 = vmatprep.subr.mxu0 0.0
      %4271 = vmatpush1.msra.mxu0 0.0
      %4272 = vmatprep.subr.mxu0 0.0
      %4273 = vmatpush1.msra.mxu0 0.0
      %4274 = vmatprep.subr.mxu0 0.0
      %4275 = vmatpush1.msra.mxu0 0.0
      %4276 = vmatprep.subr.mxu0 0.0
      %4277 = vmatpush1.msra.mxu0 0.0
      %4278 = vmatprep.subr.mxu0 0.0
      %4279 = vmatpush1.msra.mxu0 0.0
      %4280 = vmatprep.subr.mxu0 0.0
      %4281 = vmatpush1.msra.mxu0 0.0
      %4282 = vmatprep.subr.mxu0 0.0
      %4283 = vmatpush1.msra.mxu0 0.0
      %4284 = vmatprep.subr.mxu0 0.0
      %4285 = vmatpush1.msra.mxu0 0.0
      %4286 = vmatprep.subr.mxu0 0.0
      %4287 = vmatpush1.msra.mxu0 0.0
      %4288 = vmatprep.subr.mxu0 0.0
      %4289 = vmatpush1.msra.mxu0 0.0
      %4290 = vmatprep.subr.mxu0 0.0
      %4291 = vmatpush1.msra.mxu0 0.0
      %4292 = vmatprep.subr.mxu0 0.0
      %4293 = vmatpush1.msra.mxu0 0.0
      %4294 = vmatprep.subr.mxu0 0.0
      %4295 = vmatpush1.msra.mxu0 0.0
      %4296 = vmatprep.subr.mxu0 0.0
      %4297 = vmatpush1.msra.mxu0 0.0
      %4298 = vmatprep.subr.mxu0 0.0
      %4299 = vmatpush1.msra.mxu0 0.0
      %4300 = vmatprep.subr.mxu0 0.0
      %4301 = vmatpush1.msra.mxu0 0.0
      %4302 = vmatprep.mubr.f32.mxu0 0.0
      %4303 = vmatmul.mubr.f32.gmra.mrb[0].mxu0 %v4236
      %v4304 = vpop.f32.mrb[0].mxu0
      %v4305 = vadd.f32 %v4232, %v4304
      %v4306 = vpop.f32.mrb[0].mxu0
      %4307 = vdwg.mxu0
      %v4308 = vld [vmem:[%s13 + $0x120] sm:$0xff]
      %v4309 = vld [vmem:[%s13 + $0x128] sm:$0xff]
      %v4310 = vld [vmem:[%s13 + $0x130] sm:$0xff]
      %v4311 = vld [vmem:[#allocation7 + $0x3] sm:$0x7]
      %v4313 = vsel %vm3204, %v4311, 0
      %4315 = vmatprep.subr.mxu0 0.0
      %4316 = vmatpush1.msra.mxu0 %v4308
      %4317 = vmatprep.subr.mxu0 0.0
      %4318 = vmatpush1.msra.mxu0 %v4309
      %4319 = vmatprep.subr.mxu0 0.0
      %4320 = vmatpush1.msra.mxu0 %v4310
      %4321 = vmatprep.subr.mxu0 0.0
      %4322 = vmatpush1.msra.mxu0 0.0
      %4323 = vmatprep.subr.mxu0 0.0
      %4324 = vmatpush1.msra.mxu0 0.0
      %4325 = vmatprep.subr.mxu0 0.0
      %4326 = vmatpush1.msra.mxu0 0.0
      %4327 = vmatprep.subr.mxu0 0.0
      %4328 = vmatpush1.msra.mxu0 0.0
      %4329 = vmatprep.subr.mxu0 0.0
      %4330 = vmatpush1.msra.mxu0 0.0
      %4331 = vmatprep.subr.mxu0 0.0
      %4332 = vmatpush1.msra.mxu0 0.0
      %4333 = vmatprep.subr.mxu0 0.0
      %4334 = vmatpush1.msra.mxu0 0.0
      %4335 = vmatprep.subr.mxu0 0.0
      %4336 = vmatpush1.msra.mxu0 0.0
      %4337 = vmatprep.subr.mxu0 0.0
      %4338 = vmatpush1.msra.mxu0 0.0
      %4339 = vmatprep.subr.mxu0 0.0
      %4340 = vmatpush1.msra.mxu0 0.0
      %4341 = vmatprep.subr.mxu0 0.0
      %4342 = vmatpush1.msra.mxu0 0.0
      %4343 = vmatprep.subr.mxu0 0.0
      %4344 = vmatpush1.msra.mxu0 0.0
      %4345 = vmatprep.subr.mxu0 0.0
      %4346 = vmatpush1.msra.mxu0 0.0
      %4347 = vmatprep.subr.mxu0 0.0
      %4348 = vmatpush1.msra.mxu0 0.0
      %4349 = vmatprep.subr.mxu0 0.0
      %4350 = vmatpush1.msra.mxu0 0.0
      %4351 = vmatprep.subr.mxu0 0.0
      %4352 = vmatpush1.msra.mxu0 0.0
      %4353 = vmatprep.subr.mxu0 0.0
      %4354 = vmatpush1.msra.mxu0 0.0
      %4355 = vmatprep.subr.mxu0 0.0
      %4356 = vmatpush1.msra.mxu0 0.0
      %4357 = vmatprep.subr.mxu0 0.0
      %4358 = vmatpush1.msra.mxu0 0.0
      %4359 = vmatprep.subr.mxu0 0.0
      %4360 = vmatpush1.msra.mxu0 0.0
      %4361 = vmatprep.subr.mxu0 0.0
      %4362 = vmatpush1.msra.mxu0 0.0
      %4363 = vmatprep.subr.mxu0 0.0
      %4364 = vmatpush1.msra.mxu0 0.0
      %4365 = vmatprep.subr.mxu0 0.0
      %4366 = vmatpush1.msra.mxu0 0.0
      %4367 = vmatprep.subr.mxu0 0.0
      %4368 = vmatpush1.msra.mxu0 0.0
      %4369 = vmatprep.subr.mxu0 0.0
      %4370 = vmatpush1.msra.mxu0 0.0
      %4371 = vmatprep.subr.mxu0 0.0
      %4372 = vmatpush1.msra.mxu0 0.0
      %4373 = vmatprep.subr.mxu0 0.0
      %4374 = vmatpush1.msra.mxu0 0.0
      %4375 = vmatprep.subr.mxu0 0.0
      %4376 = vmatpush1.msra.mxu0 0.0
      %4377 = vmatprep.subr.mxu0 0.0
      %4378 = vmatpush1.msra.mxu0 0.0
      %4379 = vmatprep.mubr.f32.mxu0 0.0
      %4380 = vmatmul.mubr.f32.gmra.mrb[0].mxu0 %v4313
      %v4381 = vpop.f32.mrb[0].mxu0
      %v4382 = vadd.f32 0.0, %v4381
      %v4383 = vpop.f32.mrb[0].mxu0
      %4384 = vdwg.mxu0
      %v4385 = vadd.f32 %v4305, %v4382
      %v4386 = vld [vmem:[%s13 + $0x138] sm:$0xff]
      %v4387 = vld [vmem:[%s13 + $0x140] sm:$0xff]
      %v4388 = vld [vmem:[%s13 + $0x148] sm:$0xff]
      %v4389 = vld [vmem:[#allocation5 + $0x3] sm:$0x7]
      %v4391 = vsel %vm3204, %v4389, 0
      %4393 = vmatprep.subr.mxu0 0.0
      %4394 = vmatpush1.msra.mxu0 %v4386
      %4395 = vmatprep.subr.mxu0 0.0
      %4396 = vmatpush1.msra.mxu0 %v4387
      %4397 = vmatprep.subr.mxu0 0.0
      %4398 = vmatpush1.msra.mxu0 %v4388
      %4399 = vmatprep.subr.mxu0 0.0
      %4400 = vmatpush1.msra.mxu0 0.0
      %4401 = vmatprep.subr.mxu0 0.0
      %4402 = vmatpush1.msra.mxu0 0.0
      %4403 = vmatprep.subr.mxu0 0.0
      %4404 = vmatpush1.msra.mxu0 0.0
      %4405 = vmatprep.subr.mxu0 0.0
      %4406 = vmatpush1.msra.mxu0 0.0
      %4407 = vmatprep.subr.mxu0 0.0
      %4408 = vmatpush1.msra.mxu0 0.0
      %4409 = vmatprep.subr.mxu0 0.0
      %4410 = vmatpush1.msra.mxu0 0.0
      %4411 = vmatprep.subr.mxu0 0.0
      %4412 = vmatpush1.msra.mxu0 0.0
      %4413 = vmatprep.subr.mxu0 0.0
      %4414 = vmatpush1.msra.mxu0 0.0
      %4415 = vmatprep.subr.mxu0 0.0
      %4416 = vmatpush1.msra.mxu0 0.0
      %4417 = vmatprep.subr.mxu0 0.0
      %4418 = vmatpush1.msra.mxu0 0.0
      %4419 = vmatprep.subr.mxu0 0.0
      %4420 = vmatpush1.msra.mxu0 0.0
      %4421 = vmatprep.subr.mxu0 0.0
      %4422 = vmatpush1.msra.mxu0 0.0
      %4423 = vmatprep.subr.mxu0 0.0
      %4424 = vmatpush1.msra.mxu0 0.0
      %4425 = vmatprep.subr.mxu0 0.0
      %4426 = vmatpush1.msra.mxu0 0.0
      %4427 = vmatprep.subr.mxu0 0.0
      %4428 = vmatpush1.msra.mxu0 0.0
      %4429 = vmatprep.subr.mxu0 0.0
      %4430 = vmatpush1.msra.mxu0 0.0
      %4431 = vmatprep.subr.mxu0 0.0
      %4432 = vmatpush1.msra.mxu0 0.0
      %4433 = vmatprep.subr.mxu0 0.0
      %4434 = vmatpush1.msra.mxu0 0.0
      %4435 = vmatprep.subr.mxu0 0.0
      %4436 = vmatpush1.msra.mxu0 0.0
      %4437 = vmatprep.subr.mxu0 0.0
      %4438 = vmatpush1.msra.mxu0 0.0
      %4439 = vmatprep.subr.mxu0 0.0
      %4440 = vmatpush1.msra.mxu0 0.0
      %4441 = vmatprep.subr.mxu0 0.0
      %4442 = vmatpush1.msra.mxu0 0.0
      %4443 = vmatprep.subr.mxu0 0.0
      %4444 = vmatpush1.msra.mxu0 0.0
      %4445 = vmatprep.subr.mxu0 0.0
      %4446 = vmatpush1.msra.mxu0 0.0
      %4447 = vmatprep.subr.mxu0 0.0
      %4448 = vmatpush1.msra.mxu0 0.0
      %4449 = vmatprep.subr.mxu0 0.0
      %4450 = vmatpush1.msra.mxu0 0.0
      %4451 = vmatprep.subr.mxu0 0.0
      %4452 = vmatpush1.msra.mxu0 0.0
      %4453 = vmatprep.subr.mxu0 0.0
      %4454 = vmatpush1.msra.mxu0 0.0
      %4455 = vmatprep.subr.mxu0 0.0
      %4456 = vmatpush1.msra.mxu0 0.0
      %4457 = vmatprep.mubr.f32.mxu0 0.0
      %4458 = vmatmul.mubr.f32.gmra.mrb[0].mxu0 %v4391
      %v4459 = vpop.f32.mrb[0].mxu0
      %v4460 = vadd.f32 0.0, %v4459
      %v4461 = vpop.f32.mrb[0].mxu0
      %4462 = vdwg.mxu0
      %v4463 = vadd.f32 %v4385, %v4460
      %v4465 = vlaneseq
      %v4466 = vshrl.u32 %v4465, 7
      %v4467 = vsub.s32 0, %v4466
      %v4468 = vrot.slane %v4153, %v4467
      %v4470 = vadd.f32 %v4463, %v4468
      %v4471 = vmax.f32 %v4470, 0.0
      %s4472 = scalar_lea.vmem [#allocation8], 4
      %4473 = vst [vmem:[%s4472] ss:$4 sm:$0x7] %v4471
      %v4474 = vld [vmem:[%s13 + $0x90] sm:$0xff]
      %v4475 = vld [vmem:[%s13 + $0x98] sm:$0xff]
      %v4476 = vld [vmem:[%s13 + $0xa0] sm:$0xff]
      %v4477 = vld [vmem:[#allocation7 + $0x4] sm:$0x7]
      %v4478 = vld [vmem:[%s13 + $0xa8] sm:$0xff]
      %v4479 = vld [vmem:[%s13 + $0xb0] sm:$0xff]
      %v4480 = vld [vmem:[%s13 + $0xb8] sm:$0xff]
      %v4481 = vld [vmem:[#allocation5 + $0x4] sm:$0x7]
      %v4483 = vsel %vm3204, %v4481, 0
      %4485 = vmatprep.subr.mxu0 0.0
      %4486 = vmatpush1.msra.mxu0 %v4478
      %4487 = vmatprep.subr.mxu0 0.0
      %4488 = vmatpush1.msra.mxu0 %v4479
      %4489 = vmatprep.subr.mxu0 0.0
      %4490 = vmatpush1.msra.mxu0 %v4480
      %4491 = vmatprep.subr.mxu0 0.0
      %4492 = vmatpush1.msra.mxu0 0.0
      %4493 = vmatprep.subr.mxu0 0.0
      %4494 = vmatpush1.msra.mxu0 0.0
      %4495 = vmatprep.subr.mxu0 0.0
      %4496 = vmatpush1.msra.mxu0 0.0
      %4497 = vmatprep.subr.mxu0 0.0
      %4498 = vmatpush1.msra.mxu0 0.0
      %4499 = vmatprep.subr.mxu0 0.0
      %4500 = vmatpush1.msra.mxu0 0.0
      %4501 = vmatprep.subr.mxu0 0.0
      %4502 = vmatpush1.msra.mxu0 0.0
      %4503 = vmatprep.subr.mxu0 0.0
      %4504 = vmatpush1.msra.mxu0 0.0
      %4505 = vmatprep.subr.mxu0 0.0
      %4506 = vmatpush1.msra.mxu0 0.0
      %4507 = vmatprep.subr.mxu0 0.0
      %4508 = vmatpush1.msra.mxu0 0.0
      %4509 = vmatprep.subr.mxu0 0.0
      %4510 = vmatpush1.msra.mxu0 0.0
      %4511 = vmatprep.subr.mxu0 0.0
      %4512 = vmatpush1.msra.mxu0 0.0
      %4513 = vmatprep.subr.mxu0 0.0
      %4514 = vmatpush1.msra.mxu0 0.0
      %4515 = vmatprep.subr.mxu0 0.0
      %4516 = vmatpush1.msra.mxu0 0.0
      %4517 = vmatprep.subr.mxu0 0.0
      %4518 = vmatpush1.msra.mxu0 0.0
      %4519 = vmatprep.subr.mxu0 0.0
      %4520 = vmatpush1.msra.mxu0 0.0
      %4521 = vmatprep.subr.mxu0 0.0
      %4522 = vmatpush1.msra.mxu0 0.0
      %4523 = vmatprep.subr.mxu0 0.0
      %4524 = vmatpush1.msra.mxu0 0.0
      %4525 = vmatprep.subr.mxu0 0.0
      %4526 = vmatpush1.msra.mxu0 0.0
      %4527 = vmatprep.subr.mxu0 0.0
      %4528 = vmatpush1.msra.mxu0 0.0
      %4529 = vmatprep.subr.mxu0 0.0
      %4530 = vmatpush1.msra.mxu0 0.0
      %4531 = vmatprep.subr.mxu0 0.0
      %4532 = vmatpush1.msra.mxu0 0.0
      %4533 = vmatprep.subr.mxu0 0.0
      %4534 = vmatpush1.msra.mxu0 0.0
      %4535 = vmatprep.subr.mxu0 0.0
      %4536 = vmatpush1.msra.mxu0 0.0
      %4537 = vmatprep.subr.mxu0 0.0
      %4538 = vmatpush1.msra.mxu0 0.0
      %4539 = vmatprep.subr.mxu0 0.0
      %4540 = vmatpush1.msra.mxu0 0.0
      %4541 = vmatprep.subr.mxu0 0.0
      %4542 = vmatpush1.msra.mxu0 0.0
      %4543 = vmatprep.subr.mxu0 0.0
      %4544 = vmatpush1.msra.mxu0 0.0
      %4545 = vmatprep.subr.mxu0 0.0
      %4546 = vmatpush1.msra.mxu0 0.0
      %4547 = vmatprep.subr.mxu0 0.0
      %4548 = vmatpush1.msra.mxu0 0.0
      %4549 = vmatprep.mubr.f32.mxu0 0.0
      %4550 = vmatmul.mubr.f32.gmra.mrb[0].mxu0 %v4483
      %v4551 = vpop.f32.mrb[0].mxu0
      %v4552 = vadd.f32 0.0, %v4551
      %v4553 = vpop.f32.mrb[0].mxu0
      %4554 = vdwg.mxu0
      %v4556 = vsel %vm3204, %v4477, 0
      %4558 = vmatprep.subr.mxu0 0.0
      %4559 = vmatpush1.msra.mxu0 %v4474
      %4560 = vmatprep.subr.mxu0 0.0
      %4561 = vmatpush1.msra.mxu0 %v4475
      %4562 = vmatprep.subr.mxu0 0.0
      %4563 = vmatpush1.msra.mxu0 %v4476
      %4564 = vmatprep.subr.mxu0 0.0
      %4565 = vmatpush1.msra.mxu0 0.0
      %4566 = vmatprep.subr.mxu0 0.0
      %4567 = vmatpush1.msra.mxu0 0.0
      %4568 = vmatprep.subr.mxu0 0.0
      %4569 = vmatpush1.msra.mxu0 0.0
      %4570 = vmatprep.subr.mxu0 0.0
      %4571 = vmatpush1.msra.mxu0 0.0
      %4572 = vmatprep.subr.mxu0 0.0
      %4573 = vmatpush1.msra.mxu0 0.0
      %4574 = vmatprep.subr.mxu0 0.0
      %4575 = vmatpush1.msra.mxu0 0.0
      %4576 = vmatprep.subr.mxu0 0.0
      %4577 = vmatpush1.msra.mxu0 0.0
      %4578 = vmatprep.subr.mxu0 0.0
      %4579 = vmatpush1.msra.mxu0 0.0
      %4580 = vmatprep.subr.mxu0 0.0
      %4581 = vmatpush1.msra.mxu0 0.0
      %4582 = vmatprep.subr.mxu0 0.0
      %4583 = vmatpush1.msra.mxu0 0.0
      %4584 = vmatprep.subr.mxu0 0.0
      %4585 = vmatpush1.msra.mxu0 0.0
      %4586 = vmatprep.subr.mxu0 0.0
      %4587 = vmatpush1.msra.mxu0 0.0
      %4588 = vmatprep.subr.mxu0 0.0
      %4589 = vmatpush1.msra.mxu0 0.0
      %4590 = vmatprep.subr.mxu0 0.0
      %4591 = vmatpush1.msra.mxu0 0.0
      %4592 = vmatprep.subr.mxu0 0.0
      %4593 = vmatpush1.msra.mxu0 0.0
      %4594 = vmatprep.subr.mxu0 0.0
      %4595 = vmatpush1.msra.mxu0 0.0
      %4596 = vmatprep.subr.mxu0 0.0
      %4597 = vmatpush1.msra.mxu0 0.0
      %4598 = vmatprep.subr.mxu0 0.0
      %4599 = vmatpush1.msra.mxu0 0.0
      %4600 = vmatprep.subr.mxu0 0.0
      %4601 = vmatpush1.msra.mxu0 0.0
      %4602 = vmatprep.subr.mxu0 0.0
      %4603 = vmatpush1.msra.mxu0 0.0
      %4604 = vmatprep.subr.mxu0 0.0
      %4605 = vmatpush1.msra.mxu0 0.0
      %4606 = vmatprep.subr.mxu0 0.0
      %4607 = vmatpush1.msra.mxu0 0.0
      %4608 = vmatprep.subr.mxu0 0.0
      %4609 = vmatpush1.msra.mxu0 0.0
      %4610 = vmatprep.subr.mxu0 0.0
      %4611 = vmatpush1.msra.mxu0 0.0
      %4612 = vmatprep.subr.mxu0 0.0
      %4613 = vmatpush1.msra.mxu0 0.0
      %4614 = vmatprep.subr.mxu0 0.0
      %4615 = vmatpush1.msra.mxu0 0.0
      %4616 = vmatprep.subr.mxu0 0.0
      %4617 = vmatpush1.msra.mxu0 0.0
      %4618 = vmatprep.subr.mxu0 0.0
      %4619 = vmatpush1.msra.mxu0 0.0
      %4620 = vmatprep.subr.mxu0 0.0
      %4621 = vmatpush1.msra.mxu0 0.0
      %4622 = vmatprep.mubr.f32.mxu0 0.0
      %4623 = vmatmul.mubr.f32.gmra.mrb[0].mxu0 %v4556
      %v4624 = vpop.f32.mrb[0].mxu0
      %v4625 = vadd.f32 %v4552, %v4624
      %v4626 = vpop.f32.mrb[0].mxu0
      %4627 = vdwg.mxu0
      %v4628 = vadd.f32 %v4625, %v4468
      %v4629 = vmax.f32 %v4628, 0.0
      %s4630 = scalar_lea.vmem [#allocation8], 5
      %4631 = vst [vmem:[%s4630] ss:$4 sm:$0x7] %v4629
      %v4632 = vld [vmem:[%s13] sm:$0xff]
      %v4633 = vld [vmem:[%s13 + $0x8] sm:$0xff]
      %v4634 = vld [vmem:[%s13 + $0x10] sm:$0xff]
      %v4635 = vld [vmem:[#allocation7 + $0x5] sm:$0x7]
      %v4636 = vld [vmem:[%s13 + $0x18] sm:$0xff]
      %v4637 = vld [vmem:[%s13 + $0x20] sm:$0xff]
      %v4638 = vld [vmem:[%s13 + $0x28] sm:$0xff]
      %v4639 = vld [vmem:[#allocation5 + $0x5] sm:$0x7]
      %v4641 = vsel %vm3204, %v4639, 0
      %4643 = vmatprep.subr.mxu0 0.0
      %4644 = vmatpush1.msra.mxu0 %v4636
      %4645 = vmatprep.subr.mxu0 0.0
      %4646 = vmatpush1.msra.mxu0 %v4637
      %4647 = vmatprep.subr.mxu0 0.0
      %4648 = vmatpush1.msra.mxu0 %v4638
      %4649 = vmatprep.subr.mxu0 0.0
      %4650 = vmatpush1.msra.mxu0 0.0
      %4651 = vmatprep.subr.mxu0 0.0
      %4652 = vmatpush1.msra.mxu0 0.0
      %4653 = vmatprep.subr.mxu0 0.0
      %4654 = vmatpush1.msra.mxu0 0.0
      %4655 = vmatprep.subr.mxu0 0.0
      %4656 = vmatpush1.msra.mxu0 0.0
      %4657 = vmatprep.subr.mxu0 0.0
      %4658 = vmatpush1.msra.mxu0 0.0
      %4659 = vmatprep.subr.mxu0 0.0
      %4660 = vmatpush1.msra.mxu0 0.0
      %4661 = vmatprep.subr.mxu0 0.0
      %4662 = vmatpush1.msra.mxu0 0.0
      %4663 = vmatprep.subr.mxu0 0.0
      %4664 = vmatpush1.msra.mxu0 0.0
      %4665 = vmatprep.subr.mxu0 0.0
      %4666 = vmatpush1.msra.mxu0 0.0
      %4667 = vmatprep.subr.mxu0 0.0
      %4668 = vmatpush1.msra.mxu0 0.0
      %4669 = vmatprep.subr.mxu0 0.0
      %4670 = vmatpush1.msra.mxu0 0.0
      %4671 = vmatprep.subr.mxu0 0.0
      %4672 = vmatpush1.msra.mxu0 0.0
      %4673 = vmatprep.subr.mxu0 0.0
      %4674 = vmatpush1.msra.mxu0 0.0
      %4675 = vmatprep.subr.mxu0 0.0
      %4676 = vmatpush1.msra.mxu0 0.0
      %4677 = vmatprep.subr.mxu0 0.0
      %4678 = vmatpush1.msra.mxu0 0.0
      %4679 = vmatprep.subr.mxu0 0.0
      %4680 = vmatpush1.msra.mxu0 0.0
      %4681 = vmatprep.subr.mxu0 0.0
      %4682 = vmatpush1.msra.mxu0 0.0
      %4683 = vmatprep.subr.mxu0 0.0
      %4684 = vmatpush1.msra.mxu0 0.0
      %4685 = vmatprep.subr.mxu0 0.0
      %4686 = vmatpush1.msra.mxu0 0.0
      %4687 = vmatprep.subr.mxu0 0.0
      %4688 = vmatpush1.msra.mxu0 0.0
      %4689 = vmatprep.subr.mxu0 0.0
      %4690 = vmatpush1.msra.mxu0 0.0
      %4691 = vmatprep.subr.mxu0 0.0
      %4692 = vmatpush1.msra.mxu0 0.0
      %4693 = vmatprep.subr.mxu0 0.0
      %4694 = vmatpush1.msra.mxu0 0.0
      %4695 = vmatprep.subr.mxu0 0.0
      %4696 = vmatpush1.msra.mxu0 0.0
      %4697 = vmatprep.subr.mxu0 0.0
      %4698 = vmatpush1.msra.mxu0 0.0
      %4699 = vmatprep.subr.mxu0 0.0
      %4700 = vmatpush1.msra.mxu0 0.0
      %4701 = vmatprep.subr.mxu0 0.0
      %4702 = vmatpush1.msra.mxu0 0.0
      %4703 = vmatprep.subr.mxu0 0.0
      %4704 = vmatpush1.msra.mxu0 0.0
      %4705 = vmatprep.subr.mxu0 0.0
      %4706 = vmatpush1.msra.mxu0 0.0
      %4707 = vmatprep.mubr.f32.mxu0 0.0
      %4708 = vmatmul.mubr.f32.gmra.mrb[0].mxu0 %v4641
      %v4709 = vpop.f32.mrb[0].mxu0
      %v4710 = vadd.f32 0.0, %v4709
      %v4711 = vpop.f32.mrb[0].mxu0
      %4712 = vdwg.mxu0
      %v4714 = vsel %vm3204, %v4635, 0
      %4716 = vmatprep.subr.mxu0 0.0
      %4717 = vmatpush1.msra.mxu0 %v4632
      %4718 = vmatprep.subr.mxu0 0.0
      %4719 = vmatpush1.msra.mxu0 %v4633
      %4720 = vmatprep.subr.mxu0 0.0
      %4721 = vmatpush1.msra.mxu0 %v4634
      %4722 = vmatprep.subr.mxu0 0.0
      %4723 = vmatpush1.msra.mxu0 0.0
      %4724 = vmatprep.subr.mxu0 0.0
      %4725 = vmatpush1.msra.mxu0 0.0
      %4726 = vmatprep.subr.mxu0 0.0
      %4727 = vmatpush1.msra.mxu0 0.0
      %4728 = vmatprep.subr.mxu0 0.0
      %4729 = vmatpush1.msra.mxu0 0.0
      %4730 = vmatprep.subr.mxu0 0.0
      %4731 = vmatpush1.msra.mxu0 0.0
      %4732 = vmatprep.subr.mxu0 0.0
      %4733 = vmatpush1.msra.mxu0 0.0
      %4734 = vmatprep.subr.mxu0 0.0
      %4735 = vmatpush1.msra.mxu0 0.0
      %4736 = vmatprep.subr.mxu0 0.0
      %4737 = vmatpush1.msra.mxu0 0.0
      %4738 = vmatprep.subr.mxu0 0.0
      %4739 = vmatpush1.msra.mxu0 0.0
      %4740 = vmatprep.subr.mxu0 0.0
      %4741 = vmatpush1.msra.mxu0 0.0
      %4742 = vmatprep.subr.mxu0 0.0
      %4743 = vmatpush1.msra.mxu0 0.0
      %4744 = vmatprep.subr.mxu0 0.0
      %4745 = vmatpush1.msra.mxu0 0.0
      %4746 = vmatprep.subr.mxu0 0.0
      %4747 = vmatpush1.msra.mxu0 0.0
      %4748 = vmatprep.subr.mxu0 0.0
      %4749 = vmatpush1.msra.mxu0 0.0
      %4750 = vmatprep.subr.mxu0 0.0
      %4751 = vmatpush1.msra.mxu0 0.0
      %4752 = vmatprep.subr.mxu0 0.0
      %4753 = vmatpush1.msra.mxu0 0.0
      %4754 = vmatprep.subr.mxu0 0.0
      %4755 = vmatpush1.msra.mxu0 0.0
      %4756 = vmatprep.subr.mxu0 0.0
      %4757 = vmatpush1.msra.mxu0 0.0
      %4758 = vmatprep.subr.mxu0 0.0
      %4759 = vmatpush1.msra.mxu0 0.0
      %4760 = vmatprep.subr.mxu0 0.0
      %4761 = vmatpush1.msra.mxu0 0.0
      %4762 = vmatprep.subr.mxu0 0.0
      %4763 = vmatpush1.msra.mxu0 0.0
      %4764 = vmatprep.subr.mxu0 0.0
      %4765 = vmatpush1.msra.mxu0 0.0
      %4766 = vmatprep.subr.mxu0 0.0
      %4767 = vmatpush1.msra.mxu0 0.0
      %4768 = vmatprep.subr.mxu0 0.0
      %4769 = vmatpush1.msra.mxu0 0.0
      %4770 = vmatprep.subr.mxu0 0.0
      %4771 = vmatpush1.msra.mxu0 0.0
      %4772 = vmatprep.subr.mxu0 0.0
      %4773 = vmatpush1.msra.mxu0 0.0
      %4774 = vmatprep.subr.mxu0 0.0
      %4775 = vmatpush1.msra.mxu0 0.0
      %4776 = vmatprep.subr.mxu0 0.0
      %4777 = vmatpush1.msra.mxu0 0.0
      %4778 = vmatprep.subr.mxu0 0.0
      %4779 = vmatpush1.msra.mxu0 0.0
      %4780 = vmatprep.mubr.f32.mxu0 0.0
      %4781 = vmatmul.mubr.f32.gmra.mrb[0].mxu0 %v4714
      %v4782 = vpop.f32.mrb[0].mxu0
      %v4783 = vadd.f32 %v4710, %v4782
      %v4784 = vpop.f32.mrb[0].mxu0
      %4785 = vdwg.mxu0
      %v4786 = vld [vmem:[%s13 + $0xc0] sm:$0xff]
      %v4787 = vld [vmem:[%s13 + $0xc8] sm:$0xff]
      %v4788 = vld [vmem:[%s13 + $0xd0] sm:$0xff]
      %v4789 = vld [vmem:[#allocation7 + $0x4] sm:$0x7]
      %v4791 = vsel %vm3204, %v4789, 0
      %4793 = vmatprep.subr.mxu0 0.0
      %4794 = vmatpush1.msra.mxu0 %v4786
      %4795 = vmatprep.subr.mxu0 0.0
      %4796 = vmatpush1.msra.mxu0 %v4787
      %4797 = vmatprep.subr.mxu0 0.0
      %4798 = vmatpush1.msra.mxu0 %v4788
      %4799 = vmatprep.subr.mxu0 0.0
      %4800 = vmatpush1.msra.mxu0 0.0
      %4801 = vmatprep.subr.mxu0 0.0
      %4802 = vmatpush1.msra.mxu0 0.0
      %4803 = vmatprep.subr.mxu0 0.0
      %4804 = vmatpush1.msra.mxu0 0.0
      %4805 = vmatprep.subr.mxu0 0.0
      %4806 = vmatpush1.msra.mxu0 0.0
      %4807 = vmatprep.subr.mxu0 0.0
      %4808 = vmatpush1.msra.mxu0 0.0
      %4809 = vmatprep.subr.mxu0 0.0
      %4810 = vmatpush1.msra.mxu0 0.0
      %4811 = vmatprep.subr.mxu0 0.0
      %4812 = vmatpush1.msra.mxu0 0.0
      %4813 = vmatprep.subr.mxu0 0.0
      %4814 = vmatpush1.msra.mxu0 0.0
      %4815 = vmatprep.subr.mxu0 0.0
      %4816 = vmatpush1.msra.mxu0 0.0
      %4817 = vmatprep.subr.mxu0 0.0
      %4818 = vmatpush1.msra.mxu0 0.0
      %4819 = vmatprep.subr.mxu0 0.0
      %4820 = vmatpush1.msra.mxu0 0.0
      %4821 = vmatprep.subr.mxu0 0.0
      %4822 = vmatpush1.msra.mxu0 0.0
      %4823 = vmatprep.subr.mxu0 0.0
      %4824 = vmatpush1.msra.mxu0 0.0
      %4825 = vmatprep.subr.mxu0 0.0
      %4826 = vmatpush1.msra.mxu0 0.0
      %4827 = vmatprep.subr.mxu0 0.0
      %4828 = vmatpush1.msra.mxu0 0.0
      %4829 = vmatprep.subr.mxu0 0.0
      %4830 = vmatpush1.msra.mxu0 0.0
      %4831 = vmatprep.subr.mxu0 0.0
      %4832 = vmatpush1.msra.mxu0 0.0
      %4833 = vmatprep.subr.mxu0 0.0
      %4834 = vmatpush1.msra.mxu0 0.0
      %4835 = vmatprep.subr.mxu0 0.0
      %4836 = vmatpush1.msra.mxu0 0.0
      %4837 = vmatprep.subr.mxu0 0.0
      %4838 = vmatpush1.msra.mxu0 0.0
      %4839 = vmatprep.subr.mxu0 0.0
      %4840 = vmatpush1.msra.mxu0 0.0
      %4841 = vmatprep.subr.mxu0 0.0
      %4842 = vmatpush1.msra.mxu0 0.0
      %4843 = vmatprep.subr.mxu0 0.0
      %4844 = vmatpush1.msra.mxu0 0.0
      %4845 = vmatprep.subr.mxu0 0.0
      %4846 = vmatpush1.msra.mxu0 0.0
      %4847 = vmatprep.subr.mxu0 0.0
      %4848 = vmatpush1.msra.mxu0 0.0
      %4849 = vmatprep.subr.mxu0 0.0
      %4850 = vmatpush1.msra.mxu0 0.0
      %4851 = vmatprep.subr.mxu0 0.0
      %4852 = vmatpush1.msra.mxu0 0.0
      %4853 = vmatprep.subr.mxu0 0.0
      %4854 = vmatpush1.msra.mxu0 0.0
      %4855 = vmatprep.subr.mxu0 0.0
      %4856 = vmatpush1.msra.mxu0 0.0
      %4857 = vmatprep.mubr.f32.mxu0 0.0
      %4858 = vmatmul.mubr.f32.gmra.mrb[0].mxu0 %v4791
      %v4859 = vpop.f32.mrb[0].mxu0
      %v4860 = vadd.f32 0.0, %v4859
      %v4861 = vpop.f32.mrb[0].mxu0
      %4862 = vdwg.mxu0
      %v4863 = vadd.f32 %v4783, %v4860
      %v4864 = vld [vmem:[%s13 + $0xd8] sm:$0xff]
      %v4865 = vld [vmem:[%s13 + $0xe0] sm:$0xff]
      %v4866 = vld [vmem:[%s13 + $0xe8] sm:$0xff]
      %v4867 = vld [vmem:[#allocation5 + $0x4] sm:$0x7]
      %v4869 = vsel %vm3204, %v4867, 0
      %4871 = vmatprep.subr.mxu0 0.0
      %4872 = vmatpush1.msra.mxu0 %v4864
      %4873 = vmatprep.subr.mxu0 0.0
      %4874 = vmatpush1.msra.mxu0 %v4865
      %4875 = vmatprep.subr.mxu0 0.0
      %4876 = vmatpush1.msra.mxu0 %v4866
      %4877 = vmatprep.subr.mxu0 0.0
      %4878 = vmatpush1.msra.mxu0 0.0
      %4879 = vmatprep.subr.mxu0 0.0
      %4880 = vmatpush1.msra.mxu0 0.0
      %4881 = vmatprep.subr.mxu0 0.0
      %4882 = vmatpush1.msra.mxu0 0.0
      %4883 = vmatprep.subr.mxu0 0.0
      %4884 = vmatpush1.msra.mxu0 0.0
      %4885 = vmatprep.subr.mxu0 0.0
      %4886 = vmatpush1.msra.mxu0 0.0
      %4887 = vmatprep.subr.mxu0 0.0
      %4888 = vmatpush1.msra.mxu0 0.0
      %4889 = vmatprep.subr.mxu0 0.0
      %4890 = vmatpush1.msra.mxu0 0.0
      %4891 = vmatprep.subr.mxu0 0.0
      %4892 = vmatpush1.msra.mxu0 0.0
      %4893 = vmatprep.subr.mxu0 0.0
      %4894 = vmatpush1.msra.mxu0 0.0
      %4895 = vmatprep.subr.mxu0 0.0
      %4896 = vmatpush1.msra.mxu0 0.0
      %4897 = vmatprep.subr.mxu0 0.0
      %4898 = vmatpush1.msra.mxu0 0.0
      %4899 = vmatprep.subr.mxu0 0.0
      %4900 = vmatpush1.msra.mxu0 0.0
      %4901 = vmatprep.subr.mxu0 0.0
      %4902 = vmatpush1.msra.mxu0 0.0
      %4903 = vmatprep.subr.mxu0 0.0
      %4904 = vmatpush1.msra.mxu0 0.0
      %4905 = vmatprep.subr.mxu0 0.0
      %4906 = vmatpush1.msra.mxu0 0.0
      %4907 = vmatprep.subr.mxu0 0.0
      %4908 = vmatpush1.msra.mxu0 0.0
      %4909 = vmatprep.subr.mxu0 0.0
      %4910 = vmatpush1.msra.mxu0 0.0
      %4911 = vmatprep.subr.mxu0 0.0
      %4912 = vmatpush1.msra.mxu0 0.0
      %4913 = vmatprep.subr.mxu0 0.0
      %4914 = vmatpush1.msra.mxu0 0.0
      %4915 = vmatprep.subr.mxu0 0.0
      %4916 = vmatpush1.msra.mxu0 0.0
      %4917 = vmatprep.subr.mxu0 0.0
      %4918 = vmatpush1.msra.mxu0 0.0
      %4919 = vmatprep.subr.mxu0 0.0
      %4920 = vmatpush1.msra.mxu0 0.0
      %4921 = vmatprep.subr.mxu0 0.0
      %4922 = vmatpush1.msra.mxu0 0.0
      %4923 = vmatprep.subr.mxu0 0.0
      %4924 = vmatpush1.msra.mxu0 0.0
      %4925 = vmatprep.subr.mxu0 0.0
      %4926 = vmatpush1.msra.mxu0 0.0
      %4927 = vmatprep.subr.mxu0 0.0
      %4928 = vmatpush1.msra.mxu0 0.0
      %4929 = vmatprep.subr.mxu0 0.0
      %4930 = vmatpush1.msra.mxu0 0.0
      %4931 = vmatprep.subr.mxu0 0.0
      %4932 = vmatpush1.msra.mxu0 0.0
      %4933 = vmatprep.subr.mxu0 0.0
      %4934 = vmatpush1.msra.mxu0 0.0
      %4935 = vmatprep.mubr.f32.mxu0 0.0
      %4936 = vmatmul.mubr.f32.gmra.mrb[0].mxu0 %v4869
      %v4937 = vpop.f32.mrb[0].mxu0
      %v4938 = vadd.f32 0.0, %v4937
      %v4939 = vpop.f32.mrb[0].mxu0
      %4940 = vdwg.mxu0
      %v4941 = vadd.f32 %v4863, %v4938
      %v4942 = vadd.f32 %v4941, %v4468
      %v4943 = vmax.f32 %v4942, 0.0
      %s4944 = scalar_lea.vmem [#allocation8], 6
      %4945 = vst [vmem:[%s4944] ss:$4 sm:$0x7] %v4943
      %v4946 = vld [vmem:[%s13 + $0x30] sm:$0xff]
      %v4947 = vld [vmem:[%s13 + $0x38] sm:$0xff]
      %v4948 = vld [vmem:[%s13 + $0x40] sm:$0xff]
      %v4949 = vld [vmem:[#allocation7 + $0x5] sm:$0x7]
      %v4950 = vld [vmem:[%s13 + $0x48] sm:$0xff]
      %v4951 = vld [vmem:[%s13 + $0x50] sm:$0xff]
      %v4952 = vld [vmem:[%s13 + $0x58] sm:$0xff]
      %v4953 = vld [vmem:[#allocation5 + $0x5] sm:$0x7]
      %v4955 = vsel %vm3204, %v4953, 0
      %4957 = vmatprep.subr.mxu0 0.0
      %4958 = vmatpush1.msra.mxu0 %v4950
      %4959 = vmatprep.subr.mxu0 0.0
      %4960 = vmatpush1.msra.mxu0 %v4951
      %4961 = vmatprep.subr.mxu0 0.0
      %4962 = vmatpush1.msra.mxu0 %v4952
      %4963 = vmatprep.subr.mxu0 0.0
      %4964 = vmatpush1.msra.mxu0 0.0
      %4965 = vmatprep.subr.mxu0 0.0
      %4966 = vmatpush1.msra.mxu0 0.0
      %4967 = vmatprep.subr.mxu0 0.0
      %4968 = vmatpush1.msra.mxu0 0.0
      %4969 = vmatprep.subr.mxu0 0.0
      %4970 = vmatpush1.msra.mxu0 0.0
      %4971 = vmatprep.subr.mxu0 0.0
      %4972 = vmatpush1.msra.mxu0 0.0
      %4973 = vmatprep.subr.mxu0 0.0
      %4974 = vmatpush1.msra.mxu0 0.0
      %4975 = vmatprep.subr.mxu0 0.0
      %4976 = vmatpush1.msra.mxu0 0.0
      %4977 = vmatprep.subr.mxu0 0.0
      %4978 = vmatpush1.msra.mxu0 0.0
      %4979 = vmatprep.subr.mxu0 0.0
      %4980 = vmatpush1.msra.mxu0 0.0
      %4981 = vmatprep.subr.mxu0 0.0
      %4982 = vmatpush1.msra.mxu0 0.0
      %4983 = vmatprep.subr.mxu0 0.0
      %4984 = vmatpush1.msra.mxu0 0.0
      %4985 = vmatprep.subr.mxu0 0.0
      %4986 = vmatpush1.msra.mxu0 0.0
      %4987 = vmatprep.subr.mxu0 0.0
      %4988 = vmatpush1.msra.mxu0 0.0
      %4989 = vmatprep.subr.mxu0 0.0
      %4990 = vmatpush1.msra.mxu0 0.0
      %4991 = vmatprep.subr.mxu0 0.0
      %4992 = vmatpush1.msra.mxu0 0.0
      %4993 = vmatprep.subr.mxu0 0.0
      %4994 = vmatpush1.msra.mxu0 0.0
      %4995 = vmatprep.subr.mxu0 0.0
      %4996 = vmatpush1.msra.mxu0 0.0
      %4997 = vmatprep.subr.mxu0 0.0
      %4998 = vmatpush1.msra.mxu0 0.0
      %4999 = vmatprep.subr.mxu0 0.0
      %5000 = vmatpush1.msra.mxu0 0.0
      %5001 = vmatprep.subr.mxu0 0.0
      %5002 = vmatpush1.msra.mxu0 0.0
      %5003 = vmatprep.subr.mxu0 0.0
      %5004 = vmatpush1.msra.mxu0 0.0
      %5005 = vmatprep.subr.mxu0 0.0
      %5006 = vmatpush1.msra.mxu0 0.0
      %5007 = vmatprep.subr.mxu0 0.0
      %5008 = vmatpush1.msra.mxu0 0.0
      %5009 = vmatprep.subr.mxu0 0.0
      %5010 = vmatpush1.msra.mxu0 0.0
      %5011 = vmatprep.subr.mxu0 0.0
      %5012 = vmatpush1.msra.mxu0 0.0
      %5013 = vmatprep.subr.mxu0 0.0
      %5014 = vmatpush1.msra.mxu0 0.0
      %5015 = vmatprep.subr.mxu0 0.0
      %5016 = vmatpush1.msra.mxu0 0.0
      %5017 = vmatprep.subr.mxu0 0.0
      %5018 = vmatpush1.msra.mxu0 0.0
      %5019 = vmatprep.subr.mxu0 0.0
      %5020 = vmatpush1.msra.mxu0 0.0
      %5021 = vmatprep.mubr.f32.mxu0 0.0
      %5022 = vmatmul.mubr.f32.gmra.mrb[0].mxu0 %v4955
      %v5023 = vpop.f32.mrb[0].mxu0
      %v5024 = vadd.f32 0.0, %v5023
      %v5025 = vpop.f32.mrb[0].mxu0
      %5026 = vdwg.mxu0
      %v5028 = vsel %vm3204, %v4949, 0
      %5030 = vmatprep.subr.mxu0 0.0
      %5031 = vmatpush1.msra.mxu0 %v4946
      %5032 = vmatprep.subr.mxu0 0.0
      %5033 = vmatpush1.msra.mxu0 %v4947
      %5034 = vmatprep.subr.mxu0 0.0
      %5035 = vmatpush1.msra.mxu0 %v4948
      %5036 = vmatprep.subr.mxu0 0.0
      %5037 = vmatpush1.msra.mxu0 0.0
      %5038 = vmatprep.subr.mxu0 0.0
      %5039 = vmatpush1.msra.mxu0 0.0
      %5040 = vmatprep.subr.mxu0 0.0
      %5041 = vmatpush1.msra.mxu0 0.0
      %5042 = vmatprep.subr.mxu0 0.0
      %5043 = vmatpush1.msra.mxu0 0.0
      %5044 = vmatprep.subr.mxu0 0.0
      %5045 = vmatpush1.msra.mxu0 0.0
      %5046 = vmatprep.subr.mxu0 0.0
      %5047 = vmatpush1.msra.mxu0 0.0
      %5048 = vmatprep.subr.mxu0 0.0
      %5049 = vmatpush1.msra.mxu0 0.0
      %5050 = vmatprep.subr.mxu0 0.0
      %5051 = vmatpush1.msra.mxu0 0.0
      %5052 = vmatprep.subr.mxu0 0.0
      %5053 = vmatpush1.msra.mxu0 0.0
      %5054 = vmatprep.subr.mxu0 0.0
      %5055 = vmatpush1.msra.mxu0 0.0
      %5056 = vmatprep.subr.mxu0 0.0
      %5057 = vmatpush1.msra.mxu0 0.0
      %5058 = vmatprep.subr.mxu0 0.0
      %5059 = vmatpush1.msra.mxu0 0.0
      %5060 = vmatprep.subr.mxu0 0.0
      %5061 = vmatpush1.msra.mxu0 0.0
      %5062 = vmatprep.subr.mxu0 0.0
      %5063 = vmatpush1.msra.mxu0 0.0
      %5064 = vmatprep.subr.mxu0 0.0
      %5065 = vmatpush1.msra.mxu0 0.0
      %5066 = vmatprep.subr.mxu0 0.0
      %5067 = vmatpush1.msra.mxu0 0.0
      %5068 = vmatprep.subr.mxu0 0.0
      %5069 = vmatpush1.msra.mxu0 0.0
      %5070 = vmatprep.subr.mxu0 0.0
      %5071 = vmatpush1.msra.mxu0 0.0
      %5072 = vmatprep.subr.mxu0 0.0
      %5073 = vmatpush1.msra.mxu0 0.0
      %5074 = vmatprep.subr.mxu0 0.0
      %5075 = vmatpush1.msra.mxu0 0.0
      %5076 = vmatprep.subr.mxu0 0.0
      %5077 = vmatpush1.msra.mxu0 0.0
      %5078 = vmatprep.subr.mxu0 0.0
      %5079 = vmatpush1.msra.mxu0 0.0
      %5080 = vmatprep.subr.mxu0 0.0
      %5081 = vmatpush1.msra.mxu0 0.0
      %5082 = vmatprep.subr.mxu0 0.0
      %5083 = vmatpush1.msra.mxu0 0.0
      %5084 = vmatprep.subr.mxu0 0.0
      %5085 = vmatpush1.msra.mxu0 0.0
      %5086 = vmatprep.subr.mxu0 0.0
      %5087 = vmatpush1.msra.mxu0 0.0
      %5088 = vmatprep.subr.mxu0 0.0
      %5089 = vmatpush1.msra.mxu0 0.0
      %5090 = vmatprep.subr.mxu0 0.0
      %5091 = vmatpush1.msra.mxu0 0.0
      %5092 = vmatprep.subr.mxu0 0.0
      %5093 = vmatpush1.msra.mxu0 0.0
      %5094 = vmatprep.mubr.f32.mxu0 0.0
      %5095 = vmatmul.mubr.f32.gmra.mrb[0].mxu0 %v5028
      %v5096 = vpop.f32.mrb[0].mxu0
      %v5097 = vadd.f32 %v5024, %v5096
      %v5098 = vpop.f32.mrb[0].mxu0
      %5099 = vdwg.mxu0
      %v5100 = vld [vmem:[%s13 + $0xf0] sm:$0xff]
      %v5101 = vld [vmem:[%s13 + $0xf8] sm:$0xff]
      %v5102 = vld [vmem:[%s13 + $0x100] sm:$0xff]
      %v5103 = vld [vmem:[#allocation7 + $0x4] sm:$0x7]
      %v5105 = vsel %vm3204, %v5103, 0
      %5107 = vmatprep.subr.mxu0 0.0
      %5108 = vmatpush1.msra.mxu0 %v5100
      %5109 = vmatprep.subr.mxu0 0.0
      %5110 = vmatpush1.msra.mxu0 %v5101
      %5111 = vmatprep.subr.mxu0 0.0
      %5112 = vmatpush1.msra.mxu0 %v5102
      %5113 = vmatprep.subr.mxu0 0.0
      %5114 = vmatpush1.msra.mxu0 0.0
      %5115 = vmatprep.subr.mxu0 0.0
      %5116 = vmatpush1.msra.mxu0 0.0
      %5117 = vmatprep.subr.mxu0 0.0
      %5118 = vmatpush1.msra.mxu0 0.0
      %5119 = vmatprep.subr.mxu0 0.0
      %5120 = vmatpush1.msra.mxu0 0.0
      %5121 = vmatprep.subr.mxu0 0.0
      %5122 = vmatpush1.msra.mxu0 0.0
      %5123 = vmatprep.subr.mxu0 0.0
      %5124 = vmatpush1.msra.mxu0 0.0
      %5125 = vmatprep.subr.mxu0 0.0
      %5126 = vmatpush1.msra.mxu0 0.0
      %5127 = vmatprep.subr.mxu0 0.0
      %5128 = vmatpush1.msra.mxu0 0.0
      %5129 = vmatprep.subr.mxu0 0.0
      %5130 = vmatpush1.msra.mxu0 0.0
      %5131 = vmatprep.subr.mxu0 0.0
      %5132 = vmatpush1.msra.mxu0 0.0
      %5133 = vmatprep.subr.mxu0 0.0
      %5134 = vmatpush1.msra.mxu0 0.0
      %5135 = vmatprep.subr.mxu0 0.0
      %5136 = vmatpush1.msra.mxu0 0.0
      %5137 = vmatprep.subr.mxu0 0.0
      %5138 = vmatpush1.msra.mxu0 0.0
      %5139 = vmatprep.subr.mxu0 0.0
      %5140 = vmatpush1.msra.mxu0 0.0
      %5141 = vmatprep.subr.mxu0 0.0
      %5142 = vmatpush1.msra.mxu0 0.0
      %5143 = vmatprep.subr.mxu0 0.0
      %5144 = vmatpush1.msra.mxu0 0.0
      %5145 = vmatprep.subr.mxu0 0.0
      %5146 = vmatpush1.msra.mxu0 0.0
      %5147 = vmatprep.subr.mxu0 0.0
      %5148 = vmatpush1.msra.mxu0 0.0
      %5149 = vmatprep.subr.mxu0 0.0
      %5150 = vmatpush1.msra.mxu0 0.0
      %5151 = vmatprep.subr.mxu0 0.0
      %5152 = vmatpush1.msra.mxu0 0.0
      %5153 = vmatprep.subr.mxu0 0.0
      %5154 = vmatpush1.msra.mxu0 0.0
      %5155 = vmatprep.subr.mxu0 0.0
      %5156 = vmatpush1.msra.mxu0 0.0
      %5157 = vmatprep.subr.mxu0 0.0
      %5158 = vmatpush1.msra.mxu0 0.0
      %5159 = vmatprep.subr.mxu0 0.0
      %5160 = vmatpush1.msra.mxu0 0.0
      %5161 = vmatprep.subr.mxu0 0.0
      %5162 = vmatpush1.msra.mxu0 0.0
      %5163 = vmatprep.subr.mxu0 0.0
      %5164 = vmatpush1.msra.mxu0 0.0
      %5165 = vmatprep.subr.mxu0 0.0
      %5166 = vmatpush1.msra.mxu0 0.0
      %5167 = vmatprep.subr.mxu0 0.0
      %5168 = vmatpush1.msra.mxu0 0.0
      %5169 = vmatprep.subr.mxu0 0.0
      %5170 = vmatpush1.msra.mxu0 0.0
      %5171 = vmatprep.mubr.f32.mxu0 0.0
      %5172 = vmatmul.mubr.f32.gmra.mrb[0].mxu0 %v5105
      %v5173 = vpop.f32.mrb[0].mxu0
      %v5174 = vadd.f32 0.0, %v5173
      %v5175 = vpop.f32.mrb[0].mxu0
      %5176 = vdwg.mxu0
      %v5177 = vadd.f32 %v5097, %v5174
      %v5178 = vld [vmem:[%s13 + $0x108] sm:$0xff]
      %v5179 = vld [vmem:[%s13 + $0x110] sm:$0xff]
      %v5180 = vld [vmem:[%s13 + $0x118] sm:$0xff]
      %v5181 = vld [vmem:[#allocation5 + $0x4] sm:$0x7]
      %v5183 = vsel %vm3204, %v5181, 0
      %5185 = vmatprep.subr.mxu0 0.0
      %5186 = vmatpush1.msra.mxu0 %v5178
      %5187 = vmatprep.subr.mxu0 0.0
      %5188 = vmatpush1.msra.mxu0 %v5179
      %5189 = vmatprep.subr.mxu0 0.0
      %5190 = vmatpush1.msra.mxu0 %v5180
      %5191 = vmatprep.subr.mxu0 0.0
      %5192 = vmatpush1.msra.mxu0 0.0
      %5193 = vmatprep.subr.mxu0 0.0
      %5194 = vmatpush1.msra.mxu0 0.0
      %5195 = vmatprep.subr.mxu0 0.0
      %5196 = vmatpush1.msra.mxu0 0.0
      %5197 = vmatprep.subr.mxu0 0.0
      %5198 = vmatpush1.msra.mxu0 0.0
      %5199 = vmatprep.subr.mxu0 0.0
      %5200 = vmatpush1.msra.mxu0 0.0
      %5201 = vmatprep.subr.mxu0 0.0
      %5202 = vmatpush1.msra.mxu0 0.0
      %5203 = vmatprep.subr.mxu0 0.0
      %5204 = vmatpush1.msra.mxu0 0.0
      %5205 = vmatprep.subr.mxu0 0.0
      %5206 = vmatpush1.msra.mxu0 0.0
      %5207 = vmatprep.subr.mxu0 0.0
      %5208 = vmatpush1.msra.mxu0 0.0
      %5209 = vmatprep.subr.mxu0 0.0
      %5210 = vmatpush1.msra.mxu0 0.0
      %5211 = vmatprep.subr.mxu0 0.0
      %5212 = vmatpush1.msra.mxu0 0.0
      %5213 = vmatprep.subr.mxu0 0.0
      %5214 = vmatpush1.msra.mxu0 0.0
      %5215 = vmatprep.subr.mxu0 0.0
      %5216 = vmatpush1.msra.mxu0 0.0
      %5217 = vmatprep.subr.mxu0 0.0
      %5218 = vmatpush1.msra.mxu0 0.0
      %5219 = vmatprep.subr.mxu0 0.0
      %5220 = vmatpush1.msra.mxu0 0.0
      %5221 = vmatprep.subr.mxu0 0.0
      %5222 = vmatpush1.msra.mxu0 0.0
      %5223 = vmatprep.subr.mxu0 0.0
      %5224 = vmatpush1.msra.mxu0 0.0
      %5225 = vmatprep.subr.mxu0 0.0
      %5226 = vmatpush1.msra.mxu0 0.0
      %5227 = vmatprep.subr.mxu0 0.0
      %5228 = vmatpush1.msra.mxu0 0.0
      %5229 = vmatprep.subr.mxu0 0.0
      %5230 = vmatpush1.msra.mxu0 0.0
      %5231 = vmatprep.subr.mxu0 0.0
      %5232 = vmatpush1.msra.mxu0 0.0
      %5233 = vmatprep.subr.mxu0 0.0
      %5234 = vmatpush1.msra.mxu0 0.0
      %5235 = vmatprep.subr.mxu0 0.0
      %5236 = vmatpush1.msra.mxu0 0.0
      %5237 = vmatprep.subr.mxu0 0.0
      %5238 = vmatpush1.msra.mxu0 0.0
      %5239 = vmatprep.subr.mxu0 0.0
      %5240 = vmatpush1.msra.mxu0 0.0
      %5241 = vmatprep.subr.mxu0 0.0
      %5242 = vmatpush1.msra.mxu0 0.0
      %5243 = vmatprep.subr.mxu0 0.0
      %5244 = vmatpush1.msra.mxu0 0.0
      %5245 = vmatprep.subr.mxu0 0.0
      %5246 = vmatpush1.msra.mxu0 0.0
      %5247 = vmatprep.subr.mxu0 0.0
      %5248 = vmatpush1.msra.mxu0 0.0
      %5249 = vmatprep.mubr.f32.mxu0 0.0
      %5250 = vmatmul.mubr.f32.gmra.mrb[0].mxu0 %v5183
      %v5251 = vpop.f32.mrb[0].mxu0
      %v5252 = vadd.f32 0.0, %v5251
      %v5253 = vpop.f32.mrb[0].mxu0
      %5254 = vdwg.mxu0
      %v5255 = vadd.f32 %v5177, %v5252
      %v5256 = vadd.f32 %v5255, %v4468
      %v5257 = vmax.f32 %v5256, 0.0
      %s5258 = scalar_lea.vmem [#allocation8], 7
      %5259 = vst [vmem:[%s5258] ss:$4 sm:$0x7] %v5257
      %v5260 = vld [vmem:[%s16] sm:$0x1]
      %v5261 = vld [vmem:[%s15 + $0x40] sm:$0xff]
      %v5262 = vld [vmem:[%s15 + $0x48] sm:$0xff]
      %v5263 = vld [vmem:[#allocation8 + $0x4] sm:$0xff]
      %v5264 = vld [vmem:[#allocation8 + $0xc] sm:$0xf]
      %v5265 = vld [vmem:[%s15 + $0x50] sm:$0xff]
      %v5266 = vld [vmem:[%s15 + $0x58] sm:$0xff]
      %v5267 = vld [vmem:[#allocation4 + $0x4] sm:$0xff]
      %v5268 = vld [vmem:[#allocation4 + $0xc] sm:$0xf]
      %v5270 = vsel %vm1998, %v5267, 0
      %v5273 = vsel %vm1998, %v5268, 0
      %5275 = vmatprep.subr.mxu0 0.0
      %5276 = vmatpush1.msra.mxu0 %v5265
      %5277 = vmatprep.subr.mxu0 0.0
      %5278 = vmatpush1.msra.mxu0 %v5266
      %5279 = vmatprep.subr.mxu0 0.0
      %5280 = vmatpush1.msra.mxu0 0.0
      %5281 = vmatprep.subr.mxu0 0.0
      %5282 = vmatpush1.msra.mxu0 0.0
      %5283 = vmatprep.subr.mxu0 0.0
      %5284 = vmatpush1.msra.mxu0 0.0
      %5285 = vmatprep.subr.mxu0 0.0
      %5286 = vmatpush1.msra.mxu0 0.0
      %5287 = vmatprep.subr.mxu0 0.0
      %5288 = vmatpush1.msra.mxu0 0.0
      %5289 = vmatprep.subr.mxu0 0.0
      %5290 = vmatpush1.msra.mxu0 0.0
      %5291 = vmatprep.subr.mxu0 0.0
      %5292 = vmatpush1.msra.mxu0 0.0
      %5293 = vmatprep.subr.mxu0 0.0
      %5294 = vmatpush1.msra.mxu0 0.0
      %5295 = vmatprep.subr.mxu0 0.0
      %5296 = vmatpush1.msra.mxu0 0.0
      %5297 = vmatprep.subr.mxu0 0.0
      %5298 = vmatpush1.msra.mxu0 0.0
      %5299 = vmatprep.subr.mxu0 0.0
      %5300 = vmatpush1.msra.mxu0 0.0
      %5301 = vmatprep.subr.mxu0 0.0
      %5302 = vmatpush1.msra.mxu0 0.0
      %5303 = vmatprep.subr.mxu0 0.0
      %5304 = vmatpush1.msra.mxu0 0.0
      %5305 = vmatprep.subr.mxu0 0.0
      %5306 = vmatpush1.msra.mxu0 0.0
      %5307 = vmatprep.subr.mxu0 0.0
      %5308 = vmatpush1.msra.mxu0 0.0
      %5309 = vmatprep.subr.mxu0 0.0
      %5310 = vmatpush1.msra.mxu0 0.0
      %5311 = vmatprep.subr.mxu0 0.0
      %5312 = vmatpush1.msra.mxu0 0.0
      %5313 = vmatprep.subr.mxu0 0.0
      %5314 = vmatpush1.msra.mxu0 0.0
      %5315 = vmatprep.subr.mxu0 0.0
      %5316 = vmatpush1.msra.mxu0 0.0
      %5317 = vmatprep.subr.mxu0 0.0
      %5318 = vmatpush1.msra.mxu0 0.0
      %5319 = vmatprep.subr.mxu0 0.0
      %5320 = vmatpush1.msra.mxu0 0.0
      %5321 = vmatprep.subr.mxu0 0.0
      %5322 = vmatpush1.msra.mxu0 0.0
      %5323 = vmatprep.subr.mxu0 0.0
      %5324 = vmatpush1.msra.mxu0 0.0
      %5325 = vmatprep.subr.mxu0 0.0
      %5326 = vmatpush1.msra.mxu0 0.0
      %5327 = vmatprep.subr.mxu0 0.0
      %5328 = vmatpush1.msra.mxu0 0.0
      %5329 = vmatprep.subr.mxu0 0.0
      %5330 = vmatpush1.msra.mxu0 0.0
      %5331 = vmatprep.subr.mxu0 0.0
      %5332 = vmatpush1.msra.mxu0 0.0
      %5333 = vmatprep.subr.mxu0 0.0
      %5334 = vmatpush1.msra.mxu0 0.0
      %5335 = vmatprep.subr.mxu0 0.0
      %5336 = vmatpush1.msra.mxu0 0.0
      %5337 = vmatprep.subr.mxu0 0.0
      %5338 = vmatpush1.msra.mxu0 0.0
      %5339 = vmatprep.mubr.f32.mxu0 0.0
      %5340 = vmatmul.mubr.f32.gmra.mrb[0].mxu0 %v5270
      %v5341 = vpop.f32.mrb[0].mxu0
      %v5342 = vadd.f32 0.0, %v5341
      %v5343 = vpop.f32.mrb[0].mxu0
      %5344 = vmatprep.mubr.f32.mxu0 0.0
      %5345 = vmatmul.mubr.f32.gmra.mrb[0].mxu0 %v5273
      %v5346 = vpop.f32.mrb[0].mxu0
      %v5347 = vadd.f32 0.0, %v5346
      %v5348 = vpop.f32.mrb[0].mxu0
      %5349 = vdwg.mxu0
      %v5351 = vsel %vm1998, %v5263, 0
      %v5354 = vsel %vm1998, %v5264, 0
      %5356 = vmatprep.subr.mxu0 0.0
      %5357 = vmatpush1.msra.mxu0 %v5261
      %5358 = vmatprep.subr.mxu0 0.0
      %5359 = vmatpush1.msra.mxu0 %v5262
      %5360 = vmatprep.subr.mxu0 0.0
      %5361 = vmatpush1.msra.mxu0 0.0
      %5362 = vmatprep.subr.mxu0 0.0
      %5363 = vmatpush1.msra.mxu0 0.0
      %5364 = vmatprep.subr.mxu0 0.0
      %5365 = vmatpush1.msra.mxu0 0.0
      %5366 = vmatprep.subr.mxu0 0.0
      %5367 = vmatpush1.msra.mxu0 0.0
      %5368 = vmatprep.subr.mxu0 0.0
      %5369 = vmatpush1.msra.mxu0 0.0
      %5370 = vmatprep.subr.mxu0 0.0
      %5371 = vmatpush1.msra.mxu0 0.0
      %5372 = vmatprep.subr.mxu0 0.0
      %5373 = vmatpush1.msra.mxu0 0.0
      %5374 = vmatprep.subr.mxu0 0.0
      %5375 = vmatpush1.msra.mxu0 0.0
      %5376 = vmatprep.subr.mxu0 0.0
      %5377 = vmatpush1.msra.mxu0 0.0
      %5378 = vmatprep.subr.mxu0 0.0
      %5379 = vmatpush1.msra.mxu0 0.0
      %5380 = vmatprep.subr.mxu0 0.0
      %5381 = vmatpush1.msra.mxu0 0.0
      %5382 = vmatprep.subr.mxu0 0.0
      %5383 = vmatpush1.msra.mxu0 0.0
      %5384 = vmatprep.subr.mxu0 0.0
      %5385 = vmatpush1.msra.mxu0 0.0
      %5386 = vmatprep.subr.mxu0 0.0
      %5387 = vmatpush1.msra.mxu0 0.0
      %5388 = vmatprep.subr.mxu0 0.0
      %5389 = vmatpush1.msra.mxu0 0.0
      %5390 = vmatprep.subr.mxu0 0.0
      %5391 = vmatpush1.msra.mxu0 0.0
      %5392 = vmatprep.subr.mxu0 0.0
      %5393 = vmatpush1.msra.mxu0 0.0
      %5394 = vmatprep.subr.mxu0 0.0
      %5395 = vmatpush1.msra.mxu0 0.0
      %5396 = vmatprep.subr.mxu0 0.0
      %5397 = vmatpush1.msra.mxu0 0.0
      %5398 = vmatprep.subr.mxu0 0.0
      %5399 = vmatpush1.msra.mxu0 0.0
      %5400 = vmatprep.subr.mxu0 0.0
      %5401 = vmatpush1.msra.mxu0 0.0
      %5402 = vmatprep.subr.mxu0 0.0
      %5403 = vmatpush1.msra.mxu0 0.0
      %5404 = vmatprep.subr.mxu0 0.0
      %5405 = vmatpush1.msra.mxu0 0.0
      %5406 = vmatprep.subr.mxu0 0.0
      %5407 = vmatpush1.msra.mxu0 0.0
      %5408 = vmatprep.subr.mxu0 0.0
      %5409 = vmatpush1.msra.mxu0 0.0
      %5410 = vmatprep.subr.mxu0 0.0
      %5411 = vmatpush1.msra.mxu0 0.0
      %5412 = vmatprep.subr.mxu0 0.0
      %5413 = vmatpush1.msra.mxu0 0.0
      %5414 = vmatprep.subr.mxu0 0.0
      %5415 = vmatpush1.msra.mxu0 0.0
      %5416 = vmatprep.subr.mxu0 0.0
      %5417 = vmatpush1.msra.mxu0 0.0
      %5418 = vmatprep.subr.mxu0 0.0
      %5419 = vmatpush1.msra.mxu0 0.0
      %5420 = vmatprep.mubr.f32.mxu0 0.0
      %5421 = vmatmul.mubr.f32.gmra.mrb[0].mxu0 %v5351
      %v5422 = vpop.f32.mrb[0].mxu0
      %v5423 = vadd.f32 %v5342, %v5422
      %v5424 = vpop.f32.mrb[0].mxu0
      %5425 = vmatprep.mubr.f32.mxu0 0.0
      %5426 = vmatmul.mubr.f32.gmra.mrb[0].mxu0 %v5354
      %v5427 = vpop.f32.mrb[0].mxu0
      %v5428 = vadd.f32 %v5347, %v5427
      %v5429 = vpop.f32.mrb[0].mxu0
      %5430 = vdwg.mxu0
      %v5431 = vld [vmem:[%s15 + $0xc0] sm:$0xff]
      %v5432 = vld [vmem:[%s15 + $0xc8] sm:$0xff]
      %v5433 = vld [vmem:[#allocation8 + $0x3] sm:$0xff]
      %v5434 = vld [vmem:[#allocation8 + $0xb] sm:$0xf]
      %v5436 = vsel %vm1998, %v5433, 0
      %v5439 = vsel %vm1998, %v5434, 0
      %5441 = vmatprep.subr.mxu0 0.0
      %5442 = vmatpush1.msra.mxu0 %v5431
      %5443 = vmatprep.subr.mxu0 0.0
      %5444 = vmatpush1.msra.mxu0 %v5432
      %5445 = vmatprep.subr.mxu0 0.0
      %5446 = vmatpush1.msra.mxu0 0.0
      %5447 = vmatprep.subr.mxu0 0.0
      %5448 = vmatpush1.msra.mxu0 0.0
      %5449 = vmatprep.subr.mxu0 0.0
      %5450 = vmatpush1.msra.mxu0 0.0
      %5451 = vmatprep.subr.mxu0 0.0
      %5452 = vmatpush1.msra.mxu0 0.0
      %5453 = vmatprep.subr.mxu0 0.0
      %5454 = vmatpush1.msra.mxu0 0.0
      %5455 = vmatprep.subr.mxu0 0.0
      %5456 = vmatpush1.msra.mxu0 0.0
      %5457 = vmatprep.subr.mxu0 0.0
      %5458 = vmatpush1.msra.mxu0 0.0
      %5459 = vmatprep.subr.mxu0 0.0
      %5460 = vmatpush1.msra.mxu0 0.0
      %5461 = vmatprep.subr.mxu0 0.0
      %5462 = vmatpush1.msra.mxu0 0.0
      %5463 = vmatprep.subr.mxu0 0.0
      %5464 = vmatpush1.msra.mxu0 0.0
      %5465 = vmatprep.subr.mxu0 0.0
      %5466 = vmatpush1.msra.mxu0 0.0
      %5467 = vmatprep.subr.mxu0 0.0
      %5468 = vmatpush1.msra.mxu0 0.0
      %5469 = vmatprep.subr.mxu0 0.0
      %5470 = vmatpush1.msra.mxu0 0.0
      %5471 = vmatprep.subr.mxu0 0.0
      %5472 = vmatpush1.msra.mxu0 0.0
      %5473 = vmatprep.subr.mxu0 0.0
      %5474 = vmatpush1.msra.mxu0 0.0
      %5475 = vmatprep.subr.mxu0 0.0
      %5476 = vmatpush1.msra.mxu0 0.0
      %5477 = vmatprep.subr.mxu0 0.0
      %5478 = vmatpush1.msra.mxu0 0.0
      %5479 = vmatprep.subr.mxu0 0.0
      %5480 = vmatpush1.msra.mxu0 0.0
      %5481 = vmatprep.subr.mxu0 0.0
      %5482 = vmatpush1.msra.mxu0 0.0
      %5483 = vmatprep.subr.mxu0 0.0
      %5484 = vmatpush1.msra.mxu0 0.0
      %5485 = vmatprep.subr.mxu0 0.0
      %5486 = vmatpush1.msra.mxu0 0.0
      %5487 = vmatprep.subr.mxu0 0.0
      %5488 = vmatpush1.msra.mxu0 0.0
      %5489 = vmatprep.subr.mxu0 0.0
      %5490 = vmatpush1.msra.mxu0 0.0
      %5491 = vmatprep.subr.mxu0 0.0
      %5492 = vmatpush1.msra.mxu0 0.0
      %5493 = vmatprep.subr.mxu0 0.0
      %5494 = vmatpush1.msra.mxu0 0.0
      %5495 = vmatprep.subr.mxu0 0.0
      %5496 = vmatpush1.msra.mxu0 0.0
      %5497 = vmatprep.subr.mxu0 0.0
      %5498 = vmatpush1.msra.mxu0 0.0
      %5499 = vmatprep.subr.mxu0 0.0
      %5500 = vmatpush1.msra.mxu0 0.0
      %5501 = vmatprep.subr.mxu0 0.0
      %5502 = vmatpush1.msra.mxu0 0.0
      %5503 = vmatprep.subr.mxu0 0.0
      %5504 = vmatpush1.msra.mxu0 0.0
      %5505 = vmatprep.mubr.f32.mxu0 0.0
      %5506 = vmatmul.mubr.f32.gmra.mrb[0].mxu0 %v5436
      %v5507 = vpop.f32.mrb[0].mxu0
      %v5508 = vadd.f32 0.0, %v5507
      %v5509 = vpop.f32.mrb[0].mxu0
      %5510 = vmatprep.mubr.f32.mxu0 0.0
      %5511 = vmatmul.mubr.f32.gmra.mrb[0].mxu0 %v5439
      %v5512 = vpop.f32.mrb[0].mxu0
      %v5513 = vadd.f32 0.0, %v5512
      %v5514 = vpop.f32.mrb[0].mxu0
      %5515 = vdwg.mxu0
      %v5516 = vadd.f32 %v5423, %v5508
      %v5517 = vadd.f32 %v5428, %v5513
      %v5518 = vld [vmem:[%s15 + $0xd0] sm:$0xff]
      %v5519 = vld [vmem:[%s15 + $0xd8] sm:$0xff]
      %v5520 = vld [vmem:[#allocation4 + $0x3] sm:$0xff]
      %v5521 = vld [vmem:[#allocation4 + $0xb] sm:$0xf]
      %v5523 = vsel %vm1998, %v5520, 0
      %v5526 = vsel %vm1998, %v5521, 0
      %5528 = vmatprep.subr.mxu0 0.0
      %5529 = vmatpush1.msra.mxu0 %v5518
      %5530 = vmatprep.subr.mxu0 0.0
      %5531 = vmatpush1.msra.mxu0 %v5519
      %5532 = vmatprep.subr.mxu0 0.0
      %5533 = vmatpush1.msra.mxu0 0.0
      %5534 = vmatprep.subr.mxu0 0.0
      %5535 = vmatpush1.msra.mxu0 0.0
      %5536 = vmatprep.subr.mxu0 0.0
      %5537 = vmatpush1.msra.mxu0 0.0
      %5538 = vmatprep.subr.mxu0 0.0
      %5539 = vmatpush1.msra.mxu0 0.0
      %5540 = vmatprep.subr.mxu0 0.0
      %5541 = vmatpush1.msra.mxu0 0.0
      %5542 = vmatprep.subr.mxu0 0.0
      %5543 = vmatpush1.msra.mxu0 0.0
      %5544 = vmatprep.subr.mxu0 0.0
      %5545 = vmatpush1.msra.mxu0 0.0
      %5546 = vmatprep.subr.mxu0 0.0
      %5547 = vmatpush1.msra.mxu0 0.0
      %5548 = vmatprep.subr.mxu0 0.0
      %5549 = vmatpush1.msra.mxu0 0.0
      %5550 = vmatprep.subr.mxu0 0.0
      %5551 = vmatpush1.msra.mxu0 0.0
      %5552 = vmatprep.subr.mxu0 0.0
      %5553 = vmatpush1.msra.mxu0 0.0
      %5554 = vmatprep.subr.mxu0 0.0
      %5555 = vmatpush1.msra.mxu0 0.0
      %5556 = vmatprep.subr.mxu0 0.0
      %5557 = vmatpush1.msra.mxu0 0.0
      %5558 = vmatprep.subr.mxu0 0.0
      %5559 = vmatpush1.msra.mxu0 0.0
      %5560 = vmatprep.subr.mxu0 0.0
      %5561 = vmatpush1.msra.mxu0 0.0
      %5562 = vmatprep.subr.mxu0 0.0
      %5563 = vmatpush1.msra.mxu0 0.0
      %5564 = vmatprep.subr.mxu0 0.0
      %5565 = vmatpush1.msra.mxu0 0.0
      %5566 = vmatprep.subr.mxu0 0.0
      %5567 = vmatpush1.msra.mxu0 0.0
      %5568 = vmatprep.subr.mxu0 0.0
      %5569 = vmatpush1.msra.mxu0 0.0
      %5570 = vmatprep.subr.mxu0 0.0
      %5571 = vmatpush1.msra.mxu0 0.0
      %5572 = vmatprep.subr.mxu0 0.0
      %5573 = vmatpush1.msra.mxu0 0.0
      %5574 = vmatprep.subr.mxu0 0.0
      %5575 = vmatpush1.msra.mxu0 0.0
      %5576 = vmatprep.subr.mxu0 0.0
      %5577 = vmatpush1.msra.mxu0 0.0
      %5578 = vmatprep.subr.mxu0 0.0
      %5579 = vmatpush1.msra.mxu0 0.0
      %5580 = vmatprep.subr.mxu0 0.0
      %5581 = vmatpush1.msra.mxu0 0.0
      %5582 = vmatprep.subr.mxu0 0.0
      %5583 = vmatpush1.msra.mxu0 0.0
      %5584 = vmatprep.subr.mxu0 0.0
      %5585 = vmatpush1.msra.mxu0 0.0
      %5586 = vmatprep.subr.mxu0 0.0
      %5587 = vmatpush1.msra.mxu0 0.0
      %5588 = vmatprep.subr.mxu0 0.0
      %5589 = vmatpush1.msra.mxu0 0.0
      %5590 = vmatprep.subr.mxu0 0.0
      %5591 = vmatpush1.msra.mxu0 0.0
      %5592 = vmatprep.mubr.f32.mxu0 0.0
      %5593 = vmatmul.mubr.f32.gmra.mrb[0].mxu0 %v5523
      %v5594 = vpop.f32.mrb[0].mxu0
      %v5595 = vadd.f32 0.0, %v5594
      %v5596 = vpop.f32.mrb[0].mxu0
      %5597 = vmatprep.mubr.f32.mxu0 0.0
      %5598 = vmatmul.mubr.f32.gmra.mrb[0].mxu0 %v5526
      %v5599 = vpop.f32.mrb[0].mxu0
      %v5600 = vadd.f32 0.0, %v5599
      %v5601 = vpop.f32.mrb[0].mxu0
      %5602 = vdwg.mxu0
      %v5603 = vadd.f32 %v5516, %v5595
      %v5604 = vadd.f32 %v5517, %v5600
      %v5606 = vlaneseq
      %v5607 = vshrl.u32 %v5606, 7
      %v5608 = vsub.s32 0, %v5607
      %v5609 = vrot.slane %v5260, %v5608
      %v5611 = vadd.f32 %v5603, %v5609
      %v5612 = vadd.f32 %v5604, %v5609
      %v5613 = vmax.f32 %v5611, 0.0
      %v5614 = vmax.f32 %v5612, 0.0
      %s5615 = scalar_lea.vmem [#allocation9], 4
      %5616 = vst [vmem:[%s5615] ss:$4 sm:$0xff] %v5613
      %s5617 = scalar_lea.vmem [#allocation9], 36
      %5618 = vst [vmem:[%s5617] ss:$4 sm:$0xf] %v5614
      %v5619 = vld [vmem:[%s15 + $0x60] sm:$0xff]
      %v5620 = vld [vmem:[%s15 + $0x68] sm:$0xff]
      %v5621 = vld [vmem:[#allocation8 + $0x4] sm:$0xff]
      %v5622 = vld [vmem:[#allocation8 + $0xc] sm:$0xf]
      %v5623 = vld [vmem:[%s15 + $0x70] sm:$0xff]
      %v5624 = vld [vmem:[%s15 + $0x78] sm:$0xff]
      %v5625 = vld [vmem:[#allocation4 + $0x4] sm:$0xff]
      %v5626 = vld [vmem:[#allocation4 + $0xc] sm:$0xf]
      %v5628 = vsel %vm1998, %v5625, 0
      %v5631 = vsel %vm1998, %v5626, 0
      %5633 = vmatprep.subr.mxu0 0.0
      %5634 = vmatpush1.msra.mxu0 %v5623
      %5635 = vmatprep.subr.mxu0 0.0
      %5636 = vmatpush1.msra.mxu0 %v5624
      %5637 = vmatprep.subr.mxu0 0.0
      %5638 = vmatpush1.msra.mxu0 0.0
      %5639 = vmatprep.subr.mxu0 0.0
      %5640 = vmatpush1.msra.mxu0 0.0
      %5641 = vmatprep.subr.mxu0 0.0
      %5642 = vmatpush1.msra.mxu0 0.0
      %5643 = vmatprep.subr.mxu0 0.0
      %5644 = vmatpush1.msra.mxu0 0.0
      %5645 = vmatprep.subr.mxu0 0.0
      %5646 = vmatpush1.msra.mxu0 0.0
      %5647 = vmatprep.subr.mxu0 0.0
      %5648 = vmatpush1.msra.mxu0 0.0
      %5649 = vmatprep.subr.mxu0 0.0
      %5650 = vmatpush1.msra.mxu0 0.0
      %5651 = vmatprep.subr.mxu0 0.0
      %5652 = vmatpush1.msra.mxu0 0.0
      %5653 = vmatprep.subr.mxu0 0.0
      %5654 = vmatpush1.msra.mxu0 0.0
      %5655 = vmatprep.subr.mxu0 0.0
      %5656 = vmatpush1.msra.mxu0 0.0
      %5657 = vmatprep.subr.mxu0 0.0
      %5658 = vmatpush1.msra.mxu0 0.0
      %5659 = vmatprep.subr.mxu0 0.0
      %5660 = vmatpush1.msra.mxu0 0.0
      %5661 = vmatprep.subr.mxu0 0.0
      %5662 = vmatpush1.msra.mxu0 0.0
      %5663 = vmatprep.subr.mxu0 0.0
      %5664 = vmatpush1.msra.mxu0 0.0
      %5665 = vmatprep.subr.mxu0 0.0
      %5666 = vmatpush1.msra.mxu0 0.0
      %5667 = vmatprep.subr.mxu0 0.0
      %5668 = vmatpush1.msra.mxu0 0.0
      %5669 = vmatprep.subr.mxu0 0.0
      %5670 = vmatpush1.msra.mxu0 0.0
      %5671 = vmatprep.subr.mxu0 0.0
      %5672 = vmatpush1.msra.mxu0 0.0
      %5673 = vmatprep.subr.mxu0 0.0
      %5674 = vmatpush1.msra.mxu0 0.0
      %5675 = vmatprep.subr.mxu0 0.0
      %5676 = vmatpush1.msra.mxu0 0.0
      %5677 = vmatprep.subr.mxu0 0.0
      %5678 = vmatpush1.msra.mxu0 0.0
      %5679 = vmatprep.subr.mxu0 0.0
      %5680 = vmatpush1.msra.mxu0 0.0
      %5681 = vmatprep.subr.mxu0 0.0
      %5682 = vmatpush1.msra.mxu0 0.0
      %5683 = vmatprep.subr.mxu0 0.0
      %5684 = vmatpush1.msra.mxu0 0.0
      %5685 = vmatprep.subr.mxu0 0.0
      %5686 = vmatpush1.msra.mxu0 0.0
      %5687 = vmatprep.subr.mxu0 0.0
      %5688 = vmatpush1.msra.mxu0 0.0
      %5689 = vmatprep.subr.mxu0 0.0
      %5690 = vmatpush1.msra.mxu0 0.0
      %5691 = vmatprep.subr.mxu0 0.0
      %5692 = vmatpush1.msra.mxu0 0.0
      %5693 = vmatprep.subr.mxu0 0.0
      %5694 = vmatpush1.msra.mxu0 0.0
      %5695 = vmatprep.subr.mxu0 0.0
      %5696 = vmatpush1.msra.mxu0 0.0
      %5697 = vmatprep.mubr.f32.mxu0 0.0
      %5698 = vmatmul.mubr.f32.gmra.mrb[0].mxu0 %v5628
      %v5699 = vpop.f32.mrb[0].mxu0
      %v5700 = vadd.f32 0.0, %v5699
      %v5701 = vpop.f32.mrb[0].mxu0
      %5702 = vmatprep.mubr.f32.mxu0 0.0
      %5703 = vmatmul.mubr.f32.gmra.mrb[0].mxu0 %v5631
      %v5704 = vpop.f32.mrb[0].mxu0
      %v5705 = vadd.f32 0.0, %v5704
      %v5706 = vpop.f32.mrb[0].mxu0
      %5707 = vdwg.mxu0
      %v5709 = vsel %vm1998, %v5621, 0
      %v5712 = vsel %vm1998, %v5622, 0
      %5714 = vmatprep.subr.mxu0 0.0
      %5715 = vmatpush1.msra.mxu0 %v5619
      %5716 = vmatprep.subr.mxu0 0.0
      %5717 = vmatpush1.msra.mxu0 %v5620
      %5718 = vmatprep.subr.mxu0 0.0
      %5719 = vmatpush1.msra.mxu0 0.0
      %5720 = vmatprep.subr.mxu0 0.0
      %5721 = vmatpush1.msra.mxu0 0.0
      %5722 = vmatprep.subr.mxu0 0.0
      %5723 = vmatpush1.msra.mxu0 0.0
      %5724 = vmatprep.subr.mxu0 0.0
      %5725 = vmatpush1.msra.mxu0 0.0
      %5726 = vmatprep.subr.mxu0 0.0
      %5727 = vmatpush1.msra.mxu0 0.0
      %5728 = vmatprep.subr.mxu0 0.0
      %5729 = vmatpush1.msra.mxu0 0.0
      %5730 = vmatprep.subr.mxu0 0.0
      %5731 = vmatpush1.msra.mxu0 0.0
      %5732 = vmatprep.subr.mxu0 0.0
      %5733 = vmatpush1.msra.mxu0 0.0
      %5734 = vmatprep.subr.mxu0 0.0
      %5735 = vmatpush1.msra.mxu0 0.0
      %5736 = vmatprep.subr.mxu0 0.0
      %5737 = vmatpush1.msra.mxu0 0.0
      %5738 = vmatprep.subr.mxu0 0.0
      %5739 = vmatpush1.msra.mxu0 0.0
      %5740 = vmatprep.subr.mxu0 0.0
      %5741 = vmatpush1.msra.mxu0 0.0
      %5742 = vmatprep.subr.mxu0 0.0
      %5743 = vmatpush1.msra.mxu0 0.0
      %5744 = vmatprep.subr.mxu0 0.0
      %5745 = vmatpush1.msra.mxu0 0.0
      %5746 = vmatprep.subr.mxu0 0.0
      %5747 = vmatpush1.msra.mxu0 0.0
      %5748 = vmatprep.subr.mxu0 0.0
      %5749 = vmatpush1.msra.mxu0 0.0
      %5750 = vmatprep.subr.mxu0 0.0
      %5751 = vmatpush1.msra.mxu0 0.0
      %5752 = vmatprep.subr.mxu0 0.0
      %5753 = vmatpush1.msra.mxu0 0.0
      %5754 = vmatprep.subr.mxu0 0.0
      %5755 = vmatpush1.msra.mxu0 0.0
      %5756 = vmatprep.subr.mxu0 0.0
      %5757 = vmatpush1.msra.mxu0 0.0
      %5758 = vmatprep.subr.mxu0 0.0
      %5759 = vmatpush1.msra.mxu0 0.0
      %5760 = vmatprep.subr.mxu0 0.0
      %5761 = vmatpush1.msra.mxu0 0.0
      %5762 = vmatprep.subr.mxu0 0.0
      %5763 = vmatpush1.msra.mxu0 0.0
      %5764 = vmatprep.subr.mxu0 0.0
      %5765 = vmatpush1.msra.mxu0 0.0
      %5766 = vmatprep.subr.mxu0 0.0
      %5767 = vmatpush1.msra.mxu0 0.0
      %5768 = vmatprep.subr.mxu0 0.0
      %5769 = vmatpush1.msra.mxu0 0.0
      %5770 = vmatprep.subr.mxu0 0.0
      %5771 = vmatpush1.msra.mxu0 0.0
      %5772 = vmatprep.subr.mxu0 0.0
      %5773 = vmatpush1.msra.mxu0 0.0
      %5774 = vmatprep.subr.mxu0 0.0
      %5775 = vmatpush1.msra.mxu0 0.0
      %5776 = vmatprep.subr.mxu0 0.0
      %5777 = vmatpush1.msra.mxu0 0.0
      %5778 = vmatprep.mubr.f32.mxu0 0.0
      %5779 = vmatmul.mubr.f32.gmra.mrb[0].mxu0 %v5709
      %v5780 = vpop.f32.mrb[0].mxu0
      %v5781 = vadd.f32 %v5700, %v5780
      %v5782 = vpop.f32.mrb[0].mxu0
      %5783 = vmatprep.mubr.f32.mxu0 0.0
      %5784 = vmatmul.mubr.f32.gmra.mrb[0].mxu0 %v5712
      %v5785 = vpop.f32.mrb[0].mxu0
      %v5786 = vadd.f32 %v5705, %v5785
      %v5787 = vpop.f32.mrb[0].mxu0
      %5788 = vdwg.mxu0
      %v5789 = vadd.f32 %v5781, %v5609
      %v5790 = vadd.f32 %v5786, %v5609
      %v5791 = vmax.f32 %v5789, 0.0
      %v5792 = vmax.f32 %v5790, 0.0
      %s5793 = scalar_lea.vmem [#allocation9], 5
      %5794 = vst [vmem:[%s5793] ss:$4 sm:$0xff] %v5791
      %s5795 = scalar_lea.vmem [#allocation9], 37
      %5796 = vst [vmem:[%s5795] ss:$4 sm:$0xf] %v5792
      %v5797 = vld [vmem:[%s15] sm:$0xff]
      %v5798 = vld [vmem:[%s15 + $0x8] sm:$0xff]
      %v5799 = vld [vmem:[#allocation8 + $0x5] sm:$0xff]
      %v5800 = vld [vmem:[#allocation8 + $0xd] sm:$0xf]
      %v5801 = vld [vmem:[%s15 + $0x10] sm:$0xff]
      %v5802 = vld [vmem:[%s15 + $0x18] sm:$0xff]
      %v5803 = vld [vmem:[#allocation4 + $0x5] sm:$0xff]
      %v5804 = vld [vmem:[#allocation4 + $0xd] sm:$0xf]
      %v5806 = vsel %vm1998, %v5803, 0
      %v5809 = vsel %vm1998, %v5804, 0
      %5811 = vmatprep.subr.mxu0 0.0
      %5812 = vmatpush1.msra.mxu0 %v5801
      %5813 = vmatprep.subr.mxu0 0.0
      %5814 = vmatpush1.msra.mxu0 %v5802
      %5815 = vmatprep.subr.mxu0 0.0
      %5816 = vmatpush1.msra.mxu0 0.0
      %5817 = vmatprep.subr.mxu0 0.0
      %5818 = vmatpush1.msra.mxu0 0.0
      %5819 = vmatprep.subr.mxu0 0.0
      %5820 = vmatpush1.msra.mxu0 0.0
      %5821 = vmatprep.subr.mxu0 0.0
      %5822 = vmatpush1.msra.mxu0 0.0
      %5823 = vmatprep.subr.mxu0 0.0
      %5824 = vmatpush1.msra.mxu0 0.0
      %5825 = vmatprep.subr.mxu0 0.0
      %5826 = vmatpush1.msra.mxu0 0.0
      %5827 = vmatprep.subr.mxu0 0.0
      %5828 = vmatpush1.msra.mxu0 0.0
      %5829 = vmatprep.subr.mxu0 0.0
      %5830 = vmatpush1.msra.mxu0 0.0
      %5831 = vmatprep.subr.mxu0 0.0
      %5832 = vmatpush1.msra.mxu0 0.0
      %5833 = vmatprep.subr.mxu0 0.0
      %5834 = vmatpush1.msra.mxu0 0.0
      %5835 = vmatprep.subr.mxu0 0.0
      %5836 = vmatpush1.msra.mxu0 0.0
      %5837 = vmatprep.subr.mxu0 0.0
      %5838 = vmatpush1.msra.mxu0 0.0
      %5839 = vmatprep.subr.mxu0 0.0
      %5840 = vmatpush1.msra.mxu0 0.0
      %5841 = vmatprep.subr.mxu0 0.0
      %5842 = vmatpush1.msra.mxu0 0.0
      %5843 = vmatprep.subr.mxu0 0.0
      %5844 = vmatpush1.msra.mxu0 0.0
      %5845 = vmatprep.subr.mxu0 0.0
      %5846 = vmatpush1.msra.mxu0 0.0
      %5847 = vmatprep.subr.mxu0 0.0
      %5848 = vmatpush1.msra.mxu0 0.0
      %5849 = vmatprep.subr.mxu0 0.0
      %5850 = vmatpush1.msra.mxu0 0.0
      %5851 = vmatprep.subr.mxu0 0.0
      %5852 = vmatpush1.msra.mxu0 0.0
      %5853 = vmatprep.subr.mxu0 0.0
      %5854 = vmatpush1.msra.mxu0 0.0
      %5855 = vmatprep.subr.mxu0 0.0
      %5856 = vmatpush1.msra.mxu0 0.0
      %5857 = vmatprep.subr.mxu0 0.0
      %5858 = vmatpush1.msra.mxu0 0.0
      %5859 = vmatprep.subr.mxu0 0.0
      %5860 = vmatpush1.msra.mxu0 0.0
      %5861 = vmatprep.subr.mxu0 0.0
      %5862 = vmatpush1.msra.mxu0 0.0
      %5863 = vmatprep.subr.mxu0 0.0
      %5864 = vmatpush1.msra.mxu0 0.0
      %5865 = vmatprep.subr.mxu0 0.0
      %5866 = vmatpush1.msra.mxu0 0.0
      %5867 = vmatprep.subr.mxu0 0.0
      %5868 = vmatpush1.msra.mxu0 0.0
      %5869 = vmatprep.subr.mxu0 0.0
      %5870 = vmatpush1.msra.mxu0 0.0
      %5871 = vmatprep.subr.mxu0 0.0
      %5872 = vmatpush1.msra.mxu0 0.0
      %5873 = vmatprep.subr.mxu0 0.0
      %5874 = vmatpush1.msra.mxu0 0.0
      %5875 = vmatprep.mubr.f32.mxu0 0.0
      %5876 = vmatmul.mubr.f32.gmra.mrb[0].mxu0 %v5806
      %v5877 = vpop.f32.mrb[0].mxu0
      %v5878 = vadd.f32 0.0, %v5877
      %v5879 = vpop.f32.mrb[0].mxu0
      %5880 = vmatprep.mubr.f32.mxu0 0.0
      %5881 = vmatmul.mubr.f32.gmra.mrb[0].mxu0 %v5809
      %v5882 = vpop.f32.mrb[0].mxu0
      %v5883 = vadd.f32 0.0, %v5882
      %v5884 = vpop.f32.mrb[0].mxu0
      %5885 = vdwg.mxu0
      %v5887 = vsel %vm1998, %v5799, 0
      %v5890 = vsel %vm1998, %v5800, 0
      %5892 = vmatprep.subr.mxu0 0.0
      %5893 = vmatpush1.msra.mxu0 %v5797
      %5894 = vmatprep.subr.mxu0 0.0
      %5895 = vmatpush1.msra.mxu0 %v5798
      %5896 = vmatprep.subr.mxu0 0.0
      %5897 = vmatpush1.msra.mxu0 0.0
      %5898 = vmatprep.subr.mxu0 0.0
      %5899 = vmatpush1.msra.mxu0 0.0
      %5900 = vmatprep.subr.mxu0 0.0
      %5901 = vmatpush1.msra.mxu0 0.0
      %5902 = vmatprep.subr.mxu0 0.0
      %5903 = vmatpush1.msra.mxu0 0.0
      %5904 = vmatprep.subr.mxu0 0.0
      %5905 = vmatpush1.msra.mxu0 0.0
      %5906 = vmatprep.subr.mxu0 0.0
      %5907 = vmatpush1.msra.mxu0 0.0
      %5908 = vmatprep.subr.mxu0 0.0
      %5909 = vmatpush1.msra.mxu0 0.0
      %5910 = vmatprep.subr.mxu0 0.0
      %5911 = vmatpush1.msra.mxu0 0.0
      %5912 = vmatprep.subr.mxu0 0.0
      %5913 = vmatpush1.msra.mxu0 0.0
      %5914 = vmatprep.subr.mxu0 0.0
      %5915 = vmatpush1.msra.mxu0 0.0
      %5916 = vmatprep.subr.mxu0 0.0
      %5917 = vmatpush1.msra.mxu0 0.0
      %5918 = vmatprep.subr.mxu0 0.0
      %5919 = vmatpush1.msra.mxu0 0.0
      %5920 = vmatprep.subr.mxu0 0.0
      %5921 = vmatpush1.msra.mxu0 0.0
      %5922 = vmatprep.subr.mxu0 0.0
      %5923 = vmatpush1.msra.mxu0 0.0
      %5924 = vmatprep.subr.mxu0 0.0
      %5925 = vmatpush1.msra.mxu0 0.0
      %5926 = vmatprep.subr.mxu0 0.0
      %5927 = vmatpush1.msra.mxu0 0.0
      %5928 = vmatprep.subr.mxu0 0.0
      %5929 = vmatpush1.msra.mxu0 0.0
      %5930 = vmatprep.subr.mxu0 0.0
      %5931 = vmatpush1.msra.mxu0 0.0
      %5932 = vmatprep.subr.mxu0 0.0
      %5933 = vmatpush1.msra.mxu0 0.0
      %5934 = vmatprep.subr.mxu0 0.0
      %5935 = vmatpush1.msra.mxu0 0.0
      %5936 = vmatprep.subr.mxu0 0.0
      %5937 = vmatpush1.msra.mxu0 0.0
      %5938 = vmatprep.subr.mxu0 0.0
      %5939 = vmatpush1.msra.mxu0 0.0
      %5940 = vmatprep.subr.mxu0 0.0
      %5941 = vmatpush1.msra.mxu0 0.0
      %5942 = vmatprep.subr.mxu0 0.0
      %5943 = vmatpush1.msra.mxu0 0.0
      %5944 = vmatprep.subr.mxu0 0.0
      %5945 = vmatpush1.msra.mxu0 0.0
      %5946 = vmatprep.subr.mxu0 0.0
      %5947 = vmatpush1.msra.mxu0 0.0
      %5948 = vmatprep.subr.mxu0 0.0
      %5949 = vmatpush1.msra.mxu0 0.0
      %5950 = vmatprep.subr.mxu0 0.0
      %5951 = vmatpush1.msra.mxu0 0.0
      %5952 = vmatprep.subr.mxu0 0.0
      %5953 = vmatpush1.msra.mxu0 0.0
      %5954 = vmatprep.subr.mxu0 0.0
      %5955 = vmatpush1.msra.mxu0 0.0
      %5956 = vmatprep.mubr.f32.mxu0 0.0
      %5957 = vmatmul.mubr.f32.gmra.mrb[0].mxu0 %v5887
      %v5958 = vpop.f32.mrb[0].mxu0
      %v5959 = vadd.f32 %v5878, %v5958
      %v5960 = vpop.f32.mrb[0].mxu0
      %5961 = vmatprep.mubr.f32.mxu0 0.0
      %5962 = vmatmul.mubr.f32.gmra.mrb[0].mxu0 %v5890
      %v5963 = vpop.f32.mrb[0].mxu0
      %v5964 = vadd.f32 %v5883, %v5963
      %v5965 = vpop.f32.mrb[0].mxu0
      %5966 = vdwg.mxu0
      %v5967 = vld [vmem:[%s15 + $0x80] sm:$0xff]
      %v5968 = vld [vmem:[%s15 + $0x88] sm:$0xff]
      %v5969 = vld [vmem:[#allocation8 + $0x4] sm:$0xff]
      %v5970 = vld [vmem:[#allocation8 + $0xc] sm:$0xf]
      %v5972 = vsel %vm1998, %v5969, 0
      %v5975 = vsel %vm1998, %v5970, 0
      %5977 = vmatprep.subr.mxu0 0.0
      %5978 = vmatpush1.msra.mxu0 %v5967
      %5979 = vmatprep.subr.mxu0 0.0
      %5980 = vmatpush1.msra.mxu0 %v5968
      %5981 = vmatprep.subr.mxu0 0.0
      %5982 = vmatpush1.msra.mxu0 0.0
      %5983 = vmatprep.subr.mxu0 0.0
      %5984 = vmatpush1.msra.mxu0 0.0
      %5985 = vmatprep.subr.mxu0 0.0
      %5986 = vmatpush1.msra.mxu0 0.0
      %5987 = vmatprep.subr.mxu0 0.0
      %5988 = vmatpush1.msra.mxu0 0.0
      %5989 = vmatprep.subr.mxu0 0.0
      %5990 = vmatpush1.msra.mxu0 0.0
      %5991 = vmatprep.subr.mxu0 0.0
      %5992 = vmatpush1.msra.mxu0 0.0
      %5993 = vmatprep.subr.mxu0 0.0
      %5994 = vmatpush1.msra.mxu0 0.0
      %5995 = vmatprep.subr.mxu0 0.0
      %5996 = vmatpush1.msra.mxu0 0.0
      %5997 = vmatprep.subr.mxu0 0.0
      %5998 = vmatpush1.msra.mxu0 0.0
      %5999 = vmatprep.subr.mxu0 0.0
      %6000 = vmatpush1.msra.mxu0 0.0
      %6001 = vmatprep.subr.mxu0 0.0
      %6002 = vmatpush1.msra.mxu0 0.0
      %6003 = vmatprep.subr.mxu0 0.0
      %6004 = vmatpush1.msra.mxu0 0.0
      %6005 = vmatprep.subr.mxu0 0.0
      %6006 = vmatpush1.msra.mxu0 0.0
      %6007 = vmatprep.subr.mxu0 0.0
      %6008 = vmatpush1.msra.mxu0 0.0
      %6009 = vmatprep.subr.mxu0 0.0
      %6010 = vmatpush1.msra.mxu0 0.0
      %6011 = vmatprep.subr.mxu0 0.0
      %6012 = vmatpush1.msra.mxu0 0.0
      %6013 = vmatprep.subr.mxu0 0.0
      %6014 = vmatpush1.msra.mxu0 0.0
      %6015 = vmatprep.subr.mxu0 0.0
      %6016 = vmatpush1.msra.mxu0 0.0
      %6017 = vmatprep.subr.mxu0 0.0
      %6018 = vmatpush1.msra.mxu0 0.0
      %6019 = vmatprep.subr.mxu0 0.0
      %6020 = vmatpush1.msra.mxu0 0.0
      %6021 = vmatprep.subr.mxu0 0.0
      %6022 = vmatpush1.msra.mxu0 0.0
      %6023 = vmatprep.subr.mxu0 0.0
      %6024 = vmatpush1.msra.mxu0 0.0
      %6025 = vmatprep.subr.mxu0 0.0
      %6026 = vmatpush1.msra.mxu0 0.0
      %6027 = vmatprep.subr.mxu0 0.0
      %6028 = vmatpush1.msra.mxu0 0.0
      %6029 = vmatprep.subr.mxu0 0.0
      %6030 = vmatpush1.msra.mxu0 0.0
      %6031 = vmatprep.subr.mxu0 0.0
      %6032 = vmatpush1.msra.mxu0 0.0
      %6033 = vmatprep.subr.mxu0 0.0
      %6034 = vmatpush1.msra.mxu0 0.0
      %6035 = vmatprep.subr.mxu0 0.0
      %6036 = vmatpush1.msra.mxu0 0.0
      %6037 = vmatprep.subr.mxu0 0.0
      %6038 = vmatpush1.msra.mxu0 0.0
      %6039 = vmatprep.subr.mxu0 0.0
      %6040 = vmatpush1.msra.mxu0 0.0
      %6041 = vmatprep.mubr.f32.mxu0 0.0
      %6042 = vmatmul.mubr.f32.gmra.mrb[0].mxu0 %v5972
      %v6043 = vpop.f32.mrb[0].mxu0
      %v6044 = vadd.f32 0.0, %v6043
      %v6045 = vpop.f32.mrb[0].mxu0
      %6046 = vmatprep.mubr.f32.mxu0 0.0
      %6047 = vmatmul.mubr.f32.gmra.mrb[0].mxu0 %v5975
      %v6048 = vpop.f32.mrb[0].mxu0
      %v6049 = vadd.f32 0.0, %v6048
      %v6050 = vpop.f32.mrb[0].mxu0
      %6051 = vdwg.mxu0
      %v6052 = vadd.f32 %v5959, %v6044
      %v6053 = vadd.f32 %v5964, %v6049
      %v6054 = vld [vmem:[%s15 + $0x90] sm:$0xff]
      %v6055 = vld [vmem:[%s15 + $0x98] sm:$0xff]
      %v6056 = vld [vmem:[#allocation4 + $0x4] sm:$0xff]
      %v6057 = vld [vmem:[#allocation4 + $0xc] sm:$0xf]
      %v6059 = vsel %vm1998, %v6056, 0
      %v6062 = vsel %vm1998, %v6057, 0
      %6064 = vmatprep.subr.mxu0 0.0
      %6065 = vmatpush1.msra.mxu0 %v6054
      %6066 = vmatprep.subr.mxu0 0.0
      %6067 = vmatpush1.msra.mxu0 %v6055
      %6068 = vmatprep.subr.mxu0 0.0
      %6069 = vmatpush1.msra.mxu0 0.0
      %6070 = vmatprep.subr.mxu0 0.0
      %6071 = vmatpush1.msra.mxu0 0.0
      %6072 = vmatprep.subr.mxu0 0.0
      %6073 = vmatpush1.msra.mxu0 0.0
      %6074 = vmatprep.subr.mxu0 0.0
      %6075 = vmatpush1.msra.mxu0 0.0
      %6076 = vmatprep.subr.mxu0 0.0
      %6077 = vmatpush1.msra.mxu0 0.0
      %6078 = vmatprep.subr.mxu0 0.0
      %6079 = vmatpush1.msra.mxu0 0.0
      %6080 = vmatprep.subr.mxu0 0.0
      %6081 = vmatpush1.msra.mxu0 0.0
      %6082 = vmatprep.subr.mxu0 0.0
      %6083 = vmatpush1.msra.mxu0 0.0
      %6084 = vmatprep.subr.mxu0 0.0
      %6085 = vmatpush1.msra.mxu0 0.0
      %6086 = vmatprep.subr.mxu0 0.0
      %6087 = vmatpush1.msra.mxu0 0.0
      %6088 = vmatprep.subr.mxu0 0.0
      %6089 = vmatpush1.msra.mxu0 0.0
      %6090 = vmatprep.subr.mxu0 0.0
      %6091 = vmatpush1.msra.mxu0 0.0
      %6092 = vmatprep.subr.mxu0 0.0
      %6093 = vmatpush1.msra.mxu0 0.0
      %6094 = vmatprep.subr.mxu0 0.0
      %6095 = vmatpush1.msra.mxu0 0.0
      %6096 = vmatprep.subr.mxu0 0.0
      %6097 = vmatpush1.msra.mxu0 0.0
      %6098 = vmatprep.subr.mxu0 0.0
      %6099 = vmatpush1.msra.mxu0 0.0
      %6100 = vmatprep.subr.mxu0 0.0
      %6101 = vmatpush1.msra.mxu0 0.0
      %6102 = vmatprep.subr.mxu0 0.0
      %6103 = vmatpush1.msra.mxu0 0.0
      %6104 = vmatprep.subr.mxu0 0.0
      %6105 = vmatpush1.msra.mxu0 0.0
      %6106 = vmatprep.subr.mxu0 0.0
      %6107 = vmatpush1.msra.mxu0 0.0
      %6108 = vmatprep.subr.mxu0 0.0
      %6109 = vmatpush1.msra.mxu0 0.0
      %6110 = vmatprep.subr.mxu0 0.0
      %6111 = vmatpush1.msra.mxu0 0.0
      %6112 = vmatprep.subr.mxu0 0.0
      %6113 = vmatpush1.msra.mxu0 0.0
      %6114 = vmatprep.subr.mxu0 0.0
      %6115 = vmatpush1.msra.mxu0 0.0
      %6116 = vmatprep.subr.mxu0 0.0
      %6117 = vmatpush1.msra.mxu0 0.0
      %6118 = vmatprep.subr.mxu0 0.0
      %6119 = vmatpush1.msra.mxu0 0.0
      %6120 = vmatprep.subr.mxu0 0.0
      %6121 = vmatpush1.msra.mxu0 0.0
      %6122 = vmatprep.subr.mxu0 0.0
      %6123 = vmatpush1.msra.mxu0 0.0
      %6124 = vmatprep.subr.mxu0 0.0
      %6125 = vmatpush1.msra.mxu0 0.0
      %6126 = vmatprep.subr.mxu0 0.0
      %6127 = vmatpush1.msra.mxu0 0.0
      %6128 = vmatprep.mubr.f32.mxu0 0.0
      %6129 = vmatmul.mubr.f32.gmra.mrb[0].mxu0 %v6059
      %v6130 = vpop.f32.mrb[0].mxu0
      %v6131 = vadd.f32 0.0, %v6130
      %v6132 = vpop.f32.mrb[0].mxu0
      %6133 = vmatprep.mubr.f32.mxu0 0.0
      %6134 = vmatmul.mubr.f32.gmra.mrb[0].mxu0 %v6062
      %v6135 = vpop.f32.mrb[0].mxu0
      %v6136 = vadd.f32 0.0, %v6135
      %v6137 = vpop.f32.mrb[0].mxu0
      %6138 = vdwg.mxu0
      %v6139 = vadd.f32 %v6052, %v6131
      %v6140 = vadd.f32 %v6053, %v6136
      %v6141 = vadd.f32 %v6139, %v5609
      %v6142 = vadd.f32 %v6140, %v5609
      %v6143 = vmax.f32 %v6141, 0.0
      %v6144 = vmax.f32 %v6142, 0.0
      %s6145 = scalar_lea.vmem [#allocation9], 6
      %6146 = vst [vmem:[%s6145] ss:$4 sm:$0xff] %v6143
      %s6147 = scalar_lea.vmem [#allocation9], 38
      %6148 = vst [vmem:[%s6147] ss:$4 sm:$0xf] %v6144
      %v6149 = vld [vmem:[%s15 + $0x20] sm:$0xff]
      %v6150 = vld [vmem:[%s15 + $0x28] sm:$0xff]
      %v6151 = vld [vmem:[#allocation8 + $0x5] sm:$0xff]
      %v6152 = vld [vmem:[#allocation8 + $0xd] sm:$0x7]
      %v6153 = vld [vmem:[%s15 + $0x30] sm:$0xff]
      %v6154 = vld [vmem:[%s15 + $0x38] sm:$0xff]
      %v6155 = vld [vmem:[#allocation4 + $0x5] sm:$0xff]
      %v6156 = vld [vmem:[#allocation4 + $0xd] sm:$0x7]
      %v6158 = vsel %vm1998, %v6155, 0
      %v6161 = vsel %vm1998, %v6156, 0
      %6163 = vmatprep.subr.mxu0 0.0
      %6164 = vmatpush1.msra.mxu0 %v6153
      %6165 = vmatprep.subr.mxu0 0.0
      %6166 = vmatpush1.msra.mxu0 %v6154
      %6167 = vmatprep.subr.mxu0 0.0
      %6168 = vmatpush1.msra.mxu0 0.0
      %6169 = vmatprep.subr.mxu0 0.0
      %6170 = vmatpush1.msra.mxu0 0.0
      %6171 = vmatprep.subr.mxu0 0.0
      %6172 = vmatpush1.msra.mxu0 0.0
      %6173 = vmatprep.subr.mxu0 0.0
      %6174 = vmatpush1.msra.mxu0 0.0
      %6175 = vmatprep.subr.mxu0 0.0
      %6176 = vmatpush1.msra.mxu0 0.0
      %6177 = vmatprep.subr.mxu0 0.0
      %6178 = vmatpush1.msra.mxu0 0.0
      %6179 = vmatprep.subr.mxu0 0.0
      %6180 = vmatpush1.msra.mxu0 0.0
      %6181 = vmatprep.subr.mxu0 0.0
      %6182 = vmatpush1.msra.mxu0 0.0
      %6183 = vmatprep.subr.mxu0 0.0
      %6184 = vmatpush1.msra.mxu0 0.0
      %6185 = vmatprep.subr.mxu0 0.0
      %6186 = vmatpush1.msra.mxu0 0.0
      %6187 = vmatprep.subr.mxu0 0.0
      %6188 = vmatpush1.msra.mxu0 0.0
      %6189 = vmatprep.subr.mxu0 0.0
      %6190 = vmatpush1.msra.mxu0 0.0
      %6191 = vmatprep.subr.mxu0 0.0
      %6192 = vmatpush1.msra.mxu0 0.0
      %6193 = vmatprep.subr.mxu0 0.0
      %6194 = vmatpush1.msra.mxu0 0.0
      %6195 = vmatprep.subr.mxu0 0.0
      %6196 = vmatpush1.msra.mxu0 0.0
      %6197 = vmatprep.subr.mxu0 0.0
      %6198 = vmatpush1.msra.mxu0 0.0
      %6199 = vmatprep.subr.mxu0 0.0
      %6200 = vmatpush1.msra.mxu0 0.0
      %6201 = vmatprep.subr.mxu0 0.0
      %6202 = vmatpush1.msra.mxu0 0.0
      %6203 = vmatprep.subr.mxu0 0.0
      %6204 = vmatpush1.msra.mxu0 0.0
      %6205 = vmatprep.subr.mxu0 0.0
      %6206 = vmatpush1.msra.mxu0 0.0
      %6207 = vmatprep.subr.mxu0 0.0
      %6208 = vmatpush1.msra.mxu0 0.0
      %6209 = vmatprep.subr.mxu0 0.0
      %6210 = vmatpush1.msra.mxu0 0.0
      %6211 = vmatprep.subr.mxu0 0.0
      %6212 = vmatpush1.msra.mxu0 0.0
      %6213 = vmatprep.subr.mxu0 0.0
      %6214 = vmatpush1.msra.mxu0 0.0
      %6215 = vmatprep.subr.mxu0 0.0
      %6216 = vmatpush1.msra.mxu0 0.0
      %6217 = vmatprep.subr.mxu0 0.0
      %6218 = vmatpush1.msra.mxu0 0.0
      %6219 = vmatprep.subr.mxu0 0.0
      %6220 = vmatpush1.msra.mxu0 0.0
      %6221 = vmatprep.subr.mxu0 0.0
      %6222 = vmatpush1.msra.mxu0 0.0
      %6223 = vmatprep.subr.mxu0 0.0
      %6224 = vmatpush1.msra.mxu0 0.0
      %6225 = vmatprep.subr.mxu0 0.0
      %6226 = vmatpush1.msra.mxu0 0.0
      %6227 = vmatprep.mubr.f32.mxu0 0.0
      %6228 = vmatmul.mubr.f32.gmra.mrb[0].mxu0 %v6158
      %v6229 = vpop.f32.mrb[0].mxu0
      %v6230 = vadd.f32 0.0, %v6229
      %v6231 = vpop.f32.mrb[0].mxu0
      %6232 = vmatprep.mubr.f32.mxu0 0.0
      %6233 = vmatmul.mubr.f32.gmra.mrb[0].mxu0 %v6161
      %v6234 = vpop.f32.mrb[0].mxu0
      %v6235 = vadd.f32 0.0, %v6234
      %v6236 = vpop.f32.mrb[0].mxu0
      %6237 = vdwg.mxu0
      %v6239 = vsel %vm1998, %v6151, 0
      %v6242 = vsel %vm1998, %v6152, 0
      %6244 = vmatprep.subr.mxu0 0.0
      %6245 = vmatpush1.msra.mxu0 %v6149
      %6246 = vmatprep.subr.mxu0 0.0
      %6247 = vmatpush1.msra.mxu0 %v6150
      %6248 = vmatprep.subr.mxu0 0.0
      %6249 = vmatpush1.msra.mxu0 0.0
      %6250 = vmatprep.subr.mxu0 0.0
      %6251 = vmatpush1.msra.mxu0 0.0
      %6252 = vmatprep.subr.mxu0 0.0
      %6253 = vmatpush1.msra.mxu0 0.0
      %6254 = vmatprep.subr.mxu0 0.0
      %6255 = vmatpush1.msra.mxu0 0.0
      %6256 = vmatprep.subr.mxu0 0.0
      %6257 = vmatpush1.msra.mxu0 0.0
      %6258 = vmatprep.subr.mxu0 0.0
      %6259 = vmatpush1.msra.mxu0 0.0
      %6260 = vmatprep.subr.mxu0 0.0
      %6261 = vmatpush1.msra.mxu0 0.0
      %6262 = vmatprep.subr.mxu0 0.0
      %6263 = vmatpush1.msra.mxu0 0.0
      %6264 = vmatprep.subr.mxu0 0.0
      %6265 = vmatpush1.msra.mxu0 0.0
      %6266 = vmatprep.subr.mxu0 0.0
      %6267 = vmatpush1.msra.mxu0 0.0
      %6268 = vmatprep.subr.mxu0 0.0
      %6269 = vmatpush1.msra.mxu0 0.0
      %6270 = vmatprep.subr.mxu0 0.0
      %6271 = vmatpush1.msra.mxu0 0.0
      %6272 = vmatprep.subr.mxu0 0.0
      %6273 = vmatpush1.msra.mxu0 0.0
      %6274 = vmatprep.subr.mxu0 0.0
      %6275 = vmatpush1.msra.mxu0 0.0
      %6276 = vmatprep.subr.mxu0 0.0
      %6277 = vmatpush1.msra.mxu0 0.0
      %6278 = vmatprep.subr.mxu0 0.0
      %6279 = vmatpush1.msra.mxu0 0.0
      %6280 = vmatprep.subr.mxu0 0.0
      %6281 = vmatpush1.msra.mxu0 0.0
      %6282 = vmatprep.subr.mxu0 0.0
      %6283 = vmatpush1.msra.mxu0 0.0
      %6284 = vmatprep.subr.mxu0 0.0
      %6285 = vmatpush1.msra.mxu0 0.0
      %6286 = vmatprep.subr.mxu0 0.0
      %6287 = vmatpush1.msra.mxu0 0.0
      %6288 = vmatprep.subr.mxu0 0.0
      %6289 = vmatpush1.msra.mxu0 0.0
      %6290 = vmatprep.subr.mxu0 0.0
      %6291 = vmatpush1.msra.mxu0 0.0
      %6292 = vmatprep.subr.mxu0 0.0
      %6293 = vmatpush1.msra.mxu0 0.0
      %6294 = vmatprep.subr.mxu0 0.0
      %6295 = vmatpush1.msra.mxu0 0.0
      %6296 = vmatprep.subr.mxu0 0.0
      %6297 = vmatpush1.msra.mxu0 0.0
      %6298 = vmatprep.subr.mxu0 0.0
      %6299 = vmatpush1.msra.mxu0 0.0
      %6300 = vmatprep.subr.mxu0 0.0
      %6301 = vmatpush1.msra.mxu0 0.0
      %6302 = vmatprep.subr.mxu0 0.0
      %6303 = vmatpush1.msra.mxu0 0.0
      %6304 = vmatprep.subr.mxu0 0.0
      %6305 = vmatpush1.msra.mxu0 0.0
      %6306 = vmatprep.subr.mxu0 0.0
      %6307 = vmatpush1.msra.mxu0 0.0
      %6308 = vmatprep.mubr.f32.mxu0 0.0
      %6309 = vmatmul.mubr.f32.gmra.mrb[0].mxu0 %v6239
      %v6310 = vpop.f32.mrb[0].mxu0
      %v6311 = vadd.f32 %v6230, %v6310
      %v6312 = vpop.f32.mrb[0].mxu0
      %6313 = vmatprep.mubr.f32.mxu0 0.0
      %6314 = vmatmul.mubr.f32.gmra.mrb[0].mxu0 %v6242
      %v6315 = vpop.f32.mrb[0].mxu0
      %v6316 = vadd.f32 %v6235, %v6315
      %v6317 = vpop.f32.mrb[0].mxu0
      %6318 = vdwg.mxu0
      %v6319 = vld [vmem:[%s15 + $0xa0] sm:$0xff]
      %v6320 = vld [vmem:[%s15 + $0xa8] sm:$0xff]
      %v6321 = vld [vmem:[#allocation8 + $0x4] sm:$0xff]
      %v6322 = vld [vmem:[#allocation8 + $0xc] sm:$0x7]
      %v6324 = vsel %vm1998, %v6321, 0
      %v6327 = vsel %vm1998, %v6322, 0
      %6329 = vmatprep.subr.mxu0 0.0
      %6330 = vmatpush1.msra.mxu0 %v6319
      %6331 = vmatprep.subr.mxu0 0.0
      %6332 = vmatpush1.msra.mxu0 %v6320
      %6333 = vmatprep.subr.mxu0 0.0
      %6334 = vmatpush1.msra.mxu0 0.0
      %6335 = vmatprep.subr.mxu0 0.0
      %6336 = vmatpush1.msra.mxu0 0.0
      %6337 = vmatprep.subr.mxu0 0.0
      %6338 = vmatpush1.msra.mxu0 0.0
      %6339 = vmatprep.subr.mxu0 0.0
      %6340 = vmatpush1.msra.mxu0 0.0
      %6341 = vmatprep.subr.mxu0 0.0
      %6342 = vmatpush1.msra.mxu0 0.0
      %6343 = vmatprep.subr.mxu0 0.0
      %6344 = vmatpush1.msra.mxu0 0.0
      %6345 = vmatprep.subr.mxu0 0.0
      %6346 = vmatpush1.msra.mxu0 0.0
      %6347 = vmatprep.subr.mxu0 0.0
      %6348 = vmatpush1.msra.mxu0 0.0
      %6349 = vmatprep.subr.mxu0 0.0
      %6350 = vmatpush1.msra.mxu0 0.0
      %6351 = vmatprep.subr.mxu0 0.0
      %6352 = vmatpush1.msra.mxu0 0.0
      %6353 = vmatprep.subr.mxu0 0.0
      %6354 = vmatpush1.msra.mxu0 0.0
      %6355 = vmatprep.subr.mxu0 0.0
      %6356 = vmatpush1.msra.mxu0 0.0
      %6357 = vmatprep.subr.mxu0 0.0
      %6358 = vmatpush1.msra.mxu0 0.0
      %6359 = vmatprep.subr.mxu0 0.0
      %6360 = vmatpush1.msra.mxu0 0.0
      %6361 = vmatprep.subr.mxu0 0.0
      %6362 = vmatpush1.msra.mxu0 0.0
      %6363 = vmatprep.subr.mxu0 0.0
      %6364 = vmatpush1.msra.mxu0 0.0
      %6365 = vmatprep.subr.mxu0 0.0
      %6366 = vmatpush1.msra.mxu0 0.0
      %6367 = vmatprep.subr.mxu0 0.0
      %6368 = vmatpush1.msra.mxu0 0.0
      %6369 = vmatprep.subr.mxu0 0.0
      %6370 = vmatpush1.msra.mxu0 0.0
      %6371 = vmatprep.subr.mxu0 0.0
      %6372 = vmatpush1.msra.mxu0 0.0
      %6373 = vmatprep.subr.mxu0 0.0
      %6374 = vmatpush1.msra.mxu0 0.0
      %6375 = vmatprep.subr.mxu0 0.0
      %6376 = vmatpush1.msra.mxu0 0.0
      %6377 = vmatprep.subr.mxu0 0.0
      %6378 = vmatpush1.msra.mxu0 0.0
      %6379 = vmatprep.subr.mxu0 0.0
      %6380 = vmatpush1.msra.mxu0 0.0
      %6381 = vmatprep.subr.mxu0 0.0
      %6382 = vmatpush1.msra.mxu0 0.0
      %6383 = vmatprep.subr.mxu0 0.0
      %6384 = vmatpush1.msra.mxu0 0.0
      %6385 = vmatprep.subr.mxu0 0.0
      %6386 = vmatpush1.msra.mxu0 0.0
      %6387 = vmatprep.subr.mxu0 0.0
      %6388 = vmatpush1.msra.mxu0 0.0
      %6389 = vmatprep.subr.mxu0 0.0
      %6390 = vmatpush1.msra.mxu0 0.0
      %6391 = vmatprep.subr.mxu0 0.0
      %6392 = vmatpush1.msra.mxu0 0.0
      %6393 = vmatprep.mubr.f32.mxu0 0.0
      %6394 = vmatmul.mubr.f32.gmra.mrb[0].mxu0 %v6324
      %v6395 = vpop.f32.mrb[0].mxu0
      %v6396 = vadd.f32 0.0, %v6395
      %v6397 = vpop.f32.mrb[0].mxu0
      %6398 = vmatprep.mubr.f32.mxu0 0.0
      %6399 = vmatmul.mubr.f32.gmra.mrb[0].mxu0 %v6327
      %v6400 = vpop.f32.mrb[0].mxu0
      %v6401 = vadd.f32 0.0, %v6400
      %v6402 = vpop.f32.mrb[0].mxu0
      %6403 = vdwg.mxu0
      %v6404 = vadd.f32 %v6311, %v6396
      %v6405 = vadd.f32 %v6316, %v6401
      %v6406 = vld [vmem:[%s15 + $0xb0] sm:$0xff]
      %v6407 = vld [vmem:[%s15 + $0xb8] sm:$0xff]
      %v6408 = vld [vmem:[#allocation4 + $0x4] sm:$0xff]
      %v6409 = vld [vmem:[#allocation4 + $0xc] sm:$0x7]
      %v6411 = vsel %vm1998, %v6408, 0
      %v6414 = vsel %vm1998, %v6409, 0
      %6416 = vmatprep.subr.mxu0 0.0
      %6417 = vmatpush1.msra.mxu0 %v6406
      %6418 = vmatprep.subr.mxu0 0.0
      %6419 = vmatpush1.msra.mxu0 %v6407
      %6420 = vmatprep.subr.mxu0 0.0
      %6421 = vmatpush1.msra.mxu0 0.0
      %6422 = vmatprep.subr.mxu0 0.0
      %6423 = vmatpush1.msra.mxu0 0.0
      %6424 = vmatprep.subr.mxu0 0.0
      %6425 = vmatpush1.msra.mxu0 0.0
      %6426 = vmatprep.subr.mxu0 0.0
      %6427 = vmatpush1.msra.mxu0 0.0
      %6428 = vmatprep.subr.mxu0 0.0
      %6429 = vmatpush1.msra.mxu0 0.0
      %6430 = vmatprep.subr.mxu0 0.0
      %6431 = vmatpush1.msra.mxu0 0.0
      %6432 = vmatprep.subr.mxu0 0.0
      %6433 = vmatpush1.msra.mxu0 0.0
      %6434 = vmatprep.subr.mxu0 0.0
      %6435 = vmatpush1.msra.mxu0 0.0
      %6436 = vmatprep.subr.mxu0 0.0
      %6437 = vmatpush1.msra.mxu0 0.0
      %6438 = vmatprep.subr.mxu0 0.0
      %6439 = vmatpush1.msra.mxu0 0.0
      %6440 = vmatprep.subr.mxu0 0.0
      %6441 = vmatpush1.msra.mxu0 0.0
      %6442 = vmatprep.subr.mxu0 0.0
      %6443 = vmatpush1.msra.mxu0 0.0
      %6444 = vmatprep.subr.mxu0 0.0
      %6445 = vmatpush1.msra.mxu0 0.0
      %6446 = vmatprep.subr.mxu0 0.0
      %6447 = vmatpush1.msra.mxu0 0.0
      %6448 = vmatprep.subr.mxu0 0.0
      %6449 = vmatpush1.msra.mxu0 0.0
      %6450 = vmatprep.subr.mxu0 0.0
      %6451 = vmatpush1.msra.mxu0 0.0
      %6452 = vmatprep.subr.mxu0 0.0
      %6453 = vmatpush1.msra.mxu0 0.0
      %6454 = vmatprep.subr.mxu0 0.0
      %6455 = vmatpush1.msra.mxu0 0.0
      %6456 = vmatprep.subr.mxu0 0.0
      %6457 = vmatpush1.msra.mxu0 0.0
      %6458 = vmatprep.subr.mxu0 0.0
      %6459 = vmatpush1.msra.mxu0 0.0
      %6460 = vmatprep.subr.mxu0 0.0
      %6461 = vmatpush1.msra.mxu0 0.0
      %6462 = vmatprep.subr.mxu0 0.0
      %6463 = vmatpush1.msra.mxu0 0.0
      %6464 = vmatprep.subr.mxu0 0.0
      %6465 = vmatpush1.msra.mxu0 0.0
      %6466 = vmatprep.subr.mxu0 0.0
      %6467 = vmatpush1.msra.mxu0 0.0
      %6468 = vmatprep.subr.mxu0 0.0
      %6469 = vmatpush1.msra.mxu0 0.0
      %6470 = vmatprep.subr.mxu0 0.0
      %6471 = vmatpush1.msra.mxu0 0.0
      %6472 = vmatprep.subr.mxu0 0.0
      %6473 = vmatpush1.msra.mxu0 0.0
      %6474 = vmatprep.subr.mxu0 0.0
      %6475 = vmatpush1.msra.mxu0 0.0
      %6476 = vmatprep.subr.mxu0 0.0
      %6477 = vmatpush1.msra.mxu0 0.0
      %6478 = vmatprep.subr.mxu0 0.0
      %6479 = vmatpush1.msra.mxu0 0.0
      %6480 = vmatprep.mubr.f32.mxu0 0.0
      %6481 = vmatmul.mubr.f32.gmra.mrb[0].mxu0 %v6411
      %v6482 = vpop.f32.mrb[0].mxu0
      %v6483 = vadd.f32 0.0, %v6482
      %v6484 = vpop.f32.mrb[0].mxu0
      %6485 = vmatprep.mubr.f32.mxu0 0.0
      %6486 = vmatmul.mubr.f32.gmra.mrb[0].mxu0 %v6414
      %v6487 = vpop.f32.mrb[0].mxu0
      %v6488 = vadd.f32 0.0, %v6487
      %v6489 = vpop.f32.mrb[0].mxu0
      %6490 = vdwg.mxu0
      %v6491 = vadd.f32 %v6404, %v6483
      %v6492 = vadd.f32 %v6405, %v6488
      %v6493 = vadd.f32 %v6491, %v5609
      %v6494 = vadd.f32 %v6492, %v5609
      %v6495 = vmax.f32 %v6493, 0.0
      %v6496 = vmax.f32 %v6494, 0.0
      %s6497 = scalar_lea.vmem [#allocation9], 7
      %6498 = vst [vmem:[%s6497] ss:$4 sm:$0xff] %v6495
      %s6499 = scalar_lea.vmem [#allocation9], 39
      %6500 = vst [vmem:[%s6499] ss:$4 sm:$0x7] %v6496
      %v6501 = vld [vmem:[%s18] sm:$0x1]
      %v6502 = vld [vmem:[%s17 + $0x60] sm:$0xff]
      %v6503 = vld [vmem:[%s17 + $0x68] sm:$0xff]
      %v6504 = vld [vmem:[#allocation9 + $0x4] sm:$0xff]
      %v6505 = vld [vmem:[#allocation9 + $0xc] sm:$0xff]
      %v6506 = vld [vmem:[#allocation9 + $0x14] sm:$0xff]
      %v6507 = vld [vmem:[#allocation9 + $0x1c] sm:$0xff]
      %v6508 = vld [vmem:[#allocation9 + $0x24] sm:$0xff]
      %v6509 = vld [vmem:[#allocation9 + $0x2c] sm:$0x7f]
      %v6510 = vld [vmem:[%s17 + $0x70] sm:$0xff]
      %v6511 = vld [vmem:[%s17 + $0x78] sm:$0xff]
      %v6512 = vld [vmem:[#allocation3 + $0x4] sm:$0xff]
      %v6513 = vld [vmem:[#allocation3 + $0xc] sm:$0xff]
      %v6514 = vld [vmem:[#allocation3 + $0x14] sm:$0xff]
      %v6515 = vld [vmem:[#allocation3 + $0x1c] sm:$0xff]
      %v6516 = vld [vmem:[#allocation3 + $0x24] sm:$0xff]
      %v6517 = vld [vmem:[#allocation3 + $0x2c] sm:$0x7f]
      %v6519 = vsel %vm1998, %v6512, 0
      %v6522 = vsel %vm1998, %v6513, 0
      %v6525 = vsel %vm1998, %v6514, 0
      %v6528 = vsel %vm1998, %v6515, 0
      %v6531 = vsel %vm1998, %v6516, 0
      %v6534 = vsel %vm1998, %v6517, 0
      %6536 = vmatprep.subr.mxu0 0.0
      %6537 = vmatpush1.msra.mxu0 %v6510
      %6538 = vmatprep.subr.mxu0 0.0
      %6539 = vmatpush1.msra.mxu0 %v6511
      %6540 = vmatprep.subr.mxu0 0.0
      %6541 = vmatpush1.msra.mxu0 0.0
      %6542 = vmatprep.subr.mxu0 0.0
      %6543 = vmatpush1.msra.mxu0 0.0
      %6544 = vmatprep.subr.mxu0 0.0
      %6545 = vmatpush1.msra.mxu0 0.0
      %6546 = vmatprep.subr.mxu0 0.0
      %6547 = vmatpush1.msra.mxu0 0.0
      %6548 = vmatprep.subr.mxu0 0.0
      %6549 = vmatpush1.msra.mxu0 0.0
      %6550 = vmatprep.subr.mxu0 0.0
      %6551 = vmatpush1.msra.mxu0 0.0
      %6552 = vmatprep.subr.mxu0 0.0
      %6553 = vmatpush1.msra.mxu0 0.0
      %6554 = vmatprep.subr.mxu0 0.0
      %6555 = vmatpush1.msra.mxu0 0.0
      %6556 = vmatprep.subr.mxu0 0.0
      %6557 = vmatpush1.msra.mxu0 0.0
      %6558 = vmatprep.subr.mxu0 0.0
      %6559 = vmatpush1.msra.mxu0 0.0
      %6560 = vmatprep.subr.mxu0 0.0
      %6561 = vmatpush1.msra.mxu0 0.0
      %6562 = vmatprep.subr.mxu0 0.0
      %6563 = vmatpush1.msra.mxu0 0.0
      %6564 = vmatprep.subr.mxu0 0.0
      %6565 = vmatpush1.msra.mxu0 0.0
      %6566 = vmatprep.subr.mxu0 0.0
      %6567 = vmatpush1.msra.mxu0 0.0
      %6568 = vmatprep.subr.mxu0 0.0
      %6569 = vmatpush1.msra.mxu0 0.0
      %6570 = vmatprep.subr.mxu0 0.0
      %6571 = vmatpush1.msra.mxu0 0.0
      %6572 = vmatprep.subr.mxu0 0.0
      %6573 = vmatpush1.msra.mxu0 0.0
      %6574 = vmatprep.subr.mxu0 0.0
      %6575 = vmatpush1.msra.mxu0 0.0
      %6576 = vmatprep.subr.mxu0 0.0
      %6577 = vmatpush1.msra.mxu0 0.0
      %6578 = vmatprep.subr.mxu0 0.0
      %6579 = vmatpush1.msra.mxu0 0.0
      %6580 = vmatprep.subr.mxu0 0.0
      %6581 = vmatpush1.msra.mxu0 0.0
      %6582 = vmatprep.subr.mxu0 0.0
      %6583 = vmatpush1.msra.mxu0 0.0
      %6584 = vmatprep.subr.mxu0 0.0
      %6585 = vmatpush1.msra.mxu0 0.0
      %6586 = vmatprep.subr.mxu0 0.0
      %6587 = vmatpush1.msra.mxu0 0.0
      %6588 = vmatprep.subr.mxu0 0.0
      %6589 = vmatpush1.msra.mxu0 0.0
      %6590 = vmatprep.subr.mxu0 0.0
      %6591 = vmatpush1.msra.mxu0 0.0
      %6592 = vmatprep.subr.mxu0 0.0
      %6593 = vmatpush1.msra.mxu0 0.0
      %6594 = vmatprep.subr.mxu0 0.0
      %6595 = vmatpush1.msra.mxu0 0.0
      %6596 = vmatprep.subr.mxu0 0.0
      %6597 = vmatpush1.msra.mxu0 0.0
      %6598 = vmatprep.subr.mxu0 0.0
      %6599 = vmatpush1.msra.mxu0 0.0
      %6600 = vmatprep.mubr.f32.mxu0 0.0
      %6601 = vmatmul.mubr.f32.gmra.mrb[0].mxu0 %v6519
      %v6602 = vpop.f32.mrb[0].mxu0
      %v6603 = vadd.f32 0.0, %v6602
      %v6604 = vpop.f32.mrb[0].mxu0
      %6605 = vmatprep.mubr.f32.mxu0 0.0
      %6606 = vmatmul.mubr.f32.gmra.mrb[0].mxu0 %v6522
      %v6607 = vpop.f32.mrb[0].mxu0
      %v6608 = vadd.f32 0.0, %v6607
      %v6609 = vpop.f32.mrb[0].mxu0
      %6610 = vmatprep.mubr.f32.mxu0 0.0
      %6611 = vmatmul.mubr.f32.gmra.mrb[0].mxu0 %v6525
      %v6612 = vpop.f32.mrb[0].mxu0
      %v6613 = vadd.f32 0.0, %v6612
      %v6614 = vpop.f32.mrb[0].mxu0
      %6615 = vmatprep.mubr.f32.mxu0 0.0
      %6616 = vmatmul.mubr.f32.gmra.mrb[0].mxu0 %v6528
      %v6617 = vpop.f32.mrb[0].mxu0
      %v6618 = vadd.f32 0.0, %v6617
      %v6619 = vpop.f32.mrb[0].mxu0
      %6620 = vmatprep.mubr.f32.mxu0 0.0
      %6621 = vmatmul.mubr.f32.gmra.mrb[0].mxu0 %v6531
      %v6622 = vpop.f32.mrb[0].mxu0
      %v6623 = vadd.f32 0.0, %v6622
      %v6624 = vpop.f32.mrb[0].mxu0
      %6625 = vmatprep.mubr.f32.mxu0 0.0
      %6626 = vmatmul.mubr.f32.gmra.mrb[0].mxu0 %v6534
      %v6627 = vpop.f32.mrb[0].mxu0
      %v6628 = vadd.f32 0.0, %v6627
      %v6629 = vpop.f32.mrb[0].mxu0
      %6630 = vdwg.mxu0
      %v6632 = vsel %vm1998, %v6504, 0
      %v6635 = vsel %vm1998, %v6505, 0
      %v6638 = vsel %vm1998, %v6506, 0
      %v6641 = vsel %vm1998, %v6507, 0
      %v6644 = vsel %vm1998, %v6508, 0
      %v6647 = vsel %vm1998, %v6509, 0
      %6649 = vmatprep.subr.mxu0 0.0
      %6650 = vmatpush1.msra.mxu0 %v6502
      %6651 = vmatprep.subr.mxu0 0.0
      %6652 = vmatpush1.msra.mxu0 %v6503
      %6653 = vmatprep.subr.mxu0 0.0
      %6654 = vmatpush1.msra.mxu0 0.0
      %6655 = vmatprep.subr.mxu0 0.0
      %6656 = vmatpush1.msra.mxu0 0.0
      %6657 = vmatprep.subr.mxu0 0.0
      %6658 = vmatpush1.msra.mxu0 0.0
      %6659 = vmatprep.subr.mxu0 0.0
      %6660 = vmatpush1.msra.mxu0 0.0
      %6661 = vmatprep.subr.mxu0 0.0
      %6662 = vmatpush1.msra.mxu0 0.0
      %6663 = vmatprep.subr.mxu0 0.0
      %6664 = vmatpush1.msra.mxu0 0.0
      %6665 = vmatprep.subr.mxu0 0.0
      %6666 = vmatpush1.msra.mxu0 0.0
      %6667 = vmatprep.subr.mxu0 0.0
      %6668 = vmatpush1.msra.mxu0 0.0
      %6669 = vmatprep.subr.mxu0 0.0
      %6670 = vmatpush1.msra.mxu0 0.0
      %6671 = vmatprep.subr.mxu0 0.0
      %6672 = vmatpush1.msra.mxu0 0.0
      %6673 = vmatprep.subr.mxu0 0.0
      %6674 = vmatpush1.msra.mxu0 0.0
      %6675 = vmatprep.subr.mxu0 0.0
      %6676 = vmatpush1.msra.mxu0 0.0
      %6677 = vmatprep.subr.mxu0 0.0
      %6678 = vmatpush1.msra.mxu0 0.0
      %6679 = vmatprep.subr.mxu0 0.0
      %6680 = vmatpush1.msra.mxu0 0.0
      %6681 = vmatprep.subr.mxu0 0.0
      %6682 = vmatpush1.msra.mxu0 0.0
      %6683 = vmatprep.subr.mxu0 0.0
      %6684 = vmatpush1.msra.mxu0 0.0
      %6685 = vmatprep.subr.mxu0 0.0
      %6686 = vmatpush1.msra.mxu0 0.0
      %6687 = vmatprep.subr.mxu0 0.0
      %6688 = vmatpush1.msra.mxu0 0.0
      %6689 = vmatprep.subr.mxu0 0.0
      %6690 = vmatpush1.msra.mxu0 0.0
      %6691 = vmatprep.subr.mxu0 0.0
      %6692 = vmatpush1.msra.mxu0 0.0
      %6693 = vmatprep.subr.mxu0 0.0
      %6694 = vmatpush1.msra.mxu0 0.0
      %6695 = vmatprep.subr.mxu0 0.0
      %6696 = vmatpush1.msra.mxu0 0.0
      %6697 = vmatprep.subr.mxu0 0.0
      %6698 = vmatpush1.msra.mxu0 0.0
      %6699 = vmatprep.subr.mxu0 0.0
      %6700 = vmatpush1.msra.mxu0 0.0
      %6701 = vmatprep.subr.mxu0 0.0
      %6702 = vmatpush1.msra.mxu0 0.0
      %6703 = vmatprep.subr.mxu0 0.0
      %6704 = vmatpush1.msra.mxu0 0.0
      %6705 = vmatprep.subr.mxu0 0.0
      %6706 = vmatpush1.msra.mxu0 0.0
      %6707 = vmatprep.subr.mxu0 0.0
      %6708 = vmatpush1.msra.mxu0 0.0
      %6709 = vmatprep.subr.mxu0 0.0
      %6710 = vmatpush1.msra.mxu0 0.0
      %6711 = vmatprep.subr.mxu0 0.0
      %6712 = vmatpush1.msra.mxu0 0.0
      %6713 = vmatprep.mubr.f32.mxu0 0.0
      %6714 = vmatmul.mubr.f32.gmra.mrb[0].mxu0 %v6632
      %v6715 = vpop.f32.mrb[0].mxu0
      %v6716 = vadd.f32 %v6603, %v6715
      %v6717 = vpop.f32.mrb[0].mxu0
      %6718 = vmatprep.mubr.f32.mxu0 0.0
      %6719 = vmatmul.mubr.f32.gmra.mrb[0].mxu0 %v6635
      %v6720 = vpop.f32.mrb[0].mxu0
      %v6721 = vadd.f32 %v6608, %v6720
      %v6722 = vpop.f32.mrb[0].mxu0
      %6723 = vmatprep.mubr.f32.mxu0 0.0
      %6724 = vmatmul.mubr.f32.gmra.mrb[0].mxu0 %v6638
      %v6725 = vpop.f32.mrb[0].mxu0
      %v6726 = vadd.f32 %v6613, %v6725
      %v6727 = vpop.f32.mrb[0].mxu0
      %6728 = vmatprep.mubr.f32.mxu0 0.0
      %6729 = vmatmul.mubr.f32.gmra.mrb[0].mxu0 %v6641
      %v6730 = vpop.f32.mrb[0].mxu0
      %v6731 = vadd.f32 %v6618, %v6730
      %v6732 = vpop.f32.mrb[0].mxu0
      %6733 = vmatprep.mubr.f32.mxu0 0.0
      %6734 = vmatmul.mubr.f32.gmra.mrb[0].mxu0 %v6644
      %v6735 = vpop.f32.mrb[0].mxu0
      %v6736 = vadd.f32 %v6623, %v6735
      %v6737 = vpop.f32.mrb[0].mxu0
      %6738 = vmatprep.mubr.f32.mxu0 0.0
      %6739 = vmatmul.mubr.f32.gmra.mrb[0].mxu0 %v6647
      %v6740 = vpop.f32.mrb[0].mxu0
      %v6741 = vadd.f32 %v6628, %v6740
      %v6742 = vpop.f32.mrb[0].mxu0
      %6743 = vdwg.mxu0
      %v6745 = vlaneseq
      %v6746 = vshrl.u32 %v6745, 7
      %v6747 = vsub.s32 0, %v6746
      %v6748 = vrot.slane %v6501, %v6747
      %v6750 = vadd.f32 %v6716, %v6748
      %v6751 = vadd.f32 %v6721, %v6748
      %v6752 = vadd.f32 %v6726, %v6748
      %v6753 = vadd.f32 %v6731, %v6748
      %v6754 = vadd.f32 %v6736, %v6748
      %v6755 = vadd.f32 %v6741, %v6748
      %v6756 = vmax.f32 %v6750, 0.0
      %v6757 = vmax.f32 %v6751, 0.0
      %v6758 = vmax.f32 %v6752, 0.0
      %v6759 = vmax.f32 %v6753, 0.0
      %v6760 = vmax.f32 %v6754, 0.0
      %v6761 = vmax.f32 %v6755, 0.0
      %s6762 = scalar_lea.vmem [#allocation10], 4
      %6763 = vst [vmem:[%s6762] ss:$4 sm:$0xff] %v6756
      %s6764 = scalar_lea.vmem [#allocation10], 36
      %6765 = vst [vmem:[%s6764] ss:$4 sm:$0xff] %v6757
      %s6766 = scalar_lea.vmem [#allocation10], 68
      %6767 = vst [vmem:[%s6766] ss:$4 sm:$0xff] %v6758
      %s6768 = scalar_lea.vmem [#allocation10], 100
      %6769 = vst [vmem:[%s6768] ss:$4 sm:$0xff] %v6759
      %s6770 = scalar_lea.vmem [#allocation10], 132
      %6771 = vst [vmem:[%s6770] ss:$4 sm:$0xff] %v6760
      %s6772 = scalar_lea.vmem [#allocation10], 164
      %6773 = vst [vmem:[%s6772] ss:$4 sm:$0x7f] %v6761
      %v6774 = vld [vmem:[%s17] sm:$0xff]
      %v6775 = vld [vmem:[%s17 + $0x8] sm:$0xff]
      %v6776 = vld [vmem:[#allocation9 + $0x5] sm:$0xff]
      %v6777 = vld [vmem:[#allocation9 + $0xd] sm:$0xff]
      %v6778 = vld [vmem:[#allocation9 + $0x15] sm:$0xff]
      %v6779 = vld [vmem:[#allocation9 + $0x1d] sm:$0xff]
      %v6780 = vld [vmem:[#allocation9 + $0x25] sm:$0xff]
      %v6781 = vld [vmem:[#allocation9 + $0x2d] sm:$0x3f]
      %v6782 = vld [vmem:[%s17 + $0x10] sm:$0xff]
      %v6783 = vld [vmem:[%s17 + $0x18] sm:$0xff]
      %v6784 = vld [vmem:[#allocation3 + $0x5] sm:$0xff]
      %v6785 = vld [vmem:[#allocation3 + $0xd] sm:$0xff]
      %v6786 = vld [vmem:[#allocation3 + $0x15] sm:$0xff]
      %v6787 = vld [vmem:[#allocation3 + $0x1d] sm:$0xff]
      %v6788 = vld [vmem:[#allocation3 + $0x25] sm:$0xff]
      %v6789 = vld [vmem:[#allocation3 + $0x2d] sm:$0x3f]
      %v6791 = vsel %vm1998, %v6784, 0
      %v6794 = vsel %vm1998, %v6785, 0
      %v6797 = vsel %vm1998, %v6786, 0
      %v6800 = vsel %vm1998, %v6787, 0
      %v6803 = vsel %vm1998, %v6788, 0
      %v6806 = vsel %vm1998, %v6789, 0
      %6808 = vmatprep.subr.mxu0 0.0
      %6809 = vmatpush1.msra.mxu0 %v6782
      %6810 = vmatprep.subr.mxu0 0.0
      %6811 = vmatpush1.msra.mxu0 %v6783
      %6812 = vmatprep.subr.mxu0 0.0
      %6813 = vmatpush1.msra.mxu0 0.0
      %6814 = vmatprep.subr.mxu0 0.0
      %6815 = vmatpush1.msra.mxu0 0.0
      %6816 = vmatprep.subr.mxu0 0.0
      %6817 = vmatpush1.msra.mxu0 0.0
      %6818 = vmatprep.subr.mxu0 0.0
      %6819 = vmatpush1.msra.mxu0 0.0
      %6820 = vmatprep.subr.mxu0 0.0
      %6821 = vmatpush1.msra.mxu0 0.0
      %6822 = vmatprep.subr.mxu0 0.0
      %6823 = vmatpush1.msra.mxu0 0.0
      %6824 = vmatprep.subr.mxu0 0.0
      %6825 = vmatpush1.msra.mxu0 0.0
      %6826 = vmatprep.subr.mxu0 0.0
      %6827 = vmatpush1.msra.mxu0 0.0
      %6828 = vmatprep.subr.mxu0 0.0
      %6829 = vmatpush1.msra.mxu0 0.0
      %6830 = vmatprep.subr.mxu0 0.0
      %6831 = vmatpush1.msra.mxu0 0.0
      %6832 = vmatprep.subr.mxu0 0.0
      %6833 = vmatpush1.msra.mxu0 0.0
      %6834 = vmatprep.subr.mxu0 0.0
      %6835 = vmatpush1.msra.mxu0 0.0
      %6836 = vmatprep.subr.mxu0 0.0
      %6837 = vmatpush1.msra.mxu0 0.0
      %6838 = vmatprep.subr.mxu0 0.0
      %6839 = vmatpush1.msra.mxu0 0.0
      %6840 = vmatprep.subr.mxu0 0.0
      %6841 = vmatpush1.msra.mxu0 0.0
      %6842 = vmatprep.subr.mxu0 0.0
      %6843 = vmatpush1.msra.mxu0 0.0
      %6844 = vmatprep.subr.mxu0 0.0
      %6845 = vmatpush1.msra.mxu0 0.0
      %6846 = vmatprep.subr.mxu0 0.0
      %6847 = vmatpush1.msra.mxu0 0.0
      %6848 = vmatprep.subr.mxu0 0.0
      %6849 = vmatpush1.msra.mxu0 0.0
      %6850 = vmatprep.subr.mxu0 0.0
      %6851 = vmatpush1.msra.mxu0 0.0
      %6852 = vmatprep.subr.mxu0 0.0
      %6853 = vmatpush1.msra.mxu0 0.0
      %6854 = vmatprep.subr.mxu0 0.0
      %6855 = vmatpush1.msra.mxu0 0.0
      %6856 = vmatprep.subr.mxu0 0.0
      %6857 = vmatpush1.msra.mxu0 0.0
      %6858 = vmatprep.subr.mxu0 0.0
      %6859 = vmatpush1.msra.mxu0 0.0
      %6860 = vmatprep.subr.mxu0 0.0
      %6861 = vmatpush1.msra.mxu0 0.0
      %6862 = vmatprep.subr.mxu0 0.0
      %6863 = vmatpush1.msra.mxu0 0.0
      %6864 = vmatprep.subr.mxu0 0.0
      %6865 = vmatpush1.msra.mxu0 0.0
      %6866 = vmatprep.subr.mxu0 0.0
      %6867 = vmatpush1.msra.mxu0 0.0
      %6868 = vmatprep.subr.mxu0 0.0
      %6869 = vmatpush1.msra.mxu0 0.0
      %6870 = vmatprep.subr.mxu0 0.0
      %6871 = vmatpush1.msra.mxu0 0.0
      %6872 = vmatprep.mubr.f32.mxu0 0.0
      %6873 = vmatmul.mubr.f32.gmra.mrb[0].mxu0 %v6791
      %v6874 = vpop.f32.mrb[0].mxu0
      %v6875 = vadd.f32 0.0, %v6874
      %v6876 = vpop.f32.mrb[0].mxu0
      %6877 = vmatprep.mubr.f32.mxu0 0.0
      %6878 = vmatmul.mubr.f32.gmra.mrb[0].mxu0 %v6794
      %v6879 = vpop.f32.mrb[0].mxu0
      %v6880 = vadd.f32 0.0, %v6879
      %v6881 = vpop.f32.mrb[0].mxu0
      %6882 = vmatprep.mubr.f32.mxu0 0.0
      %6883 = vmatmul.mubr.f32.gmra.mrb[0].mxu0 %v6797
      %v6884 = vpop.f32.mrb[0].mxu0
      %v6885 = vadd.f32 0.0, %v6884
      %v6886 = vpop.f32.mrb[0].mxu0
      %6887 = vmatprep.mubr.f32.mxu0 0.0
      %6888 = vmatmul.mubr.f32.gmra.mrb[0].mxu0 %v6800
      %v6889 = vpop.f32.mrb[0].mxu0
      %v6890 = vadd.f32 0.0, %v6889
      %v6891 = vpop.f32.mrb[0].mxu0
      %6892 = vmatprep.mubr.f32.mxu0 0.0
      %6893 = vmatmul.mubr.f32.gmra.mrb[0].mxu0 %v6803
      %v6894 = vpop.f32.mrb[0].mxu0
      %v6895 = vadd.f32 0.0, %v6894
      %v6896 = vpop.f32.mrb[0].mxu0
      %6897 = vmatprep.mubr.f32.mxu0 0.0
      %6898 = vmatmul.mubr.f32.gmra.mrb[0].mxu0 %v6806
      %v6899 = vpop.f32.mrb[0].mxu0
      %v6900 = vadd.f32 0.0, %v6899
      %v6901 = vpop.f32.mrb[0].mxu0
      %6902 = vdwg.mxu0
      %v6904 = vsel %vm1998, %v6776, 0
      %v6907 = vsel %vm1998, %v6777, 0
      %v6910 = vsel %vm1998, %v6778, 0
      %v6913 = vsel %vm1998, %v6779, 0
      %v6916 = vsel %vm1998, %v6780, 0
      %v6919 = vsel %vm1998, %v6781, 0
      %6921 = vmatprep.subr.mxu0 0.0
      %6922 = vmatpush1.msra.mxu0 %v6774
      %6923 = vmatprep.subr.mxu0 0.0
      %6924 = vmatpush1.msra.mxu0 %v6775
      %6925 = vmatprep.subr.mxu0 0.0
      %6926 = vmatpush1.msra.mxu0 0.0
      %6927 = vmatprep.subr.mxu0 0.0
      %6928 = vmatpush1.msra.mxu0 0.0
      %6929 = vmatprep.subr.mxu0 0.0
      %6930 = vmatpush1.msra.mxu0 0.0
      %6931 = vmatprep.subr.mxu0 0.0
      %6932 = vmatpush1.msra.mxu0 0.0
      %6933 = vmatprep.subr.mxu0 0.0
      %6934 = vmatpush1.msra.mxu0 0.0
      %6935 = vmatprep.subr.mxu0 0.0
      %6936 = vmatpush1.msra.mxu0 0.0
      %6937 = vmatprep.subr.mxu0 0.0
      %6938 = vmatpush1.msra.mxu0 0.0
      %6939 = vmatprep.subr.mxu0 0.0
      %6940 = vmatpush1.msra.mxu0 0.0
      %6941 = vmatprep.subr.mxu0 0.0
      %6942 = vmatpush1.msra.mxu0 0.0
      %6943 = vmatprep.subr.mxu0 0.0
      %6944 = vmatpush1.msra.mxu0 0.0
      %6945 = vmatprep.subr.mxu0 0.0
      %6946 = vmatpush1.msra.mxu0 0.0
      %6947 = vmatprep.subr.mxu0 0.0
      %6948 = vmatpush1.msra.mxu0 0.0
      %6949 = vmatprep.subr.mxu0 0.0
      %6950 = vmatpush1.msra.mxu0 0.0
      %6951 = vmatprep.subr.mxu0 0.0
      %6952 = vmatpush1.msra.mxu0 0.0
      %6953 = vmatprep.subr.mxu0 0.0
      %6954 = vmatpush1.msra.mxu0 0.0
      %6955 = vmatprep.subr.mxu0 0.0
      %6956 = vmatpush1.msra.mxu0 0.0
      %6957 = vmatprep.subr.mxu0 0.0
      %6958 = vmatpush1.msra.mxu0 0.0
      %6959 = vmatprep.subr.mxu0 0.0
      %6960 = vmatpush1.msra.mxu0 0.0
      %6961 = vmatprep.subr.mxu0 0.0
      %6962 = vmatpush1.msra.mxu0 0.0
      %6963 = vmatprep.subr.mxu0 0.0
      %6964 = vmatpush1.msra.mxu0 0.0
      %6965 = vmatprep.subr.mxu0 0.0
      %6966 = vmatpush1.msra.mxu0 0.0
      %6967 = vmatprep.subr.mxu0 0.0
      %6968 = vmatpush1.msra.mxu0 0.0
      %6969 = vmatprep.subr.mxu0 0.0
      %6970 = vmatpush1.msra.mxu0 0.0
      %6971 = vmatprep.subr.mxu0 0.0
      %6972 = vmatpush1.msra.mxu0 0.0
      %6973 = vmatprep.subr.mxu0 0.0
      %6974 = vmatpush1.msra.mxu0 0.0
      %6975 = vmatprep.subr.mxu0 0.0
      %6976 = vmatpush1.msra.mxu0 0.0
      %6977 = vmatprep.subr.mxu0 0.0
      %6978 = vmatpush1.msra.mxu0 0.0
      %6979 = vmatprep.subr.mxu0 0.0
      %6980 = vmatpush1.msra.mxu0 0.0
      %6981 = vmatprep.subr.mxu0 0.0
      %6982 = vmatpush1.msra.mxu0 0.0
      %6983 = vmatprep.subr.mxu0 0.0
      %6984 = vmatpush1.msra.mxu0 0.0
      %6985 = vmatprep.mubr.f32.mxu0 0.0
      %6986 = vmatmul.mubr.f32.gmra.mrb[0].mxu0 %v6904
      %v6987 = vpop.f32.mrb[0].mxu0
      %v6988 = vadd.f32 %v6875, %v6987
      %v6989 = vpop.f32.mrb[0].mxu0
      %6990 = vmatprep.mubr.f32.mxu0 0.0
      %6991 = vmatmul.mubr.f32.gmra.mrb[0].mxu0 %v6907
      %v6992 = vpop.f32.mrb[0].mxu0
      %v6993 = vadd.f32 %v6880, %v6992
      %v6994 = vpop.f32.mrb[0].mxu0
      %6995 = vmatprep.mubr.f32.mxu0 0.0
      %6996 = vmatmul.mubr.f32.gmra.mrb[0].mxu0 %v6910
      %v6997 = vpop.f32.mrb[0].mxu0
      %v6998 = vadd.f32 %v6885, %v6997
      %v6999 = vpop.f32.mrb[0].mxu0
      %7000 = vmatprep.mubr.f32.mxu0 0.0
      %7001 = vmatmul.mubr.f32.gmra.mrb[0].mxu0 %v6913
      %v7002 = vpop.f32.mrb[0].mxu0
      %v7003 = vadd.f32 %v6890, %v7002
      %v7004 = vpop.f32.mrb[0].mxu0
      %7005 = vmatprep.mubr.f32.mxu0 0.0
      %7006 = vmatmul.mubr.f32.gmra.mrb[0].mxu0 %v6916
      %v7007 = vpop.f32.mrb[0].mxu0
      %v7008 = vadd.f32 %v6895, %v7007
      %v7009 = vpop.f32.mrb[0].mxu0
      %7010 = vmatprep.mubr.f32.mxu0 0.0
      %7011 = vmatmul.mubr.f32.gmra.mrb[0].mxu0 %v6919
      %v7012 = vpop.f32.mrb[0].mxu0
      %v7013 = vadd.f32 %v6900, %v7012
      %v7014 = vpop.f32.mrb[0].mxu0
      %7015 = vdwg.mxu0
      %v7016 = vld [vmem:[%s17 + $0x80] sm:$0xff]
      %v7017 = vld [vmem:[%s17 + $0x88] sm:$0xff]
      %v7018 = vld [vmem:[#allocation9 + $0x4] sm:$0xff]
      %v7019 = vld [vmem:[#allocation9 + $0xc] sm:$0xff]
      %v7020 = vld [vmem:[#allocation9 + $0x14] sm:$0xff]
      %v7021 = vld [vmem:[#allocation9 + $0x1c] sm:$0xff]
      %v7022 = vld [vmem:[#allocation9 + $0x24] sm:$0xff]
      %v7023 = vld [vmem:[#allocation9 + $0x2c] sm:$0x3f]
      %v7025 = vsel %vm1998, %v7018, 0
      %v7028 = vsel %vm1998, %v7019, 0
      %v7031 = vsel %vm1998, %v7020, 0
      %v7034 = vsel %vm1998, %v7021, 0
      %v7037 = vsel %vm1998, %v7022, 0
      %v7040 = vsel %vm1998, %v7023, 0
      %7042 = vmatprep.subr.mxu0 0.0
      %7043 = vmatpush1.msra.mxu0 %v7016
      %7044 = vmatprep.subr.mxu0 0.0
      %7045 = vmatpush1.msra.mxu0 %v7017
      %7046 = vmatprep.subr.mxu0 0.0
      %7047 = vmatpush1.msra.mxu0 0.0
      %7048 = vmatprep.subr.mxu0 0.0
      %7049 = vmatpush1.msra.mxu0 0.0
      %7050 = vmatprep.subr.mxu0 0.0
      %7051 = vmatpush1.msra.mxu0 0.0
      %7052 = vmatprep.subr.mxu0 0.0
      %7053 = vmatpush1.msra.mxu0 0.0
      %7054 = vmatprep.subr.mxu0 0.0
      %7055 = vmatpush1.msra.mxu0 0.0
      %7056 = vmatprep.subr.mxu0 0.0
      %7057 = vmatpush1.msra.mxu0 0.0
      %7058 = vmatprep.subr.mxu0 0.0
      %7059 = vmatpush1.msra.mxu0 0.0
      %7060 = vmatprep.subr.mxu0 0.0
      %7061 = vmatpush1.msra.mxu0 0.0
      %7062 = vmatprep.subr.mxu0 0.0
      %7063 = vmatpush1.msra.mxu0 0.0
      %7064 = vmatprep.subr.mxu0 0.0
      %7065 = vmatpush1.msra.mxu0 0.0
      %7066 = vmatprep.subr.mxu0 0.0
      %7067 = vmatpush1.msra.mxu0 0.0
      %7068 = vmatprep.subr.mxu0 0.0
      %7069 = vmatpush1.msra.mxu0 0.0
      %7070 = vmatprep.subr.mxu0 0.0
      %7071 = vmatpush1.msra.mxu0 0.0
      %7072 = vmatprep.subr.mxu0 0.0
      %7073 = vmatpush1.msra.mxu0 0.0
      %7074 = vmatprep.subr.mxu0 0.0
      %7075 = vmatpush1.msra.mxu0 0.0
      %7076 = vmatprep.subr.mxu0 0.0
      %7077 = vmatpush1.msra.mxu0 0.0
      %7078 = vmatprep.subr.mxu0 0.0
      %7079 = vmatpush1.msra.mxu0 0.0
      %7080 = vmatprep.subr.mxu0 0.0
      %7081 = vmatpush1.msra.mxu0 0.0
      %7082 = vmatprep.subr.mxu0 0.0
      %7083 = vmatpush1.msra.mxu0 0.0
      %7084 = vmatprep.subr.mxu0 0.0
      %7085 = vmatpush1.msra.mxu0 0.0
      %7086 = vmatprep.subr.mxu0 0.0
      %7087 = vmatpush1.msra.mxu0 0.0
      %7088 = vmatprep.subr.mxu0 0.0
      %7089 = vmatpush1.msra.mxu0 0.0
      %7090 = vmatprep.subr.mxu0 0.0
      %7091 = vmatpush1.msra.mxu0 0.0
      %7092 = vmatprep.subr.mxu0 0.0
      %7093 = vmatpush1.msra.mxu0 0.0
      %7094 = vmatprep.subr.mxu0 0.0
      %7095 = vmatpush1.msra.mxu0 0.0
      %7096 = vmatprep.subr.mxu0 0.0
      %7097 = vmatpush1.msra.mxu0 0.0
      %7098 = vmatprep.subr.mxu0 0.0
      %7099 = vmatpush1.msra.mxu0 0.0
      %7100 = vmatprep.subr.mxu0 0.0
      %7101 = vmatpush1.msra.mxu0 0.0
      %7102 = vmatprep.subr.mxu0 0.0
      %7103 = vmatpush1.msra.mxu0 0.0
      %7104 = vmatprep.subr.mxu0 0.0
      %7105 = vmatpush1.msra.mxu0 0.0
      %7106 = vmatprep.mubr.f32.mxu0 0.0
      %7107 = vmatmul.mubr.f32.gmra.mrb[0].mxu0 %v7025
      %v7108 = vpop.f32.mrb[0].mxu0
      %v7109 = vadd.f32 0.0, %v7108
      %v7110 = vpop.f32.mrb[0].mxu0
      %7111 = vmatprep.mubr.f32.mxu0 0.0
      %7112 = vmatmul.mubr.f32.gmra.mrb[0].mxu0 %v7028
      %v7113 = vpop.f32.mrb[0].mxu0
      %v7114 = vadd.f32 0.0, %v7113
      %v7115 = vpop.f32.mrb[0].mxu0
      %7116 = vmatprep.mubr.f32.mxu0 0.0
      %7117 = vmatmul.mubr.f32.gmra.mrb[0].mxu0 %v7031
      %v7118 = vpop.f32.mrb[0].mxu0
      %v7119 = vadd.f32 0.0, %v7118
      %v7120 = vpop.f32.mrb[0].mxu0
      %7121 = vmatprep.mubr.f32.mxu0 0.0
      %7122 = vmatmul.mubr.f32.gmra.mrb[0].mxu0 %v7034
      %v7123 = vpop.f32.mrb[0].mxu0
      %v7124 = vadd.f32 0.0, %v7123
      %v7125 = vpop.f32.mrb[0].mxu0
      %7126 = vmatprep.mubr.f32.mxu0 0.0
      %7127 = vmatmul.mubr.f32.gmra.mrb[0].mxu0 %v7037
      %v7128 = vpop.f32.mrb[0].mxu0
      %v7129 = vadd.f32 0.0, %v7128
      %v7130 = vpop.f32.mrb[0].mxu0
      %7131 = vmatprep.mubr.f32.mxu0 0.0
      %7132 = vmatmul.mubr.f32.gmra.mrb[0].mxu0 %v7040
      %v7133 = vpop.f32.mrb[0].mxu0
      %v7134 = vadd.f32 0.0, %v7133
      %v7135 = vpop.f32.mrb[0].mxu0
      %7136 = vdwg.mxu0
      %v7137 = vadd.f32 %v6988, %v7109
      %v7138 = vadd.f32 %v6993, %v7114
      %v7139 = vadd.f32 %v6998, %v7119
      %v7140 = vadd.f32 %v7003, %v7124
      %v7141 = vadd.f32 %v7008, %v7129
      %v7142 = vadd.f32 %v7013, %v7134
      %v7143 = vld [vmem:[%s17 + $0x90] sm:$0xff]
      %v7144 = vld [vmem:[%s17 + $0x98] sm:$0xff]
      %v7145 = vld [vmem:[#allocation3 + $0x4] sm:$0xff]
      %v7146 = vld [vmem:[#allocation3 + $0xc] sm:$0xff]
      %v7147 = vld [vmem:[#allocation3 + $0x14] sm:$0xff]
      %v7148 = vld [vmem:[#allocation3 + $0x1c] sm:$0xff]
      %v7149 = vld [vmem:[#allocation3 + $0x24] sm:$0xff]
      %v7150 = vld [vmem:[#allocation3 + $0x2c] sm:$0x3f]
      %v7152 = vsel %vm1998, %v7145, 0
      %v7155 = vsel %vm1998, %v7146, 0
      %v7158 = vsel %vm1998, %v7147, 0
      %v7161 = vsel %vm1998, %v7148, 0
      %v7164 = vsel %vm1998, %v7149, 0
      %v7167 = vsel %vm1998, %v7150, 0
      %7169 = vmatprep.subr.mxu0 0.0
      %7170 = vmatpush1.msra.mxu0 %v7143
      %7171 = vmatprep.subr.mxu0 0.0
      %7172 = vmatpush1.msra.mxu0 %v7144
      %7173 = vmatprep.subr.mxu0 0.0
      %7174 = vmatpush1.msra.mxu0 0.0
      %7175 = vmatprep.subr.mxu0 0.0
      %7176 = vmatpush1.msra.mxu0 0.0
      %7177 = vmatprep.subr.mxu0 0.0
      %7178 = vmatpush1.msra.mxu0 0.0
      %7179 = vmatprep.subr.mxu0 0.0
      %7180 = vmatpush1.msra.mxu0 0.0
      %7181 = vmatprep.subr.mxu0 0.0
      %7182 = vmatpush1.msra.mxu0 0.0
      %7183 = vmatprep.subr.mxu0 0.0
      %7184 = vmatpush1.msra.mxu0 0.0
      %7185 = vmatprep.subr.mxu0 0.0
      %7186 = vmatpush1.msra.mxu0 0.0
      %7187 = vmatprep.subr.mxu0 0.0
      %7188 = vmatpush1.msra.mxu0 0.0
      %7189 = vmatprep.subr.mxu0 0.0
      %7190 = vmatpush1.msra.mxu0 0.0
      %7191 = vmatprep.subr.mxu0 0.0
      %7192 = vmatpush1.msra.mxu0 0.0
      %7193 = vmatprep.subr.mxu0 0.0
      %7194 = vmatpush1.msra.mxu0 0.0
      %7195 = vmatprep.subr.mxu0 0.0
      %7196 = vmatpush1.msra.mxu0 0.0
      %7197 = vmatprep.subr.mxu0 0.0
      %7198 = vmatpush1.msra.mxu0 0.0
      %7199 = vmatprep.subr.mxu0 0.0
      %7200 = vmatpush1.msra.mxu0 0.0
      %7201 = vmatprep.subr.mxu0 0.0
      %7202 = vmatpush1.msra.mxu0 0.0
      %7203 = vmatprep.subr.mxu0 0.0
      %7204 = vmatpush1.msra.mxu0 0.0
      %7205 = vmatprep.subr.mxu0 0.0
      %7206 = vmatpush1.msra.mxu0 0.0
      %7207 = vmatprep.subr.mxu0 0.0
      %7208 = vmatpush1.msra.mxu0 0.0
      %7209 = vmatprep.subr.mxu0 0.0
      %7210 = vmatpush1.msra.mxu0 0.0
      %7211 = vmatprep.subr.mxu0 0.0
      %7212 = vmatpush1.msra.mxu0 0.0
      %7213 = vmatprep.subr.mxu0 0.0
      %7214 = vmatpush1.msra.mxu0 0.0
      %7215 = vmatprep.subr.mxu0 0.0
      %7216 = vmatpush1.msra.mxu0 0.0
      %7217 = vmatprep.subr.mxu0 0.0
      %7218 = vmatpush1.msra.mxu0 0.0
      %7219 = vmatprep.subr.mxu0 0.0
      %7220 = vmatpush1.msra.mxu0 0.0
      %7221 = vmatprep.subr.mxu0 0.0
      %7222 = vmatpush1.msra.mxu0 0.0
      %7223 = vmatprep.subr.mxu0 0.0
      %7224 = vmatpush1.msra.mxu0 0.0
      %7225 = vmatprep.subr.mxu0 0.0
      %7226 = vmatpush1.msra.mxu0 0.0
      %7227 = vmatprep.subr.mxu0 0.0
      %7228 = vmatpush1.msra.mxu0 0.0
      %7229 = vmatprep.subr.mxu0 0.0
      %7230 = vmatpush1.msra.mxu0 0.0
      %7231 = vmatprep.subr.mxu0 0.0
      %7232 = vmatpush1.msra.mxu0 0.0
      %7233 = vmatprep.mubr.f32.mxu0 0.0
      %7234 = vmatmul.mubr.f32.gmra.mrb[0].mxu0 %v7152
      %v7235 = vpop.f32.mrb[0].mxu0
      %v7236 = vadd.f32 0.0, %v7235
      %v7237 = vpop.f32.mrb[0].mxu0
      %7238 = vmatprep.mubr.f32.mxu0 0.0
      %7239 = vmatmul.mubr.f32.gmra.mrb[0].mxu0 %v7155
      %v7240 = vpop.f32.mrb[0].mxu0
      %v7241 = vadd.f32 0.0, %v7240
      %v7242 = vpop.f32.mrb[0].mxu0
      %7243 = vmatprep.mubr.f32.mxu0 0.0
      %7244 = vmatmul.mubr.f32.gmra.mrb[0].mxu0 %v7158
      %v7245 = vpop.f32.mrb[0].mxu0
      %v7246 = vadd.f32 0.0, %v7245
      %v7247 = vpop.f32.mrb[0].mxu0
      %7248 = vmatprep.mubr.f32.mxu0 0.0
      %7249 = vmatmul.mubr.f32.gmra.mrb[0].mxu0 %v7161
      %v7250 = vpop.f32.mrb[0].mxu0
      %v7251 = vadd.f32 0.0, %v7250
      %v7252 = vpop.f32.mrb[0].mxu0
      %7253 = vmatprep.mubr.f32.mxu0 0.0
      %7254 = vmatmul.mubr.f32.gmra.mrb[0].mxu0 %v7164
      %v7255 = vpop.f32.mrb[0].mxu0
      %v7256 = vadd.f32 0.0, %v7255
      %v7257 = vpop.f32.mrb[0].mxu0
      %7258 = vmatprep.mubr.f32.mxu0 0.0
      %7259 = vmatmul.mubr.f32.gmra.mrb[0].mxu0 %v7167
      %v7260 = vpop.f32.mrb[0].mxu0
      %v7261 = vadd.f32 0.0, %v7260
      %v7262 = vpop.f32.mrb[0].mxu0
      %7263 = vdwg.mxu0
      %v7264 = vadd.f32 %v7137, %v7236
      %v7265 = vadd.f32 %v7138, %v7241
      %v7266 = vadd.f32 %v7139, %v7246
      %v7267 = vadd.f32 %v7140, %v7251
      %v7268 = vadd.f32 %v7141, %v7256
      %v7269 = vadd.f32 %v7142, %v7261
      %v7270 = vadd.f32 %v7264, %v6748
      %v7271 = vadd.f32 %v7265, %v6748
      %v7272 = vadd.f32 %v7266, %v6748
      %v7273 = vadd.f32 %v7267, %v6748
      %v7274 = vadd.f32 %v7268, %v6748
      %v7275 = vadd.f32 %v7269, %v6748
      %v7276 = vmax.f32 %v7270, 0.0
      %v7277 = vmax.f32 %v7271, 0.0
      %v7278 = vmax.f32 %v7272, 0.0
      %v7279 = vmax.f32 %v7273, 0.0
      %v7280 = vmax.f32 %v7274, 0.0
      %v7281 = vmax.f32 %v7275, 0.0
      %s7282 = scalar_lea.vmem [#allocation10], 5
      %7283 = vst [vmem:[%s7282] ss:$4 sm:$0xff] %v7276
      %s7284 = scalar_lea.vmem [#allocation10], 37
      %7285 = vst [vmem:[%s7284] ss:$4 sm:$0xff] %v7277
      %s7286 = scalar_lea.vmem [#allocation10], 69
      %7287 = vst [vmem:[%s7286] ss:$4 sm:$0xff] %v7278
      %s7288 = scalar_lea.vmem [#allocation10], 101
      %7289 = vst [vmem:[%s7288] ss:$4 sm:$0xff] %v7279
      %s7290 = scalar_lea.vmem [#allocation10], 133
      %7291 = vst [vmem:[%s7290] ss:$4 sm:$0xff] %v7280
      %s7292 = scalar_lea.vmem [#allocation10], 165
      %7293 = vst [vmem:[%s7292] ss:$4 sm:$0x3f] %v7281
      %v7294 = vld [vmem:[%s17 + $0x20] sm:$0xff]
      %v7295 = vld [vmem:[%s17 + $0x28] sm:$0xff]
      %v7296 = vld [vmem:[#allocation9 + $0x5] sm:$0xff]
      %v7297 = vld [vmem:[#allocation9 + $0xd] sm:$0xff]
      %v7298 = vld [vmem:[#allocation9 + $0x15] sm:$0xff]
      %v7299 = vld [vmem:[#allocation9 + $0x1d] sm:$0xff]
      %v7300 = vld [vmem:[#allocation9 + $0x25] sm:$0xff]
      %v7301 = vld [vmem:[#allocation9 + $0x2d] sm:$0x3f]
      %v7302 = vld [vmem:[%s17 + $0x30] sm:$0xff]
      %v7303 = vld [vmem:[%s17 + $0x38] sm:$0xff]
      %v7304 = vld [vmem:[#allocation3 + $0x5] sm:$0xff]
      %v7305 = vld [vmem:[#allocation3 + $0xd] sm:$0xff]
      %v7306 = vld [vmem:[#allocation3 + $0x15] sm:$0xff]
      %v7307 = vld [vmem:[#allocation3 + $0x1d] sm:$0xff]
      %v7308 = vld [vmem:[#allocation3 + $0x25] sm:$0xff]
      %v7309 = vld [vmem:[#allocation3 + $0x2d] sm:$0x3f]
      %v7311 = vsel %vm1998, %v7304, 0
      %v7314 = vsel %vm1998, %v7305, 0
      %v7317 = vsel %vm1998, %v7306, 0
      %v7320 = vsel %vm1998, %v7307, 0
      %v7323 = vsel %vm1998, %v7308, 0
      %v7326 = vsel %vm1998, %v7309, 0
      %7328 = vmatprep.subr.mxu0 0.0
      %7329 = vmatpush1.msra.mxu0 %v7302
      %7330 = vmatprep.subr.mxu0 0.0
      %7331 = vmatpush1.msra.mxu0 %v7303
      %7332 = vmatprep.subr.mxu0 0.0
      %7333 = vmatpush1.msra.mxu0 0.0
      %7334 = vmatprep.subr.mxu0 0.0
      %7335 = vmatpush1.msra.mxu0 0.0
      %7336 = vmatprep.subr.mxu0 0.0
      %7337 = vmatpush1.msra.mxu0 0.0
      %7338 = vmatprep.subr.mxu0 0.0
      %7339 = vmatpush1.msra.mxu0 0.0
      %7340 = vmatprep.subr.mxu0 0.0
      %7341 = vmatpush1.msra.mxu0 0.0
      %7342 = vmatprep.subr.mxu0 0.0
      %7343 = vmatpush1.msra.mxu0 0.0
      %7344 = vmatprep.subr.mxu0 0.0
      %7345 = vmatpush1.msra.mxu0 0.0
      %7346 = vmatprep.subr.mxu0 0.0
      %7347 = vmatpush1.msra.mxu0 0.0
      %7348 = vmatprep.subr.mxu0 0.0
      %7349 = vmatpush1.msra.mxu0 0.0
      %7350 = vmatprep.subr.mxu0 0.0
      %7351 = vmatpush1.msra.mxu0 0.0
      %7352 = vmatprep.subr.mxu0 0.0
      %7353 = vmatpush1.msra.mxu0 0.0
      %7354 = vmatprep.subr.mxu0 0.0
      %7355 = vmatpush1.msra.mxu0 0.0
      %7356 = vmatprep.subr.mxu0 0.0
      %7357 = vmatpush1.msra.mxu0 0.0
      %7358 = vmatprep.subr.mxu0 0.0
      %7359 = vmatpush1.msra.mxu0 0.0
      %7360 = vmatprep.subr.mxu0 0.0
      %7361 = vmatpush1.msra.mxu0 0.0
      %7362 = vmatprep.subr.mxu0 0.0
      %7363 = vmatpush1.msra.mxu0 0.0
      %7364 = vmatprep.subr.mxu0 0.0
      %7365 = vmatpush1.msra.mxu0 0.0
      %7366 = vmatprep.subr.mxu0 0.0
      %7367 = vmatpush1.msra.mxu0 0.0
      %7368 = vmatprep.subr.mxu0 0.0
      %7369 = vmatpush1.msra.mxu0 0.0
      %7370 = vmatprep.subr.mxu0 0.0
      %7371 = vmatpush1.msra.mxu0 0.0
      %7372 = vmatprep.subr.mxu0 0.0
      %7373 = vmatpush1.msra.mxu0 0.0
      %7374 = vmatprep.subr.mxu0 0.0
      %7375 = vmatpush1.msra.mxu0 0.0
      %7376 = vmatprep.subr.mxu0 0.0
      %7377 = vmatpush1.msra.mxu0 0.0
      %7378 = vmatprep.subr.mxu0 0.0
      %7379 = vmatpush1.msra.mxu0 0.0
      %7380 = vmatprep.subr.mxu0 0.0
      %7381 = vmatpush1.msra.mxu0 0.0
      %7382 = vmatprep.subr.mxu0 0.0
      %7383 = vmatpush1.msra.mxu0 0.0
      %7384 = vmatprep.subr.mxu0 0.0
      %7385 = vmatpush1.msra.mxu0 0.0
      %7386 = vmatprep.subr.mxu0 0.0
      %7387 = vmatpush1.msra.mxu0 0.0
      %7388 = vmatprep.subr.mxu0 0.0
      %7389 = vmatpush1.msra.mxu0 0.0
      %7390 = vmatprep.subr.mxu0 0.0
      %7391 = vmatpush1.msra.mxu0 0.0
      %7392 = vmatprep.mubr.f32.mxu0 0.0
      %7393 = vmatmul.mubr.f32.gmra.mrb[0].mxu0 %v7311
      %v7394 = vpop.f32.mrb[0].mxu0
      %v7395 = vadd.f32 0.0, %v7394
      %v7396 = vpop.f32.mrb[0].mxu0
      %7397 = vmatprep.mubr.f32.mxu0 0.0
      %7398 = vmatmul.mubr.f32.gmra.mrb[0].mxu0 %v7314
      %v7399 = vpop.f32.mrb[0].mxu0
      %v7400 = vadd.f32 0.0, %v7399
      %v7401 = vpop.f32.mrb[0].mxu0
      %7402 = vmatprep.mubr.f32.mxu0 0.0
      %7403 = vmatmul.mubr.f32.gmra.mrb[0].mxu0 %v7317
      %v7404 = vpop.f32.mrb[0].mxu0
      %v7405 = vadd.f32 0.0, %v7404
      %v7406 = vpop.f32.mrb[0].mxu0
      %7407 = vmatprep.mubr.f32.mxu0 0.0
      %7408 = vmatmul.mubr.f32.gmra.mrb[0].mxu0 %v7320
      %v7409 = vpop.f32.mrb[0].mxu0
      %v7410 = vadd.f32 0.0, %v7409
      %v7411 = vpop.f32.mrb[0].mxu0
      %7412 = vmatprep.mubr.f32.mxu0 0.0
      %7413 = vmatmul.mubr.f32.gmra.mrb[0].mxu0 %v7323
      %v7414 = vpop.f32.mrb[0].mxu0
      %v7415 = vadd.f32 0.0, %v7414
      %v7416 = vpop.f32.mrb[0].mxu0
      %7417 = vmatprep.mubr.f32.mxu0 0.0
      %7418 = vmatmul.mubr.f32.gmra.mrb[0].mxu0 %v7326
      %v7419 = vpop.f32.mrb[0].mxu0
      %v7420 = vadd.f32 0.0, %v7419
      %v7421 = vpop.f32.mrb[0].mxu0
      %7422 = vdwg.mxu0
      %v7424 = vsel %vm1998, %v7296, 0
      %v7427 = vsel %vm1998, %v7297, 0
      %v7430 = vsel %vm1998, %v7298, 0
      %v7433 = vsel %vm1998, %v7299, 0
      %v7436 = vsel %vm1998, %v7300, 0
      %v7439 = vsel %vm1998, %v7301, 0
      %7441 = vmatprep.subr.mxu0 0.0
      %7442 = vmatpush1.msra.mxu0 %v7294
      %7443 = vmatprep.subr.mxu0 0.0
      %7444 = vmatpush1.msra.mxu0 %v7295
      %7445 = vmatprep.subr.mxu0 0.0
      %7446 = vmatpush1.msra.mxu0 0.0
      %7447 = vmatprep.subr.mxu0 0.0
      %7448 = vmatpush1.msra.mxu0 0.0
      %7449 = vmatprep.subr.mxu0 0.0
      %7450 = vmatpush1.msra.mxu0 0.0
      %7451 = vmatprep.subr.mxu0 0.0
      %7452 = vmatpush1.msra.mxu0 0.0
      %7453 = vmatprep.subr.mxu0 0.0
      %7454 = vmatpush1.msra.mxu0 0.0
      %7455 = vmatprep.subr.mxu0 0.0
      %7456 = vmatpush1.msra.mxu0 0.0
      %7457 = vmatprep.subr.mxu0 0.0
      %7458 = vmatpush1.msra.mxu0 0.0
      %7459 = vmatprep.subr.mxu0 0.0
      %7460 = vmatpush1.msra.mxu0 0.0
      %7461 = vmatprep.subr.mxu0 0.0
      %7462 = vmatpush1.msra.mxu0 0.0
      %7463 = vmatprep.subr.mxu0 0.0
      %7464 = vmatpush1.msra.mxu0 0.0
      %7465 = vmatprep.subr.mxu0 0.0
      %7466 = vmatpush1.msra.mxu0 0.0
      %7467 = vmatprep.subr.mxu0 0.0
      %7468 = vmatpush1.msra.mxu0 0.0
      %7469 = vmatprep.subr.mxu0 0.0
      %7470 = vmatpush1.msra.mxu0 0.0
      %7471 = vmatprep.subr.mxu0 0.0
      %7472 = vmatpush1.msra.mxu0 0.0
      %7473 = vmatprep.subr.mxu0 0.0
      %7474 = vmatpush1.msra.mxu0 0.0
      %7475 = vmatprep.subr.mxu0 0.0
      %7476 = vmatpush1.msra.mxu0 0.0
      %7477 = vmatprep.subr.mxu0 0.0
      %7478 = vmatpush1.msra.mxu0 0.0
      %7479 = vmatprep.subr.mxu0 0.0
      %7480 = vmatpush1.msra.mxu0 0.0
      %7481 = vmatprep.subr.mxu0 0.0
      %7482 = vmatpush1.msra.mxu0 0.0
      %7483 = vmatprep.subr.mxu0 0.0
      %7484 = vmatpush1.msra.mxu0 0.0
      %7485 = vmatprep.subr.mxu0 0.0
      %7486 = vmatpush1.msra.mxu0 0.0
      %7487 = vmatprep.subr.mxu0 0.0
      %7488 = vmatpush1.msra.mxu0 0.0
      %7489 = vmatprep.subr.mxu0 0.0
      %7490 = vmatpush1.msra.mxu0 0.0
      %7491 = vmatprep.subr.mxu0 0.0
      %7492 = vmatpush1.msra.mxu0 0.0
      %7493 = vmatprep.subr.mxu0 0.0
      %7494 = vmatpush1.msra.mxu0 0.0
      %7495 = vmatprep.subr.mxu0 0.0
      %7496 = vmatpush1.msra.mxu0 0.0
      %7497 = vmatprep.subr.mxu0 0.0
      %7498 = vmatpush1.msra.mxu0 0.0
      %7499 = vmatprep.subr.mxu0 0.0
      %7500 = vmatpush1.msra.mxu0 0.0
      %7501 = vmatprep.subr.mxu0 0.0
      %7502 = vmatpush1.msra.mxu0 0.0
      %7503 = vmatprep.subr.mxu0 0.0
      %7504 = vmatpush1.msra.mxu0 0.0
      %7505 = vmatprep.mubr.f32.mxu0 0.0
      %7506 = vmatmul.mubr.f32.gmra.mrb[0].mxu0 %v7424
      %v7507 = vpop.f32.mrb[0].mxu0
      %v7508 = vadd.f32 %v7395, %v7507
      %v7509 = vpop.f32.mrb[0].mxu0
      %7510 = vmatprep.mubr.f32.mxu0 0.0
      %7511 = vmatmul.mubr.f32.gmra.mrb[0].mxu0 %v7427
      %v7512 = vpop.f32.mrb[0].mxu0
      %v7513 = vadd.f32 %v7400, %v7512
      %v7514 = vpop.f32.mrb[0].mxu0
      %7515 = vmatprep.mubr.f32.mxu0 0.0
      %7516 = vmatmul.mubr.f32.gmra.mrb[0].mxu0 %v7430
      %v7517 = vpop.f32.mrb[0].mxu0
      %v7518 = vadd.f32 %v7405, %v7517
      %v7519 = vpop.f32.mrb[0].mxu0
      %7520 = vmatprep.mubr.f32.mxu0 0.0
      %7521 = vmatmul.mubr.f32.gmra.mrb[0].mxu0 %v7433
      %v7522 = vpop.f32.mrb[0].mxu0
      %v7523 = vadd.f32 %v7410, %v7522
      %v7524 = vpop.f32.mrb[0].mxu0
      %7525 = vmatprep.mubr.f32.mxu0 0.0
      %7526 = vmatmul.mubr.f32.gmra.mrb[0].mxu0 %v7436
      %v7527 = vpop.f32.mrb[0].mxu0
      %v7528 = vadd.f32 %v7415, %v7527
      %v7529 = vpop.f32.mrb[0].mxu0
      %7530 = vmatprep.mubr.f32.mxu0 0.0
      %7531 = vmatmul.mubr.f32.gmra.mrb[0].mxu0 %v7439
      %v7532 = vpop.f32.mrb[0].mxu0
      %v7533 = vadd.f32 %v7420, %v7532
      %v7534 = vpop.f32.mrb[0].mxu0
      %7535 = vdwg.mxu0
      %v7536 = vld [vmem:[%s17 + $0xa0] sm:$0xff]
      %v7537 = vld [vmem:[%s17 + $0xa8] sm:$0xff]
      %v7538 = vld [vmem:[#allocation9 + $0x4] sm:$0xff]
      %v7539 = vld [vmem:[#allocation9 + $0xc] sm:$0xff]
      %v7540 = vld [vmem:[#allocation9 + $0x14] sm:$0xff]
      %v7541 = vld [vmem:[#allocation9 + $0x1c] sm:$0xff]
      %v7542 = vld [vmem:[#allocation9 + $0x24] sm:$0xff]
      %v7543 = vld [vmem:[#allocation9 + $0x2c] sm:$0x3f]
      %v7545 = vsel %vm1998, %v7538, 0
      %v7548 = vsel %vm1998, %v7539, 0
      %v7551 = vsel %vm1998, %v7540, 0
      %v7554 = vsel %vm1998, %v7541, 0
      %v7557 = vsel %vm1998, %v7542, 0
      %v7560 = vsel %vm1998, %v7543, 0
      %7562 = vmatprep.subr.mxu0 0.0
      %7563 = vmatpush1.msra.mxu0 %v7536
      %7564 = vmatprep.subr.mxu0 0.0
      %7565 = vmatpush1.msra.mxu0 %v7537
      %7566 = vmatprep.subr.mxu0 0.0
      %7567 = vmatpush1.msra.mxu0 0.0
      %7568 = vmatprep.subr.mxu0 0.0
      %7569 = vmatpush1.msra.mxu0 0.0
      %7570 = vmatprep.subr.mxu0 0.0
      %7571 = vmatpush1.msra.mxu0 0.0
      %7572 = vmatprep.subr.mxu0 0.0
      %7573 = vmatpush1.msra.mxu0 0.0
      %7574 = vmatprep.subr.mxu0 0.0
      %7575 = vmatpush1.msra.mxu0 0.0
      %7576 = vmatprep.subr.mxu0 0.0
      %7577 = vmatpush1.msra.mxu0 0.0
      %7578 = vmatprep.subr.mxu0 0.0
      %7579 = vmatpush1.msra.mxu0 0.0
      %7580 = vmatprep.subr.mxu0 0.0
      %7581 = vmatpush1.msra.mxu0 0.0
      %7582 = vmatprep.subr.mxu0 0.0
      %7583 = vmatpush1.msra.mxu0 0.0
      %7584 = vmatprep.subr.mxu0 0.0
      %7585 = vmatpush1.msra.mxu0 0.0
      %7586 = vmatprep.subr.mxu0 0.0
      %7587 = vmatpush1.msra.mxu0 0.0
      %7588 = vmatprep.subr.mxu0 0.0
      %7589 = vmatpush1.msra.mxu0 0.0
      %7590 = vmatprep.subr.mxu0 0.0
      %7591 = vmatpush1.msra.mxu0 0.0
      %7592 = vmatprep.subr.mxu0 0.0
      %7593 = vmatpush1.msra.mxu0 0.0
      %7594 = vmatprep.subr.mxu0 0.0
      %7595 = vmatpush1.msra.mxu0 0.0
      %7596 = vmatprep.subr.mxu0 0.0
      %7597 = vmatpush1.msra.mxu0 0.0
      %7598 = vmatprep.subr.mxu0 0.0
      %7599 = vmatpush1.msra.mxu0 0.0
      %7600 = vmatprep.subr.mxu0 0.0
      %7601 = vmatpush1.msra.mxu0 0.0
      %7602 = vmatprep.subr.mxu0 0.0
      %7603 = vmatpush1.msra.mxu0 0.0
      %7604 = vmatprep.subr.mxu0 0.0
      %7605 = vmatpush1.msra.mxu0 0.0
      %7606 = vmatprep.subr.mxu0 0.0
      %7607 = vmatpush1.msra.mxu0 0.0
      %7608 = vmatprep.subr.mxu0 0.0
      %7609 = vmatpush1.msra.mxu0 0.0
      %7610 = vmatprep.subr.mxu0 0.0
      %7611 = vmatpush1.msra.mxu0 0.0
      %7612 = vmatprep.subr.mxu0 0.0
      %7613 = vmatpush1.msra.mxu0 0.0
      %7614 = vmatprep.subr.mxu0 0.0
      %7615 = vmatpush1.msra.mxu0 0.0
      %7616 = vmatprep.subr.mxu0 0.0
      %7617 = vmatpush1.msra.mxu0 0.0
      %7618 = vmatprep.subr.mxu0 0.0
      %7619 = vmatpush1.msra.mxu0 0.0
      %7620 = vmatprep.subr.mxu0 0.0
      %7621 = vmatpush1.msra.mxu0 0.0
      %7622 = vmatprep.subr.mxu0 0.0
      %7623 = vmatpush1.msra.mxu0 0.0
      %7624 = vmatprep.subr.mxu0 0.0
      %7625 = vmatpush1.msra.mxu0 0.0
      %7626 = vmatprep.mubr.f32.mxu0 0.0
      %7627 = vmatmul.mubr.f32.gmra.mrb[0].mxu0 %v7545
      %v7628 = vpop.f32.mrb[0].mxu0
      %v7629 = vadd.f32 0.0, %v7628
      %v7630 = vpop.f32.mrb[0].mxu0
      %7631 = vmatprep.mubr.f32.mxu0 0.0
      %7632 = vmatmul.mubr.f32.gmra.mrb[0].mxu0 %v7548
      %v7633 = vpop.f32.mrb[0].mxu0
      %v7634 = vadd.f32 0.0, %v7633
      %v7635 = vpop.f32.mrb[0].mxu0
      %7636 = vmatprep.mubr.f32.mxu0 0.0
      %7637 = vmatmul.mubr.f32.gmra.mrb[0].mxu0 %v7551
      %v7638 = vpop.f32.mrb[0].mxu0
      %v7639 = vadd.f32 0.0, %v7638
      %v7640 = vpop.f32.mrb[0].mxu0
      %7641 = vmatprep.mubr.f32.mxu0 0.0
      %7642 = vmatmul.mubr.f32.gmra.mrb[0].mxu0 %v7554
      %v7643 = vpop.f32.mrb[0].mxu0
      %v7644 = vadd.f32 0.0, %v7643
      %v7645 = vpop.f32.mrb[0].mxu0
      %7646 = vmatprep.mubr.f32.mxu0 0.0
      %7647 = vmatmul.mubr.f32.gmra.mrb[0].mxu0 %v7557
      %v7648 = vpop.f32.mrb[0].mxu0
      %v7649 = vadd.f32 0.0, %v7648
      %v7650 = vpop.f32.mrb[0].mxu0
      %7651 = vmatprep.mubr.f32.mxu0 0.0
      %7652 = vmatmul.mubr.f32.gmra.mrb[0].mxu0 %v7560
      %v7653 = vpop.f32.mrb[0].mxu0
      %v7654 = vadd.f32 0.0, %v7653
      %v7655 = vpop.f32.mrb[0].mxu0
      %7656 = vdwg.mxu0
      %v7657 = vadd.f32 %v7508, %v7629
      %v7658 = vadd.f32 %v7513, %v7634
      %v7659 = vadd.f32 %v7518, %v7639
      %v7660 = vadd.f32 %v7523, %v7644
      %v7661 = vadd.f32 %v7528, %v7649
      %v7662 = vadd.f32 %v7533, %v7654
      %v7663 = vld [vmem:[%s17 + $0xb0] sm:$0xff]
      %v7664 = vld [vmem:[%s17 + $0xb8] sm:$0xff]
      %v7665 = vld [vmem:[#allocation3 + $0x4] sm:$0xff]
      %v7666 = vld [vmem:[#allocation3 + $0xc] sm:$0xff]
      %v7667 = vld [vmem:[#allocation3 + $0x14] sm:$0xff]
      %v7668 = vld [vmem:[#allocation3 + $0x1c] sm:$0xff]
      %v7669 = vld [vmem:[#allocation3 + $0x24] sm:$0xff]
      %v7670 = vld [vmem:[#allocation3 + $0x2c] sm:$0x3f]
      %v7672 = vsel %vm1998, %v7665, 0
      %v7675 = vsel %vm1998, %v7666, 0
      %v7678 = vsel %vm1998, %v7667, 0
      %v7681 = vsel %vm1998, %v7668, 0
      %v7684 = vsel %vm1998, %v7669, 0
      %v7687 = vsel %vm1998, %v7670, 0
      %7689 = vmatprep.subr.mxu0 0.0
      %7690 = vmatpush1.msra.mxu0 %v7663
      %7691 = vmatprep.subr.mxu0 0.0
      %7692 = vmatpush1.msra.mxu0 %v7664
      %7693 = vmatprep.subr.mxu0 0.0
      %7694 = vmatpush1.msra.mxu0 0.0
      %7695 = vmatprep.subr.mxu0 0.0
      %7696 = vmatpush1.msra.mxu0 0.0
      %7697 = vmatprep.subr.mxu0 0.0
      %7698 = vmatpush1.msra.mxu0 0.0
      %7699 = vmatprep.subr.mxu0 0.0
      %7700 = vmatpush1.msra.mxu0 0.0
      %7701 = vmatprep.subr.mxu0 0.0
      %7702 = vmatpush1.msra.mxu0 0.0
      %7703 = vmatprep.subr.mxu0 0.0
      %7704 = vmatpush1.msra.mxu0 0.0
      %7705 = vmatprep.subr.mxu0 0.0
      %7706 = vmatpush1.msra.mxu0 0.0
      %7707 = vmatprep.subr.mxu0 0.0
      %7708 = vmatpush1.msra.mxu0 0.0
      %7709 = vmatprep.subr.mxu0 0.0
      %7710 = vmatpush1.msra.mxu0 0.0
      %7711 = vmatprep.subr.mxu0 0.0
      %7712 = vmatpush1.msra.mxu0 0.0
      %7713 = vmatprep.subr.mxu0 0.0
      %7714 = vmatpush1.msra.mxu0 0.0
      %7715 = vmatprep.subr.mxu0 0.0
      %7716 = vmatpush1.msra.mxu0 0.0
      %7717 = vmatprep.subr.mxu0 0.0
      %7718 = vmatpush1.msra.mxu0 0.0
      %7719 = vmatprep.subr.mxu0 0.0
      %7720 = vmatpush1.msra.mxu0 0.0
      %7721 = vmatprep.subr.mxu0 0.0
      %7722 = vmatpush1.msra.mxu0 0.0
      %7723 = vmatprep.subr.mxu0 0.0
      %7724 = vmatpush1.msra.mxu0 0.0
      %7725 = vmatprep.subr.mxu0 0.0
      %7726 = vmatpush1.msra.mxu0 0.0
      %7727 = vmatprep.subr.mxu0 0.0
      %7728 = vmatpush1.msra.mxu0 0.0
      %7729 = vmatprep.subr.mxu0 0.0
      %7730 = vmatpush1.msra.mxu0 0.0
      %7731 = vmatprep.subr.mxu0 0.0
      %7732 = vmatpush1.msra.mxu0 0.0
      %7733 = vmatprep.subr.mxu0 0.0
      %7734 = vmatpush1.msra.mxu0 0.0
      %7735 = vmatprep.subr.mxu0 0.0
      %7736 = vmatpush1.msra.mxu0 0.0
      %7737 = vmatprep.subr.mxu0 0.0
      %7738 = vmatpush1.msra.mxu0 0.0
      %7739 = vmatprep.subr.mxu0 0.0
      %7740 = vmatpush1.msra.mxu0 0.0
      %7741 = vmatprep.subr.mxu0 0.0
      %7742 = vmatpush1.msra.mxu0 0.0
      %7743 = vmatprep.subr.mxu0 0.0
      %7744 = vmatpush1.msra.mxu0 0.0
      %7745 = vmatprep.subr.mxu0 0.0
      %7746 = vmatpush1.msra.mxu0 0.0
      %7747 = vmatprep.subr.mxu0 0.0
      %7748 = vmatpush1.msra.mxu0 0.0
      %7749 = vmatprep.subr.mxu0 0.0
      %7750 = vmatpush1.msra.mxu0 0.0
      %7751 = vmatprep.subr.mxu0 0.0
      %7752 = vmatpush1.msra.mxu0 0.0
      %7753 = vmatprep.mubr.f32.mxu0 0.0
      %7754 = vmatmul.mubr.f32.gmra.mrb[0].mxu0 %v7672
      %v7755 = vpop.f32.mrb[0].mxu0
      %v7756 = vadd.f32 0.0, %v7755
      %v7757 = vpop.f32.mrb[0].mxu0
      %7758 = vmatprep.mubr.f32.mxu0 0.0
      %7759 = vmatmul.mubr.f32.gmra.mrb[0].mxu0 %v7675
      %v7760 = vpop.f32.mrb[0].mxu0
      %v7761 = vadd.f32 0.0, %v7760
      %v7762 = vpop.f32.mrb[0].mxu0
      %7763 = vmatprep.mubr.f32.mxu0 0.0
      %7764 = vmatmul.mubr.f32.gmra.mrb[0].mxu0 %v7678
      %v7765 = vpop.f32.mrb[0].mxu0
      %v7766 = vadd.f32 0.0, %v7765
      %v7767 = vpop.f32.mrb[0].mxu0
      %7768 = vmatprep.mubr.f32.mxu0 0.0
      %7769 = vmatmul.mubr.f32.gmra.mrb[0].mxu0 %v7681
      %v7770 = vpop.f32.mrb[0].mxu0
      %v7771 = vadd.f32 0.0, %v7770
      %v7772 = vpop.f32.mrb[0].mxu0
      %7773 = vmatprep.mubr.f32.mxu0 0.0
      %7774 = vmatmul.mubr.f32.gmra.mrb[0].mxu0 %v7684
      %v7775 = vpop.f32.mrb[0].mxu0
      %v7776 = vadd.f32 0.0, %v7775
      %v7777 = vpop.f32.mrb[0].mxu0
      %7778 = vmatprep.mubr.f32.mxu0 0.0
      %7779 = vmatmul.mubr.f32.gmra.mrb[0].mxu0 %v7687
      %v7780 = vpop.f32.mrb[0].mxu0
      %v7781 = vadd.f32 0.0, %v7780
      %v7782 = vpop.f32.mrb[0].mxu0
      %7783 = vdwg.mxu0
      %v7784 = vadd.f32 %v7657, %v7756
      %v7785 = vadd.f32 %v7658, %v7761
      %v7786 = vadd.f32 %v7659, %v7766
      %v7787 = vadd.f32 %v7660, %v7771
      %v7788 = vadd.f32 %v7661, %v7776
      %v7789 = vadd.f32 %v7662, %v7781
      %v7790 = vadd.f32 %v7784, %v6748
      %v7791 = vadd.f32 %v7785, %v6748
      %v7792 = vadd.f32 %v7786, %v6748
      %v7793 = vadd.f32 %v7787, %v6748
      %v7794 = vadd.f32 %v7788, %v6748
      %v7795 = vadd.f32 %v7789, %v6748
      %v7796 = vmax.f32 %v7790, 0.0
      %v7797 = vmax.f32 %v7791, 0.0
      %v7798 = vmax.f32 %v7792, 0.0
      %v7799 = vmax.f32 %v7793, 0.0
      %v7800 = vmax.f32 %v7794, 0.0
      %v7801 = vmax.f32 %v7795, 0.0
      %s7802 = scalar_lea.vmem [#allocation10], 6
      %7803 = vst [vmem:[%s7802] ss:$4 sm:$0xff] %v7796
      %s7804 = scalar_lea.vmem [#allocation10], 38
      %7805 = vst [vmem:[%s7804] ss:$4 sm:$0xff] %v7797
      %s7806 = scalar_lea.vmem [#allocation10], 70
      %7807 = vst [vmem:[%s7806] ss:$4 sm:$0xff] %v7798
      %s7808 = scalar_lea.vmem [#allocation10], 102
      %7809 = vst [vmem:[%s7808] ss:$4 sm:$0xff] %v7799
      %s7810 = scalar_lea.vmem [#allocation10], 134
      %7811 = vst [vmem:[%s7810] ss:$4 sm:$0xff] %v7800
      %s7812 = scalar_lea.vmem [#allocation10], 166
      %7813 = vst [vmem:[%s7812] ss:$4 sm:$0x3f] %v7801
      %v7814 = vld [vmem:[%s17 + $0x40] sm:$0xff]
      %v7815 = vld [vmem:[%s17 + $0x48] sm:$0xff]
      %v7816 = vld [vmem:[#allocation9 + $0x5] sm:$0xff]
      %v7817 = vld [vmem:[#allocation9 + $0xd] sm:$0xff]
      %v7818 = vld [vmem:[#allocation9 + $0x15] sm:$0xff]
      %v7819 = vld [vmem:[#allocation9 + $0x1d] sm:$0xff]
      %v7820 = vld [vmem:[#allocation9 + $0x25] sm:$0xff]
      %v7821 = vld [vmem:[#allocation9 + $0x2d] sm:$0x3f]
      %v7822 = vld [vmem:[%s17 + $0x50] sm:$0xff]
      %v7823 = vld [vmem:[%s17 + $0x58] sm:$0xff]
      %v7824 = vld [vmem:[#allocation3 + $0x5] sm:$0xff]
      %v7825 = vld [vmem:[#allocation3 + $0xd] sm:$0xff]
      %v7826 = vld [vmem:[#allocation3 + $0x15] sm:$0xff]
      %v7827 = vld [vmem:[#allocation3 + $0x1d] sm:$0xff]
      %v7828 = vld [vmem:[#allocation3 + $0x25] sm:$0xff]
      %v7829 = vld [vmem:[#allocation3 + $0x2d] sm:$0x3f]
      %v7831 = vsel %vm1998, %v7824, 0
      %v7834 = vsel %vm1998, %v7825, 0
      %v7837 = vsel %vm1998, %v7826, 0
      %v7840 = vsel %vm1998, %v7827, 0
      %v7843 = vsel %vm1998, %v7828, 0
      %v7846 = vsel %vm1998, %v7829, 0
      %7848 = vmatprep.subr.mxu0 0.0
      %7849 = vmatpush1.msra.mxu0 %v7822
      %7850 = vmatprep.subr.mxu0 0.0
      %7851 = vmatpush1.msra.mxu0 %v7823
      %7852 = vmatprep.subr.mxu0 0.0
      %7853 = vmatpush1.msra.mxu0 0.0
      %7854 = vmatprep.subr.mxu0 0.0
      %7855 = vmatpush1.msra.mxu0 0.0
      %7856 = vmatprep.subr.mxu0 0.0
      %7857 = vmatpush1.msra.mxu0 0.0
      %7858 = vmatprep.subr.mxu0 0.0
      %7859 = vmatpush1.msra.mxu0 0.0
      %7860 = vmatprep.subr.mxu0 0.0
      %7861 = vmatpush1.msra.mxu0 0.0
      %7862 = vmatprep.subr.mxu0 0.0
      %7863 = vmatpush1.msra.mxu0 0.0
      %7864 = vmatprep.subr.mxu0 0.0
      %7865 = vmatpush1.msra.mxu0 0.0
      %7866 = vmatprep.subr.mxu0 0.0
      %7867 = vmatpush1.msra.mxu0 0.0
      %7868 = vmatprep.subr.mxu0 0.0
      %7869 = vmatpush1.msra.mxu0 0.0
      %7870 = vmatprep.subr.mxu0 0.0
      %7871 = vmatpush1.msra.mxu0 0.0
      %7872 = vmatprep.subr.mxu0 0.0
      %7873 = vmatpush1.msra.mxu0 0.0
      %7874 = vmatprep.subr.mxu0 0.0
      %7875 = vmatpush1.msra.mxu0 0.0
      %7876 = vmatprep.subr.mxu0 0.0
      %7877 = vmatpush1.msra.mxu0 0.0
      %7878 = vmatprep.subr.mxu0 0.0
      %7879 = vmatpush1.msra.mxu0 0.0
      %7880 = vmatprep.subr.mxu0 0.0
      %7881 = vmatpush1.msra.mxu0 0.0
      %7882 = vmatprep.subr.mxu0 0.0
      %7883 = vmatpush1.msra.mxu0 0.0
      %7884 = vmatprep.subr.mxu0 0.0
      %7885 = vmatpush1.msra.mxu0 0.0
      %7886 = vmatprep.subr.mxu0 0.0
      %7887 = vmatpush1.msra.mxu0 0.0
      %7888 = vmatprep.subr.mxu0 0.0
      %7889 = vmatpush1.msra.mxu0 0.0
      %7890 = vmatprep.subr.mxu0 0.0
      %7891 = vmatpush1.msra.mxu0 0.0
      %7892 = vmatprep.subr.mxu0 0.0
      %7893 = vmatpush1.msra.mxu0 0.0
      %7894 = vmatprep.subr.mxu0 0.0
      %7895 = vmatpush1.msra.mxu0 0.0
      %7896 = vmatprep.subr.mxu0 0.0
      %7897 = vmatpush1.msra.mxu0 0.0
      %7898 = vmatprep.subr.mxu0 0.0
      %7899 = vmatpush1.msra.mxu0 0.0
      %7900 = vmatprep.subr.mxu0 0.0
      %7901 = vmatpush1.msra.mxu0 0.0
      %7902 = vmatprep.subr.mxu0 0.0
      %7903 = vmatpush1.msra.mxu0 0.0
      %7904 = vmatprep.subr.mxu0 0.0
      %7905 = vmatpush1.msra.mxu0 0.0
      %7906 = vmatprep.subr.mxu0 0.0
      %7907 = vmatpush1.msra.mxu0 0.0
      %7908 = vmatprep.subr.mxu0 0.0
      %7909 = vmatpush1.msra.mxu0 0.0
      %7910 = vmatprep.subr.mxu0 0.0
      %7911 = vmatpush1.msra.mxu0 0.0
      %7912 = vmatprep.mubr.f32.mxu0 0.0
      %7913 = vmatmul.mubr.f32.gmra.mrb[0].mxu0 %v7831
      %v7914 = vpop.f32.mrb[0].mxu0
      %v7915 = vadd.f32 0.0, %v7914
      %v7916 = vpop.f32.mrb[0].mxu0
      %7917 = vmatprep.mubr.f32.mxu0 0.0
      %7918 = vmatmul.mubr.f32.gmra.mrb[0].mxu0 %v7834
      %v7919 = vpop.f32.mrb[0].mxu0
      %v7920 = vadd.f32 0.0, %v7919
      %v7921 = vpop.f32.mrb[0].mxu0
      %7922 = vmatprep.mubr.f32.mxu0 0.0
      %7923 = vmatmul.mubr.f32.gmra.mrb[0].mxu0 %v7837
      %v7924 = vpop.f32.mrb[0].mxu0
      %v7925 = vadd.f32 0.0, %v7924
      %v7926 = vpop.f32.mrb[0].mxu0
      %7927 = vmatprep.mubr.f32.mxu0 0.0
      %7928 = vmatmul.mubr.f32.gmra.mrb[0].mxu0 %v7840
      %v7929 = vpop.f32.mrb[0].mxu0
      %v7930 = vadd.f32 0.0, %v7929
      %v7931 = vpop.f32.mrb[0].mxu0
      %7932 = vmatprep.mubr.f32.mxu0 0.0
      %7933 = vmatmul.mubr.f32.gmra.mrb[0].mxu0 %v7843
      %v7934 = vpop.f32.mrb[0].mxu0
      %v7935 = vadd.f32 0.0, %v7934
      %v7936 = vpop.f32.mrb[0].mxu0
      %7937 = vmatprep.mubr.f32.mxu0 0.0
      %7938 = vmatmul.mubr.f32.gmra.mrb[0].mxu0 %v7846
      %v7939 = vpop.f32.mrb[0].mxu0
      %v7940 = vadd.f32 0.0, %v7939
      %v7941 = vpop.f32.mrb[0].mxu0
      %7942 = vdwg.mxu0
      %v7944 = vsel %vm1998, %v7816, 0
      %v7947 = vsel %vm1998, %v7817, 0
      %v7950 = vsel %vm1998, %v7818, 0
      %v7953 = vsel %vm1998, %v7819, 0
      %v7956 = vsel %vm1998, %v7820, 0
      %v7959 = vsel %vm1998, %v7821, 0
      %7961 = vmatprep.subr.mxu0 0.0
      %7962 = vmatpush1.msra.mxu0 %v7814
      %7963 = vmatprep.subr.mxu0 0.0
      %7964 = vmatpush1.msra.mxu0 %v7815
      %7965 = vmatprep.subr.mxu0 0.0
      %7966 = vmatpush1.msra.mxu0 0.0
      %7967 = vmatprep.subr.mxu0 0.0
      %7968 = vmatpush1.msra.mxu0 0.0
      %7969 = vmatprep.subr.mxu0 0.0
      %7970 = vmatpush1.msra.mxu0 0.0
      %7971 = vmatprep.subr.mxu0 0.0
      %7972 = vmatpush1.msra.mxu0 0.0
      %7973 = vmatprep.subr.mxu0 0.0
      %7974 = vmatpush1.msra.mxu0 0.0
      %7975 = vmatprep.subr.mxu0 0.0
      %7976 = vmatpush1.msra.mxu0 0.0
      %7977 = vmatprep.subr.mxu0 0.0
      %7978 = vmatpush1.msra.mxu0 0.0
      %7979 = vmatprep.subr.mxu0 0.0
      %7980 = vmatpush1.msra.mxu0 0.0
      %7981 = vmatprep.subr.mxu0 0.0
      %7982 = vmatpush1.msra.mxu0 0.0
      %7983 = vmatprep.subr.mxu0 0.0
      %7984 = vmatpush1.msra.mxu0 0.0
      %7985 = vmatprep.subr.mxu0 0.0
      %7986 = vmatpush1.msra.mxu0 0.0
      %7987 = vmatprep.subr.mxu0 0.0
      %7988 = vmatpush1.msra.mxu0 0.0
      %7989 = vmatprep.subr.mxu0 0.0
      %7990 = vmatpush1.msra.mxu0 0.0
      %7991 = vmatprep.subr.mxu0 0.0
      %7992 = vmatpush1.msra.mxu0 0.0
      %7993 = vmatprep.subr.mxu0 0.0
      %7994 = vmatpush1.msra.mxu0 0.0
      %7995 = vmatprep.subr.mxu0 0.0
      %7996 = vmatpush1.msra.mxu0 0.0
      %7997 = vmatprep.subr.mxu0 0.0
      %7998 = vmatpush1.msra.mxu0 0.0
      %7999 = vmatprep.subr.mxu0 0.0
      %8000 = vmatpush1.msra.mxu0 0.0
      %8001 = vmatprep.subr.mxu0 0.0
      %8002 = vmatpush1.msra.mxu0 0.0
      %8003 = vmatprep.subr.mxu0 0.0
      %8004 = vmatpush1.msra.mxu0 0.0
      %8005 = vmatprep.subr.mxu0 0.0
      %8006 = vmatpush1.msra.mxu0 0.0
      %8007 = vmatprep.subr.mxu0 0.0
      %8008 = vmatpush1.msra.mxu0 0.0
      %8009 = vmatprep.subr.mxu0 0.0
      %8010 = vmatpush1.msra.mxu0 0.0
      %8011 = vmatprep.subr.mxu0 0.0
      %8012 = vmatpush1.msra.mxu0 0.0
      %8013 = vmatprep.subr.mxu0 0.0
      %8014 = vmatpush1.msra.mxu0 0.0
      %8015 = vmatprep.subr.mxu0 0.0
      %8016 = vmatpush1.msra.mxu0 0.0
      %8017 = vmatprep.subr.mxu0 0.0
      %8018 = vmatpush1.msra.mxu0 0.0
      %8019 = vmatprep.subr.mxu0 0.0
      %8020 = vmatpush1.msra.mxu0 0.0
      %8021 = vmatprep.subr.mxu0 0.0
      %8022 = vmatpush1.msra.mxu0 0.0
      %8023 = vmatprep.subr.mxu0 0.0
      %8024 = vmatpush1.msra.mxu0 0.0
      %8025 = vmatprep.mubr.f32.mxu0 0.0
      %8026 = vmatmul.mubr.f32.gmra.mrb[0].mxu0 %v7944
      %v8027 = vpop.f32.mrb[0].mxu0
      %v8028 = vadd.f32 %v7915, %v8027
      %v8029 = vpop.f32.mrb[0].mxu0
      %8030 = vmatprep.mubr.f32.mxu0 0.0
      %8031 = vmatmul.mubr.f32.gmra.mrb[0].mxu0 %v7947
      %v8032 = vpop.f32.mrb[0].mxu0
      %v8033 = vadd.f32 %v7920, %v8032
      %v8034 = vpop.f32.mrb[0].mxu0
      %8035 = vmatprep.mubr.f32.mxu0 0.0
      %8036 = vmatmul.mubr.f32.gmra.mrb[0].mxu0 %v7950
      %v8037 = vpop.f32.mrb[0].mxu0
      %v8038 = vadd.f32 %v7925, %v8037
      %v8039 = vpop.f32.mrb[0].mxu0
      %8040 = vmatprep.mubr.f32.mxu0 0.0
      %8041 = vmatmul.mubr.f32.gmra.mrb[0].mxu0 %v7953
      %v8042 = vpop.f32.mrb[0].mxu0
      %v8043 = vadd.f32 %v7930, %v8042
      %v8044 = vpop.f32.mrb[0].mxu0
      %8045 = vmatprep.mubr.f32.mxu0 0.0
      %8046 = vmatmul.mubr.f32.gmra.mrb[0].mxu0 %v7956
      %v8047 = vpop.f32.mrb[0].mxu0
      %v8048 = vadd.f32 %v7935, %v8047
      %v8049 = vpop.f32.mrb[0].mxu0
      %8050 = vmatprep.mubr.f32.mxu0 0.0
      %8051 = vmatmul.mubr.f32.gmra.mrb[0].mxu0 %v7959
      %v8052 = vpop.f32.mrb[0].mxu0
      %v8053 = vadd.f32 %v7940, %v8052
      %v8054 = vpop.f32.mrb[0].mxu0
      %8055 = vdwg.mxu0
      %v8056 = vld [vmem:[%s17 + $0xc0] sm:$0xff]
      %v8057 = vld [vmem:[%s17 + $0xc8] sm:$0xff]
      %v8058 = vld [vmem:[#allocation9 + $0x4] sm:$0xff]
      %v8059 = vld [vmem:[#allocation9 + $0xc] sm:$0xff]
      %v8060 = vld [vmem:[#allocation9 + $0x14] sm:$0xff]
      %v8061 = vld [vmem:[#allocation9 + $0x1c] sm:$0xff]
      %v8062 = vld [vmem:[#allocation9 + $0x24] sm:$0xff]
      %v8063 = vld [vmem:[#allocation9 + $0x2c] sm:$0x3f]
      %v8065 = vsel %vm1998, %v8058, 0
      %v8068 = vsel %vm1998, %v8059, 0
      %v8071 = vsel %vm1998, %v8060, 0
      %v8074 = vsel %vm1998, %v8061, 0
      %v8077 = vsel %vm1998, %v8062, 0
      %v8080 = vsel %vm1998, %v8063, 0
      %8082 = vmatprep.subr.mxu0 0.0
      %8083 = vmatpush1.msra.mxu0 %v8056
      %8084 = vmatprep.subr.mxu0 0.0
      %8085 = vmatpush1.msra.mxu0 %v8057
      %8086 = vmatprep.subr.mxu0 0.0
      %8087 = vmatpush1.msra.mxu0 0.0
      %8088 = vmatprep.subr.mxu0 0.0
      %8089 = vmatpush1.msra.mxu0 0.0
      %8090 = vmatprep.subr.mxu0 0.0
      %8091 = vmatpush1.msra.mxu0 0.0
      %8092 = vmatprep.subr.mxu0 0.0
      %8093 = vmatpush1.msra.mxu0 0.0
      %8094 = vmatprep.subr.mxu0 0.0
      %8095 = vmatpush1.msra.mxu0 0.0
      %8096 = vmatprep.subr.mxu0 0.0
      %8097 = vmatpush1.msra.mxu0 0.0
      %8098 = vmatprep.subr.mxu0 0.0
      %8099 = vmatpush1.msra.mxu0 0.0
      %8100 = vmatprep.subr.mxu0 0.0
      %8101 = vmatpush1.msra.mxu0 0.0
      %8102 = vmatprep.subr.mxu0 0.0
      %8103 = vmatpush1.msra.mxu0 0.0
      %8104 = vmatprep.subr.mxu0 0.0
      %8105 = vmatpush1.msra.mxu0 0.0
      %8106 = vmatprep.subr.mxu0 0.0
      %8107 = vmatpush1.msra.mxu0 0.0
      %8108 = vmatprep.subr.mxu0 0.0
      %8109 = vmatpush1.msra.mxu0 0.0
      %8110 = vmatprep.subr.mxu0 0.0
      %8111 = vmatpush1.msra.mxu0 0.0
      %8112 = vmatprep.subr.mxu0 0.0
      %8113 = vmatpush1.msra.mxu0 0.0
      %8114 = vmatprep.subr.mxu0 0.0
      %8115 = vmatpush1.msra.mxu0 0.0
      %8116 = vmatprep.subr.mxu0 0.0
      %8117 = vmatpush1.msra.mxu0 0.0
      %8118 = vmatprep.subr.mxu0 0.0
      %8119 = vmatpush1.msra.mxu0 0.0
      %8120 = vmatprep.subr.mxu0 0.0
      %8121 = vmatpush1.msra.mxu0 0.0
      %8122 = vmatprep.subr.mxu0 0.0
      %8123 = vmatpush1.msra.mxu0 0.0
      %8124 = vmatprep.subr.mxu0 0.0
      %8125 = vmatpush1.msra.mxu0 0.0
      %8126 = vmatprep.subr.mxu0 0.0
      %8127 = vmatpush1.msra.mxu0 0.0
      %8128 = vmatprep.subr.mxu0 0.0
      %8129 = vmatpush1.msra.mxu0 0.0
      %8130 = vmatprep.subr.mxu0 0.0
      %8131 = vmatpush1.msra.mxu0 0.0
      %8132 = vmatprep.subr.mxu0 0.0
      %8133 = vmatpush1.msra.mxu0 0.0
      %8134 = vmatprep.subr.mxu0 0.0
      %8135 = vmatpush1.msra.mxu0 0.0
      %8136 = vmatprep.subr.mxu0 0.0
      %8137 = vmatpush1.msra.mxu0 0.0
      %8138 = vmatprep.subr.mxu0 0.0
      %8139 = vmatpush1.msra.mxu0 0.0
      %8140 = vmatprep.subr.mxu0 0.0
      %8141 = vmatpush1.msra.mxu0 0.0
      %8142 = vmatprep.subr.mxu0 0.0
      %8143 = vmatpush1.msra.mxu0 0.0
      %8144 = vmatprep.subr.mxu0 0.0
      %8145 = vmatpush1.msra.mxu0 0.0
      %8146 = vmatprep.mubr.f32.mxu0 0.0
      %8147 = vmatmul.mubr.f32.gmra.mrb[0].mxu0 %v8065
      %v8148 = vpop.f32.mrb[0].mxu0
      %v8149 = vadd.f32 0.0, %v8148
      %v8150 = vpop.f32.mrb[0].mxu0
      %8151 = vmatprep.mubr.f32.mxu0 0.0
      %8152 = vmatmul.mubr.f32.gmra.mrb[0].mxu0 %v8068
      %v8153 = vpop.f32.mrb[0].mxu0
      %v8154 = vadd.f32 0.0, %v8153
      %v8155 = vpop.f32.mrb[0].mxu0
      %8156 = vmatprep.mubr.f32.mxu0 0.0
      %8157 = vmatmul.mubr.f32.gmra.mrb[0].mxu0 %v8071
      %v8158 = vpop.f32.mrb[0].mxu0
      %v8159 = vadd.f32 0.0, %v8158
      %v8160 = vpop.f32.mrb[0].mxu0
      %8161 = vmatprep.mubr.f32.mxu0 0.0
      %8162 = vmatmul.mubr.f32.gmra.mrb[0].mxu0 %v8074
      %v8163 = vpop.f32.mrb[0].mxu0
      %v8164 = vadd.f32 0.0, %v8163
      %v8165 = vpop.f32.mrb[0].mxu0
      %8166 = vmatprep.mubr.f32.mxu0 0.0
      %8167 = vmatmul.mubr.f32.gmra.mrb[0].mxu0 %v8077
      %v8168 = vpop.f32.mrb[0].mxu0
      %v8169 = vadd.f32 0.0, %v8168
      %v8170 = vpop.f32.mrb[0].mxu0
      %8171 = vmatprep.mubr.f32.mxu0 0.0
      %8172 = vmatmul.mubr.f32.gmra.mrb[0].mxu0 %v8080
      %v8173 = vpop.f32.mrb[0].mxu0
      %v8174 = vadd.f32 0.0, %v8173
      %v8175 = vpop.f32.mrb[0].mxu0
      %8176 = vdwg.mxu0
      %v8177 = vadd.f32 %v8028, %v8149
      %v8178 = vadd.f32 %v8033, %v8154
      %v8179 = vadd.f32 %v8038, %v8159
      %v8180 = vadd.f32 %v8043, %v8164
      %v8181 = vadd.f32 %v8048, %v8169
      %v8182 = vadd.f32 %v8053, %v8174
      %v8183 = vld [vmem:[%s17 + $0xd0] sm:$0xff]
      %v8184 = vld [vmem:[%s17 + $0xd8] sm:$0xff]
      %v8185 = vld [vmem:[#allocation3 + $0x4] sm:$0xff]
      %v8186 = vld [vmem:[#allocation3 + $0xc] sm:$0xff]
      %v8187 = vld [vmem:[#allocation3 + $0x14] sm:$0xff]
      %v8188 = vld [vmem:[#allocation3 + $0x1c] sm:$0xff]
      %v8189 = vld [vmem:[#allocation3 + $0x24] sm:$0xff]
      %v8190 = vld [vmem:[#allocation3 + $0x2c] sm:$0x3f]
      %v8192 = vsel %vm1998, %v8185, 0
      %v8195 = vsel %vm1998, %v8186, 0
      %v8198 = vsel %vm1998, %v8187, 0
      %v8201 = vsel %vm1998, %v8188, 0
      %v8204 = vsel %vm1998, %v8189, 0
      %v8207 = vsel %vm1998, %v8190, 0
      %8209 = vmatprep.subr.mxu0 0.0
      %8210 = vmatpush1.msra.mxu0 %v8183
      %8211 = vmatprep.subr.mxu0 0.0
      %8212 = vmatpush1.msra.mxu0 %v8184
      %8213 = vmatprep.subr.mxu0 0.0
      %8214 = vmatpush1.msra.mxu0 0.0
      %8215 = vmatprep.subr.mxu0 0.0
      %8216 = vmatpush1.msra.mxu0 0.0
      %8217 = vmatprep.subr.mxu0 0.0
      %8218 = vmatpush1.msra.mxu0 0.0
      %8219 = vmatprep.subr.mxu0 0.0
      %8220 = vmatpush1.msra.mxu0 0.0
      %8221 = vmatprep.subr.mxu0 0.0
      %8222 = vmatpush1.msra.mxu0 0.0
      %8223 = vmatprep.subr.mxu0 0.0
      %8224 = vmatpush1.msra.mxu0 0.0
      %8225 = vmatprep.subr.mxu0 0.0
      %8226 = vmatpush1.msra.mxu0 0.0
      %8227 = vmatprep.subr.mxu0 0.0
      %8228 = vmatpush1.msra.mxu0 0.0
      %8229 = vmatprep.subr.mxu0 0.0
      %8230 = vmatpush1.msra.mxu0 0.0
      %8231 = vmatprep.subr.mxu0 0.0
      %8232 = vmatpush1.msra.mxu0 0.0
      %8233 = vmatprep.subr.mxu0 0.0
      %8234 = vmatpush1.msra.mxu0 0.0
      %8235 = vmatprep.subr.mxu0 0.0
      %8236 = vmatpush1.msra.mxu0 0.0
      %8237 = vmatprep.subr.mxu0 0.0
      %8238 = vmatpush1.msra.mxu0 0.0
      %8239 = vmatprep.subr.mxu0 0.0
      %8240 = vmatpush1.msra.mxu0 0.0
      %8241 = vmatprep.subr.mxu0 0.0
      %8242 = vmatpush1.msra.mxu0 0.0
      %8243 = vmatprep.subr.mxu0 0.0
      %8244 = vmatpush1.msra.mxu0 0.0
      %8245 = vmatprep.subr.mxu0 0.0
      %8246 = vmatpush1.msra.mxu0 0.0
      %8247 = vmatprep.subr.mxu0 0.0
      %8248 = vmatpush1.msra.mxu0 0.0
      %8249 = vmatprep.subr.mxu0 0.0
      %8250 = vmatpush1.msra.mxu0 0.0
      %8251 = vmatprep.subr.mxu0 0.0
      %8252 = vmatpush1.msra.mxu0 0.0
      %8253 = vmatprep.subr.mxu0 0.0
      %8254 = vmatpush1.msra.mxu0 0.0
      %8255 = vmatprep.subr.mxu0 0.0
      %8256 = vmatpush1.msra.mxu0 0.0
      %8257 = vmatprep.subr.mxu0 0.0
      %8258 = vmatpush1.msra.mxu0 0.0
      %8259 = vmatprep.subr.mxu0 0.0
      %8260 = vmatpush1.msra.mxu0 0.0
      %8261 = vmatprep.subr.mxu0 0.0
      %8262 = vmatpush1.msra.mxu0 0.0
      %8263 = vmatprep.subr.mxu0 0.0
      %8264 = vmatpush1.msra.mxu0 0.0
      %8265 = vmatprep.subr.mxu0 0.0
      %8266 = vmatpush1.msra.mxu0 0.0
      %8267 = vmatprep.subr.mxu0 0.0
      %8268 = vmatpush1.msra.mxu0 0.0
      %8269 = vmatprep.subr.mxu0 0.0
      %8270 = vmatpush1.msra.mxu0 0.0
      %8271 = vmatprep.subr.mxu0 0.0
      %8272 = vmatpush1.msra.mxu0 0.0
      %8273 = vmatprep.mubr.f32.mxu0 0.0
      %8274 = vmatmul.mubr.f32.gmra.mrb[0].mxu0 %v8192
      %v8275 = vpop.f32.mrb[0].mxu0
      %v8276 = vadd.f32 0.0, %v8275
      %v8277 = vpop.f32.mrb[0].mxu0
      %8278 = vmatprep.mubr.f32.mxu0 0.0
      %8279 = vmatmul.mubr.f32.gmra.mrb[0].mxu0 %v8195
      %v8280 = vpop.f32.mrb[0].mxu0
      %v8281 = vadd.f32 0.0, %v8280
      %v8282 = vpop.f32.mrb[0].mxu0
      %8283 = vmatprep.mubr.f32.mxu0 0.0
      %8284 = vmatmul.mubr.f32.gmra.mrb[0].mxu0 %v8198
      %v8285 = vpop.f32.mrb[0].mxu0
      %v8286 = vadd.f32 0.0, %v8285
      %v8287 = vpop.f32.mrb[0].mxu0
      %8288 = vmatprep.mubr.f32.mxu0 0.0
      %8289 = vmatmul.mubr.f32.gmra.mrb[0].mxu0 %v8201
      %v8290 = vpop.f32.mrb[0].mxu0
      %v8291 = vadd.f32 0.0, %v8290
      %v8292 = vpop.f32.mrb[0].mxu0
      %8293 = vmatprep.mubr.f32.mxu0 0.0
      %8294 = vmatmul.mubr.f32.gmra.mrb[0].mxu0 %v8204
      %v8295 = vpop.f32.mrb[0].mxu0
      %v8296 = vadd.f32 0.0, %v8295
      %v8297 = vpop.f32.mrb[0].mxu0
      %8298 = vmatprep.mubr.f32.mxu0 0.0
      %8299 = vmatmul.mubr.f32.gmra.mrb[0].mxu0 %v8207
      %v8300 = vpop.f32.mrb[0].mxu0
      %v8301 = vadd.f32 0.0, %v8300
      %v8302 = vpop.f32.mrb[0].mxu0
      %8303 = vdwg.mxu0
      %v8304 = vadd.f32 %v8177, %v8276
      %v8305 = vadd.f32 %v8178, %v8281
      %v8306 = vadd.f32 %v8179, %v8286
      %v8307 = vadd.f32 %v8180, %v8291
      %v8308 = vadd.f32 %v8181, %v8296
      %v8309 = vadd.f32 %v8182, %v8301
      %v8310 = vadd.f32 %v8304, %v6748
      %v8311 = vadd.f32 %v8305, %v6748
      %v8312 = vadd.f32 %v8306, %v6748
      %v8313 = vadd.f32 %v8307, %v6748
      %v8314 = vadd.f32 %v8308, %v6748
      %v8315 = vadd.f32 %v8309, %v6748
      %v8316 = vmax.f32 %v8310, 0.0
      %v8317 = vmax.f32 %v8311, 0.0
      %v8318 = vmax.f32 %v8312, 0.0
      %v8319 = vmax.f32 %v8313, 0.0
      %v8320 = vmax.f32 %v8314, 0.0
      %v8321 = vmax.f32 %v8315, 0.0
      %s8322 = scalar_lea.vmem [#allocation10], 7
      %8323 = vst [vmem:[%s8322] ss:$4 sm:$0xff] %v8316
      %s8324 = scalar_lea.vmem [#allocation10], 39
      %8325 = vst [vmem:[%s8324] ss:$4 sm:$0xff] %v8317
      %s8326 = scalar_lea.vmem [#allocation10], 71
      %8327 = vst [vmem:[%s8326] ss:$4 sm:$0xff] %v8318
      %s8328 = scalar_lea.vmem [#allocation10], 103
      %8329 = vst [vmem:[%s8328] ss:$4 sm:$0xff] %v8319
      %s8330 = scalar_lea.vmem [#allocation10], 135
      %8331 = vst [vmem:[%s8330] ss:$4 sm:$0xff] %v8320
      %s8332 = scalar_lea.vmem [#allocation10], 167
      %8333 = vst [vmem:[%s8332] ss:$4 sm:$0x3f] %v8321
      %v8334 = vld [vmem:[#allocation10 + $0x4] sm:$0xff]
      %v8335 = vld [vmem:[#allocation10 + $0xc] sm:$0xff]
      %v8336 = vld [vmem:[#allocation10 + $0x14] sm:$0xff]
      %v8337 = vld [vmem:[#allocation10 + $0x1c] sm:$0xff]
      %v8338 = vld [vmem:[#allocation10 + $0x24] sm:$0xff]
      %v8339 = vld [vmem:[#allocation10 + $0x2c] sm:$0xff]
      %v8340 = vld [vmem:[#allocation10 + $0x34] sm:$0xff]
      %v8341 = vld [vmem:[#allocation10 + $0x3c] sm:$0xff]
      %v8342 = vld [vmem:[#allocation10 + $0x44] sm:$0xff]
      %v8343 = vld [vmem:[#allocation10 + $0x4c] sm:$0xff]
      %v8344 = vld [vmem:[#allocation10 + $0x54] sm:$0xff]
      %v8345 = vld [vmem:[#allocation10 + $0x5c] sm:$0xff]
      %v8346 = vld [vmem:[#allocation10 + $0x64] sm:$0xff]
      %v8347 = vld [vmem:[#allocation10 + $0x6c] sm:$0xff]
      %v8348 = vld [vmem:[#allocation10 + $0x74] sm:$0xff]
      %v8349 = vld [vmem:[#allocation10 + $0x7c] sm:$0xff]
      %v8350 = vld [vmem:[#allocation10 + $0x84] sm:$0xff]
      %v8351 = vld [vmem:[#allocation10 + $0x8c] sm:$0xff]
      %v8352 = vld [vmem:[#allocation10 + $0x94] sm:$0xff]
      %v8353 = vld [vmem:[#allocation10 + $0x9c] sm:$0xff]
      %v8354 = vld [vmem:[#allocation10 + $0xa4] sm:$0xff]
      %v8355 = vld [vmem:[#allocation10 + $0xac] sm:$0xff]
      %v8356 = vld [vmem:[#allocation10 + $0xb4] sm:$0xff]
      %v8357 = vld [vmem:[#allocation10 + $0xbc] sm:$0x1]
      %v8358 = vld [vmem:[#allocation2 + $0x4] sm:$0xff]
      %v8359 = vld [vmem:[#allocation2 + $0xc] sm:$0xff]
      %v8360 = vld [vmem:[#allocation2 + $0x14] sm:$0xff]
      %v8361 = vld [vmem:[#allocation2 + $0x1c] sm:$0xff]
      %v8362 = vld [vmem:[#allocation2 + $0x24] sm:$0xff]
      %v8363 = vld [vmem:[#allocation2 + $0x2c] sm:$0xff]
      %v8364 = vld [vmem:[#allocation2 + $0x34] sm:$0xff]
      %v8365 = vld [vmem:[#allocation2 + $0x3c] sm:$0xff]
      %v8366 = vld [vmem:[#allocation2 + $0x44] sm:$0xff]
      %v8367 = vld [vmem:[#allocation2 + $0x4c] sm:$0xff]
      %v8368 = vld [vmem:[#allocation2 + $0x54] sm:$0xff]
      %v8369 = vld [vmem:[#allocation2 + $0x5c] sm:$0xff]
      %v8370 = vld [vmem:[#allocation2 + $0x64] sm:$0xff]
      %v8371 = vld [vmem:[#allocation2 + $0x6c] sm:$0xff]
      %v8372 = vld [vmem:[#allocation2 + $0x74] sm:$0xff]
      %v8373 = vld [vmem:[#allocation2 + $0x7c] sm:$0xff]
      %v8374 = vld [vmem:[#allocation2 + $0x84] sm:$0xff]
      %v8375 = vld [vmem:[#allocation2 + $0x8c] sm:$0xff]
      %v8376 = vld [vmem:[#allocation2 + $0x94] sm:$0xff]
      %v8377 = vld [vmem:[#allocation2 + $0x9c] sm:$0xff]
      %v8378 = vld [vmem:[#allocation2 + $0xa4] sm:$0xff]
      %v8379 = vld [vmem:[#allocation2 + $0xac] sm:$0xff]
      %v8380 = vld [vmem:[#allocation2 + $0xb4] sm:$0xff]
      %v8381 = vld [vmem:[#allocation2 + $0xbc] sm:$0x1]
      %v8382 = vld [vmem:[%s19] sm:$0xff]
      %v8383 = vld [vmem:[%s19 + $0x8] sm:$0xff]
      %v8385 = vsel %vm1041, %v8358, 0
      %v8388 = vsel %vm1041, %v8359, 0
      %v8391 = vsel %vm1041, %v8360, 0
      %v8394 = vsel %vm1041, %v8361, 0
      %v8397 = vsel %vm1041, %v8362, 0
      %v8400 = vsel %vm1041, %v8363, 0
      %v8403 = vsel %vm1041, %v8364, 0
      %v8406 = vsel %vm1041, %v8365, 0
      %v8409 = vsel %vm1041, %v8366, 0
      %v8412 = vsel %vm1041, %v8367, 0
      %v8415 = vsel %vm1041, %v8368, 0
      %v8418 = vsel %vm1041, %v8369, 0
      %v8421 = vsel %vm1041, %v8370, 0
      %v8424 = vsel %vm1041, %v8371, 0
      %v8427 = vsel %vm1041, %v8372, 0
      %v8430 = vsel %vm1041, %v8373, 0
      %v8433 = vsel %vm1041, %v8374, 0
      %v8436 = vsel %vm1041, %v8375, 0
      %v8439 = vsel %vm1041, %v8376, 0
      %v8442 = vsel %vm1041, %v8377, 0
      %v8445 = vsel %vm1041, %v8378, 0
      %v8448 = vsel %vm1041, %v8379, 0
      %v8451 = vsel %vm1041, %v8380, 0
      %v8454 = vsel %vm1041, %v8381, 0
      %8456 = vmatprep.subr.mxu0 0.0
      %8457 = vmatpush1.msra.mxu0 %v8383
      %8458 = vmatprep.subr.mxu0 0.0
      %8459 = vmatpush1.msra.mxu0 0.0
      %8460 = vmatprep.subr.mxu0 0.0
      %8461 = vmatpush1.msra.mxu0 0.0
      %8462 = vmatprep.subr.mxu0 0.0
      %8463 = vmatpush1.msra.mxu0 0.0
      %8464 = vmatprep.subr.mxu0 0.0
      %8465 = vmatpush1.msra.mxu0 0.0
      %8466 = vmatprep.subr.mxu0 0.0
      %8467 = vmatpush1.msra.mxu0 0.0
      %8468 = vmatprep.subr.mxu0 0.0
      %8469 = vmatpush1.msra.mxu0 0.0
      %8470 = vmatprep.subr.mxu0 0.0
      %8471 = vmatpush1.msra.mxu0 0.0
      %8472 = vmatprep.subr.mxu0 0.0
      %8473 = vmatpush1.msra.mxu0 0.0
      %8474 = vmatprep.subr.mxu0 0.0
      %8475 = vmatpush1.msra.mxu0 0.0
      %8476 = vmatprep.subr.mxu0 0.0
      %8477 = vmatpush1.msra.mxu0 0.0
      %8478 = vmatprep.subr.mxu0 0.0
      %8479 = vmatpush1.msra.mxu0 0.0
      %8480 = vmatprep.subr.mxu0 0.0
      %8481 = vmatpush1.msra.mxu0 0.0
      %8482 = vmatprep.subr.mxu0 0.0
      %8483 = vmatpush1.msra.mxu0 0.0
      %8484 = vmatprep.subr.mxu0 0.0
      %8485 = vmatpush1.msra.mxu0 0.0
      %8486 = vmatprep.subr.mxu0 0.0
      %8487 = vmatpush1.msra.mxu0 0.0
      %8488 = vmatprep.subr.mxu0 0.0
      %8489 = vmatpush1.msra.mxu0 0.0
      %8490 = vmatprep.subr.mxu0 0.0
      %8491 = vmatpush1.msra.mxu0 0.0
      %8492 = vmatprep.subr.mxu0 0.0
      %8493 = vmatpush1.msra.mxu0 0.0
      %8494 = vmatprep.subr.mxu0 0.0
      %8495 = vmatpush1.msra.mxu0 0.0
      %8496 = vmatprep.subr.mxu0 0.0
      %8497 = vmatpush1.msra.mxu0 0.0
      %8498 = vmatprep.subr.mxu0 0.0
      %8499 = vmatpush1.msra.mxu0 0.0
      %8500 = vmatprep.subr.mxu0 0.0
      %8501 = vmatpush1.msra.mxu0 0.0
      %8502 = vmatprep.subr.mxu0 0.0
      %8503 = vmatpush1.msra.mxu0 0.0
      %8504 = vmatprep.subr.mxu0 0.0
      %8505 = vmatpush1.msra.mxu0 0.0
      %8506 = vmatprep.subr.mxu0 0.0
      %8507 = vmatpush1.msra.mxu0 0.0
      %8508 = vmatprep.subr.mxu0 0.0
      %8509 = vmatpush1.msra.mxu0 0.0
      %8510 = vmatprep.subr.mxu0 0.0
      %8511 = vmatpush1.msra.mxu0 0.0
      %8512 = vmatprep.subr.mxu0 0.0
      %8513 = vmatpush1.msra.mxu0 0.0
      %8514 = vmatprep.subr.mxu0 0.0
      %8515 = vmatpush1.msra.mxu0 0.0
      %8516 = vmatprep.subr.mxu0 0.0
      %8517 = vmatpush1.msra.mxu0 0.0
      %8518 = vmatprep.subr.mxu0 0.0
      %8519 = vmatpush1.msra.mxu0 0.0
      %8520 = vmatprep.mubr.f32.mxu0 0.0
      %8521 = vmatmul.mubr.f32.gmra.mrb[0].mxu0 %v8385
      %v8522 = vpop.f32.mrb[0].mxu0
      %v8523 = vadd.f32 0.0, %v8522
      %v8524 = vpop.f32.mrb[0].mxu0
      %8525 = vmatprep.mubr.f32.mxu0 0.0
      %8526 = vmatmul.mubr.f32.gmra.mrb[0].mxu0 %v8388
      %v8527 = vpop.f32.mrb[0].mxu0
      %v8528 = vadd.f32 0.0, %v8527
      %v8529 = vpop.f32.mrb[0].mxu0
      %8530 = vmatprep.mubr.f32.mxu0 0.0
      %8531 = vmatmul.mubr.f32.gmra.mrb[0].mxu0 %v8391
      %v8532 = vpop.f32.mrb[0].mxu0
      %v8533 = vadd.f32 0.0, %v8532
      %v8534 = vpop.f32.mrb[0].mxu0
      %8535 = vmatprep.mubr.f32.mxu0 0.0
      %8536 = vmatmul.mubr.f32.gmra.mrb[0].mxu0 %v8394
      %v8537 = vpop.f32.mrb[0].mxu0
      %v8538 = vadd.f32 0.0, %v8537
      %v8539 = vpop.f32.mrb[0].mxu0
      %8540 = vmatprep.mubr.f32.mxu0 0.0
      %8541 = vmatmul.mubr.f32.gmra.mrb[0].mxu0 %v8397
      %v8542 = vpop.f32.mrb[0].mxu0
      %v8543 = vadd.f32 0.0, %v8542
      %v8544 = vpop.f32.mrb[0].mxu0
      %8545 = vmatprep.mubr.f32.mxu0 0.0
      %8546 = vmatmul.mubr.f32.gmra.mrb[0].mxu0 %v8400
      %v8547 = vpop.f32.mrb[0].mxu0
      %v8548 = vadd.f32 0.0, %v8547
      %v8549 = vpop.f32.mrb[0].mxu0
      %8550 = vmatprep.mubr.f32.mxu0 0.0
      %8551 = vmatmul.mubr.f32.gmra.mrb[0].mxu0 %v8403
      %v8552 = vpop.f32.mrb[0].mxu0
      %v8553 = vadd.f32 0.0, %v8552
      %v8554 = vpop.f32.mrb[0].mxu0
      %8555 = vmatprep.mubr.f32.mxu0 0.0
      %8556 = vmatmul.mubr.f32.gmra.mrb[0].mxu0 %v8406
      %v8557 = vpop.f32.mrb[0].mxu0
      %v8558 = vadd.f32 0.0, %v8557
      %v8559 = vpop.f32.mrb[0].mxu0
      %8560 = vmatprep.mubr.f32.mxu0 0.0
      %8561 = vmatmul.mubr.f32.gmra.mrb[0].mxu0 %v8409
      %v8562 = vpop.f32.mrb[0].mxu0
      %v8563 = vadd.f32 0.0, %v8562
      %v8564 = vpop.f32.mrb[0].mxu0
      %8565 = vmatprep.mubr.f32.mxu0 0.0
      %8566 = vmatmul.mubr.f32.gmra.mrb[0].mxu0 %v8412
      %v8567 = vpop.f32.mrb[0].mxu0
      %v8568 = vadd.f32 0.0, %v8567
      %v8569 = vpop.f32.mrb[0].mxu0
      %8570 = vmatprep.mubr.f32.mxu0 0.0
      %8571 = vmatmul.mubr.f32.gmra.mrb[0].mxu0 %v8415
      %v8572 = vpop.f32.mrb[0].mxu0
      %v8573 = vadd.f32 0.0, %v8572
      %v8574 = vpop.f32.mrb[0].mxu0
      %8575 = vmatprep.mubr.f32.mxu0 0.0
      %8576 = vmatmul.mubr.f32.gmra.mrb[0].mxu0 %v8418
      %v8577 = vpop.f32.mrb[0].mxu0
      %v8578 = vadd.f32 0.0, %v8577
      %v8579 = vpop.f32.mrb[0].mxu0
      %8580 = vmatprep.mubr.f32.mxu0 0.0
      %8581 = vmatmul.mubr.f32.gmra.mrb[0].mxu0 %v8421
      %v8582 = vpop.f32.mrb[0].mxu0
      %v8583 = vadd.f32 0.0, %v8582
      %v8584 = vpop.f32.mrb[0].mxu0
      %8585 = vmatprep.mubr.f32.mxu0 0.0
      %8586 = vmatmul.mubr.f32.gmra.mrb[0].mxu0 %v8424
      %v8587 = vpop.f32.mrb[0].mxu0
      %v8588 = vadd.f32 0.0, %v8587
      %v8589 = vpop.f32.mrb[0].mxu0
      %8590 = vmatprep.mubr.f32.mxu0 0.0
      %8591 = vmatmul.mubr.f32.gmra.mrb[0].mxu0 %v8427
      %v8592 = vpop.f32.mrb[0].mxu0
      %v8593 = vadd.f32 0.0, %v8592
      %v8594 = vpop.f32.mrb[0].mxu0
      %8595 = vmatprep.mubr.f32.mxu0 0.0
      %8596 = vmatmul.mubr.f32.gmra.mrb[0].mxu0 %v8430
      %v8597 = vpop.f32.mrb[0].mxu0
      %v8598 = vadd.f32 0.0, %v8597
      %v8599 = vpop.f32.mrb[0].mxu0
      %8600 = vmatprep.mubr.f32.mxu0 0.0
      %8601 = vmatmul.mubr.f32.gmra.mrb[0].mxu0 %v8433
      %v8602 = vpop.f32.mrb[0].mxu0
      %v8603 = vadd.f32 0.0, %v8602
      %v8604 = vpop.f32.mrb[0].mxu0
      %8605 = vmatprep.mubr.f32.mxu0 0.0
      %8606 = vmatmul.mubr.f32.gmra.mrb[0].mxu0 %v8436
      %v8607 = vpop.f32.mrb[0].mxu0
      %v8608 = vadd.f32 0.0, %v8607
      %v8609 = vpop.f32.mrb[0].mxu0
      %8610 = vmatprep.mubr.f32.mxu0 0.0
      %8611 = vmatmul.mubr.f32.gmra.mrb[0].mxu0 %v8439
      %v8612 = vpop.f32.mrb[0].mxu0
      %v8613 = vadd.f32 0.0, %v8612
      %v8614 = vpop.f32.mrb[0].mxu0
      %8615 = vmatprep.mubr.f32.mxu0 0.0
      %8616 = vmatmul.mubr.f32.gmra.mrb[0].mxu0 %v8442
      %v8617 = vpop.f32.mrb[0].mxu0
      %v8618 = vadd.f32 0.0, %v8617
      %v8619 = vpop.f32.mrb[0].mxu0
      %8620 = vmatprep.mubr.f32.mxu0 0.0
      %8621 = vmatmul.mubr.f32.gmra.mrb[0].mxu0 %v8445
      %v8622 = vpop.f32.mrb[0].mxu0
      %v8623 = vadd.f32 0.0, %v8622
      %v8624 = vpop.f32.mrb[0].mxu0
      %8625 = vmatprep.mubr.f32.mxu0 0.0
      %8626 = vmatmul.mubr.f32.gmra.mrb[0].mxu0 %v8448
      %v8627 = vpop.f32.mrb[0].mxu0
      %v8628 = vadd.f32 0.0, %v8627
      %v8629 = vpop.f32.mrb[0].mxu0
      %8630 = vmatprep.mubr.f32.mxu0 0.0
      %8631 = vmatmul.mubr.f32.gmra.mrb[0].mxu0 %v8451
      %v8632 = vpop.f32.mrb[0].mxu0
      %v8633 = vadd.f32 0.0, %v8632
      %v8634 = vpop.f32.mrb[0].mxu0
      %8635 = vmatprep.mubr.f32.mxu0 0.0
      %8636 = vmatmul.mubr.f32.gmra.mrb[0].mxu0 %v8454
      %v8637 = vpop.f32.mrb[0].mxu0
      %v8638 = vadd.f32 0.0, %v8637
      %v8639 = vpop.f32.mrb[0].mxu0
      %8640 = vdwg.mxu0
      %v8642 = vsel %vm1041, %v8334, 0
      %v8645 = vsel %vm1041, %v8335, 0
      %v8648 = vsel %vm1041, %v8336, 0
      %v8651 = vsel %vm1041, %v8337, 0
      %v8654 = vsel %vm1041, %v8338, 0
      %v8657 = vsel %vm1041, %v8339, 0
      %v8660 = vsel %vm1041, %v8340, 0
      %v8663 = vsel %vm1041, %v8341, 0
      %v8666 = vsel %vm1041, %v8342, 0
      %v8669 = vsel %vm1041, %v8343, 0
      %v8672 = vsel %vm1041, %v8344, 0
      %v8675 = vsel %vm1041, %v8345, 0
      %v8678 = vsel %vm1041, %v8346, 0
      %v8681 = vsel %vm1041, %v8347, 0
      %v8684 = vsel %vm1041, %v8348, 0
      %v8687 = vsel %vm1041, %v8349, 0
      %v8690 = vsel %vm1041, %v8350, 0
      %v8693 = vsel %vm1041, %v8351, 0
      %v8696 = vsel %vm1041, %v8352, 0
      %v8699 = vsel %vm1041, %v8353, 0
      %v8702 = vsel %vm1041, %v8354, 0
      %v8705 = vsel %vm1041, %v8355, 0
      %v8708 = vsel %vm1041, %v8356, 0
      %v8711 = vsel %vm1041, %v8357, 0
      %8713 = vmatprep.subr.mxu0 0.0
      %8714 = vmatpush1.msra.mxu0 %v8382
      %8715 = vmatprep.subr.mxu0 0.0
      %8716 = vmatpush1.msra.mxu0 0.0
      %8717 = vmatprep.subr.mxu0 0.0
      %8718 = vmatpush1.msra.mxu0 0.0
      %8719 = vmatprep.subr.mxu0 0.0
      %8720 = vmatpush1.msra.mxu0 0.0
      %8721 = vmatprep.subr.mxu0 0.0
      %8722 = vmatpush1.msra.mxu0 0.0
      %8723 = vmatprep.subr.mxu0 0.0
      %8724 = vmatpush1.msra.mxu0 0.0
      %8725 = vmatprep.subr.mxu0 0.0
      %8726 = vmatpush1.msra.mxu0 0.0
      %8727 = vmatprep.subr.mxu0 0.0
      %8728 = vmatpush1.msra.mxu0 0.0
      %8729 = vmatprep.subr.mxu0 0.0
      %8730 = vmatpush1.msra.mxu0 0.0
      %8731 = vmatprep.subr.mxu0 0.0
      %8732 = vmatpush1.msra.mxu0 0.0
      %8733 = vmatprep.subr.mxu0 0.0
      %8734 = vmatpush1.msra.mxu0 0.0
      %8735 = vmatprep.subr.mxu0 0.0
      %8736 = vmatpush1.msra.mxu0 0.0
      %8737 = vmatprep.subr.mxu0 0.0
      %8738 = vmatpush1.msra.mxu0 0.0
      %8739 = vmatprep.subr.mxu0 0.0
      %8740 = vmatpush1.msra.mxu0 0.0
      %8741 = vmatprep.subr.mxu0 0.0
      %8742 = vmatpush1.msra.mxu0 0.0
      %8743 = vmatprep.subr.mxu0 0.0
      %8744 = vmatpush1.msra.mxu0 0.0
      %8745 = vmatprep.subr.mxu0 0.0
      %8746 = vmatpush1.msra.mxu0 0.0
      %8747 = vmatprep.subr.mxu0 0.0
      %8748 = vmatpush1.msra.mxu0 0.0
      %8749 = vmatprep.subr.mxu0 0.0
      %8750 = vmatpush1.msra.mxu0 0.0
      %8751 = vmatprep.subr.mxu0 0.0
      %8752 = vmatpush1.msra.mxu0 0.0
      %8753 = vmatprep.subr.mxu0 0.0
      %8754 = vmatpush1.msra.mxu0 0.0
      %8755 = vmatprep.subr.mxu0 0.0
      %8756 = vmatpush1.msra.mxu0 0.0
      %8757 = vmatprep.subr.mxu0 0.0
      %8758 = vmatpush1.msra.mxu0 0.0
      %8759 = vmatprep.subr.mxu0 0.0
      %8760 = vmatpush1.msra.mxu0 0.0
      %8761 = vmatprep.subr.mxu0 0.0
      %8762 = vmatpush1.msra.mxu0 0.0
      %8763 = vmatprep.subr.mxu0 0.0
      %8764 = vmatpush1.msra.mxu0 0.0
      %8765 = vmatprep.subr.mxu0 0.0
      %8766 = vmatpush1.msra.mxu0 0.0
      %8767 = vmatprep.subr.mxu0 0.0
      %8768 = vmatpush1.msra.mxu0 0.0
      %8769 = vmatprep.subr.mxu0 0.0
      %8770 = vmatpush1.msra.mxu0 0.0
      %8771 = vmatprep.subr.mxu0 0.0
      %8772 = vmatpush1.msra.mxu0 0.0
      %8773 = vmatprep.subr.mxu0 0.0
      %8774 = vmatpush1.msra.mxu0 0.0
      %8775 = vmatprep.subr.mxu0 0.0
      %8776 = vmatpush1.msra.mxu0 0.0
      %8777 = vmatprep.mubr.f32.mxu0 0.0
      %8778 = vmatmul.mubr.f32.gmra.mrb[0].mxu0 %v8642
      %v8779 = vpop.f32.mrb[0].mxu0
      %v8780 = vadd.f32 %v8523, %v8779
      %v8781 = vpop.f32.mrb[0].mxu0
      %8782 = vmatprep.mubr.f32.mxu0 0.0
      %8783 = vmatmul.mubr.f32.gmra.mrb[0].mxu0 %v8645
      %v8784 = vpop.f32.mrb[0].mxu0
      %v8785 = vadd.f32 %v8528, %v8784
      %v8786 = vpop.f32.mrb[0].mxu0
      %8787 = vmatprep.mubr.f32.mxu0 0.0
      %8788 = vmatmul.mubr.f32.gmra.mrb[0].mxu0 %v8648
      %v8789 = vpop.f32.mrb[0].mxu0
      %v8790 = vadd.f32 %v8533, %v8789
      %v8791 = vpop.f32.mrb[0].mxu0
      %8792 = vmatprep.mubr.f32.mxu0 0.0
      %8793 = vmatmul.mubr.f32.gmra.mrb[0].mxu0 %v8651
      %v8794 = vpop.f32.mrb[0].mxu0
      %v8795 = vadd.f32 %v8538, %v8794
      %v8796 = vpop.f32.mrb[0].mxu0
      %8797 = vmatprep.mubr.f32.mxu0 0.0
      %8798 = vmatmul.mubr.f32.gmra.mrb[0].mxu0 %v8654
      %v8799 = vpop.f32.mrb[0].mxu0
      %v8800 = vadd.f32 %v8543, %v8799
      %v8801 = vpop.f32.mrb[0].mxu0
      %8802 = vmatprep.mubr.f32.mxu0 0.0
      %8803 = vmatmul.mubr.f32.gmra.mrb[0].mxu0 %v8657
      %v8804 = vpop.f32.mrb[0].mxu0
      %v8805 = vadd.f32 %v8548, %v8804
      %v8806 = vpop.f32.mrb[0].mxu0
      %8807 = vmatprep.mubr.f32.mxu0 0.0
      %8808 = vmatmul.mubr.f32.gmra.mrb[0].mxu0 %v8660
      %v8809 = vpop.f32.mrb[0].mxu0
      %v8810 = vadd.f32 %v8553, %v8809
      %v8811 = vpop.f32.mrb[0].mxu0
      %8812 = vmatprep.mubr.f32.mxu0 0.0
      %8813 = vmatmul.mubr.f32.gmra.mrb[0].mxu0 %v8663
      %v8814 = vpop.f32.mrb[0].mxu0
      %v8815 = vadd.f32 %v8558, %v8814
      %v8816 = vpop.f32.mrb[0].mxu0
      %8817 = vmatprep.mubr.f32.mxu0 0.0
      %8818 = vmatmul.mubr.f32.gmra.mrb[0].mxu0 %v8666
      %v8819 = vpop.f32.mrb[0].mxu0
      %v8820 = vadd.f32 %v8563, %v8819
      %v8821 = vpop.f32.mrb[0].mxu0
      %8822 = vmatprep.mubr.f32.mxu0 0.0
      %8823 = vmatmul.mubr.f32.gmra.mrb[0].mxu0 %v8669
      %v8824 = vpop.f32.mrb[0].mxu0
      %v8825 = vadd.f32 %v8568, %v8824
      %v8826 = vpop.f32.mrb[0].mxu0
      %8827 = vmatprep.mubr.f32.mxu0 0.0
      %8828 = vmatmul.mubr.f32.gmra.mrb[0].mxu0 %v8672
      %v8829 = vpop.f32.mrb[0].mxu0
      %v8830 = vadd.f32 %v8573, %v8829
      %v8831 = vpop.f32.mrb[0].mxu0
      %8832 = vmatprep.mubr.f32.mxu0 0.0
      %8833 = vmatmul.mubr.f32.gmra.mrb[0].mxu0 %v8675
      %v8834 = vpop.f32.mrb[0].mxu0
      %v8835 = vadd.f32 %v8578, %v8834
      %v8836 = vpop.f32.mrb[0].mxu0
      %8837 = vmatprep.mubr.f32.mxu0 0.0
      %8838 = vmatmul.mubr.f32.gmra.mrb[0].mxu0 %v8678
      %v8839 = vpop.f32.mrb[0].mxu0
      %v8840 = vadd.f32 %v8583, %v8839
      %v8841 = vpop.f32.mrb[0].mxu0
      %8842 = vmatprep.mubr.f32.mxu0 0.0
      %8843 = vmatmul.mubr.f32.gmra.mrb[0].mxu0 %v8681
      %v8844 = vpop.f32.mrb[0].mxu0
      %v8845 = vadd.f32 %v8588, %v8844
      %v8846 = vpop.f32.mrb[0].mxu0
      %8847 = vmatprep.mubr.f32.mxu0 0.0
      %8848 = vmatmul.mubr.f32.gmra.mrb[0].mxu0 %v8684
      %v8849 = vpop.f32.mrb[0].mxu0
      %v8850 = vadd.f32 %v8593, %v8849
      %v8851 = vpop.f32.mrb[0].mxu0
      %8852 = vmatprep.mubr.f32.mxu0 0.0
      %8853 = vmatmul.mubr.f32.gmra.mrb[0].mxu0 %v8687
      %v8854 = vpop.f32.mrb[0].mxu0
      %v8855 = vadd.f32 %v8598, %v8854
      %v8856 = vpop.f32.mrb[0].mxu0
      %8857 = vmatprep.mubr.f32.mxu0 0.0
      %8858 = vmatmul.mubr.f32.gmra.mrb[0].mxu0 %v8690
      %v8859 = vpop.f32.mrb[0].mxu0
      %v8860 = vadd.f32 %v8603, %v8859
      %v8861 = vpop.f32.mrb[0].mxu0
      %8862 = vmatprep.mubr.f32.mxu0 0.0
      %8863 = vmatmul.mubr.f32.gmra.mrb[0].mxu0 %v8693
      %v8864 = vpop.f32.mrb[0].mxu0
      %v8865 = vadd.f32 %v8608, %v8864
      %v8866 = vpop.f32.mrb[0].mxu0
      %8867 = vmatprep.mubr.f32.mxu0 0.0
      %8868 = vmatmul.mubr.f32.gmra.mrb[0].mxu0 %v8696
      %v8869 = vpop.f32.mrb[0].mxu0
      %v8870 = vadd.f32 %v8613, %v8869
      %v8871 = vpop.f32.mrb[0].mxu0
      %8872 = vmatprep.mubr.f32.mxu0 0.0
      %8873 = vmatmul.mubr.f32.gmra.mrb[0].mxu0 %v8699
      %v8874 = vpop.f32.mrb[0].mxu0
      %v8875 = vadd.f32 %v8618, %v8874
      %v8876 = vpop.f32.mrb[0].mxu0
      %8877 = vmatprep.mubr.f32.mxu0 0.0
      %8878 = vmatmul.mubr.f32.gmra.mrb[0].mxu0 %v8702
      %v8879 = vpop.f32.mrb[0].mxu0
      %v8880 = vadd.f32 %v8623, %v8879
      %v8881 = vpop.f32.mrb[0].mxu0
      %8882 = vmatprep.mubr.f32.mxu0 0.0
      %8883 = vmatmul.mubr.f32.gmra.mrb[0].mxu0 %v8705
      %v8884 = vpop.f32.mrb[0].mxu0
      %v8885 = vadd.f32 %v8628, %v8884
      %v8886 = vpop.f32.mrb[0].mxu0
      %8887 = vmatprep.mubr.f32.mxu0 0.0
      %8888 = vmatmul.mubr.f32.gmra.mrb[0].mxu0 %v8708
      %v8889 = vpop.f32.mrb[0].mxu0
      %v8890 = vadd.f32 %v8633, %v8889
      %v8891 = vpop.f32.mrb[0].mxu0
      %8892 = vmatprep.mubr.f32.mxu0 0.0
      %8893 = vmatmul.mubr.f32.gmra.mrb[0].mxu0 %v8711
      %v8894 = vpop.f32.mrb[0].mxu0
      %v8895 = vadd.f32 %v8638, %v8894
      %v8896 = vpop.f32.mrb[0].mxu0
      %8897 = vdwg.mxu0
      %v8898 = vld [vmem:[%s20] sm:$0x1]
      %v8900 = vlaneseq
      %v8901 = vshrl.u32 %v8900, 7
      %v8902 = vsub.s32 0, %v8901
      %v8903 = vrot.slane %v8898, %v8902
      %v8905 = vadd.f32 %v8780, %v8903
      %v8906 = vadd.f32 %v8785, %v8903
      %v8907 = vadd.f32 %v8790, %v8903
      %v8908 = vadd.f32 %v8795, %v8903
      %v8909 = vadd.f32 %v8800, %v8903
      %v8910 = vadd.f32 %v8805, %v8903
      %v8911 = vadd.f32 %v8810, %v8903
      %v8912 = vadd.f32 %v8815, %v8903
      %v8913 = vadd.f32 %v8820, %v8903
      %v8914 = vadd.f32 %v8825, %v8903
      %v8915 = vadd.f32 %v8830, %v8903
      %v8916 = vadd.f32 %v8835, %v8903
      %v8917 = vadd.f32 %v8840, %v8903
      %v8918 = vadd.f32 %v8845, %v8903
      %v8919 = vadd.f32 %v8850, %v8903
      %v8920 = vadd.f32 %v8855, %v8903
      %v8921 = vadd.f32 %v8860, %v8903
      %v8922 = vadd.f32 %v8865, %v8903
      %v8923 = vadd.f32 %v8870, %v8903
      %v8924 = vadd.f32 %v8875, %v8903
      %v8925 = vadd.f32 %v8880, %v8903
      %v8926 = vadd.f32 %v8885, %v8903
      %v8927 = vadd.f32 %v8890, %v8903
      %v8928 = vadd.f32 %v8895, %v8903
      %v8929 = vsel %vm755, %v8905, -inf
      %8930 = vmax.xlane.f32.xlu0 %v8929
      %v8931 = vpop.xlane.xlu0 %8930
      %v8932 = vsel %vm755, %v8906, -inf
      %8933 = vmax.xlane.f32.xlu0 %v8932
      %v8934 = vpop.xlane.xlu0 %8933
      %v8935 = vsel %vm755, %v8907, -inf
      %8936 = vmax.xlane.f32.xlu0 %v8935
      %v8937 = vpop.xlane.xlu0 %8936
      %v8938 = vsel %vm755, %v8908, -inf
      %8939 = vmax.xlane.f32.xlu0 %v8938
      %v8940 = vpop.xlane.xlu0 %8939
      %v8941 = vsel %vm755, %v8909, -inf
      %8942 = vmax.xlane.f32.xlu0 %v8941
      %v8943 = vpop.xlane.xlu0 %8942
      %v8944 = vsel %vm755, %v8910, -inf
      %8945 = vmax.xlane.f32.xlu0 %v8944
      %v8946 = vpop.xlane.xlu0 %8945
      %v8947 = vsel %vm755, %v8911, -inf
      %8948 = vmax.xlane.f32.xlu0 %v8947
      %v8949 = vpop.xlane.xlu0 %8948
      %v8950 = vsel %vm755, %v8912, -inf
      %8951 = vmax.xlane.f32.xlu0 %v8950
      %v8952 = vpop.xlane.xlu0 %8951
      %v8953 = vsel %vm755, %v8913, -inf
      %8954 = vmax.xlane.f32.xlu0 %v8953
      %v8955 = vpop.xlane.xlu0 %8954
      %v8956 = vsel %vm755, %v8914, -inf
      %8957 = vmax.xlane.f32.xlu0 %v8956
      %v8958 = vpop.xlane.xlu0 %8957
      %v8959 = vsel %vm755, %v8915, -inf
      %8960 = vmax.xlane.f32.xlu0 %v8959
      %v8961 = vpop.xlane.xlu0 %8960
      %v8962 = vsel %vm755, %v8916, -inf
      %8963 = vmax.xlane.f32.xlu0 %v8962
      %v8964 = vpop.xlane.xlu0 %8963
      %v8965 = vsel %vm755, %v8917, -inf
      %8966 = vmax.xlane.f32.xlu0 %v8965
      %v8967 = vpop.xlane.xlu0 %8966
      %v8968 = vsel %vm755, %v8918, -inf
      %8969 = vmax.xlane.f32.xlu0 %v8968
      %v8970 = vpop.xlane.xlu0 %8969
      %v8971 = vsel %vm755, %v8919, -inf
      %8972 = vmax.xlane.f32.xlu0 %v8971
      %v8973 = vpop.xlane.xlu0 %8972
      %v8974 = vsel %vm755, %v8920, -inf
      %8975 = vmax.xlane.f32.xlu0 %v8974
      %v8976 = vpop.xlane.xlu0 %8975
      %v8977 = vsel %vm755, %v8921, -inf
      %8978 = vmax.xlane.f32.xlu0 %v8977
      %v8979 = vpop.xlane.xlu0 %8978
      %v8980 = vsel %vm755, %v8922, -inf
      %8981 = vmax.xlane.f32.xlu0 %v8980
      %v8982 = vpop.xlane.xlu0 %8981
      %v8983 = vsel %vm755, %v8923, -inf
      %8984 = vmax.xlane.f32.xlu0 %v8983
      %v8985 = vpop.xlane.xlu0 %8984
      %v8986 = vsel %vm755, %v8924, -inf
      %8987 = vmax.xlane.f32.xlu0 %v8986
      %v8988 = vpop.xlane.xlu0 %8987
      %v8989 = vsel %vm755, %v8925, -inf
      %8990 = vmax.xlane.f32.xlu0 %v8989
      %v8991 = vpop.xlane.xlu0 %8990
      %v8992 = vsel %vm755, %v8926, -inf
      %8993 = vmax.xlane.f32.xlu0 %v8992
      %v8994 = vpop.xlane.xlu0 %8993
      %v8995 = vsel %vm755, %v8927, -inf
      %8996 = vmax.xlane.f32.xlu0 %v8995
      %v8997 = vpop.xlane.xlu0 %8996
      %vm8998 = vcmask 16384
      %v8999 = vsel %vm8998, %v8928, -inf
      %9000 = vmax.xlane.f32.xlu0 %v8999
      %v9001 = vpop.xlane.xlu0 %9000
      %v9002 = vsub.f32 %v8905, %v8931
      %v9003 = vsub.f32 %v8906, %v8934
      %v9004 = vsub.f32 %v8907, %v8937
      %v9005 = vsub.f32 %v8908, %v8940
      %v9006 = vsub.f32 %v8909, %v8943
      %v9007 = vsub.f32 %v8910, %v8946
      %v9008 = vsub.f32 %v8911, %v8949
      %v9009 = vsub.f32 %v8912, %v8952
      %v9010 = vsub.f32 %v8913, %v8955
      %v9011 = vsub.f32 %v8914, %v8958
      %v9012 = vsub.f32 %v8915, %v8961
      %v9013 = vsub.f32 %v8916, %v8964
      %v9014 = vsub.f32 %v8917, %v8967
      %v9015 = vsub.f32 %v8918, %v8970
      %v9016 = vsub.f32 %v8919, %v8973
      %v9017 = vsub.f32 %v8920, %v8976
      %v9018 = vsub.f32 %v8921, %v8979
      %v9019 = vsub.f32 %v8922, %v8982
      %v9020 = vsub.f32 %v8923, %v8985
      %v9021 = vsub.f32 %v8924, %v8988
      %v9022 = vsub.f32 %v8925, %v8991
      %v9023 = vsub.f32 %v8926, %v8994
      %v9024 = vsub.f32 %v8927, %v8997
      %v9025 = vsub.f32 %v8928, %v9001
      %v9026 = vmul.f32 %v9002, 1.442695
      %v9027 = vpow.pop %v9026
      %v9028 = vmul.f32 %v9003, 1.442695
      %v9029 = vpow.pop %v9028
      %v9030 = vmul.f32 %v9004, 1.442695
      %v9031 = vpow.pop %v9030
      %v9032 = vmul.f32 %v9005, 1.442695
      %v9033 = vpow.pop %v9032
      %v9034 = vmul.f32 %v9006, 1.442695
      %v9035 = vpow.pop %v9034
      %v9036 = vmul.f32 %v9007, 1.442695
      %v9037 = vpow.pop %v9036
      %v9038 = vmul.f32 %v9008, 1.442695
      %v9039 = vpow.pop %v9038
      %v9040 = vmul.f32 %v9009, 1.442695
      %v9041 = vpow.pop %v9040
      %v9042 = vmul.f32 %v9010, 1.442695
      %v9043 = vpow.pop %v9042
      %v9044 = vmul.f32 %v9011, 1.442695
      %v9045 = vpow.pop %v9044
      %v9046 = vmul.f32 %v9012, 1.442695
      %v9047 = vpow.pop %v9046
      %v9048 = vmul.f32 %v9013, 1.442695
      %v9049 = vpow.pop %v9048
      %v9050 = vmul.f32 %v9014, 1.442695
      %v9051 = vpow.pop %v9050
      %v9052 = vmul.f32 %v9015, 1.442695
      %v9053 = vpow.pop %v9052
      %v9054 = vmul.f32 %v9016, 1.442695
      %v9055 = vpow.pop %v9054
      %v9056 = vmul.f32 %v9017, 1.442695
      %v9057 = vpow.pop %v9056
      %v9058 = vmul.f32 %v9018, 1.442695
      %v9059 = vpow.pop %v9058
      %v9060 = vmul.f32 %v9019, 1.442695
      %v9061 = vpow.pop %v9060
      %v9062 = vmul.f32 %v9020, 1.442695
      %v9063 = vpow.pop %v9062
      %v9064 = vmul.f32 %v9021, 1.442695
      %v9065 = vpow.pop %v9064
      %v9066 = vmul.f32 %v9022, 1.442695
      %v9067 = vpow.pop %v9066
      %v9068 = vmul.f32 %v9023, 1.442695
      %v9069 = vpow.pop %v9068
      %v9070 = vmul.f32 %v9024, 1.442695
      %v9071 = vpow.pop %v9070
      %v9072 = vmul.f32 %v9025, 1.442695
      %v9073 = vpow.pop %v9072
      %v9074 = vsel %vm755, %v9027, 0.0
      %9075 = vadd.xlane.f32.xlu0 %v9074
      %v9076 = vpop.xlane.xlu0 %9075
      %v9077 = vsel %vm755, %v9029, 0.0
      %9078 = vadd.xlane.f32.xlu0 %v9077
      %v9079 = vpop.xlane.xlu0 %9078
      %v9080 = vsel %vm755, %v9031, 0.0
      %9081 = vadd.xlane.f32.xlu0 %v9080
      %v9082 = vpop.xlane.xlu0 %9081
      %v9083 = vsel %vm755, %v9033, 0.0
      %9084 = vadd.xlane.f32.xlu0 %v9083
      %v9085 = vpop.xlane.xlu0 %9084
      %v9086 = vsel %vm755, %v9035, 0.0
      %9087 = vadd.xlane.f32.xlu0 %v9086
      %v9088 = vpop.xlane.xlu0 %9087
      %v9089 = vsel %vm755, %v9037, 0.0
      %9090 = vadd.xlane.f32.xlu0 %v9089
      %v9091 = vpop.xlane.xlu0 %9090
      %v9092 = vsel %vm755, %v9039, 0.0
      %9093 = vadd.xlane.f32.xlu0 %v9092
      %v9094 = vpop.xlane.xlu0 %9093
      %v9095 = vsel %vm755, %v9041, 0.0
      %9096 = vadd.xlane.f32.xlu0 %v9095
      %v9097 = vpop.xlane.xlu0 %9096
      %v9098 = vsel %vm755, %v9043, 0.0
      %9099 = vadd.xlane.f32.xlu0 %v9098
      %v9100 = vpop.xlane.xlu0 %9099
      %v9101 = vsel %vm755, %v9045, 0.0
      %9102 = vadd.xlane.f32.xlu0 %v9101
      %v9103 = vpop.xlane.xlu0 %9102
      %v9104 = vsel %vm755, %v9047, 0.0
      %9105 = vadd.xlane.f32.xlu0 %v9104
      %v9106 = vpop.xlane.xlu0 %9105
      %v9107 = vsel %vm755, %v9049, 0.0
      %9108 = vadd.xlane.f32.xlu0 %v9107
      %v9109 = vpop.xlane.xlu0 %9108
      %v9110 = vsel %vm755, %v9051, 0.0
      %9111 = vadd.xlane.f32.xlu0 %v9110
      %v9112 = vpop.xlane.xlu0 %9111
      %v9113 = vsel %vm755, %v9053, 0.0
      %9114 = vadd.xlane.f32.xlu0 %v9113
      %v9115 = vpop.xlane.xlu0 %9114
      %v9116 = vsel %vm755, %v9055, 0.0
      %9117 = vadd.xlane.f32.xlu0 %v9116
      %v9118 = vpop.xlane.xlu0 %9117
      %v9119 = vsel %vm755, %v9057, 0.0
      %9120 = vadd.xlane.f32.xlu0 %v9119
      %v9121 = vpop.xlane.xlu0 %9120
      %v9122 = vsel %vm755, %v9059, 0.0
      %9123 = vadd.xlane.f32.xlu0 %v9122
      %v9124 = vpop.xlane.xlu0 %9123
      %v9125 = vsel %vm755, %v9061, 0.0
      %9126 = vadd.xlane.f32.xlu0 %v9125
      %v9127 = vpop.xlane.xlu0 %9126
      %v9128 = vsel %vm755, %v9063, 0.0
      %9129 = vadd.xlane.f32.xlu0 %v9128
      %v9130 = vpop.xlane.xlu0 %9129
      %v9131 = vsel %vm755, %v9065, 0.0
      %9132 = vadd.xlane.f32.xlu0 %v9131
      %v9133 = vpop.xlane.xlu0 %9132
      %v9134 = vsel %vm755, %v9067, 0.0
      %9135 = vadd.xlane.f32.xlu0 %v9134
      %v9136 = vpop.xlane.xlu0 %9135
      %v9137 = vsel %vm755, %v9069, 0.0
      %9138 = vadd.xlane.f32.xlu0 %v9137
      %v9139 = vpop.xlane.xlu0 %9138
      %v9140 = vsel %vm755, %v9071, 0.0
      %9141 = vadd.xlane.f32.xlu0 %v9140
      %v9142 = vpop.xlane.xlu0 %9141
      %v9143 = vsel %vm8998, %v9073, 0.0
      %9144 = vadd.xlane.f32.xlu0 %v9143
      %v9145 = vpop.xlane.xlu0 %9144
      %v9146 = vrcp.pop %v9076
      %v9147 = vrcp.pop %v9079
      %v9148 = vrcp.pop %v9082
      %v9149 = vrcp.pop %v9085
      %v9150 = vrcp.pop %v9088
      %v9151 = vrcp.pop %v9091
      %v9152 = vrcp.pop %v9094
      %v9153 = vrcp.pop %v9097
      %v9154 = vrcp.pop %v9100
      %v9155 = vrcp.pop %v9103
      %v9156 = vrcp.pop %v9106
      %v9157 = vrcp.pop %v9109
      %v9158 = vrcp.pop %v9112
      %v9159 = vrcp.pop %v9115
      %v9160 = vrcp.pop %v9118
      %v9161 = vrcp.pop %v9121
      %v9162 = vrcp.pop %v9124
      %v9163 = vrcp.pop %v9127
      %v9164 = vrcp.pop %v9130
      %v9165 = vrcp.pop %v9133
      %v9166 = vrcp.pop %v9136
      %v9167 = vrcp.pop %v9139
      %v9168 = vrcp.pop %v9142
      %v9169 = vrcp.pop %v9145
      %v9170 = vmul.f32 %v9027, %v9146
      %v9171 = vmul.f32 %v9029, %v9147
      %v9172 = vmul.f32 %v9031, %v9148
      %v9173 = vmul.f32 %v9033, %v9149
      %v9174 = vmul.f32 %v9035, %v9150
      %v9175 = vmul.f32 %v9037, %v9151
      %v9176 = vmul.f32 %v9039, %v9152
      %v9177 = vmul.f32 %v9041, %v9153
      %v9178 = vmul.f32 %v9043, %v9154
      %v9179 = vmul.f32 %v9045, %v9155
      %v9180 = vmul.f32 %v9047, %v9156
      %v9181 = vmul.f32 %v9049, %v9157
      %v9182 = vmul.f32 %v9051, %v9158
      %v9183 = vmul.f32 %v9053, %v9159
      %v9184 = vmul.f32 %v9055, %v9160
      %v9185 = vmul.f32 %v9057, %v9161
      %v9186 = vmul.f32 %v9059, %v9162
      %v9187 = vmul.f32 %v9061, %v9163
      %v9188 = vmul.f32 %v9063, %v9164
      %v9189 = vmul.f32 %v9065, %v9165
      %v9190 = vmul.f32 %v9067, %v9166
      %v9191 = vmul.f32 %v9069, %v9167
      %v9192 = vmul.f32 %v9071, %v9168
      %v9193 = vmul.f32 %v9073, %v9169
      %9194 = vxpose.xlu0.b32.start [1/16] %v9170, 128
      %9195 = vxpose.xlu0.b32.cont [2/16] %v9171, 128
      %9196 = vxpose.xlu0.b32.cont [3/16] %v9172, 128
      %9197 = vxpose.xlu0.b32.cont [4/16] %v9173, 128
      %9198 = vxpose.xlu0.b32.cont [5/16] %v9174, 128
      %9199 = vxpose.xlu0.b32.cont [6/16] %v9175, 128
      %9200 = vxpose.xlu0.b32.cont [7/16] %v9176, 128
      %9201 = vxpose.xlu0.b32.cont [8/16] %v9177, 128
      %9202 = vxpose.xlu0.b32.cont [9/16] %v9178, 128
      %9203 = vxpose.xlu0.b32.cont [10/16] %v9179, 128
      %9204 = vxpose.xlu0.b32.cont [11/16] %v9180, 128
      %9205 = vxpose.xlu0.b32.cont [12/16] %v9181, 128
      %9206 = vxpose.xlu0.b32.cont [13/16] %v9182, 128
      %9207 = vxpose.xlu0.b32.cont [14/16] %v9183, 128
      %9208 = vxpose.xlu0.b32.cont [15/16] %v9184, 128
      %9209 = vxpose.xlu0.b32.end [16/16] %v9185, 128
      %v9210 = vpop.trf.xlu0
      %v9211 = vpop.trf.xlu0
      %v9212 = vpop.trf.xlu0
      %v9213 = vpop.trf.xlu0
      %v9214 = vpop.trf.xlu0
      %v9215 = vpop.trf.xlu0
      %v9216 = vpop.trf.xlu0
      %v9217 = vpop.trf.xlu0
      %v9218 = vpop.trf.xlu0
      %v9219 = vpop.trf.xlu0
      %v9220 = vpop.trf.xlu0
      %v9221 = vpop.trf.xlu0
      %v9222 = vpop.trf.xlu0
      %v9223 = vpop.trf.xlu0
      %v9224 = vpop.trf.xlu0
      %v9225 = vpop.trf.xlu0
      %9226 = vxpose.xlu0.b32.start [1/16] %v9186, 128
      %9227 = vxpose.xlu0.b32.cont [2/16] %v9187, 128
      %9228 = vxpose.xlu0.b32.cont [3/16] %v9188, 128
      %9229 = vxpose.xlu0.b32.cont [4/16] %v9189, 128
      %9230 = vxpose.xlu0.b32.cont [5/16] %v9190, 128
      %9231 = vxpose.xlu0.b32.cont [6/16] %v9191, 128
      %9232 = vxpose.xlu0.b32.cont [7/16] %v9192, 128
      %9233 = vxpose.xlu0.b32.cont [8/16] %v9193, 128
      %9234 = vxpose.xlu0.b32.cont [9/16] 0.0, 128
      %9235 = vxpose.xlu0.b32.cont [10/16] 0.0, 128
      %9236 = vxpose.xlu0.b32.cont [11/16] 0.0, 128
      %9237 = vxpose.xlu0.b32.cont [12/16] 0.0, 128
      %9238 = vxpose.xlu0.b32.cont [13/16] 0.0, 128
      %9239 = vxpose.xlu0.b32.cont [14/16] 0.0, 128
      %9240 = vxpose.xlu0.b32.cont [15/16] 0.0, 128
      %9241 = vxpose.xlu0.b32.end [16/16] 0.0, 128
      %v9242 = vpop.trf.xlu0
      %v9243 = vpop.trf.xlu0
      %v9244 = vpop.trf.xlu0
      %v9245 = vpop.trf.xlu0
      %v9246 = vpop.trf.xlu0
      %v9247 = vpop.trf.xlu0
      %v9248 = vpop.trf.xlu0
      %v9249 = vpop.trf.xlu0
      %v9250 = vpop.trf.xlu0
      %v9251 = vpop.trf.xlu0
      %v9252 = vpop.trf.xlu0
      %v9253 = vpop.trf.xlu0
      %v9254 = vpop.trf.xlu0
      %v9255 = vpop.trf.xlu0
      %v9256 = vpop.trf.xlu0
      %v9257 = vpop.trf.xlu0
      %v9260 = vcombine.low %v9210, %v9242
      %vm9262 = vcmask 464900
      %vm9263 = vmor %vm9262, %vm828
      %9264 = vst.msk [vmem:[%s656] sm:$0x77] %vm9263, %v9260
      %p9265 = scmp.lt.s32.totalorder %s32, 1
      %s9266 = scalar_select %p9265, %s32, 1
      %s9267 = smul.addr %s9266, 2
      %s9268 = smul.addr %s9267, 4
      %s9269 = scalar_lea.vmem %s21, %s9268
      // Predicated region
      $region105: #{tpu_custom_call.1} parent=103 // pred_check
        %p9270 = pneg %p496
      $region106: #{tpu_custom_call.1} parent=103 // pred_check_branch
        %9272 = sbr.rel (%p9270) target = $region108
      $region107: #{tpu_custom_call.1} parent=103 // pred_region
        _
      $region108: #{tpu_custom_call.1} parent=103 // pred_fallthru
        _
    $region104: #{tpu_custom_call.1} parent=5 // pred_fallthru
      _
    %p9273 = scmp.le.s32.totalorder 2, %s27
    // Predicated region
    $region109: #{tpu_custom_call.1} parent=5 // pred_check
      %p9274 = pneg %p9273
    $region110: #{tpu_custom_call.1} parent=5 // pred_check_branch
      %9276 = sbr.rel (%p9274) target = $region112
    $region111: #{tpu_custom_call.1} parent=5 // pred_region
      %s9277 = ssub.s32 %s27, 2
      // Predicated region
      $region113: #{tpu_custom_call.1} parent=111 // pred_check
        %p9278 = pneg %p502
      $region114: #{tpu_custom_call.1} parent=111 // pred_check_branch
        %9280 = sbr.rel (%p9278) target = $region116
      $region115: #{tpu_custom_call.1} parent=111 // pred_region
        %p9281 = scmp.lt.s32.totalorder %s33, 1
        %s9282 = scalar_select %p9281, %s33, 1
        %s9283 = smul.addr %s9282, 2
        %s9284 = smul.addr %s9283, 4
        %s9285 = scalar_lea.vmem %s21, %s9284
      $region116: #{tpu_custom_call.1} parent=111 // pred_fallthru
        _
    $region112: #{tpu_custom_call.1} parent=5 // pred_fallthru
      _
  $region6: #{tpu_custom_call.1} parent=0 // loop_footer
    %s31 = sadd.s32 1, %s27
  $region7: #{tpu_custom_call.1} parent=0 // loop_footer_branch
    %26 = sbr.rel target = $region3
  $region8: #{tpu_custom_call.1} parent=0 // loop_exit
    _

</llo_original>
